<compile_context>
chip_gen: v7x
topology: tpu7x:2x2x1
jax: 0.10.0
libtpu: 0.0.40
codegen_flags: <defaults>
</compile_context>

<pallas_src>
import functools

import jax
import jax.numpy as jnp
from jax.experimental import pallas as pl
from jax.experimental.pallas import tpu as pltpu

LANE = 128                        # TPU lane width; channel axes padded to this.
VMEM_LIMIT = 32 * 1024 * 1024     # scoped-VMEM limit, safe on v5e/v6e/v7x.


def _round_up(n, m):
    return ((n + m - 1) // m) * m


def _cpad(c):
    return max(LANE, _round_up(c, LANE))


def _pad_last(x, target):
    if x.shape[-1] == target:
        return x
    return jnp.pad(x, [(0, 0)] * (x.ndim - 1) + [(0, target - x.shape[-1])])


# ------------------------------ Pallas kernels --------------------------------

def _conv3x3_kernel(x_ref, w_ref, o_ref, *, H, W):
    """3x3 'same' conv for one sample: 9 shifted bf16 matmuls, f32 accumulate.

    x_ref: (1, H+2, W+2, Cin_p) f32   spatially zero-padded, lane-padded input
    w_ref: (9, Cin_p, Cout_p)   bf16  tap-major weights (index = ky*3 + kx)
    o_ref: (1, H*W, Cout_p)     f32   spatially flattened, lane-dense output
    """
    x = x_ref[0]
    cin = x.shape[-1]
    cout = o_ref.shape[-1]
    acc = jnp.zeros((H * W, cout), jnp.float32)
    for ky in range(3):
        for kx in range(3):
            patch = x[ky:ky + H, kx:kx + W, :].reshape(H * W, cin)
            acc += jnp.dot(patch.astype(jnp.bfloat16),
                           w_ref[ky * 3 + kx],
                           preferred_element_type=jnp.float32)
    o_ref[0] = acc


def conv3x3_pallas(x_nhwc, w_taps):
    """x_nhwc: (N, H, W, Cin_p) f32 (lane-padded channels).
    w_taps: (9, Cin_p, Cout_p) bf16.  Returns (N, H*W, Cout_p) f32."""
    N, H, W, cin = x_nhwc.shape
    cout = w_taps.shape[-1]
    xp = jnp.pad(x_nhwc, ((0, 0), (1, 1), (1, 1), (0, 0)))   # conv padding=1
    kernel = functools.partial(_conv3x3_kernel, H=H, W=W)
    return pl.pallas_call(
        kernel,
        out_shape=jax.ShapeDtypeStruct((N, H * W, cout), jnp.float32),
        grid=(N,),
        in_specs=[
            pl.BlockSpec((1, H + 2, W + 2, cin), lambda n: (n, 0, 0, 0)),
            pl.BlockSpec((9, cin, cout), lambda n: (0, 0, 0)),
        ],
        out_specs=pl.BlockSpec((1, H * W, cout), lambda n: (n, 0, 0)),
        compiler_params=pltpu.CompilerParams(
            dimension_semantics=("parallel",),
            vmem_limit_bytes=VMEM_LIMIT),
    )(xp, w_taps)


def _gate_gn_relu_kernel(a_ref, b_ref, wa_ref, wb_ref, bias_ref,
                         gamma_ref, beta_ref, o_ref, *, c_real, eps):
    """Fused 1x1 gate conv -> sigmoid -> gated mix -> GroupNorm(1) -> ReLU.

    a_ref, b_ref: (1, HW, Cp) f32 (channel-concat order is [a, b]).
    wa_ref/wb_ref: (Cp, Cp) bf16 split gate weights; bias/gamma/beta: (1, Cp).
    Padded channels of a/b/weights/bias/gamma/beta are all zero, so padded
    outputs stay exactly zero and GroupNorm statistics only need the real
    element count (passed statically as c_real).
    """
    a = a_ref[0]
    b = b_ref[0]
    z = (jnp.dot(a.astype(jnp.bfloat16), wa_ref[...],
                 preferred_element_type=jnp.float32)
         + jnp.dot(b.astype(jnp.bfloat16), wb_ref[...],
                   preferred_element_type=jnp.float32)
         + bias_ref[...])
    # sigmoid via EUP exp + EUP approx reciprocal (keeps the VALU free).
    gate = pl.reciprocal(1.0 + jnp.exp(-z), approx=True)
    mixed = gate * a + (1.0 - gate) * b
    # GroupNorm(num_groups=1): per-sample stats over (HW, c_real).  Padded
    # channels of `mixed` are exactly zero, so plain sums are correct; use
    # E[x^2] - mean^2 so no mask is needed for the variance either.
    inv_cnt = 1.0 / (a.shape[0] * c_real)
    mean = jnp.sum(mixed) * inv_cnt
    var = jnp.maximum(jnp.sum(mixed * mixed) * inv_cnt - mean * mean, 0.0)
    xn = (mixed - mean) * jax.lax.rsqrt(var + eps)
    out = xn * gamma_ref[...] + beta_ref[...]
    o_ref[0] = jnp.maximum(out, 0.0)


def gate_gn_relu_pallas(a, b, wa, wb, bias, gamma, beta, *, c_real, eps=1e-5):
    """a, b: (N, HW, Cp) f32.  Returns (N, HW, Cp) f32 (padded channels = 0)."""
    N, HW, Cp = a.shape
    kernel = functools.partial(_gate_gn_relu_kernel, c_real=c_real, eps=eps)
    return pl.pallas_call(
        kernel,
        out_shape=jax.ShapeDtypeStruct((N, HW, Cp), jnp.float32),
        grid=(N,),
        in_specs=[
            pl.BlockSpec((1, HW, Cp), lambda n: (n, 0, 0)),
            pl.BlockSpec((1, HW, Cp), lambda n: (n, 0, 0)),
            pl.BlockSpec((Cp, Cp), lambda n: (0, 0)),
            pl.BlockSpec((Cp, Cp), lambda n: (0, 0)),
            pl.BlockSpec((1, Cp), lambda n: (0, 0)),
            pl.BlockSpec((1, Cp), lambda n: (0, 0)),
            pl.BlockSpec((1, Cp), lambda n: (0, 0)),
        ],
        out_specs=pl.BlockSpec((1, HW, Cp), lambda n: (n, 0, 0)),
        compiler_params=pltpu.CompilerParams(
            dimension_semantics=("parallel",),
            vmem_limit_bytes=VMEM_LIMIT),
    )(a, b, wa, wb, bias, gamma, beta)


# -------------------------------- XLA glue ------------------------------------

def avg_pool_2x2(x):
    """NHWC 2x2 average pool, stride 2 (== nn.AvgPool2d((2,2), 2))."""
    N, H, W, C = x.shape
    return x.reshape(N, H // 2, 2, W // 2, 2, C).mean(axis=(2, 4))


def upsample_x2_bilinear(x):
    """NHWC x2 bilinear upsample, align_corners=False.  Exact separable form of
    F.interpolate for scale factor 2 -- gather-free (shifts + FMAs)."""
    N, H, W, C = x.shape
    up = jnp.concatenate([x[:, :1], x[:, :-1]], axis=1)       # row i-1, clamped
    dn = jnp.concatenate([x[:, 1:], x[:, -1:]], axis=1)       # row i+1, clamped
    r_even = 0.25 * up + 0.75 * x
    r_odd = 0.75 * x + 0.25 * dn
    rows = jnp.stack([r_even, r_odd], axis=2).reshape(N, 2 * H, W, C)
    lf = jnp.concatenate([rows[:, :, :1], rows[:, :, :-1]], axis=2)
    rt = jnp.concatenate([rows[:, :, 1:], rows[:, :, -1:]], axis=2)
    c_even = 0.25 * lf + 0.75 * rows
    c_odd = 0.75 * rows + 0.25 * rt
    return jnp.stack([c_even, c_odd], axis=3).reshape(N, 2 * H, 2 * W, C)


def _pack_conv_weight(taps, cin, cin_p, cout_p):
    """Pack [(w(3,3,cin,cout), col_offset), ...] into one (9, cin_p, cout_p)
    bf16 tap-major weight (fused branches land on lane-aligned column slabs)."""
    w = jnp.zeros((9, cin_p, cout_p), jnp.float32)
    for wt, off in taps:
        cout = wt.shape[-1]
        w = w.at[:, :cin, off:off + cout].set(wt.reshape(9, cin, cout))
    return w.astype(jnp.bfloat16)


def _pack_gate_params(gw, gb, gamma, beta, c, c_p):
    wa = jnp.zeros((c_p, c_p), jnp.float32).at[:c, :c].set(gw[:c])
    wb = jnp.zeros((c_p, c_p), jnp.float32).at[:c, :c].set(gw[c:])
    return (wa.astype(jnp.bfloat16), wb.astype(jnp.bfloat16),
            _pad_last(gb, c_p), _pad_last(gamma, c_p), _pad_last(beta, c_p))


# ---------------------------- OctaveConv forward ------------------------------

@functools.partial(jax.jit, static_argnames=("stride",))
def octave_conv_forward(X_h_nchw, X_l_nchw, params, stride=1):
    X_h = jnp.transpose(X_h_nchw, (0, 2, 3, 1))            # NCHW -> NHWC
    X_l = jnp.transpose(X_l_nchw, (0, 2, 3, 1))
    if stride == 2:
        X_h = avg_pool_2x2(X_h)
        X_l = avg_pool_2x2(X_l)

    N, Hh, Wh, in_h = X_h.shape
    _, Hl, Wl, in_l = X_l.shape
    out_h = params["w_h2h"].shape[-1]
    out_l = params["w_l2l"].shape[-1]
    cin_h_p, cin_l_p = _cpad(in_h), _cpad(in_l)
    ch_p, cl_p = _cpad(out_h), _cpad(out_l)

    # Lane-pad activations (padded channels stay zero end-to-end).
    X_h_p = _pad_last(X_h, cin_h_p)
    X_l_p = _pad_last(X_l, cin_l_p)
    X_h2l_in = avg_pool_2x2(X_h_p)                          # h2g_pool(X_h)

    # Pack conv weights: l2h + l2l share the X_l read -> fuse along Cout so the
    # whole low branch is a single wider, lane-dense matmul.
    w_h2h = _pack_conv_weight([(params["w_h2h"], 0)], in_h, cin_h_p, ch_p)
    w_h2l = _pack_conv_weight([(params["w_h2l"], 0)], in_h, cin_h_p, cl_p)
    w_low = _pack_conv_weight([(params["w_l2h"], 0), (params["w_l2l"], ch_p)],
                              in_l, cin_l_p, ch_p + cl_p)

    # Pallas 3x3 convs (outputs spatially flattened: (N, H*W, C_pad) f32).
    X_h2h = conv3x3_pallas(X_h_p, w_h2h)                    # (N, Hh*Wh, ch_p)
    X_h2l = conv3x3_pallas(X_h2l_in, w_h2l)                 # (N, Hl*Wl, cl_p)
    low = conv3x3_pallas(X_l_p, w_low)                      # (N, Hl*Wl, ch_p+cl_p)
    X_l2h = low[..., :ch_p]                                 # lane-aligned split
    X_l2l = low[..., ch_p:]

    # x2 bilinear upsample of X_l2h to the high-branch resolution.
    X_l2h_up = upsample_x2_bilinear(X_l2h.reshape(N, Hl, Wl, ch_p))
    X_l2h_up = X_l2h_up.reshape(N, Hh * Wh, ch_p)

    # Fused gate conv -> sigmoid -> gated mix -> GroupNorm(1) -> ReLU.
    gp_h = _pack_gate_params(params["gw_h"], params["gb_h"],
                             params["gamma_h"], params["beta_h"], out_h, ch_p)
    gp_l = _pack_gate_params(params["gw_l"], params["gb_l"],
                             params["gamma_l"], params["beta_l"], out_l, cl_p)
    Y_h = gate_gn_relu_pallas(X_l2h_up, X_h2h, *gp_h, c_real=out_h)
    Y_l = gate_gn_relu_pallas(X_h2l, X_l2l, *gp_l, c_real=out_l)

    # Strip channel padding, restore NCHW.
    Y_h = Y_h[..., :out_h].reshape(N, Hh, Wh, out_h)
    Y_l = Y_l[..., :out_l].reshape(N, Hl, Wl, out_l)
    return (jnp.transpose(Y_h, (0, 3, 1, 2)),
            jnp.transpose(Y_l, (0, 3, 1, 2)))


# --------------------------- pure-XLA reference --------------------------------

def _bilinear_resize_ref(x, out_h, out_w):
    """Gather-based NHWC bilinear resize, align_corners=False (reference only)."""
    N, h, w, C = x.shape

    def coords(out_size, in_size):
        src = (jnp.arange(out_size, dtype=jnp.float32) + 0.5) * (
            in_size / out_size) - 0.5
        src = jnp.clip(src, 0.0, in_size - 1)
        i0 = jnp.floor(src).astype(jnp.int32)
        i1 = jnp.minimum(i0 + 1, in_size - 1)
        return i0, i1, src - i0.astype(jnp.float32)

    y0, y1, fy = coords(out_h, h)
    x0, x1, fx = coords(out_w, w)
    rows = (x[:, y0] * (1.0 - fy)[None, :, None, None]
            + x[:, y1] * fy[None, :, None, None])
    return (rows[:, :, x0] * (1.0 - fx)[None, None, :, None]
            + rows[:, :, x1] * fx[None, None, :, None])


@functools.partial(jax.jit, static_argnames=("stride",))
def _reference_forward(X_h_nchw, X_l_nchw, params, stride=1):
    X_h = jnp.transpose(X_h_nchw, (0, 2, 3, 1))
    X_l = jnp.transpose(X_l_nchw, (0, 2, 3, 1))
    if stride == 2:
        X_h, X_l = avg_pool_2x2(X_h), avg_pool_2x2(X_l)
    conv = lambda x, w: jax.lax.conv_general_dilated(
        x, w, (1, 1), "SAME", dimension_numbers=("NHWC", "HWIO", "NHWC"))
    X_h2h = conv(X_h, params["w_h2h"])
    X_l2h = conv(X_l, params["w_l2h"])
    X_l2l = conv(X_l, params["w_l2l"])
    X_h2l = conv(avg_pool_2x2(X_h), params["w_h2l"])
    X_l2h = _bilinear_resize_ref(X_l2h, X_h2h.shape[1], X_h2h.shape[2])

    def gate_gn_relu(a, b, gw, gb, gamma, beta):
        z = jnp.einsum("nhwc,cd->nhwd", jnp.concatenate([a, b], -1), gw) + gb
        g = jax.nn.sigmoid(z)
        m = g * a + (1.0 - g) * b
        mean = m.mean(axis=(1, 2, 3), keepdims=True)
        var = ((m - mean) ** 2).mean(axis=(1, 2, 3), keepdims=True)
        out = (m - mean) * jax.lax.rsqrt(var + 1e-5) * gamma + beta
        return jnp.maximum(out, 0.0)

    Yh = gate_gn_relu(X_l2h, X_h2h, params["gw_h"], params["gb_h"],
                      params["gamma_h"], params["beta_h"])
    Yl = gate_gn_relu(X_h2l, X_l2l, params["gw_l"], params["gb_l"],
                      params["gamma_l"], params["beta_l"])
    return (jnp.transpose(Yh, (0, 3, 1, 2)), jnp.transpose(Yl, (0, 3, 1, 2)))


# ----------------------------------- main --------------------------------------

if __name__ == "__main__":
    key = jax.random.PRNGKey(0)
    k = jax.random.split(key, 10)

    in_channels, out_channels, alpha = 4, 4, 0.5
    N, H, W = 2, 16, 16
    in_l = int(alpha * in_channels)
    in_h = in_channels - in_l
    out_l = int(alpha * out_channels)
    out_h = out_channels - out_l

    params = dict(
        # 3x3 octave conv weights, layout (ky, kx, Cin, Cout), bias=False
        w_h2h=0.1 * jax.random.normal(k[0], (3, 3, in_h, out_h), jnp.float32),
        w_l2h=0.1 * jax.random.normal(k[1], (3, 3, in_l, out_h), jnp.float32),
        w_l2l=0.1 * jax.random.normal(k[2], (3, 3, in_l, out_l), jnp.float32),
        w_h2l=0.1 * jax.random.normal(k[3], (3, 3, in_h, out_l), jnp.float32),
        # 1x1 gate convs (with bias), layout (2*C_in, C_out)
        gw_h=0.1 * jax.random.normal(k[4], (2 * out_h, out_h), jnp.float32),
        gb_h=0.1 * jax.random.normal(k[5], (1, out_h), jnp.float32),
        gw_l=0.1 * jax.random.normal(k[6], (2 * out_l, out_l), jnp.float32),
        gb_l=0.1 * jax.random.normal(k[7], (1, out_l), jnp.float32),
        # GroupNorm(num_groups=1) affine params (PyTorch init: ones / zeros)
        gamma_h=jnp.ones((1, out_h), jnp.float32),
        beta_h=jnp.zeros((1, out_h), jnp.float32),
        gamma_l=jnp.ones((1, out_l), jnp.float32),
        beta_l=jnp.zeros((1, out_l), jnp.float32),
    )

    # PyTorch convention: x = (X_h, X_l), NCHW, low branch at half resolution.
    X_h_in = jax.random.normal(k[8], (N, in_h, H, W), jnp.float32)
    X_l_in = jax.random.normal(k[9], (N, in_l, H // 2, W // 2), jnp.float32)

    Y_h, Y_l = octave_conv_forward(X_h_in, X_l_in, params, stride=1)
    jax.block_until_ready((Y_h, Y_l))

    assert Y_h.shape == (N, out_h, H, W), Y_h.shape
    assert Y_l.shape == (N, out_l, H // 2, W // 2), Y_l.shape
    assert bool(jnp.all(Y_h >= 0)) and bool(jnp.all(Y_l >= 0))  # ReLU outputs

    # Validate against a pure-XLA reference (bf16 MXU operands + approx
    # reciprocal sigmoid in the kernel -> loose tolerance).
    R_h, R_l = _reference_forward(X_h_in, X_l_in, params, stride=1)
    err_h = float(jnp.max(jnp.abs(Y_h - R_h)))
    err_l = float(jnp.max(jnp.abs(Y_l - R_l)))
    assert err_h < 5e-2 and err_l < 5e-2, (err_h, err_l)

    print("KERNEL_OK")
</pallas_src>

<mosaic_0001>
module attributes {stable_mosaic.version = 11 : i64} {
  func.func @_conv3x3_kernel(%arg0: i32, %arg1: memref<1x10x10x128xf32, #tpu.memory_space<vmem>>, %arg2: memref<9x128x256xbf16, #tpu.memory_space<vmem>>, %arg3: memref<1x64x256xf32, #tpu.memory_space<vmem>>) attributes {dimension_semantics = [#tpu.dimension_semantics<parallel>], iteration_bounds = array<i64: 2>, scalar_prefetch = 0 : i64, scratch_operands = 0 : i64, tpu.core_type = #tpu.core_type<tc>, window_params = [{transform_indices = @transform_0, window_bounds = array<i64: 1, 10, 10, 128>}, {pipeline_mode = #tpu.pipeline_mode<synchronous>, transform_indices = @transform_1, window_bounds = array<i64: 9, 128, 256>}, {transform_indices = @transform_2, window_bounds = array<i64: 1, 64, 256>}]} {
    %c0 = arith.constant 0 : index
    %c0_0 = arith.constant 0 : index
    %c0_1 = arith.constant 0 : index
    %c0_2 = arith.constant 0 : index
    %0 = vector.load %arg1[%c0, %c0_0, %c0_1, %c0_2] : memref<1x10x10x128xf32, #tpu.memory_space<vmem>>, vector<1x10x10x128xf32>
    %1 = vector.shape_cast %0 : vector<1x10x10x128xf32> to vector<10x10x128xf32>
    %cst = arith.constant 0.000000e+00 : f32
    %2 = vector.broadcast %cst : f32 to vector<64x256xf32>
    %3 = vector.extract_strided_slice %1 {offsets = [0, 0, 0], sizes = [8, 8, 128], strides = [1, 1, 1]} : vector<10x10x128xf32> to vector<8x8x128xf32>
    %4 = vector.shape_cast %3 : vector<8x8x128xf32> to vector<64x128xf32>
    %5 = arith.truncf %4 : vector<64x128xf32> to vector<64x128xbf16>
    %c0_3 = arith.constant 0 : index
    %c0_4 = arith.constant 0 : index
    %c0_5 = arith.constant 0 : index
    %6 = vector.load %arg2[%c0_3, %c0_4, %c0_5] : memref<9x128x256xbf16, #tpu.memory_space<vmem>>, vector<1x128x256xbf16>
    %7 = vector.shape_cast %6 : vector<1x128x256xbf16> to vector<128x256xbf16>
    %cst_6 = arith.constant dense<0.000000e+00> : vector<64x256xf32>
    %8 = tpu.matmul %5, %7, %cst_6 {dimension_numbers = #tpu.dot_dimension_numbers<[1], [0], [0], [1], [0, 0, 1, 1], [], []>} : vector<64x128xbf16>, vector<128x256xbf16>, vector<64x256xf32> -> vector<64x256xf32>
    %9 = arith.addf %2, %8 : vector<64x256xf32>
    %10 = vector.extract_strided_slice %1 {offsets = [0, 1, 0], sizes = [8, 8, 128], strides = [1, 1, 1]} : vector<10x10x128xf32> to vector<8x8x128xf32>
    %11 = vector.shape_cast %10 : vector<8x8x128xf32> to vector<64x128xf32>
    %12 = arith.truncf %11 : vector<64x128xf32> to vector<64x128xbf16>
    %c1 = arith.constant 1 : index
    %c0_7 = arith.constant 0 : index
    %c0_8 = arith.constant 0 : index
    %13 = vector.load %arg2[%c1, %c0_7, %c0_8] : memref<9x128x256xbf16, #tpu.memory_space<vmem>>, vector<1x128x256xbf16>
    %14 = vector.shape_cast %13 : vector<1x128x256xbf16> to vector<128x256xbf16>
    %cst_9 = arith.constant dense<0.000000e+00> : vector<64x256xf32>
    %15 = tpu.matmul %12, %14, %cst_9 {dimension_numbers = #tpu.dot_dimension_numbers<[1], [0], [0], [1], [0, 0, 1, 1], [], []>} : vector<64x128xbf16>, vector<128x256xbf16>, vector<64x256xf32> -> vector<64x256xf32>
    %16 = arith.addf %9, %15 : vector<64x256xf32>
    %17 = vector.extract_strided_slice %1 {offsets = [0, 2, 0], sizes = [8, 8, 128], strides = [1, 1, 1]} : vector<10x10x128xf32> to vector<8x8x128xf32>
    %18 = vector.shape_cast %17 : vector<8x8x128xf32> to vector<64x128xf32>
    %19 = arith.truncf %18 : vector<64x128xf32> to vector<64x128xbf16>
    %c2 = arith.constant 2 : index
    %c0_10 = arith.constant 0 : index
    %c0_11 = arith.constant 0 : index
    %20 = vector.load %arg2[%c2, %c0_10, %c0_11] : memref<9x128x256xbf16, #tpu.memory_space<vmem>>, vector<1x128x256xbf16>
    %21 = vector.shape_cast %20 : vector<1x128x256xbf16> to vector<128x256xbf16>
    %cst_12 = arith.constant dense<0.000000e+00> : vector<64x256xf32>
    %22 = tpu.matmul %19, %21, %cst_12 {dimension_numbers = #tpu.dot_dimension_numbers<[1], [0], [0], [1], [0, 0, 1, 1], [], []>} : vector<64x128xbf16>, vector<128x256xbf16>, vector<64x256xf32> -> vector<64x256xf32>
    %23 = arith.addf %16, %22 : vector<64x256xf32>
    %24 = vector.extract_strided_slice %1 {offsets = [1, 0, 0], sizes = [8, 8, 128], strides = [1, 1, 1]} : vector<10x10x128xf32> to vector<8x8x128xf32>
    %25 = vector.shape_cast %24 : vector<8x8x128xf32> to vector<64x128xf32>
    %26 = arith.truncf %25 : vector<64x128xf32> to vector<64x128xbf16>
    %c3 = arith.constant 3 : index
    %c0_13 = arith.constant 0 : index
    %c0_14 = arith.constant 0 : index
    %27 = vector.load %arg2[%c3, %c0_13, %c0_14] : memref<9x128x256xbf16, #tpu.memory_space<vmem>>, vector<1x128x256xbf16>
    %28 = vector.shape_cast %27 : vector<1x128x256xbf16> to vector<128x256xbf16>
    %cst_15 = arith.constant dense<0.000000e+00> : vector<64x256xf32>
    %29 = tpu.matmul %26, %28, %cst_15 {dimension_numbers = #tpu.dot_dimension_numbers<[1], [0], [0], [1], [0, 0, 1, 1], [], []>} : vector<64x128xbf16>, vector<128x256xbf16>, vector<64x256xf32> -> vector<64x256xf32>
    %30 = arith.addf %23, %29 : vector<64x256xf32>
    %31 = vector.extract_strided_slice %1 {offsets = [1, 1, 0], sizes = [8, 8, 128], strides = [1, 1, 1]} : vector<10x10x128xf32> to vector<8x8x128xf32>
    %32 = vector.shape_cast %31 : vector<8x8x128xf32> to vector<64x128xf32>
    %33 = arith.truncf %32 : vector<64x128xf32> to vector<64x128xbf16>
    %c4 = arith.constant 4 : index
    %c0_16 = arith.constant 0 : index
    %c0_17 = arith.constant 0 : index
    %34 = vector.load %arg2[%c4, %c0_16, %c0_17] : memref<9x128x256xbf16, #tpu.memory_space<vmem>>, vector<1x128x256xbf16>
    %35 = vector.shape_cast %34 : vector<1x128x256xbf16> to vector<128x256xbf16>
    %cst_18 = arith.constant dense<0.000000e+00> : vector<64x256xf32>
    %36 = tpu.matmul %33, %35, %cst_18 {dimension_numbers = #tpu.dot_dimension_numbers<[1], [0], [0], [1], [0, 0, 1, 1], [], []>} : vector<64x128xbf16>, vector<128x256xbf16>, vector<64x256xf32> -> vector<64x256xf32>
    %37 = arith.addf %30, %36 : vector<64x256xf32>
    %38 = vector.extract_strided_slice %1 {offsets = [1, 2, 0], sizes = [8, 8, 128], strides = [1, 1, 1]} : vector<10x10x128xf32> to vector<8x8x128xf32>
    %39 = vector.shape_cast %38 : vector<8x8x128xf32> to vector<64x128xf32>
    %40 = arith.truncf %39 : vector<64x128xf32> to vector<64x128xbf16>
    %c5 = arith.constant 5 : index
    %c0_19 = arith.constant 0 : index
    %c0_20 = arith.constant 0 : index
    %41 = vector.load %arg2[%c5, %c0_19, %c0_20] : memref<9x128x256xbf16, #tpu.memory_space<vmem>>, vector<1x128x256xbf16>
    %42 = vector.shape_cast %41 : vector<1x128x256xbf16> to vector<128x256xbf16>
    %cst_21 = arith.constant dense<0.000000e+00> : vector<64x256xf32>
    %43 = tpu.matmul %40, %42, %cst_21 {dimension_numbers = #tpu.dot_dimension_numbers<[1], [0], [0], [1], [0, 0, 1, 1], [], []>} : vector<64x128xbf16>, vector<128x256xbf16>, vector<64x256xf32> -> vector<64x256xf32>
    %44 = arith.addf %37, %43 : vector<64x256xf32>
    %45 = vector.extract_strided_slice %1 {offsets = [2, 0, 0], sizes = [8, 8, 128], strides = [1, 1, 1]} : vector<10x10x128xf32> to vector<8x8x128xf32>
    %46 = vector.shape_cast %45 : vector<8x8x128xf32> to vector<64x128xf32>
    %47 = arith.truncf %46 : vector<64x128xf32> to vector<64x128xbf16>
    %c6 = arith.constant 6 : index
    %c0_22 = arith.constant 0 : index
    %c0_23 = arith.constant 0 : index
    %48 = vector.load %arg2[%c6, %c0_22, %c0_23] : memref<9x128x256xbf16, #tpu.memory_space<vmem>>, vector<1x128x256xbf16>
    %49 = vector.shape_cast %48 : vector<1x128x256xbf16> to vector<128x256xbf16>
    %cst_24 = arith.constant dense<0.000000e+00> : vector<64x256xf32>
    %50 = tpu.matmul %47, %49, %cst_24 {dimension_numbers = #tpu.dot_dimension_numbers<[1], [0], [0], [1], [0, 0, 1, 1], [], []>} : vector<64x128xbf16>, vector<128x256xbf16>, vector<64x256xf32> -> vector<64x256xf32>
    %51 = arith.addf %44, %50 : vector<64x256xf32>
    %52 = vector.extract_strided_slice %1 {offsets = [2, 1, 0], sizes = [8, 8, 128], strides = [1, 1, 1]} : vector<10x10x128xf32> to vector<8x8x128xf32>
    %53 = vector.shape_cast %52 : vector<8x8x128xf32> to vector<64x128xf32>
    %54 = arith.truncf %53 : vector<64x128xf32> to vector<64x128xbf16>
    %c7 = arith.constant 7 : index
    %c0_25 = arith.constant 0 : index
    %c0_26 = arith.constant 0 : index
    %55 = vector.load %arg2[%c7, %c0_25, %c0_26] : memref<9x128x256xbf16, #tpu.memory_space<vmem>>, vector<1x128x256xbf16>
    %56 = vector.shape_cast %55 : vector<1x128x256xbf16> to vector<128x256xbf16>
    %cst_27 = arith.constant dense<0.000000e+00> : vector<64x256xf32>
    %57 = tpu.matmul %54, %56, %cst_27 {dimension_numbers = #tpu.dot_dimension_numbers<[1], [0], [0], [1], [0, 0, 1, 1], [], []>} : vector<64x128xbf16>, vector<128x256xbf16>, vector<64x256xf32> -> vector<64x256xf32>
    %58 = arith.addf %51, %57 : vector<64x256xf32>
    %59 = vector.extract_strided_slice %1 {offsets = [2, 2, 0], sizes = [8, 8, 128], strides = [1, 1, 1]} : vector<10x10x128xf32> to vector<8x8x128xf32>
    %60 = vector.shape_cast %59 : vector<8x8x128xf32> to vector<64x128xf32>
    %61 = arith.truncf %60 : vector<64x128xf32> to vector<64x128xbf16>
    %c8 = arith.constant 8 : index
    %c0_28 = arith.constant 0 : index
    %c0_29 = arith.constant 0 : index
    %62 = vector.load %arg2[%c8, %c0_28, %c0_29] : memref<9x128x256xbf16, #tpu.memory_space<vmem>>, vector<1x128x256xbf16>
    %63 = vector.shape_cast %62 : vector<1x128x256xbf16> to vector<128x256xbf16>
    %cst_30 = arith.constant dense<0.000000e+00> : vector<64x256xf32>
    %64 = tpu.matmul %61, %63, %cst_30 {dimension_numbers = #tpu.dot_dimension_numbers<[1], [0], [0], [1], [0, 0, 1, 1], [], []>} : vector<64x128xbf16>, vector<128x256xbf16>, vector<64x256xf32> -> vector<64x256xf32>
    %65 = arith.addf %58, %64 : vector<64x256xf32>
    %c0_31 = arith.constant 0 : index
    %c0_32 = arith.constant 0 : index
    %c0_33 = arith.constant 0 : index
    %66 = vector.load %arg3[%c0_31, %c0_32, %c0_33] : memref<1x64x256xf32, #tpu.memory_space<vmem>>, vector<1x64x256xf32>
    %67 = vector.shape_cast %66 : vector<1x64x256xf32> to vector<64x256xf32>
    %68 = vector.shape_cast %65 : vector<64x256xf32> to vector<1x64x256xf32>
    tpu.vector_store %arg3[%c0_31, %c0_32, %c0_33], %68 {strides = array<i32>} : memref<1x64x256xf32, #tpu.memory_space<vmem>>, vector<1x64x256xf32>,
    return
  }
  func.func @transform_0(%arg0: i32) -> (i32, i32, i32, i32) {
    %c0_i32 = arith.constant 0 : i32
    %c0_i32_0 = arith.constant 0 : i32
    %c0_i32_1 = arith.constant 0 : i32
    %c0_i32_2 = arith.constant 0 : i32
    return %arg0, %c0_i32, %c0_i32_0, %c0_i32_1 : i32, i32, i32, i32
  }
  func.func @transform_1(%arg0: i32) -> (i32, i32, i32) {
    %c0_i32 = arith.constant 0 : i32
    %c0_i32_0 = arith.constant 0 : i32
    %c0_i32_1 = arith.constant 0 : i32
    %c0_i32_2 = arith.constant 0 : i32
    return %c0_i32, %c0_i32_0, %c0_i32_1 : i32, i32, i32
  }
  func.func @transform_2(%arg0: i32) -> (i32, i32, i32) {
    %c0_i32 = arith.constant 0 : i32
    %c0_i32_0 = arith.constant 0 : i32
    %c0_i32_1 = arith.constant 0 : i32
    return %arg0, %c0_i32, %c0_i32_0 : i32, i32, i32
  }
}

module attributes {stable_mosaic.version = 11 : i64} {
  func.func @_conv3x3_kernel(%arg0: i32, %arg1: memref<1x18x18x128xf32, #tpu.memory_space<vmem>>, %arg2: memref<9x128x128xbf16, #tpu.memory_space<vmem>>, %arg3: memref<1x256x128xf32, #tpu.memory_space<vmem>>) attributes {dimension_semantics = [#tpu.dimension_semantics<parallel>], iteration_bounds = array<i64: 2>, scalar_prefetch = 0 : i64, scratch_operands = 0 : i64, tpu.core_type = #tpu.core_type<tc>, window_params = [{transform_indices = @transform_0, window_bounds = array<i64: 1, 18, 18, 128>}, {pipeline_mode = #tpu.pipeline_mode<synchronous>, transform_indices = @transform_1, window_bounds = array<i64: 9, 128, 128>}, {transform_indices = @transform_2, window_bounds = array<i64: 1, 256, 128>}]} {
    %c0 = arith.constant 0 : index
    %c0_0 = arith.constant 0 : index
    %c0_1 = arith.constant 0 : index
    %c0_2 = arith.constant 0 : index
    %0 = vector.load %arg1[%c0, %c0_0, %c0_1, %c0_2] : memref<1x18x18x128xf32, #tpu.memory_space<vmem>>, vector<1x18x18x128xf32>
    %1 = vector.shape_cast %0 : vector<1x18x18x128xf32> to vector<18x18x128xf32>
    %cst = arith.constant 0.000000e+00 : f32
    %2 = vector.broadcast %cst : f32 to vector<256x128xf32>
    %3 = vector.extract_strided_slice %1 {offsets = [0, 0, 0], sizes = [16, 16, 128], strides = [1, 1, 1]} : vector<18x18x128xf32> to vector<16x16x128xf32>
    %4 = vector.shape_cast %3 : vector<16x16x128xf32> to vector<256x128xf32>
    %5 = arith.truncf %4 : vector<256x128xf32> to vector<256x128xbf16>
    %c0_3 = arith.constant 0 : index
    %c0_4 = arith.constant 0 : index
    %c0_5 = arith.constant 0 : index
    %6 = vector.load %arg2[%c0_3, %c0_4, %c0_5] : memref<9x128x128xbf16, #tpu.memory_space<vmem>>, vector<1x128x128xbf16>
    %7 = vector.shape_cast %6 : vector<1x128x128xbf16> to vector<128x128xbf16>
    %cst_6 = arith.constant dense<0.000000e+00> : vector<256x128xf32>
    %8 = tpu.matmul %5, %7, %cst_6 {dimension_numbers = #tpu.dot_dimension_numbers<[1], [0], [0], [1], [0, 0, 1, 1], [], []>} : vector<256x128xbf16>, vector<128x128xbf16>, vector<256x128xf32> -> vector<256x128xf32>
    %9 = arith.addf %2, %8 : vector<256x128xf32>
    %10 = vector.extract_strided_slice %1 {offsets = [0, 1, 0], sizes = [16, 16, 128], strides = [1, 1, 1]} : vector<18x18x128xf32> to vector<16x16x128xf32>
    %11 = vector.shape_cast %10 : vector<16x16x128xf32> to vector<256x128xf32>
    %12 = arith.truncf %11 : vector<256x128xf32> to vector<256x128xbf16>
    %c1 = arith.constant 1 : index
    %c0_7 = arith.constant 0 : index
    %c0_8 = arith.constant 0 : index
    %13 = vector.load %arg2[%c1, %c0_7, %c0_8] : memref<9x128x128xbf16, #tpu.memory_space<vmem>>, vector<1x128x128xbf16>
    %14 = vector.shape_cast %13 : vector<1x128x128xbf16> to vector<128x128xbf16>
    %cst_9 = arith.constant dense<0.000000e+00> : vector<256x128xf32>
    %15 = tpu.matmul %12, %14, %cst_9 {dimension_numbers = #tpu.dot_dimension_numbers<[1], [0], [0], [1], [0, 0, 1, 1], [], []>} : vector<256x128xbf16>, vector<128x128xbf16>, vector<256x128xf32> -> vector<256x128xf32>
    %16 = arith.addf %9, %15 : vector<256x128xf32>
    %17 = vector.extract_strided_slice %1 {offsets = [0, 2, 0], sizes = [16, 16, 128], strides = [1, 1, 1]} : vector<18x18x128xf32> to vector<16x16x128xf32>
    %18 = vector.shape_cast %17 : vector<16x16x128xf32> to vector<256x128xf32>
    %19 = arith.truncf %18 : vector<256x128xf32> to vector<256x128xbf16>
    %c2 = arith.constant 2 : index
    %c0_10 = arith.constant 0 : index
    %c0_11 = arith.constant 0 : index
    %20 = vector.load %arg2[%c2, %c0_10, %c0_11] : memref<9x128x128xbf16, #tpu.memory_space<vmem>>, vector<1x128x128xbf16>
    %21 = vector.shape_cast %20 : vector<1x128x128xbf16> to vector<128x128xbf16>
    %cst_12 = arith.constant dense<0.000000e+00> : vector<256x128xf32>
    %22 = tpu.matmul %19, %21, %cst_12 {dimension_numbers = #tpu.dot_dimension_numbers<[1], [0], [0], [1], [0, 0, 1, 1], [], []>} : vector<256x128xbf16>, vector<128x128xbf16>, vector<256x128xf32> -> vector<256x128xf32>
    %23 = arith.addf %16, %22 : vector<256x128xf32>
    %24 = vector.extract_strided_slice %1 {offsets = [1, 0, 0], sizes = [16, 16, 128], strides = [1, 1, 1]} : vector<18x18x128xf32> to vector<16x16x128xf32>
    %25 = vector.shape_cast %24 : vector<16x16x128xf32> to vector<256x128xf32>
    %26 = arith.truncf %25 : vector<256x128xf32> to vector<256x128xbf16>
    %c3 = arith.constant 3 : index
    %c0_13 = arith.constant 0 : index
    %c0_14 = arith.constant 0 : index
    %27 = vector.load %arg2[%c3, %c0_13, %c0_14] : memref<9x128x128xbf16, #tpu.memory_space<vmem>>, vector<1x128x128xbf16>
    %28 = vector.shape_cast %27 : vector<1x128x128xbf16> to vector<128x128xbf16>
    %cst_15 = arith.constant dense<0.000000e+00> : vector<256x128xf32>
    %29 = tpu.matmul %26, %28, %cst_15 {dimension_numbers = #tpu.dot_dimension_numbers<[1], [0], [0], [1], [0, 0, 1, 1], [], []>} : vector<256x128xbf16>, vector<128x128xbf16>, vector<256x128xf32> -> vector<256x128xf32>
    %30 = arith.addf %23, %29 : vector<256x128xf32>
    %31 = vector.extract_strided_slice %1 {offsets = [1, 1, 0], sizes = [16, 16, 128], strides = [1, 1, 1]} : vector<18x18x128xf32> to vector<16x16x128xf32>
    %32 = vector.shape_cast %31 : vector<16x16x128xf32> to vector<256x128xf32>
    %33 = arith.truncf %32 : vector<256x128xf32> to vector<256x128xbf16>
    %c4 = arith.constant 4 : index
    %c0_16 = arith.constant 0 : index
    %c0_17 = arith.constant 0 : index
    %34 = vector.load %arg2[%c4, %c0_16, %c0_17] : memref<9x128x128xbf16, #tpu.memory_space<vmem>>, vector<1x128x128xbf16>
    %35 = vector.shape_cast %34 : vector<1x128x128xbf16> to vector<128x128xbf16>
    %cst_18 = arith.constant dense<0.000000e+00> : vector<256x128xf32>
    %36 = tpu.matmul %33, %35, %cst_18 {dimension_numbers = #tpu.dot_dimension_numbers<[1], [0], [0], [1], [0, 0, 1, 1], [], []>} : vector<256x128xbf16>, vector<128x128xbf16>, vector<256x128xf32> -> vector<256x128xf32>
    %37 = arith.addf %30, %36 : vector<256x128xf32>
    %38 = vector.extract_strided_slice %1 {offsets = [1, 2, 0], sizes = [16, 16, 128], strides = [1, 1, 1]} : vector<18x18x128xf32> to vector<16x16x128xf32>
    %39 = vector.shape_cast %38 : vector<16x16x128xf32> to vector<256x128xf32>
    %40 = arith.truncf %39 : vector<256x128xf32> to vector<256x128xbf16>
    %c5 = arith.constant 5 : index
    %c0_19 = arith.constant 0 : index
    %c0_20 = arith.constant 0 : index
    %41 = vector.load %arg2[%c5, %c0_19, %c0_20] : memref<9x128x128xbf16, #tpu.memory_space<vmem>>, vector<1x128x128xbf16>
    %42 = vector.shape_cast %41 : vector<1x128x128xbf16> to vector<128x128xbf16>
    %cst_21 = arith.constant dense<0.000000e+00> : vector<256x128xf32>
    %43 = tpu.matmul %40, %42, %cst_21 {dimension_numbers = #tpu.dot_dimension_numbers<[1], [0], [0], [1], [0, 0, 1, 1], [], []>} : vector<256x128xbf16>, vector<128x128xbf16>, vector<256x128xf32> -> vector<256x128xf32>
    %44 = arith.addf %37, %43 : vector<256x128xf32>
    %45 = vector.extract_strided_slice %1 {offsets = [2, 0, 0], sizes = [16, 16, 128], strides = [1, 1, 1]} : vector<18x18x128xf32> to vector<16x16x128xf32>
    %46 = vector.shape_cast %45 : vector<16x16x128xf32> to vector<256x128xf32>
    %47 = arith.truncf %46 : vector<256x128xf32> to vector<256x128xbf16>
    %c6 = arith.constant 6 : index
    %c0_22 = arith.constant 0 : index
    %c0_23 = arith.constant 0 : index
    %48 = vector.load %arg2[%c6, %c0_22, %c0_23] : memref<9x128x128xbf16, #tpu.memory_space<vmem>>, vector<1x128x128xbf16>
    %49 = vector.shape_cast %48 : vector<1x128x128xbf16> to vector<128x128xbf16>
    %cst_24 = arith.constant dense<0.000000e+00> : vector<256x128xf32>
    %50 = tpu.matmul %47, %49, %cst_24 {dimension_numbers = #tpu.dot_dimension_numbers<[1], [0], [0], [1], [0, 0, 1, 1], [], []>} : vector<256x128xbf16>, vector<128x128xbf16>, vector<256x128xf32> -> vector<256x128xf32>
    %51 = arith.addf %44, %50 : vector<256x128xf32>
    %52 = vector.extract_strided_slice %1 {offsets = [2, 1, 0], sizes = [16, 16, 128], strides = [1, 1, 1]} : vector<18x18x128xf32> to vector<16x16x128xf32>
    %53 = vector.shape_cast %52 : vector<16x16x128xf32> to vector<256x128xf32>
    %54 = arith.truncf %53 : vector<256x128xf32> to vector<256x128xbf16>
    %c7 = arith.constant 7 : index
    %c0_25 = arith.constant 0 : index
    %c0_26 = arith.constant 0 : index
    %55 = vector.load %arg2[%c7, %c0_25, %c0_26] : memref<9x128x128xbf16, #tpu.memory_space<vmem>>, vector<1x128x128xbf16>
    %56 = vector.shape_cast %55 : vector<1x128x128xbf16> to vector<128x128xbf16>
    %cst_27 = arith.constant dense<0.000000e+00> : vector<256x128xf32>
    %57 = tpu.matmul %54, %56, %cst_27 {dimension_numbers = #tpu.dot_dimension_numbers<[1], [0], [0], [1], [0, 0, 1, 1], [], []>} : vector<256x128xbf16>, vector<128x128xbf16>, vector<256x128xf32> -> vector<256x128xf32>
    %58 = arith.addf %51, %57 : vector<256x128xf32>
    %59 = vector.extract_strided_slice %1 {offsets = [2, 2, 0], sizes = [16, 16, 128], strides = [1, 1, 1]} : vector<18x18x128xf32> to vector<16x16x128xf32>
    %60 = vector.shape_cast %59 : vector<16x16x128xf32> to vector<256x128xf32>
    %61 = arith.truncf %60 : vector<256x128xf32> to vector<256x128xbf16>
    %c8 = arith.constant 8 : index
    %c0_28 = arith.constant 0 : index
    %c0_29 = arith.constant 0 : index
    %62 = vector.load %arg2[%c8, %c0_28, %c0_29] : memref<9x128x128xbf16, #tpu.memory_space<vmem>>, vector<1x128x128xbf16>
    %63 = vector.shape_cast %62 : vector<1x128x128xbf16> to vector<128x128xbf16>
    %cst_30 = arith.constant dense<0.000000e+00> : vector<256x128xf32>
    %64 = tpu.matmul %61, %63, %cst_30 {dimension_numbers = #tpu.dot_dimension_numbers<[1], [0], [0], [1], [0, 0, 1, 1], [], []>} : vector<256x128xbf16>, vector<128x128xbf16>, vector<256x128xf32> -> vector<256x128xf32>
    %65 = arith.addf %58, %64 : vector<256x128xf32>
    %c0_31 = arith.constant 0 : index
    %c0_32 = arith.constant 0 : index
    %c0_33 = arith.constant 0 : index
    %66 = vector.load %arg3[%c0_31, %c0_32, %c0_33] : memref<1x256x128xf32, #tpu.memory_space<vmem>>, vector<1x256x128xf32>
    %67 = vector.shape_cast %66 : vector<1x256x128xf32> to vector<256x128xf32>
    %68 = vector.shape_cast %65 : vector<256x128xf32> to vector<1x256x128xf32>
    tpu.vector_store %arg3[%c0_31, %c0_32, %c0_33], %68 {strides = array<i32>} : memref<1x256x128xf32, #tpu.memory_space<vmem>>, vector<1x256x128xf32>,
    return
  }
  func.func @transform_0(%arg0: i32) -> (i32, i32, i32, i32) {
    %c0_i32 = arith.constant 0 : i32
    %c0_i32_0 = arith.constant 0 : i32
    %c0_i32_1 = arith.constant 0 : i32
    %c0_i32_2 = arith.constant 0 : i32
    return %arg0, %c0_i32, %c0_i32_0, %c0_i32_1 : i32, i32, i32, i32
  }
  func.func @transform_1(%arg0: i32) -> (i32, i32, i32) {
    %c0_i32 = arith.constant 0 : i32
    %c0_i32_0 = arith.constant 0 : i32
    %c0_i32_1 = arith.constant 0 : i32
    %c0_i32_2 = arith.constant 0 : i32
    return %c0_i32, %c0_i32_0, %c0_i32_1 : i32, i32, i32
  }
  func.func @transform_2(%arg0: i32) -> (i32, i32, i32) {
    %c0_i32 = arith.constant 0 : i32
    %c0_i32_0 = arith.constant 0 : i32
    %c0_i32_1 = arith.constant 0 : i32
    return %arg0, %c0_i32, %c0_i32_0 : i32, i32, i32
  }
}

module attributes {stable_mosaic.version = 11 : i64} {
  func.func @_gate_gn_relu_kernel(%arg0: i32, %arg1: memref<1x256x128xf32, #tpu.memory_space<vmem>>, %arg2: memref<1x256x128xf32, #tpu.memory_space<vmem>>, %arg3: memref<128x128xbf16, #tpu.memory_space<vmem>>, %arg4: memref<128x128xbf16, #tpu.memory_space<vmem>>, %arg5: memref<1x128xf32, #tpu.memory_space<vmem>>, %arg6: memref<1x128xf32, #tpu.memory_space<vmem>>, %arg7: memref<1x128xf32, #tpu.memory_space<vmem>>, %arg8: memref<1x256x128xf32, #tpu.memory_space<vmem>>) attributes {dimension_semantics = [#tpu.dimension_semantics<parallel>], iteration_bounds = array<i64: 2>, scalar_prefetch = 0 : i64, scratch_operands = 0 : i64, tpu.core_type = #tpu.core_type<tc>, window_params = [{transform_indices = @transform_0, window_bounds = array<i64: 1, 256, 128>}, {transform_indices = @transform_1, window_bounds = array<i64: 1, 256, 128>}, {pipeline_mode = #tpu.pipeline_mode<synchronous>, transform_indices = @transform_2, window_bounds = array<i64: 128, 128>}, {pipeline_mode = #tpu.pipeline_mode<synchronous>, transform_indices = @transform_3, window_bounds = array<i64: 128, 128>}, {pipeline_mode = #tpu.pipeline_mode<synchronous>, transform_indices = @transform_4, window_bounds = array<i64: 1, 128>}, {pipeline_mode = #tpu.pipeline_mode<synchronous>, transform_indices = @transform_5, window_bounds = array<i64: 1, 128>}, {pipeline_mode = #tpu.pipeline_mode<synchronous>, transform_indices = @transform_6, window_bounds = array<i64: 1, 128>}, {transform_indices = @transform_7, window_bounds = array<i64: 1, 256, 128>}]} {
    %c0 = arith.constant 0 : index
    %c0_0 = arith.constant 0 : index
    %c0_1 = arith.constant 0 : index
    %0 = vector.load %arg1[%c0, %c0_0, %c0_1] : memref<1x256x128xf32, #tpu.memory_space<vmem>>, vector<1x256x128xf32>
    %1 = vector.shape_cast %0 : vector<1x256x128xf32> to vector<256x128xf32>
    %c0_2 = arith.constant 0 : index
    %c0_3 = arith.constant 0 : index
    %c0_4 = arith.constant 0 : index
    %2 = vector.load %arg2[%c0_2, %c0_3, %c0_4] : memref<1x256x128xf32, #tpu.memory_space<vmem>>, vector<1x256x128xf32>
    %3 = vector.shape_cast %2 : vector<1x256x128xf32> to vector<256x128xf32>
    %4 = arith.truncf %1 : vector<256x128xf32> to vector<256x128xbf16>
    %c0_5 = arith.constant 0 : index
    %c0_6 = arith.constant 0 : index
    %5 = vector.load %arg3[%c0_5, %c0_6] : memref<128x128xbf16, #tpu.memory_space<vmem>>, vector<128x128xbf16>
    %cst = arith.constant dense<0.000000e+00> : vector<256x128xf32>
    %6 = tpu.matmul %4, %5, %cst {dimension_numbers = #tpu.dot_dimension_numbers<[1], [0], [0], [1], [0, 0, 1, 1], [], []>} : vector<256x128xbf16>, vector<128x128xbf16>, vector<256x128xf32> -> vector<256x128xf32>
    %7 = arith.truncf %3 : vector<256x128xf32> to vector<256x128xbf16>
    %c0_7 = arith.constant 0 : index
    %c0_8 = arith.constant 0 : index
    %8 = vector.load %arg4[%c0_7, %c0_8] : memref<128x128xbf16, #tpu.memory_space<vmem>>, vector<128x128xbf16>
    %cst_9 = arith.constant dense<0.000000e+00> : vector<256x128xf32>
    %9 = tpu.matmul %7, %8, %cst_9 {dimension_numbers = #tpu.dot_dimension_numbers<[1], [0], [0], [1], [0, 0, 1, 1], [], []>} : vector<256x128xbf16>, vector<128x128xbf16>, vector<256x128xf32> -> vector<256x128xf32>
    %10 = arith.addf %6, %9 : vector<256x128xf32>
    %c0_10 = arith.constant 0 : index
    %c0_11 = arith.constant 0 : index
    %11 = vector.load %arg5[%c0_10, %c0_11] : memref<1x128xf32, #tpu.memory_space<vmem>>, vector<1x128xf32>
    %12 = vector.broadcast %11 : vector<1x128xf32> to vector<256x128xf32>
    %13 = arith.addf %10, %12 : vector<256x128xf32>
    %cst_12 = arith.constant 0.000000e+00 : f32
    %14 = vector.broadcast %cst_12 : f32 to vector<256x128xf32>
    %15 = arith.subf %14, %13 : vector<256x128xf32>
    %16 = math.exp %15 : vector<256x128xf32>
    %cst_13 = arith.constant 1.000000e+00 : f32
    %17 = vector.broadcast %cst_13 : f32 to vector<256x128xf32>
    %18 = arith.addf %17, %16 : vector<256x128xf32>
    %19 = tpu.reciprocal %18 {approx = true} : vector<256x128xf32> -> vector<256x128xf32>
    %20 = arith.mulf %19, %1 : vector<256x128xf32>
    %cst_14 = arith.constant 1.000000e+00 : f32
    %21 = vector.broadcast %cst_14 : f32 to vector<256x128xf32>
    %22 = arith.subf %21, %19 : vector<256x128xf32>
    %23 = arith.mulf %22, %3 : vector<256x128xf32>
    %24 = arith.addf %20, %23 : vector<256x128xf32>
    %25 = vector.shape_cast %24 : vector<256x128xf32> to vector<1x256x128xf32>
    %cst_15 = arith.constant dense<0.000000e+00> : vector<1xf32>
    %26 = vector.multi_reduction <add>, %25, %cst_15 [1, 2] : vector<1x256x128xf32> to vector<1xf32>
    %27 = vector.shape_cast %26 : vector<1xf32> to vector<1x1x1xf32>
    %28 = vector.extract %27[0, 0, 0] : f32 from vector<1x1x1xf32>
    %cst_16 = arith.constant 0.001953125 : f32
    %29 = arith.mulf %28, %cst_16 : f32
    %30 = arith.mulf %24, %24 : vector<256x128xf32>
    %31 = vector.shape_cast %30 : vector<256x128xf32> to vector<1x256x128xf32>
    %cst_17 = arith.constant dense<0.000000e+00> : vector<1xf32>
    %32 = vector.multi_reduction <add>, %31, %cst_17 [1, 2] : vector<1x256x128xf32> to vector<1xf32>
    %33 = vector.shape_cast %32 : vector<1xf32> to vector<1x1x1xf32>
    %34 = vector.extract %33[0, 0, 0] : f32 from vector<1x1x1xf32>
    %cst_18 = arith.constant 0.001953125 : f32
    %35 = arith.mulf %34, %cst_18 : f32
    %36 = arith.mulf %29, %29 : f32
    %37 = arith.subf %35, %36 : f32
    %cst_19 = arith.constant 0.000000e+00 : f32
    %38 = arith.maximumf %37, %cst_19 : f32
    %39 = vector.broadcast %29 : f32 to vector<256x128xf32>
    %40 = arith.subf %24, %39 : vector<256x128xf32>
    %cst_20 = arith.constant 9.99999974E-6 : f32
    %41 = arith.addf %38, %cst_20 : f32
    %42 = math.rsqrt %41 : f32
    %43 = vector.broadcast %42 : f32 to vector<256x128xf32>
    %44 = arith.mulf %40, %43 : vector<256x128xf32>
    %c0_21 = arith.constant 0 : index
    %c0_22 = arith.constant 0 : index
    %45 = vector.load %arg6[%c0_21, %c0_22] : memref<1x128xf32, #tpu.memory_space<vmem>>, vector<1x128xf32>
    %46 = vector.broadcast %45 : vector<1x128xf32> to vector<256x128xf32>
    %47 = arith.mulf %44, %46 : vector<256x128xf32>
    %c0_23 = arith.constant 0 : index
    %c0_24 = arith.constant 0 : index
    %48 = vector.load %arg7[%c0_23, %c0_24] : memref<1x128xf32, #tpu.memory_space<vmem>>, vector<1x128xf32>
    %49 = vector.broadcast %48 : vector<1x128xf32> to vector<256x128xf32>
    %50 = arith.addf %47, %49 : vector<256x128xf32>
    %cst_25 = arith.constant 0.000000e+00 : f32
    %51 = vector.broadcast %cst_25 : f32 to vector<256x128xf32>
    %52 = arith.maximumf %50, %51 : vector<256x128xf32>
    %c0_26 = arith.constant 0 : index
    %c0_27 = arith.constant 0 : index
    %c0_28 = arith.constant 0 : index
    %53 = vector.load %arg8[%c0_26, %c0_27, %c0_28] : memref<1x256x128xf32, #tpu.memory_space<vmem>>, vector<1x256x128xf32>
    %54 = vector.shape_cast %53 : vector<1x256x128xf32> to vector<256x128xf32>
    %55 = vector.shape_cast %52 : vector<256x128xf32> to vector<1x256x128xf32>
    tpu.vector_store %arg8[%c0_26, %c0_27, %c0_28], %55 {strides = array<i32>} : memref<1x256x128xf32, #tpu.memory_space<vmem>>, vector<1x256x128xf32>,
    return
  }
  func.func @transform_0(%arg0: i32) -> (i32, i32, i32) {
    %c0_i32 = arith.constant 0 : i32
    %c0_i32_0 = arith.constant 0 : i32
    %c0_i32_1 = arith.constant 0 : i32
    return %arg0, %c0_i32, %c0_i32_0 : i32, i32, i32
  }
  func.func @transform_1(%arg0: i32) -> (i32, i32, i32) {
    %c0_i32 = arith.constant 0 : i32
    %c0_i32_0 = arith.constant 0 : i32
    %c0_i32_1 = arith.constant 0 : i32
    return %arg0, %c0_i32, %c0_i32_0 : i32, i32, i32
  }
  func.func @transform_2(%arg0: i32) -> (i32, i32) {
    %c0_i32 = arith.constant 0 : i32
    %c0_i32_0 = arith.constant 0 : i32
    %c0_i32_1 = arith.constant 0 : i32
    return %c0_i32, %c0_i32_0 : i32, i32
  }
  func.func @transform_3(%arg0: i32) -> (i32, i32) {
    %c0_i32 = arith.constant 0 : i32
    %c0_i32_0 = arith.constant 0 : i32
    %c0_i32_1 = arith.constant 0 : i32
    return %c0_i32, %c0_i32_0 : i32, i32
  }
  func.func @transform_4(%arg0: i32) -> (i32, i32) {
    %c0_i32 = arith.constant 0 : i32
    %c0_i32_0 = arith.constant 0 : i32
    %c0_i32_1 = arith.constant 0 : i32
    return %c0_i32, %c0_i32_0 : i32, i32
  }
  func.func @transform_5(%arg0: i32) -> (i32, i32) {
    %c0_i32 = arith.constant 0 : i32
    %c0_i32_0 = arith.constant 0 : i32
    %c0_i32_1 = arith.constant 0 : i32
    return %c0_i32, %c0_i32_0 : i32, i32
  }
  func.func @transform_6(%arg0: i32) -> (i32, i32) {
    %c0_i32 = arith.constant 0 : i32
    %c0_i32_0 = arith.constant 0 : i32
    %c0_i32_1 = arith.constant 0 : i32
    return %c0_i32, %c0_i32_0 : i32, i32
  }
  func.func @transform_7(%arg0: i32) -> (i32, i32, i32) {
    %c0_i32 = arith.constant 0 : i32
    %c0_i32_0 = arith.constant 0 : i32
    %c0_i32_1 = arith.constant 0 : i32
    return %arg0, %c0_i32, %c0_i32_0 : i32, i32, i32
  }
}

module attributes {stable_mosaic.version = 11 : i64} {
  func.func @_conv3x3_kernel(%arg0: i32, %arg1: memref<1x10x10x128xf32, #tpu.memory_space<vmem>>, %arg2: memref<9x128x128xbf16, #tpu.memory_space<vmem>>, %arg3: memref<1x64x128xf32, #tpu.memory_space<vmem>>) attributes {dimension_semantics = [#tpu.dimension_semantics<parallel>], iteration_bounds = array<i64: 2>, scalar_prefetch = 0 : i64, scratch_operands = 0 : i64, tpu.core_type = #tpu.core_type<tc>, window_params = [{transform_indices = @transform_0, window_bounds = array<i64: 1, 10, 10, 128>}, {pipeline_mode = #tpu.pipeline_mode<synchronous>, transform_indices = @transform_1, window_bounds = array<i64: 9, 128, 128>}, {transform_indices = @transform_2, window_bounds = array<i64: 1, 64, 128>}]} {
    %c0 = arith.constant 0 : index
    %c0_0 = arith.constant 0 : index
    %c0_1 = arith.constant 0 : index
    %c0_2 = arith.constant 0 : index
    %0 = vector.load %arg1[%c0, %c0_0, %c0_1, %c0_2] : memref<1x10x10x128xf32, #tpu.memory_space<vmem>>, vector<1x10x10x128xf32>
    %1 = vector.shape_cast %0 : vector<1x10x10x128xf32> to vector<10x10x128xf32>
    %cst = arith.constant 0.000000e+00 : f32
    %2 = vector.broadcast %cst : f32 to vector<64x128xf32>
    %3 = vector.extract_strided_slice %1 {offsets = [0, 0, 0], sizes = [8, 8, 128], strides = [1, 1, 1]} : vector<10x10x128xf32> to vector<8x8x128xf32>
    %4 = vector.shape_cast %3 : vector<8x8x128xf32> to vector<64x128xf32>
    %5 = arith.truncf %4 : vector<64x128xf32> to vector<64x128xbf16>
    %c0_3 = arith.constant 0 : index
    %c0_4 = arith.constant 0 : index
    %c0_5 = arith.constant 0 : index
    %6 = vector.load %arg2[%c0_3, %c0_4, %c0_5] : memref<9x128x128xbf16, #tpu.memory_space<vmem>>, vector<1x128x128xbf16>
    %7 = vector.shape_cast %6 : vector<1x128x128xbf16> to vector<128x128xbf16>
    %cst_6 = arith.constant dense<0.000000e+00> : vector<64x128xf32>
    %8 = tpu.matmul %5, %7, %cst_6 {dimension_numbers = #tpu.dot_dimension_numbers<[1], [0], [0], [1], [0, 0, 1, 1], [], []>} : vector<64x128xbf16>, vector<128x128xbf16>, vector<64x128xf32> -> vector<64x128xf32>
    %9 = arith.addf %2, %8 : vector<64x128xf32>
    %10 = vector.extract_strided_slice %1 {offsets = [0, 1, 0], sizes = [8, 8, 128], strides = [1, 1, 1]} : vector<10x10x128xf32> to vector<8x8x128xf32>
    %11 = vector.shape_cast %10 : vector<8x8x128xf32> to vector<64x128xf32>
    %12 = arith.truncf %11 : vector<64x128xf32> to vector<64x128xbf16>
    %c1 = arith.constant 1 : index
    %c0_7 = arith.constant 0 : index
    %c0_8 = arith.constant 0 : index
    %13 = vector.load %arg2[%c1, %c0_7, %c0_8] : memref<9x128x128xbf16, #tpu.memory_space<vmem>>, vector<1x128x128xbf16>
    %14 = vector.shape_cast %13 : vector<1x128x128xbf16> to vector<128x128xbf16>
    %cst_9 = arith.constant dense<0.000000e+00> : vector<64x128xf32>
    %15 = tpu.matmul %12, %14, %cst_9 {dimension_numbers = #tpu.dot_dimension_numbers<[1], [0], [0], [1], [0, 0, 1, 1], [], []>} : vector<64x128xbf16>, vector<128x128xbf16>, vector<64x128xf32> -> vector<64x128xf32>
    %16 = arith.addf %9, %15 : vector<64x128xf32>
    %17 = vector.extract_strided_slice %1 {offsets = [0, 2, 0], sizes = [8, 8, 128], strides = [1, 1, 1]} : vector<10x10x128xf32> to vector<8x8x128xf32>
    %18 = vector.shape_cast %17 : vector<8x8x128xf32> to vector<64x128xf32>
    %19 = arith.truncf %18 : vector<64x128xf32> to vector<64x128xbf16>
    %c2 = arith.constant 2 : index
    %c0_10 = arith.constant 0 : index
    %c0_11 = arith.constant 0 : index
    %20 = vector.load %arg2[%c2, %c0_10, %c0_11] : memref<9x128x128xbf16, #tpu.memory_space<vmem>>, vector<1x128x128xbf16>
    %21 = vector.shape_cast %20 : vector<1x128x128xbf16> to vector<128x128xbf16>
    %cst_12 = arith.constant dense<0.000000e+00> : vector<64x128xf32>
    %22 = tpu.matmul %19, %21, %cst_12 {dimension_numbers = #tpu.dot_dimension_numbers<[1], [0], [0], [1], [0, 0, 1, 1], [], []>} : vector<64x128xbf16>, vector<128x128xbf16>, vector<64x128xf32> -> vector<64x128xf32>
    %23 = arith.addf %16, %22 : vector<64x128xf32>
    %24 = vector.extract_strided_slice %1 {offsets = [1, 0, 0], sizes = [8, 8, 128], strides = [1, 1, 1]} : vector<10x10x128xf32> to vector<8x8x128xf32>
    %25 = vector.shape_cast %24 : vector<8x8x128xf32> to vector<64x128xf32>
    %26 = arith.truncf %25 : vector<64x128xf32> to vector<64x128xbf16>
    %c3 = arith.constant 3 : index
    %c0_13 = arith.constant 0 : index
    %c0_14 = arith.constant 0 : index
    %27 = vector.load %arg2[%c3, %c0_13, %c0_14] : memref<9x128x128xbf16, #tpu.memory_space<vmem>>, vector<1x128x128xbf16>
    %28 = vector.shape_cast %27 : vector<1x128x128xbf16> to vector<128x128xbf16>
    %cst_15 = arith.constant dense<0.000000e+00> : vector<64x128xf32>
    %29 = tpu.matmul %26, %28, %cst_15 {dimension_numbers = #tpu.dot_dimension_numbers<[1], [0], [0], [1], [0, 0, 1, 1], [], []>} : vector<64x128xbf16>, vector<128x128xbf16>, vector<64x128xf32> -> vector<64x128xf32>
    %30 = arith.addf %23, %29 : vector<64x128xf32>
    %31 = vector.extract_strided_slice %1 {offsets = [1, 1, 0], sizes = [8, 8, 128], strides = [1, 1, 1]} : vector<10x10x128xf32> to vector<8x8x128xf32>
    %32 = vector.shape_cast %31 : vector<8x8x128xf32> to vector<64x128xf32>
    %33 = arith.truncf %32 : vector<64x128xf32> to vector<64x128xbf16>
    %c4 = arith.constant 4 : index
    %c0_16 = arith.constant 0 : index
    %c0_17 = arith.constant 0 : index
    %34 = vector.load %arg2[%c4, %c0_16, %c0_17] : memref<9x128x128xbf16, #tpu.memory_space<vmem>>, vector<1x128x128xbf16>
    %35 = vector.shape_cast %34 : vector<1x128x128xbf16> to vector<128x128xbf16>
    %cst_18 = arith.constant dense<0.000000e+00> : vector<64x128xf32>
    %36 = tpu.matmul %33, %35, %cst_18 {dimension_numbers = #tpu.dot_dimension_numbers<[1], [0], [0], [1], [0, 0, 1, 1], [], []>} : vector<64x128xbf16>, vector<128x128xbf16>, vector<64x128xf32> -> vector<64x128xf32>
    %37 = arith.addf %30, %36 : vector<64x128xf32>
    %38 = vector.extract_strided_slice %1 {offsets = [1, 2, 0], sizes = [8, 8, 128], strides = [1, 1, 1]} : vector<10x10x128xf32> to vector<8x8x128xf32>
    %39 = vector.shape_cast %38 : vector<8x8x128xf32> to vector<64x128xf32>
    %40 = arith.truncf %39 : vector<64x128xf32> to vector<64x128xbf16>
    %c5 = arith.constant 5 : index
    %c0_19 = arith.constant 0 : index
    %c0_20 = arith.constant 0 : index
    %41 = vector.load %arg2[%c5, %c0_19, %c0_20] : memref<9x128x128xbf16, #tpu.memory_space<vmem>>, vector<1x128x128xbf16>
    %42 = vector.shape_cast %41 : vector<1x128x128xbf16> to vector<128x128xbf16>
    %cst_21 = arith.constant dense<0.000000e+00> : vector<64x128xf32>
    %43 = tpu.matmul %40, %42, %cst_21 {dimension_numbers = #tpu.dot_dimension_numbers<[1], [0], [0], [1], [0, 0, 1, 1], [], []>} : vector<64x128xbf16>, vector<128x128xbf16>, vector<64x128xf32> -> vector<64x128xf32>
    %44 = arith.addf %37, %43 : vector<64x128xf32>
    %45 = vector.extract_strided_slice %1 {offsets = [2, 0, 0], sizes = [8, 8, 128], strides = [1, 1, 1]} : vector<10x10x128xf32> to vector<8x8x128xf32>
    %46 = vector.shape_cast %45 : vector<8x8x128xf32> to vector<64x128xf32>
    %47 = arith.truncf %46 : vector<64x128xf32> to vector<64x128xbf16>
    %c6 = arith.constant 6 : index
    %c0_22 = arith.constant 0 : index
    %c0_23 = arith.constant 0 : index
    %48 = vector.load %arg2[%c6, %c0_22, %c0_23] : memref<9x128x128xbf16, #tpu.memory_space<vmem>>, vector<1x128x128xbf16>
    %49 = vector.shape_cast %48 : vector<1x128x128xbf16> to vector<128x128xbf16>
    %cst_24 = arith.constant dense<0.000000e+00> : vector<64x128xf32>
    %50 = tpu.matmul %47, %49, %cst_24 {dimension_numbers = #tpu.dot_dimension_numbers<[1], [0], [0], [1], [0, 0, 1, 1], [], []>} : vector<64x128xbf16>, vector<128x128xbf16>, vector<64x128xf32> -> vector<64x128xf32>
    %51 = arith.addf %44, %50 : vector<64x128xf32>
    %52 = vector.extract_strided_slice %1 {offsets = [2, 1, 0], sizes = [8, 8, 128], strides = [1, 1, 1]} : vector<10x10x128xf32> to vector<8x8x128xf32>
    %53 = vector.shape_cast %52 : vector<8x8x128xf32> to vector<64x128xf32>
    %54 = arith.truncf %53 : vector<64x128xf32> to vector<64x128xbf16>
    %c7 = arith.constant 7 : index
    %c0_25 = arith.constant 0 : index
    %c0_26 = arith.constant 0 : index
    %55 = vector.load %arg2[%c7, %c0_25, %c0_26] : memref<9x128x128xbf16, #tpu.memory_space<vmem>>, vector<1x128x128xbf16>
    %56 = vector.shape_cast %55 : vector<1x128x128xbf16> to vector<128x128xbf16>
    %cst_27 = arith.constant dense<0.000000e+00> : vector<64x128xf32>
    %57 = tpu.matmul %54, %56, %cst_27 {dimension_numbers = #tpu.dot_dimension_numbers<[1], [0], [0], [1], [0, 0, 1, 1], [], []>} : vector<64x128xbf16>, vector<128x128xbf16>, vector<64x128xf32> -> vector<64x128xf32>
    %58 = arith.addf %51, %57 : vector<64x128xf32>
    %59 = vector.extract_strided_slice %1 {offsets = [2, 2, 0], sizes = [8, 8, 128], strides = [1, 1, 1]} : vector<10x10x128xf32> to vector<8x8x128xf32>
    %60 = vector.shape_cast %59 : vector<8x8x128xf32> to vector<64x128xf32>
    %61 = arith.truncf %60 : vector<64x128xf32> to vector<64x128xbf16>
    %c8 = arith.constant 8 : index
    %c0_28 = arith.constant 0 : index
    %c0_29 = arith.constant 0 : index
    %62 = vector.load %arg2[%c8, %c0_28, %c0_29] : memref<9x128x128xbf16, #tpu.memory_space<vmem>>, vector<1x128x128xbf16>
    %63 = vector.shape_cast %62 : vector<1x128x128xbf16> to vector<128x128xbf16>
    %cst_30 = arith.constant dense<0.000000e+00> : vector<64x128xf32>
    %64 = tpu.matmul %61, %63, %cst_30 {dimension_numbers = #tpu.dot_dimension_numbers<[1], [0], [0], [1], [0, 0, 1, 1], [], []>} : vector<64x128xbf16>, vector<128x128xbf16>, vector<64x128xf32> -> vector<64x128xf32>
    %65 = arith.addf %58, %64 : vector<64x128xf32>
    %c0_31 = arith.constant 0 : index
    %c0_32 = arith.constant 0 : index
    %c0_33 = arith.constant 0 : index
    %66 = vector.load %arg3[%c0_31, %c0_32, %c0_33] : memref<1x64x128xf32, #tpu.memory_space<vmem>>, vector<1x64x128xf32>
    %67 = vector.shape_cast %66 : vector<1x64x128xf32> to vector<64x128xf32>
    %68 = vector.shape_cast %65 : vector<64x128xf32> to vector<1x64x128xf32>
    tpu.vector_store %arg3[%c0_31, %c0_32, %c0_33], %68 {strides = array<i32>} : memref<1x64x128xf32, #tpu.memory_space<vmem>>, vector<1x64x128xf32>,
    return
  }
  func.func @transform_0(%arg0: i32) -> (i32, i32, i32, i32) {
    %c0_i32 = arith.constant 0 : i32
    %c0_i32_0 = arith.constant 0 : i32
    %c0_i32_1 = arith.constant 0 : i32
    %c0_i32_2 = arith.constant 0 : i32
    return %arg0, %c0_i32, %c0_i32_0, %c0_i32_1 : i32, i32, i32, i32
  }
  func.func @transform_1(%arg0: i32) -> (i32, i32, i32) {
    %c0_i32 = arith.constant 0 : i32
    %c0_i32_0 = arith.constant 0 : i32
    %c0_i32_1 = arith.constant 0 : i32
    %c0_i32_2 = arith.constant 0 : i32
    return %c0_i32, %c0_i32_0, %c0_i32_1 : i32, i32, i32
  }
  func.func @transform_2(%arg0: i32) -> (i32, i32, i32) {
    %c0_i32 = arith.constant 0 : i32
    %c0_i32_0 = arith.constant 0 : i32
    %c0_i32_1 = arith.constant 0 : i32
    return %arg0, %c0_i32, %c0_i32_0 : i32, i32, i32
  }
}

module attributes {stable_mosaic.version = 11 : i64} {
  func.func @_gate_gn_relu_kernel(%arg0: i32, %arg1: memref<1x64x128xf32, #tpu.memory_space<vmem>>, %arg2: memref<1x64x128xf32, #tpu.memory_space<vmem>>, %arg3: memref<128x128xbf16, #tpu.memory_space<vmem>>, %arg4: memref<128x128xbf16, #tpu.memory_space<vmem>>, %arg5: memref<1x128xf32, #tpu.memory_space<vmem>>, %arg6: memref<1x128xf32, #tpu.memory_space<vmem>>, %arg7: memref<1x128xf32, #tpu.memory_space<vmem>>, %arg8: memref<1x64x128xf32, #tpu.memory_space<vmem>>) attributes {dimension_semantics = [#tpu.dimension_semantics<parallel>], iteration_bounds = array<i64: 2>, scalar_prefetch = 0 : i64, scratch_operands = 0 : i64, tpu.core_type = #tpu.core_type<tc>, window_params = [{transform_indices = @transform_0, window_bounds = array<i64: 1, 64, 128>}, {transform_indices = @transform_1, window_bounds = array<i64: 1, 64, 128>}, {pipeline_mode = #tpu.pipeline_mode<synchronous>, transform_indices = @transform_2, window_bounds = array<i64: 128, 128>}, {pipeline_mode = #tpu.pipeline_mode<synchronous>, transform_indices = @transform_3, window_bounds = array<i64: 128, 128>}, {pipeline_mode = #tpu.pipeline_mode<synchronous>, transform_indices = @transform_4, window_bounds = array<i64: 1, 128>}, {pipeline_mode = #tpu.pipeline_mode<synchronous>, transform_indices = @transform_5, window_bounds = array<i64: 1, 128>}, {pipeline_mode = #tpu.pipeline_mode<synchronous>, transform_indices = @transform_6, window_bounds = array<i64: 1, 128>}, {transform_indices = @transform_7, window_bounds = array<i64: 1, 64, 128>}]} {
    %c0 = arith.constant 0 : index
    %c0_0 = arith.constant 0 : index
    %c0_1 = arith.constant 0 : index
    %0 = vector.load %arg1[%c0, %c0_0, %c0_1] : memref<1x64x128xf32, #tpu.memory_space<vmem>>, vector<1x64x128xf32>
    %1 = vector.shape_cast %0 : vector<1x64x128xf32> to vector<64x128xf32>
    %c0_2 = arith.constant 0 : index
    %c0_3 = arith.constant 0 : index
    %c0_4 = arith.constant 0 : index
    %2 = vector.load %arg2[%c0_2, %c0_3, %c0_4] : memref<1x64x128xf32, #tpu.memory_space<vmem>>, vector<1x64x128xf32>
    %3 = vector.shape_cast %2 : vector<1x64x128xf32> to vector<64x128xf32>
    %4 = arith.truncf %1 : vector<64x128xf32> to vector<64x128xbf16>
    %c0_5 = arith.constant 0 : index
    %c0_6 = arith.constant 0 : index
    %5 = vector.load %arg3[%c0_5, %c0_6] : memref<128x128xbf16, #tpu.memory_space<vmem>>, vector<128x128xbf16>
    %cst = arith.constant dense<0.000000e+00> : vector<64x128xf32>
    %6 = tpu.matmul %4, %5, %cst {dimension_numbers = #tpu.dot_dimension_numbers<[1], [0], [0], [1], [0, 0, 1, 1], [], []>} : vector<64x128xbf16>, vector<128x128xbf16>, vector<64x128xf32> -> vector<64x128xf32>
    %7 = arith.truncf %3 : vector<64x128xf32> to vector<64x128xbf16>
    %c0_7 = arith.constant 0 : index
    %c0_8 = arith.constant 0 : index
    %8 = vector.load %arg4[%c0_7, %c0_8] : memref<128x128xbf16, #tpu.memory_space<vmem>>, vector<128x128xbf16>
    %cst_9 = arith.constant dense<0.000000e+00> : vector<64x128xf32>
    %9 = tpu.matmul %7, %8, %cst_9 {dimension_numbers = #tpu.dot_dimension_numbers<[1], [0], [0], [1], [0, 0, 1, 1], [], []>} : vector<64x128xbf16>, vector<128x128xbf16>, vector<64x128xf32> -> vector<64x128xf32>
    %10 = arith.addf %6, %9 : vector<64x128xf32>
    %c0_10 = arith.constant 0 : index
    %c0_11 = arith.constant 0 : index
    %11 = vector.load %arg5[%c0_10, %c0_11] : memref<1x128xf32, #tpu.memory_space<vmem>>, vector<1x128xf32>
    %12 = vector.broadcast %11 : vector<1x128xf32> to vector<64x128xf32>
    %13 = arith.addf %10, %12 : vector<64x128xf32>
    %cst_12 = arith.constant 0.000000e+00 : f32
    %14 = vector.broadcast %cst_12 : f32 to vector<64x128xf32>
    %15 = arith.subf %14, %13 : vector<64x128xf32>
    %16 = math.exp %15 : vector<64x128xf32>
    %cst_13 = arith.constant 1.000000e+00 : f32
    %17 = vector.broadcast %cst_13 : f32 to vector<64x128xf32>
    %18 = arith.addf %17, %16 : vector<64x128xf32>
    %19 = tpu.reciprocal %18 {approx = true} : vector<64x128xf32> -> vector<64x128xf32>
    %20 = arith.mulf %19, %1 : vector<64x128xf32>
    %cst_14 = arith.constant 1.000000e+00 : f32
    %21 = vector.broadcast %cst_14 : f32 to vector<64x128xf32>
    %22 = arith.subf %21, %19 : vector<64x128xf32>
    %23 = arith.mulf %22, %3 : vector<64x128xf32>
    %24 = arith.addf %20, %23 : vector<64x128xf32>
    %25 = vector.shape_cast %24 : vector<64x128xf32> to vector<1x64x128xf32>
    %cst_15 = arith.constant dense<0.000000e+00> : vector<1xf32>
    %26 = vector.multi_reduction <add>, %25, %cst_15 [1, 2] : vector<1x64x128xf32> to vector<1xf32>
    %27 = vector.shape_cast %26 : vector<1xf32> to vector<1x1x1xf32>
    %28 = vector.extract %27[0, 0, 0] : f32 from vector<1x1x1xf32>
    %cst_16 = arith.constant 7.812500e-03 : f32
    %29 = arith.mulf %28, %cst_16 : f32
    %30 = arith.mulf %24, %24 : vector<64x128xf32>
    %31 = vector.shape_cast %30 : vector<64x128xf32> to vector<1x64x128xf32>
    %cst_17 = arith.constant dense<0.000000e+00> : vector<1xf32>
    %32 = vector.multi_reduction <add>, %31, %cst_17 [1, 2] : vector<1x64x128xf32> to vector<1xf32>
    %33 = vector.shape_cast %32 : vector<1xf32> to vector<1x1x1xf32>
    %34 = vector.extract %33[0, 0, 0] : f32 from vector<1x1x1xf32>
    %cst_18 = arith.constant 7.812500e-03 : f32
    %35 = arith.mulf %34, %cst_18 : f32
    %36 = arith.mulf %29, %29 : f32
    %37 = arith.subf %35, %36 : f32
    %cst_19 = arith.constant 0.000000e+00 : f32
    %38 = arith.maximumf %37, %cst_19 : f32
    %39 = vector.broadcast %29 : f32 to vector<64x128xf32>
    %40 = arith.subf %24, %39 : vector<64x128xf32>
    %cst_20 = arith.constant 9.99999974E-6 : f32
    %41 = arith.addf %38, %cst_20 : f32
    %42 = math.rsqrt %41 : f32
    %43 = vector.broadcast %42 : f32 to vector<64x128xf32>
    %44 = arith.mulf %40, %43 : vector<64x128xf32>
    %c0_21 = arith.constant 0 : index
    %c0_22 = arith.constant 0 : index
    %45 = vector.load %arg6[%c0_21, %c0_22] : memref<1x128xf32, #tpu.memory_space<vmem>>, vector<1x128xf32>
    %46 = vector.broadcast %45 : vector<1x128xf32> to vector<64x128xf32>
    %47 = arith.mulf %44, %46 : vector<64x128xf32>
    %c0_23 = arith.constant 0 : index
    %c0_24 = arith.constant 0 : index
    %48 = vector.load %arg7[%c0_23, %c0_24] : memref<1x128xf32, #tpu.memory_space<vmem>>, vector<1x128xf32>
    %49 = vector.broadcast %48 : vector<1x128xf32> to vector<64x128xf32>
    %50 = arith.addf %47, %49 : vector<64x128xf32>
    %cst_25 = arith.constant 0.000000e+00 : f32
    %51 = vector.broadcast %cst_25 : f32 to vector<64x128xf32>
    %52 = arith.maximumf %50, %51 : vector<64x128xf32>
    %c0_26 = arith.constant 0 : index
    %c0_27 = arith.constant 0 : index
    %c0_28 = arith.constant 0 : index
    %53 = vector.load %arg8[%c0_26, %c0_27, %c0_28] : memref<1x64x128xf32, #tpu.memory_space<vmem>>, vector<1x64x128xf32>
    %54 = vector.shape_cast %53 : vector<1x64x128xf32> to vector<64x128xf32>
    %55 = vector.shape_cast %52 : vector<64x128xf32> to vector<1x64x128xf32>
    tpu.vector_store %arg8[%c0_26, %c0_27, %c0_28], %55 {strides = array<i32>} : memref<1x64x128xf32, #tpu.memory_space<vmem>>, vector<1x64x128xf32>,
    return
  }
  func.func @transform_0(%arg0: i32) -> (i32, i32, i32) {
    %c0_i32 = arith.constant 0 : i32
    %c0_i32_0 = arith.constant 0 : i32
    %c0_i32_1 = arith.constant 0 : i32
    return %arg0, %c0_i32, %c0_i32_0 : i32, i32, i32
  }
  func.func @transform_1(%arg0: i32) -> (i32, i32, i32) {
    %c0_i32 = arith.constant 0 : i32
    %c0_i32_0 = arith.constant 0 : i32
    %c0_i32_1 = arith.constant 0 : i32
    return %arg0, %c0_i32, %c0_i32_0 : i32, i32, i32
  }
  func.func @transform_2(%arg0: i32) -> (i32, i32) {
    %c0_i32 = arith.constant 0 : i32
    %c0_i32_0 = arith.constant 0 : i32
    %c0_i32_1 = arith.constant 0 : i32
    return %c0_i32, %c0_i32_0 : i32, i32
  }
  func.func @transform_3(%arg0: i32) -> (i32, i32) {
    %c0_i32 = arith.constant 0 : i32
    %c0_i32_0 = arith.constant 0 : i32
    %c0_i32_1 = arith.constant 0 : i32
    return %c0_i32, %c0_i32_0 : i32, i32
  }
  func.func @transform_4(%arg0: i32) -> (i32, i32) {
    %c0_i32 = arith.constant 0 : i32
    %c0_i32_0 = arith.constant 0 : i32
    %c0_i32_1 = arith.constant 0 : i32
    return %c0_i32, %c0_i32_0 : i32, i32
  }
  func.func @transform_5(%arg0: i32) -> (i32, i32) {
    %c0_i32 = arith.constant 0 : i32
    %c0_i32_0 = arith.constant 0 : i32
    %c0_i32_1 = arith.constant 0 : i32
    return %c0_i32, %c0_i32_0 : i32, i32
  }
  func.func @transform_6(%arg0: i32) -> (i32, i32) {
    %c0_i32 = arith.constant 0 : i32
    %c0_i32_0 = arith.constant 0 : i32
    %c0_i32_1 = arith.constant 0 : i32
    return %c0_i32, %c0_i32_0 : i32, i32
  }
  func.func @transform_7(%arg0: i32) -> (i32, i32, i32) {
    %c0_i32 = arith.constant 0 : i32
    %c0_i32_0 = arith.constant 0 : i32
    %c0_i32_1 = arith.constant 0 : i32
    return %arg0, %c0_i32, %c0_i32_0 : i32, i32, i32
  }
}

</mosaic_0001>

<llo_original>
// kernel: octave_conv_forward.7
$region0: #{octave_conv_forward.7}
  #allocation0 [shape = 'u32[]', space=smem, size = 0x4, offset = 0x4, fixed_abs, tag = 'smem constant byte address 0x4 - core index']
  #allocation1 [shape = 'u32[144,128]{1,0:T(1,128)}', space=vmem, size = 0x12000, scoped, tag = 'internal scratch']
  %s0 = inlined_call_operand.vmem [shape: f32[2,10,10,128], index: 0, kind: input, shape index: {}]
  %s1 = inlined_call_operand.vmem [shape: bf16[9,128,256], index: 1, kind: input, shape index: {}]
  %s2 = inlined_call_operand.vmem [shape: f32[2,64,256], index: 2, kind: output, shape index: {}]
  %s3 = sld [smem:[#allocation0]]
  $region41: #{octave_conv_forward.7} parent=0
    _
  %s5 = ssub.s32 1, %s3
  %s6 = scalar_select 0, %s5, %s3
  loop: start=0, step=1, limit=4
  $region2: #{octave_conv_forward.7} parent=0 // loop_pre_header
    _
  $region3: #{octave_conv_forward.7} parent=0 // loop_header
    %s8 = sphi 0, %s12
    %p9 = scmp.ge.s32.totalorder %s8, 4
    %s18 = sphi 0, %s20
    %s21 = sphi 0, %s18
    %s22 = sphi 0, %s21
    %s38 = sphi 0, %s22
    %s42 = sphi 0, %s42
    %s44 = sphi 0, %s42
    %s45 = sphi 0, %s44
    %s59 = sphi 0, %s45
    %s65 = sphi 0, %s67
    %s68 = sphi 0, %s65
    %s69 = sphi 0, %s68
    %s85 = sphi 0, %s69
  $region4: #{octave_conv_forward.7} parent=0 // loop_header_branch
    %11 = sbr.rel (%p9) target = $region8
  $region5: #{octave_conv_forward.7} parent=0 // loop_body
    %s13 = ssub.s32 %s8, 1
    %s14 = ssub.s32 %s8, 2
    %s15 = sadd.s32 %s8, 1
    %s16 = ssub.s32 %s8, %s15
    %p17 = scmp.eq.s32.totalorder %s16, 0
    %s19 = sadd.s32 %s18, 1
    %s20 = scalar_select %p17, %s18, %s19
    %p23 = pneg %p17
    %p24 = scmp.eq.s32.totalorder %s8, 1
    %p25 = por %p23, %p24
    %p26 = scmp.ne.s32.totalorder %s18, %s21
    %p27 = scmp.eq.s32.totalorder %s8, 0
    %p28 = por %p26, %p27
    %p29 = scmp.ne.s32.totalorder %s18, %s21
    %p30 = scmp.eq.s32.totalorder %s13, 1
    %p31 = por %p29, %p30
    %p32 = scmp.ne.s32.totalorder %s21, %s22
    %p33 = scmp.eq.s32.totalorder %s13, 0
    %p34 = por %p32, %p33
    %p35 = scmp.ne.s32.totalorder %s21, %s22
    %p36 = scmp.eq.s32.totalorder %s14, 1
    %p37 = por %p35, %p36
    %p39 = scmp.ne.s32.totalorder %s22, %s38
    %p40 = scmp.eq.s32.totalorder %s14, 0
    %p41 = por %p39, %p40
    %s43 = sadd.s32 %s42, 1
    %p46 = scmp.eq.s32.totalorder %s8, 1
    %p47 = scmp.ne.s32.totalorder %s42, %s44
    %p48 = scmp.eq.s32.totalorder %s8, 0
    %p49 = por %p47, %p48
    %p50 = scmp.ne.s32.totalorder %s42, %s44
    %p51 = scmp.eq.s32.totalorder %s13, 1
    %p52 = por %p50, %p51
    %p53 = scmp.ne.s32.totalorder %s44, %s45
    %p54 = scmp.eq.s32.totalorder %s13, 0
    %p55 = por %p53, %p54
    %p56 = scmp.ne.s32.totalorder %s44, %s45
    %p57 = scmp.eq.s32.totalorder %s14, 1
    %p58 = por %p56, %p57
    %p60 = scmp.ne.s32.totalorder %s45, %s59
    %p61 = scmp.eq.s32.totalorder %s14, 0
    %p62 = por %p60, %p61
    %s63 = ssub.s32 %s8, %s15
    %p64 = scmp.eq.s32.totalorder %s63, 0
    %s66 = sadd.s32 %s65, 1
    %s67 = scalar_select %p64, %s65, %s66
    %p70 = pneg %p64
    %p71 = scmp.eq.s32.totalorder %s8, 1
    %p72 = por %p70, %p71
    %p73 = scmp.ne.s32.totalorder %s65, %s68
    %p74 = scmp.eq.s32.totalorder %s8, 0
    %p75 = por %p73, %p74
    %p76 = scmp.ne.s32.totalorder %s65, %s68
    %p77 = scmp.eq.s32.totalorder %s13, 1
    %p78 = por %p76, %p77
    %p79 = scmp.ne.s32.totalorder %s68, %s69
    %p80 = scmp.eq.s32.totalorder %s13, 0
    %p81 = por %p79, %p80
    %p82 = scmp.ne.s32.totalorder %s68, %s69
    %p83 = scmp.eq.s32.totalorder %s14, 1
    %p84 = por %p82, %p83
    %p86 = scmp.ne.s32.totalorder %s69, %s85
    %p87 = scmp.eq.s32.totalorder %s14, 0
    %p88 = por %p86, %p87
    %p89 = scmp.le.s32.totalorder 1, %s8
    %p90 = scmp.lt.s32.totalorder %s8, 3
    %p91 = pnand %p89, %p90
    %p92 = pneg %p91
    // Predicated region
    $region9: #{octave_conv_forward.7} parent=5 // pred_check
      _
    $region10: #{octave_conv_forward.7} parent=5 // pred_check_branch
      %94 = sbr.rel (%p91) target = $region12
    $region11: #{octave_conv_forward.7} parent=5 // pred_region
      %s95 = ssub.s32 %s8, 1
      // Predicated region
      $region13: #{octave_conv_forward.7} parent=11 // pred_check
        %p96 = pneg %p55
      $region14: #{octave_conv_forward.7} parent=11 // pred_check_branch
        %98 = sbr.rel (%p96) target = $region16
      $region15: #{octave_conv_forward.7} parent=11 // pred_region
        _
      $region16: #{octave_conv_forward.7} parent=11 // pred_fallthru
        _
    $region12: #{octave_conv_forward.7} parent=5 // pred_fallthru
      _
    %p99 = scmp.lt.s32.totalorder %s8, 2
    // Predicated region
    $region17: #{octave_conv_forward.7} parent=5 // pred_check
      %p100 = pneg %p99
    $region18: #{octave_conv_forward.7} parent=5 // pred_check_branch
      %102 = sbr.rel (%p100) target = $region20
    $region19: #{octave_conv_forward.7} parent=5 // pred_region
      // Predicated region
      $region21: #{octave_conv_forward.7} parent=19 // pred_check
        %p103 = pneg %p28
      $region22: #{octave_conv_forward.7} parent=19 // pred_check_branch
        %105 = sbr.rel (%p103) target = $region24
      $region23: #{octave_conv_forward.7} parent=19 // pred_region
        %p106 = scmp.lt.s32.totalorder %s8, 1
        %s107 = scalar_select %p106, %s8, 1
        %s108 = smul.addr %s107, 20
        %s109 = smul.addr %s108, 8
        %s110 = scalar_lea.vmem %s0, %s109
      $region24: #{octave_conv_forward.7} parent=19 // pred_fallthru
        _
    $region20: #{octave_conv_forward.7} parent=5 // pred_fallthru
      _
    %p111 = scmp.le.s32.totalorder 1, %s8
    %p112 = scmp.lt.s32.totalorder %s8, 3
    %p113 = pnand %p111, %p112
    %p114 = pneg %p113
    // Predicated region
    $region25: #{octave_conv_forward.7} parent=5 // pred_check
      _
    $region26: #{octave_conv_forward.7} parent=5 // pred_check_branch
      %116 = sbr.rel (%p113) target = $region28
    $region27: #{octave_conv_forward.7} parent=5 // pred_region
      %s117 = ssub.s32 %s8, 1
      %p118 = scmp.lt.s32.totalorder %s13, 1
      %s119 = scalar_select %p118, %s13, 1
      %s120 = smul.addr %s119, 20
      %s121 = smul.addr %s120, 8
      %s122 = scalar_lea.vmem %s0, %s121
      %p123 = pneg %p34
      %p124 = pneg %p31
      %p125 = pneg %p55
      %p126 = pneg %p52
      %p127 = pneg %p81
      %p128 = pneg %p78
      %p129 = scmp.lt.s32.totalorder %s13, 1
      %s130 = scalar_select %p129, %s13, 1
      %s131 = smul.addr %s130, 16
      %s132 = smul.addr %s131, 8
      %s133 = scalar_lea.vmem %s2, %s132
      %p134 = scmp.lt.s32.totalorder %s13, 1
      %s135 = scalar_select %p134, %s13, 1
      %s136 = smul.addr %s135, 20
      %s137 = smul.addr %s136, 8
      %s138 = scalar_lea.vmem %s0, %s137
      %p139 = scmp.lt.s32.totalorder %s13, 1
      %s140 = scalar_select %p139, %s13, 1
      %s141 = smul.addr %s140, 16
      %s142 = smul.addr %s141, 8
      %s143 = scalar_lea.vmem %s2, %s142
      %v145 = vld [vmem:[%s138] sm:$0xff]
      %v146 = vld [vmem:[%s138 + $0x8] sm:$0x3]
      %v147 = vld [vmem:[%s138 + $0x10] sm:$0xff]
      %v148 = vld [vmem:[%s138 + $0x18] sm:$0x3]
      %v149 = vld [vmem:[%s138 + $0x20] sm:$0xff]
      %v150 = vld [vmem:[%s138 + $0x28] sm:$0x3]
      %v151 = vld [vmem:[%s138 + $0x30] sm:$0xff]
      %v152 = vld [vmem:[%s138 + $0x38] sm:$0x3]
      %v153 = vld [vmem:[%s138 + $0x40] sm:$0xff]
      %v154 = vld [vmem:[%s138 + $0x48] sm:$0x3]
      %v155 = vld [vmem:[%s138 + $0x50] sm:$0xff]
      %v156 = vld [vmem:[%s138 + $0x58] sm:$0x3]
      %v157 = vld [vmem:[%s138 + $0x60] sm:$0xff]
      %v158 = vld [vmem:[%s138 + $0x68] sm:$0x3]
      %v159 = vld [vmem:[%s138 + $0x70] sm:$0xff]
      %v160 = vld [vmem:[%s138 + $0x78] sm:$0x3]
      %v161 = vld [vmem:[%s138 + $0x80] sm:$0xff]
      %v162 = vld [vmem:[%s138 + $0x88] sm:$0x3]
      %v163 = vld [vmem:[%s138 + $0x90] sm:$0xff]
      %v164 = vld [vmem:[%s138 + $0x98] sm:$0x3]
      %v165 = vpack.c.bf16 %v147, %v145
      %v166 = vpack.c.bf16 %v151, %v149
      %v167 = vpack.c.bf16 %v155, %v153
      %v168 = vpack.c.bf16 %v159, %v157
      %v169 = vld [vmem:[%s1] sm:$0xff]
      %v170 = vld [vmem:[%s1 + $0x8] sm:$0xff]
      %v171 = vld [vmem:[%s1 + $0x10] sm:$0xff]
      %v172 = vld [vmem:[%s1 + $0x18] sm:$0xff]
      %v173 = vld [vmem:[%s1 + $0x20] sm:$0xff]
      %v174 = vld [vmem:[%s1 + $0x28] sm:$0xff]
      %v175 = vld [vmem:[%s1 + $0x30] sm:$0xff]
      %v176 = vld [vmem:[%s1 + $0x38] sm:$0xff]
      %v177 = vld [vmem:[%s1 + $0x40] sm:$0xff]
      %v178 = vld [vmem:[%s1 + $0x48] sm:$0xff]
      %v179 = vld [vmem:[%s1 + $0x50] sm:$0xff]
      %v180 = vld [vmem:[%s1 + $0x58] sm:$0xff]
      %v181 = vld [vmem:[%s1 + $0x60] sm:$0xff]
      %v182 = vld [vmem:[%s1 + $0x68] sm:$0xff]
      %v183 = vld [vmem:[%s1 + $0x70] sm:$0xff]
      %v184 = vld [vmem:[%s1 + $0x78] sm:$0xff]
      %vm201 = vcmask 1046528
      %v202 = vrot.slane %v145, 1
      %v203 = vrot.slane %v146, 1
      %v204 = vsel %vm201, %v202, %v203
      %v205 = vrot.slane %v147, 1
      %v206 = vrot.slane %v148, 1
      %v207 = vsel %vm201, %v205, %v206
      %v208 = vrot.slane %v149, 1
      %v209 = vrot.slane %v150, 1
      %v210 = vsel %vm201, %v208, %v209
      %v211 = vrot.slane %v151, 1
      %v212 = vrot.slane %v152, 1
      %v213 = vsel %vm201, %v211, %v212
      %v214 = vrot.slane %v153, 1
      %v215 = vrot.slane %v154, 1
      %v216 = vsel %vm201, %v214, %v215
      %v217 = vrot.slane %v155, 1
      %v218 = vrot.slane %v156, 1
      %v219 = vsel %vm201, %v217, %v218
      %v220 = vrot.slane %v157, 1
      %v221 = vrot.slane %v158, 1
      %v222 = vsel %vm201, %v220, %v221
      %v223 = vrot.slane %v159, 1
      %v224 = vrot.slane %v160, 1
      %v225 = vsel %vm201, %v223, %v224
      %v234 = vpack.c.bf16 %v207, %v204
      %v235 = vpack.c.bf16 %v213, %v210
      %v236 = vpack.c.bf16 %v219, %v216
      %v237 = vpack.c.bf16 %v225, %v222
      %s238 = scalar_lea.vmem %s1, 128
      %v239 = vld [vmem:[%s238] sm:$0xff]
      %v240 = vld [vmem:[%s238 + $0x8] sm:$0xff]
      %v241 = vld [vmem:[%s238 + $0x10] sm:$0xff]
      %v242 = vld [vmem:[%s238 + $0x18] sm:$0xff]
      %v243 = vld [vmem:[%s238 + $0x20] sm:$0xff]
      %v244 = vld [vmem:[%s238 + $0x28] sm:$0xff]
      %v245 = vld [vmem:[%s238 + $0x30] sm:$0xff]
      %v246 = vld [vmem:[%s238 + $0x38] sm:$0xff]
      %v247 = vld [vmem:[%s238 + $0x40] sm:$0xff]
      %v248 = vld [vmem:[%s238 + $0x48] sm:$0xff]
      %v249 = vld [vmem:[%s238 + $0x50] sm:$0xff]
      %v250 = vld [vmem:[%s238 + $0x58] sm:$0xff]
      %v251 = vld [vmem:[%s238 + $0x60] sm:$0xff]
      %v252 = vld [vmem:[%s238 + $0x68] sm:$0xff]
      %v253 = vld [vmem:[%s238 + $0x70] sm:$0xff]
      %v254 = vld [vmem:[%s238 + $0x78] sm:$0xff]
      %v271 = vunpack.c.l.b16 %v239
      %v272 = vunpack.c.h.b16 %v239
      %v273 = vunpack.c.l.b16 %v240
      %v274 = vunpack.c.h.b16 %v240
      %v275 = vunpack.c.l.b16 %v241
      %v276 = vunpack.c.h.b16 %v241
      %v277 = vunpack.c.l.b16 %v242
      %v278 = vunpack.c.h.b16 %v242
      %v279 = vunpack.c.l.b16 %v243
      %v280 = vunpack.c.h.b16 %v243
      %v281 = vunpack.c.l.b16 %v244
      %v282 = vunpack.c.h.b16 %v244
      %v283 = vunpack.c.l.b16 %v245
      %v284 = vunpack.c.h.b16 %v245
      %v285 = vunpack.c.l.b16 %v246
      %v286 = vunpack.c.h.b16 %v246
      %v287 = vunpack.c.l.b16 %v247
      %v288 = vunpack.c.h.b16 %v247
      %v289 = vunpack.c.l.b16 %v248
      %v290 = vunpack.c.h.b16 %v248
      %v291 = vunpack.c.l.b16 %v249
      %v292 = vunpack.c.h.b16 %v249
      %v293 = vunpack.c.l.b16 %v250
      %v294 = vunpack.c.h.b16 %v250
      %v295 = vunpack.c.l.b16 %v251
      %v296 = vunpack.c.h.b16 %v251
      %v297 = vunpack.c.l.b16 %v252
      %v298 = vunpack.c.h.b16 %v252
      %v299 = vunpack.c.l.b16 %v253
      %v300 = vunpack.c.h.b16 %v253
      %v301 = vunpack.c.l.b16 %v254
      %v302 = vunpack.c.h.b16 %v254
      %v303 = vpack.c.b16 %v273, %v271
      %v304 = vpack.c.b16 %v274, %v272
      %v305 = vpack.c.b16 %v277, %v275
      %v306 = vpack.c.b16 %v278, %v276
      %v307 = vpack.c.b16 %v281, %v279
      %v308 = vpack.c.b16 %v282, %v280
      %v309 = vpack.c.b16 %v285, %v283
      %v310 = vpack.c.b16 %v286, %v284
      %v311 = vpack.c.b16 %v289, %v287
      %v312 = vpack.c.b16 %v290, %v288
      %v313 = vpack.c.b16 %v293, %v291
      %v314 = vpack.c.b16 %v294, %v292
      %v315 = vpack.c.b16 %v297, %v295
      %v316 = vpack.c.b16 %v298, %v296
      %v317 = vpack.c.b16 %v301, %v299
      %v318 = vpack.c.b16 %v302, %v300
      %335 = vmatprep.subr.bf16.mxu0 %v304
      %336 = vmatpush1.bf16.msra.mxu0 %v303
      %337 = vmatprep.subr.bf16.mxu0 %v306
      %338 = vmatpush1.bf16.msra.mxu0 %v305
      %339 = vmatprep.subr.bf16.mxu0 %v308
      %340 = vmatpush1.bf16.msra.mxu0 %v307
      %341 = vmatprep.subr.bf16.mxu0 %v310
      %342 = vmatpush1.bf16.msra.mxu0 %v309
      %343 = vmatprep.subr.bf16.mxu0 %v312
      %344 = vmatpush1.bf16.msra.mxu0 %v311
      %345 = vmatprep.subr.bf16.mxu0 %v314
      %346 = vmatpush1.bf16.msra.mxu0 %v313
      %347 = vmatprep.subr.bf16.mxu0 %v316
      %348 = vmatpush1.bf16.msra.mxu0 %v315
      %349 = vmatprep.subr.bf16.mxu0 %v318
      %350 = vmatpush1.bf16.msra.mxu0 %v317
      %351 = vmatprep.subr.bf16.mxu0 0
      %352 = vmatpush1.bf16.msra.mxu0 0
      %353 = vmatprep.subr.bf16.mxu0 0
      %354 = vmatpush1.bf16.msra.mxu0 0
      %355 = vmatprep.subr.bf16.mxu0 0
      %356 = vmatpush1.bf16.msra.mxu0 0
      %357 = vmatprep.subr.bf16.mxu0 0
      %358 = vmatpush1.bf16.msra.mxu0 0
      %359 = vmatprep.subr.bf16.mxu0 0
      %360 = vmatpush1.bf16.msra.mxu0 0
      %361 = vmatprep.subr.bf16.mxu0 0
      %362 = vmatpush1.bf16.msra.mxu0 0
      %363 = vmatprep.subr.bf16.mxu0 0
      %364 = vmatpush1.bf16.msra.mxu0 0
      %365 = vmatprep.subr.bf16.mxu0 0
      %366 = vmatpush1.bf16.msra.mxu0 0
      %367 = vmatprep.mubr.bf16.mxu0 0
      %368 = vmatmul.mubr.bf16.gmra.mrb[0].mxu0 %v234
      %v369 = vpop.f32.mrb[0].mxu0
      %v370 = vadd.f32 0.0, %v369
      %v371 = vpop.f32.mrb[0].mxu0
      %v372 = vadd.f32 0.0, %v371
      %v373 = vpop.f32.mrb[0].mxu0
      %v374 = vadd.f32 0.0, %v373
      %v375 = vpop.f32.mrb[0].mxu0
      %v376 = vadd.f32 0.0, %v375
      %377 = vmatprep.mubr.bf16.mxu0 0
      %378 = vmatmul.mubr.bf16.gmra.mrb[0].mxu0 %v235
      %v379 = vpop.f32.mrb[0].mxu0
      %v380 = vadd.f32 0.0, %v379
      %v381 = vpop.f32.mrb[0].mxu0
      %v382 = vadd.f32 0.0, %v381
      %v383 = vpop.f32.mrb[0].mxu0
      %v384 = vadd.f32 0.0, %v383
      %v385 = vpop.f32.mrb[0].mxu0
      %v386 = vadd.f32 0.0, %v385
      %387 = vmatprep.mubr.bf16.mxu0 0
      %388 = vmatmul.mubr.bf16.gmra.mrb[0].mxu0 %v236
      %v389 = vpop.f32.mrb[0].mxu0
      %v390 = vadd.f32 0.0, %v389
      %v391 = vpop.f32.mrb[0].mxu0
      %v392 = vadd.f32 0.0, %v391
      %v393 = vpop.f32.mrb[0].mxu0
      %v394 = vadd.f32 0.0, %v393
      %v395 = vpop.f32.mrb[0].mxu0
      %v396 = vadd.f32 0.0, %v395
      %397 = vmatprep.mubr.bf16.mxu0 0
      %398 = vmatmul.mubr.bf16.gmra.mrb[0].mxu0 %v237
      %v399 = vpop.f32.mrb[0].mxu0
      %v400 = vadd.f32 0.0, %v399
      %v401 = vpop.f32.mrb[0].mxu0
      %v402 = vadd.f32 0.0, %v401
      %v403 = vpop.f32.mrb[0].mxu0
      %v404 = vadd.f32 0.0, %v403
      %v405 = vpop.f32.mrb[0].mxu0
      %v406 = vadd.f32 0.0, %v405
      %407 = vdwg.mxu0
      %v424 = vunpack.c.l.b16 %v169
      %v425 = vunpack.c.h.b16 %v169
      %v426 = vunpack.c.l.b16 %v170
      %v427 = vunpack.c.h.b16 %v170
      %v428 = vunpack.c.l.b16 %v171
      %v429 = vunpack.c.h.b16 %v171
      %v430 = vunpack.c.l.b16 %v172
      %v431 = vunpack.c.h.b16 %v172
      %v432 = vunpack.c.l.b16 %v173
      %v433 = vunpack.c.h.b16 %v173
      %v434 = vunpack.c.l.b16 %v174
      %v435 = vunpack.c.h.b16 %v174
      %v436 = vunpack.c.l.b16 %v175
      %v437 = vunpack.c.h.b16 %v175
      %v438 = vunpack.c.l.b16 %v176
      %v439 = vunpack.c.h.b16 %v176
      %v440 = vunpack.c.l.b16 %v177
      %v441 = vunpack.c.h.b16 %v177
      %v442 = vunpack.c.l.b16 %v178
      %v443 = vunpack.c.h.b16 %v178
      %v444 = vunpack.c.l.b16 %v179
      %v445 = vunpack.c.h.b16 %v179
      %v446 = vunpack.c.l.b16 %v180
      %v447 = vunpack.c.h.b16 %v180
      %v448 = vunpack.c.l.b16 %v181
      %v449 = vunpack.c.h.b16 %v181
      %v450 = vunpack.c.l.b16 %v182
      %v451 = vunpack.c.h.b16 %v182
      %v452 = vunpack.c.l.b16 %v183
      %v453 = vunpack.c.h.b16 %v183
      %v454 = vunpack.c.l.b16 %v184
      %v455 = vunpack.c.h.b16 %v184
      %v456 = vpack.c.b16 %v426, %v424
      %v457 = vpack.c.b16 %v427, %v425
      %v458 = vpack.c.b16 %v430, %v428
      %v459 = vpack.c.b16 %v431, %v429
      %v460 = vpack.c.b16 %v434, %v432
      %v461 = vpack.c.b16 %v435, %v433
      %v462 = vpack.c.b16 %v438, %v436
      %v463 = vpack.c.b16 %v439, %v437
      %v464 = vpack.c.b16 %v442, %v440
      %v465 = vpack.c.b16 %v443, %v441
      %v466 = vpack.c.b16 %v446, %v444
      %v467 = vpack.c.b16 %v447, %v445
      %v468 = vpack.c.b16 %v450, %v448
      %v469 = vpack.c.b16 %v451, %v449
      %v470 = vpack.c.b16 %v454, %v452
      %v471 = vpack.c.b16 %v455, %v453
      %488 = vmatprep.subr.bf16.mxu0 %v457
      %489 = vmatpush1.bf16.msra.mxu0 %v456
      %490 = vmatprep.subr.bf16.mxu0 %v459
      %491 = vmatpush1.bf16.msra.mxu0 %v458
      %492 = vmatprep.subr.bf16.mxu0 %v461
      %493 = vmatpush1.bf16.msra.mxu0 %v460
      %494 = vmatprep.subr.bf16.mxu0 %v463
      %495 = vmatpush1.bf16.msra.mxu0 %v462
      %496 = vmatprep.subr.bf16.mxu0 %v465
      %497 = vmatpush1.bf16.msra.mxu0 %v464
      %498 = vmatprep.subr.bf16.mxu0 %v467
      %499 = vmatpush1.bf16.msra.mxu0 %v466
      %500 = vmatprep.subr.bf16.mxu0 %v469
      %501 = vmatpush1.bf16.msra.mxu0 %v468
      %502 = vmatprep.subr.bf16.mxu0 %v471
      %503 = vmatpush1.bf16.msra.mxu0 %v470
      %504 = vmatprep.subr.bf16.mxu0 0
      %505 = vmatpush1.bf16.msra.mxu0 0
      %506 = vmatprep.subr.bf16.mxu0 0
      %507 = vmatpush1.bf16.msra.mxu0 0
      %508 = vmatprep.subr.bf16.mxu0 0
      %509 = vmatpush1.bf16.msra.mxu0 0
      %510 = vmatprep.subr.bf16.mxu0 0
      %511 = vmatpush1.bf16.msra.mxu0 0
      %512 = vmatprep.subr.bf16.mxu0 0
      %513 = vmatpush1.bf16.msra.mxu0 0
      %514 = vmatprep.subr.bf16.mxu0 0
      %515 = vmatpush1.bf16.msra.mxu0 0
      %516 = vmatprep.subr.bf16.mxu0 0
      %517 = vmatpush1.bf16.msra.mxu0 0
      %518 = vmatprep.subr.bf16.mxu0 0
      %519 = vmatpush1.bf16.msra.mxu0 0
      %520 = vmatprep.mubr.bf16.mxu0 0
      %521 = vmatmul.mubr.bf16.gmra.mrb[0].mxu0 %v165
      %v522 = vpop.f32.mrb[0].mxu0
      %v523 = vadd.f32 %v370, %v522
      %v524 = vpop.f32.mrb[0].mxu0
      %v525 = vadd.f32 %v372, %v524
      %v526 = vpop.f32.mrb[0].mxu0
      %v527 = vadd.f32 %v374, %v526
      %v528 = vpop.f32.mrb[0].mxu0
      %v529 = vadd.f32 %v376, %v528
      %530 = vmatprep.mubr.bf16.mxu0 0
      %531 = vmatmul.mubr.bf16.gmra.mrb[0].mxu0 %v166
      %v532 = vpop.f32.mrb[0].mxu0
      %v533 = vadd.f32 %v380, %v532
      %v534 = vpop.f32.mrb[0].mxu0
      %v535 = vadd.f32 %v382, %v534
      %v536 = vpop.f32.mrb[0].mxu0
      %v537 = vadd.f32 %v384, %v536
      %v538 = vpop.f32.mrb[0].mxu0
      %v539 = vadd.f32 %v386, %v538
      %540 = vmatprep.mubr.bf16.mxu0 0
      %541 = vmatmul.mubr.bf16.gmra.mrb[0].mxu0 %v167
      %v542 = vpop.f32.mrb[0].mxu0
      %v543 = vadd.f32 %v390, %v542
      %v544 = vpop.f32.mrb[0].mxu0
      %v545 = vadd.f32 %v392, %v544
      %v546 = vpop.f32.mrb[0].mxu0
      %v547 = vadd.f32 %v394, %v546
      %v548 = vpop.f32.mrb[0].mxu0
      %v549 = vadd.f32 %v396, %v548
      %550 = vmatprep.mubr.bf16.mxu0 0
      %551 = vmatmul.mubr.bf16.gmra.mrb[0].mxu0 %v168
      %v552 = vpop.f32.mrb[0].mxu0
      %v553 = vadd.f32 %v400, %v552
      %v554 = vpop.f32.mrb[0].mxu0
      %v555 = vadd.f32 %v402, %v554
      %v556 = vpop.f32.mrb[0].mxu0
      %v557 = vadd.f32 %v404, %v556
      %v558 = vpop.f32.mrb[0].mxu0
      %v559 = vadd.f32 %v406, %v558
      %560 = vdwg.mxu0
      %vm561 = vcmask 1045504
      %v562 = vrot.slane %v145, 2
      %v563 = vrot.slane %v146, 2
      %v564 = vsel %vm561, %v562, %v563
      %v565 = vrot.slane %v147, 2
      %v566 = vrot.slane %v148, 2
      %v567 = vsel %vm561, %v565, %v566
      %v568 = vrot.slane %v149, 2
      %v569 = vrot.slane %v150, 2
      %v570 = vsel %vm561, %v568, %v569
      %v571 = vrot.slane %v151, 2
      %v572 = vrot.slane %v152, 2
      %v573 = vsel %vm561, %v571, %v572
      %v574 = vrot.slane %v153, 2
      %v575 = vrot.slane %v154, 2
      %v576 = vsel %vm561, %v574, %v575
      %v577 = vrot.slane %v155, 2
      %v578 = vrot.slane %v156, 2
      %v579 = vsel %vm561, %v577, %v578
      %v580 = vrot.slane %v157, 2
      %v581 = vrot.slane %v158, 2
      %v582 = vsel %vm561, %v580, %v581
      %v583 = vrot.slane %v159, 2
      %v584 = vrot.slane %v160, 2
      %v585 = vsel %vm561, %v583, %v584
      %v594 = vpack.c.bf16 %v567, %v564
      %v595 = vpack.c.bf16 %v573, %v570
      %v596 = vpack.c.bf16 %v579, %v576
      %v597 = vpack.c.bf16 %v585, %v582
      %s598 = scalar_lea.vmem %s1, 256
      %v599 = vld [vmem:[%s598] sm:$0xff]
      %v600 = vld [vmem:[%s598 + $0x8] sm:$0xff]
      %v601 = vld [vmem:[%s598 + $0x10] sm:$0xff]
      %v602 = vld [vmem:[%s598 + $0x18] sm:$0xff]
      %v603 = vld [vmem:[%s598 + $0x20] sm:$0xff]
      %v604 = vld [vmem:[%s598 + $0x28] sm:$0xff]
      %v605 = vld [vmem:[%s598 + $0x30] sm:$0xff]
      %v606 = vld [vmem:[%s598 + $0x38] sm:$0xff]
      %v607 = vld [vmem:[%s598 + $0x40] sm:$0xff]
      %v608 = vld [vmem:[%s598 + $0x48] sm:$0xff]
      %v609 = vld [vmem:[%s598 + $0x50] sm:$0xff]
      %v610 = vld [vmem:[%s598 + $0x58] sm:$0xff]
      %v611 = vld [vmem:[%s598 + $0x60] sm:$0xff]
      %v612 = vld [vmem:[%s598 + $0x68] sm:$0xff]
      %v613 = vld [vmem:[%s598 + $0x70] sm:$0xff]
      %v614 = vld [vmem:[%s598 + $0x78] sm:$0xff]
      %v631 = vunpack.c.l.b16 %v599
      %v632 = vunpack.c.h.b16 %v599
      %v633 = vunpack.c.l.b16 %v600
      %v634 = vunpack.c.h.b16 %v600
      %v635 = vunpack.c.l.b16 %v601
      %v636 = vunpack.c.h.b16 %v601
      %v637 = vunpack.c.l.b16 %v602
      %v638 = vunpack.c.h.b16 %v602
      %v639 = vunpack.c.l.b16 %v603
      %v640 = vunpack.c.h.b16 %v603
      %v641 = vunpack.c.l.b16 %v604
      %v642 = vunpack.c.h.b16 %v604
      %v643 = vunpack.c.l.b16 %v605
      %v644 = vunpack.c.h.b16 %v605
      %v645 = vunpack.c.l.b16 %v606
      %v646 = vunpack.c.h.b16 %v606
      %v647 = vunpack.c.l.b16 %v607
      %v648 = vunpack.c.h.b16 %v607
      %v649 = vunpack.c.l.b16 %v608
      %v650 = vunpack.c.h.b16 %v608
      %v651 = vunpack.c.l.b16 %v609
      %v652 = vunpack.c.h.b16 %v609
      %v653 = vunpack.c.l.b16 %v610
      %v654 = vunpack.c.h.b16 %v610
      %v655 = vunpack.c.l.b16 %v611
      %v656 = vunpack.c.h.b16 %v611
      %v657 = vunpack.c.l.b16 %v612
      %v658 = vunpack.c.h.b16 %v612
      %v659 = vunpack.c.l.b16 %v613
      %v660 = vunpack.c.h.b16 %v613
      %v661 = vunpack.c.l.b16 %v614
      %v662 = vunpack.c.h.b16 %v614
      %v663 = vpack.c.b16 %v633, %v631
      %v664 = vpack.c.b16 %v634, %v632
      %v665 = vpack.c.b16 %v637, %v635
      %v666 = vpack.c.b16 %v638, %v636
      %v667 = vpack.c.b16 %v641, %v639
      %v668 = vpack.c.b16 %v642, %v640
      %v669 = vpack.c.b16 %v645, %v643
      %v670 = vpack.c.b16 %v646, %v644
      %v671 = vpack.c.b16 %v649, %v647
      %v672 = vpack.c.b16 %v650, %v648
      %v673 = vpack.c.b16 %v653, %v651
      %v674 = vpack.c.b16 %v654, %v652
      %v675 = vpack.c.b16 %v657, %v655
      %v676 = vpack.c.b16 %v658, %v656
      %v677 = vpack.c.b16 %v661, %v659
      %v678 = vpack.c.b16 %v662, %v660
      %695 = vmatprep.subr.bf16.mxu0 %v664
      %696 = vmatpush1.bf16.msra.mxu0 %v663
      %697 = vmatprep.subr.bf16.mxu0 %v666
      %698 = vmatpush1.bf16.msra.mxu0 %v665
      %699 = vmatprep.subr.bf16.mxu0 %v668
      %700 = vmatpush1.bf16.msra.mxu0 %v667
      %701 = vmatprep.subr.bf16.mxu0 %v670
      %702 = vmatpush1.bf16.msra.mxu0 %v669
      %703 = vmatprep.subr.bf16.mxu0 %v672
      %704 = vmatpush1.bf16.msra.mxu0 %v671
      %705 = vmatprep.subr.bf16.mxu0 %v674
      %706 = vmatpush1.bf16.msra.mxu0 %v673
      %707 = vmatprep.subr.bf16.mxu0 %v676
      %708 = vmatpush1.bf16.msra.mxu0 %v675
      %709 = vmatprep.subr.bf16.mxu0 %v678
      %710 = vmatpush1.bf16.msra.mxu0 %v677
      %711 = vmatprep.subr.bf16.mxu0 0
      %712 = vmatpush1.bf16.msra.mxu0 0
      %713 = vmatprep.subr.bf16.mxu0 0
      %714 = vmatpush1.bf16.msra.mxu0 0
      %715 = vmatprep.subr.bf16.mxu0 0
      %716 = vmatpush1.bf16.msra.mxu0 0
      %717 = vmatprep.subr.bf16.mxu0 0
      %718 = vmatpush1.bf16.msra.mxu0 0
      %719 = vmatprep.subr.bf16.mxu0 0
      %720 = vmatpush1.bf16.msra.mxu0 0
      %721 = vmatprep.subr.bf16.mxu0 0
      %722 = vmatpush1.bf16.msra.mxu0 0
      %723 = vmatprep.subr.bf16.mxu0 0
      %724 = vmatpush1.bf16.msra.mxu0 0
      %725 = vmatprep.subr.bf16.mxu0 0
      %726 = vmatpush1.bf16.msra.mxu0 0
      %727 = vmatprep.mubr.bf16.mxu0 0
      %728 = vmatmul.mubr.bf16.gmra.mrb[0].mxu0 %v594
      %v729 = vpop.f32.mrb[0].mxu0
      %v730 = vadd.f32 0.0, %v729
      %v731 = vpop.f32.mrb[0].mxu0
      %v732 = vadd.f32 0.0, %v731
      %v733 = vpop.f32.mrb[0].mxu0
      %v734 = vadd.f32 0.0, %v733
      %v735 = vpop.f32.mrb[0].mxu0
      %v736 = vadd.f32 0.0, %v735
      %737 = vmatprep.mubr.bf16.mxu0 0
      %738 = vmatmul.mubr.bf16.gmra.mrb[0].mxu0 %v595
      %v739 = vpop.f32.mrb[0].mxu0
      %v740 = vadd.f32 0.0, %v739
      %v741 = vpop.f32.mrb[0].mxu0
      %v742 = vadd.f32 0.0, %v741
      %v743 = vpop.f32.mrb[0].mxu0
      %v744 = vadd.f32 0.0, %v743
      %v745 = vpop.f32.mrb[0].mxu0
      %v746 = vadd.f32 0.0, %v745
      %747 = vmatprep.mubr.bf16.mxu0 0
      %748 = vmatmul.mubr.bf16.gmra.mrb[0].mxu0 %v596
      %v749 = vpop.f32.mrb[0].mxu0
      %v750 = vadd.f32 0.0, %v749
      %v751 = vpop.f32.mrb[0].mxu0
      %v752 = vadd.f32 0.0, %v751
      %v753 = vpop.f32.mrb[0].mxu0
      %v754 = vadd.f32 0.0, %v753
      %v755 = vpop.f32.mrb[0].mxu0
      %v756 = vadd.f32 0.0, %v755
      %757 = vmatprep.mubr.bf16.mxu0 0
      %758 = vmatmul.mubr.bf16.gmra.mrb[0].mxu0 %v597
      %v759 = vpop.f32.mrb[0].mxu0
      %v760 = vadd.f32 0.0, %v759
      %v761 = vpop.f32.mrb[0].mxu0
      %v762 = vadd.f32 0.0, %v761
      %v763 = vpop.f32.mrb[0].mxu0
      %v764 = vadd.f32 0.0, %v763
      %v765 = vpop.f32.mrb[0].mxu0
      %v766 = vadd.f32 0.0, %v765
      %767 = vdwg.mxu0
      %v768 = vadd.f32 %v523, %v730
      %v769 = vadd.f32 %v525, %v732
      %v770 = vadd.f32 %v527, %v734
      %v771 = vadd.f32 %v529, %v736
      %v772 = vadd.f32 %v533, %v740
      %v773 = vadd.f32 %v535, %v742
      %v774 = vadd.f32 %v537, %v744
      %v775 = vadd.f32 %v539, %v746
      %v776 = vadd.f32 %v543, %v750
      %v777 = vadd.f32 %v545, %v752
      %v778 = vadd.f32 %v547, %v754
      %v779 = vadd.f32 %v549, %v756
      %v780 = vadd.f32 %v553, %v760
      %v781 = vadd.f32 %v555, %v762
      %v782 = vadd.f32 %v557, %v764
      %v783 = vadd.f32 %v559, %v766
      %v784 = vpack.c.bf16 %v149, %v147
      %v785 = vpack.c.bf16 %v153, %v151
      %v786 = vpack.c.bf16 %v157, %v155
      %v787 = vpack.c.bf16 %v161, %v159
      %s788 = scalar_lea.vmem %s1, 384
      %v789 = vld [vmem:[%s788] sm:$0xff]
      %v790 = vld [vmem:[%s788 + $0x8] sm:$0xff]
      %v791 = vld [vmem:[%s788 + $0x10] sm:$0xff]
      %v792 = vld [vmem:[%s788 + $0x18] sm:$0xff]
      %v793 = vld [vmem:[%s788 + $0x20] sm:$0xff]
      %v794 = vld [vmem:[%s788 + $0x28] sm:$0xff]
      %v795 = vld [vmem:[%s788 + $0x30] sm:$0xff]
      %v796 = vld [vmem:[%s788 + $0x38] sm:$0xff]
      %v797 = vld [vmem:[%s788 + $0x40] sm:$0xff]
      %v798 = vld [vmem:[%s788 + $0x48] sm:$0xff]
      %v799 = vld [vmem:[%s788 + $0x50] sm:$0xff]
      %v800 = vld [vmem:[%s788 + $0x58] sm:$0xff]
      %v801 = vld [vmem:[%s788 + $0x60] sm:$0xff]
      %v802 = vld [vmem:[%s788 + $0x68] sm:$0xff]
      %v803 = vld [vmem:[%s788 + $0x70] sm:$0xff]
      %v804 = vld [vmem:[%s788 + $0x78] sm:$0xff]
      %v821 = vunpack.c.l.b16 %v789
      %v822 = vunpack.c.h.b16 %v789
      %v823 = vunpack.c.l.b16 %v790
      %v824 = vunpack.c.h.b16 %v790
      %v825 = vunpack.c.l.b16 %v791
      %v826 = vunpack.c.h.b16 %v791
      %v827 = vunpack.c.l.b16 %v792
      %v828 = vunpack.c.h.b16 %v792
      %v829 = vunpack.c.l.b16 %v793
      %v830 = vunpack.c.h.b16 %v793
      %v831 = vunpack.c.l.b16 %v794
      %v832 = vunpack.c.h.b16 %v794
      %v833 = vunpack.c.l.b16 %v795
      %v834 = vunpack.c.h.b16 %v795
      %v835 = vunpack.c.l.b16 %v796
      %v836 = vunpack.c.h.b16 %v796
      %v837 = vunpack.c.l.b16 %v797
      %v838 = vunpack.c.h.b16 %v797
      %v839 = vunpack.c.l.b16 %v798
      %v840 = vunpack.c.h.b16 %v798
      %v841 = vunpack.c.l.b16 %v799
      %v842 = vunpack.c.h.b16 %v799
      %v843 = vunpack.c.l.b16 %v800
      %v844 = vunpack.c.h.b16 %v800
      %v845 = vunpack.c.l.b16 %v801
      %v846 = vunpack.c.h.b16 %v801
      %v847 = vunpack.c.l.b16 %v802
      %v848 = vunpack.c.h.b16 %v802
      %v849 = vunpack.c.l.b16 %v803
      %v850 = vunpack.c.h.b16 %v803
      %v851 = vunpack.c.l.b16 %v804
      %v852 = vunpack.c.h.b16 %v804
      %v853 = vpack.c.b16 %v823, %v821
      %v854 = vpack.c.b16 %v824, %v822
      %v855 = vpack.c.b16 %v827, %v825
      %v856 = vpack.c.b16 %v828, %v826
      %v857 = vpack.c.b16 %v831, %v829
      %v858 = vpack.c.b16 %v832, %v830
      %v859 = vpack.c.b16 %v835, %v833
      %v860 = vpack.c.b16 %v836, %v834
      %v861 = vpack.c.b16 %v839, %v837
      %v862 = vpack.c.b16 %v840, %v838
      %v863 = vpack.c.b16 %v843, %v841
      %v864 = vpack.c.b16 %v844, %v842
      %v865 = vpack.c.b16 %v847, %v845
      %v866 = vpack.c.b16 %v848, %v846
      %v867 = vpack.c.b16 %v851, %v849
      %v868 = vpack.c.b16 %v852, %v850
      %885 = vmatprep.subr.bf16.mxu0 %v854
      %886 = vmatpush1.bf16.msra.mxu0 %v853
      %887 = vmatprep.subr.bf16.mxu0 %v856
      %888 = vmatpush1.bf16.msra.mxu0 %v855
      %889 = vmatprep.subr.bf16.mxu0 %v858
      %890 = vmatpush1.bf16.msra.mxu0 %v857
      %891 = vmatprep.subr.bf16.mxu0 %v860
      %892 = vmatpush1.bf16.msra.mxu0 %v859
      %893 = vmatprep.subr.bf16.mxu0 %v862
      %894 = vmatpush1.bf16.msra.mxu0 %v861
      %895 = vmatprep.subr.bf16.mxu0 %v864
      %896 = vmatpush1.bf16.msra.mxu0 %v863
      %897 = vmatprep.subr.bf16.mxu0 %v866
      %898 = vmatpush1.bf16.msra.mxu0 %v865
      %899 = vmatprep.subr.bf16.mxu0 %v868
      %900 = vmatpush1.bf16.msra.mxu0 %v867
      %901 = vmatprep.subr.bf16.mxu0 0
      %902 = vmatpush1.bf16.msra.mxu0 0
      %903 = vmatprep.subr.bf16.mxu0 0
      %904 = vmatpush1.bf16.msra.mxu0 0
      %905 = vmatprep.subr.bf16.mxu0 0
      %906 = vmatpush1.bf16.msra.mxu0 0
      %907 = vmatprep.subr.bf16.mxu0 0
      %908 = vmatpush1.bf16.msra.mxu0 0
      %909 = vmatprep.subr.bf16.mxu0 0
      %910 = vmatpush1.bf16.msra.mxu0 0
      %911 = vmatprep.subr.bf16.mxu0 0
      %912 = vmatpush1.bf16.msra.mxu0 0
      %913 = vmatprep.subr.bf16.mxu0 0
      %914 = vmatpush1.bf16.msra.mxu0 0
      %915 = vmatprep.subr.bf16.mxu0 0
      %916 = vmatpush1.bf16.msra.mxu0 0
      %917 = vmatprep.mubr.bf16.mxu0 0
      %918 = vmatmul.mubr.bf16.gmra.mrb[0].mxu0 %v784
      %v919 = vpop.f32.mrb[0].mxu0
      %v920 = vadd.f32 0.0, %v919
      %v921 = vpop.f32.mrb[0].mxu0
      %v922 = vadd.f32 0.0, %v921
      %v923 = vpop.f32.mrb[0].mxu0
      %v924 = vadd.f32 0.0, %v923
      %v925 = vpop.f32.mrb[0].mxu0
      %v926 = vadd.f32 0.0, %v925
      %927 = vmatprep.mubr.bf16.mxu0 0
      %928 = vmatmul.mubr.bf16.gmra.mrb[0].mxu0 %v785
      %v929 = vpop.f32.mrb[0].mxu0
      %v930 = vadd.f32 0.0, %v929
      %v931 = vpop.f32.mrb[0].mxu0
      %v932 = vadd.f32 0.0, %v931
      %v933 = vpop.f32.mrb[0].mxu0
      %v934 = vadd.f32 0.0, %v933
      %v935 = vpop.f32.mrb[0].mxu0
      %v936 = vadd.f32 0.0, %v935
      %937 = vmatprep.mubr.bf16.mxu0 0
      %938 = vmatmul.mubr.bf16.gmra.mrb[0].mxu0 %v786
      %v939 = vpop.f32.mrb[0].mxu0
      %v940 = vadd.f32 0.0, %v939
      %v941 = vpop.f32.mrb[0].mxu0
      %v942 = vadd.f32 0.0, %v941
      %v943 = vpop.f32.mrb[0].mxu0
      %v944 = vadd.f32 0.0, %v943
      %v945 = vpop.f32.mrb[0].mxu0
      %v946 = vadd.f32 0.0, %v945
      %947 = vmatprep.mubr.bf16.mxu0 0
      %948 = vmatmul.mubr.bf16.gmra.mrb[0].mxu0 %v787
      %v949 = vpop.f32.mrb[0].mxu0
      %v950 = vadd.f32 0.0, %v949
      %v951 = vpop.f32.mrb[0].mxu0
      %v952 = vadd.f32 0.0, %v951
      %v953 = vpop.f32.mrb[0].mxu0
      %v954 = vadd.f32 0.0, %v953
      %v955 = vpop.f32.mrb[0].mxu0
      %v956 = vadd.f32 0.0, %v955
      %957 = vdwg.mxu0
      %v958 = vadd.f32 %v768, %v920
      %v959 = vadd.f32 %v769, %v922
      %v960 = vadd.f32 %v770, %v924
      %v961 = vadd.f32 %v771, %v926
      %v962 = vadd.f32 %v772, %v930
      %v963 = vadd.f32 %v773, %v932
      %v964 = vadd.f32 %v774, %v934
      %v965 = vadd.f32 %v775, %v936
      %v966 = vadd.f32 %v776, %v940
      %v967 = vadd.f32 %v777, %v942
      %v968 = vadd.f32 %v778, %v944
      %v969 = vadd.f32 %v779, %v946
      %v970 = vadd.f32 %v780, %v950
      %v971 = vadd.f32 %v781, %v952
      %v972 = vadd.f32 %v782, %v954
      %v973 = vadd.f32 %v783, %v956
      %v976 = vrot.slane %v161, 1
      %v977 = vrot.slane %v162, 1
      %v978 = vsel %vm201, %v976, %v977
      %v980 = vpack.c.bf16 %v210, %v207
      %v981 = vpack.c.bf16 %v216, %v213
      %v982 = vpack.c.bf16 %v222, %v219
      %v983 = vpack.c.bf16 %v978, %v225
      %s984 = scalar_lea.vmem %s1, 512
      %v985 = vld [vmem:[%s984] sm:$0xff]
      %v986 = vld [vmem:[%s984 + $0x8] sm:$0xff]
      %v987 = vld [vmem:[%s984 + $0x10] sm:$0xff]
      %v988 = vld [vmem:[%s984 + $0x18] sm:$0xff]
      %v989 = vld [vmem:[%s984 + $0x20] sm:$0xff]
      %v990 = vld [vmem:[%s984 + $0x28] sm:$0xff]
      %v991 = vld [vmem:[%s984 + $0x30] sm:$0xff]
      %v992 = vld [vmem:[%s984 + $0x38] sm:$0xff]
      %v993 = vld [vmem:[%s984 + $0x40] sm:$0xff]
      %v994 = vld [vmem:[%s984 + $0x48] sm:$0xff]
      %v995 = vld [vmem:[%s984 + $0x50] sm:$0xff]
      %v996 = vld [vmem:[%s984 + $0x58] sm:$0xff]
      %v997 = vld [vmem:[%s984 + $0x60] sm:$0xff]
      %v998 = vld [vmem:[%s984 + $0x68] sm:$0xff]
      %v999 = vld [vmem:[%s984 + $0x70] sm:$0xff]
      %v1000 = vld [vmem:[%s984 + $0x78] sm:$0xff]
      %v1017 = vunpack.c.l.b16 %v985
      %v1018 = vunpack.c.h.b16 %v985
      %v1019 = vunpack.c.l.b16 %v986
      %v1020 = vunpack.c.h.b16 %v986
      %v1021 = vunpack.c.l.b16 %v987
      %v1022 = vunpack.c.h.b16 %v987
      %v1023 = vunpack.c.l.b16 %v988
      %v1024 = vunpack.c.h.b16 %v988
      %v1025 = vunpack.c.l.b16 %v989
      %v1026 = vunpack.c.h.b16 %v989
      %v1027 = vunpack.c.l.b16 %v990
      %v1028 = vunpack.c.h.b16 %v990
      %v1029 = vunpack.c.l.b16 %v991
      %v1030 = vunpack.c.h.b16 %v991
      %v1031 = vunpack.c.l.b16 %v992
      %v1032 = vunpack.c.h.b16 %v992
      %v1033 = vunpack.c.l.b16 %v993
      %v1034 = vunpack.c.h.b16 %v993
      %v1035 = vunpack.c.l.b16 %v994
      %v1036 = vunpack.c.h.b16 %v994
      %v1037 = vunpack.c.l.b16 %v995
      %v1038 = vunpack.c.h.b16 %v995
      %v1039 = vunpack.c.l.b16 %v996
      %v1040 = vunpack.c.h.b16 %v996
      %v1041 = vunpack.c.l.b16 %v997
      %v1042 = vunpack.c.h.b16 %v997
      %v1043 = vunpack.c.l.b16 %v998
      %v1044 = vunpack.c.h.b16 %v998
      %v1045 = vunpack.c.l.b16 %v999
      %v1046 = vunpack.c.h.b16 %v999
      %v1047 = vunpack.c.l.b16 %v1000
      %v1048 = vunpack.c.h.b16 %v1000
      %v1049 = vpack.c.b16 %v1019, %v1017
      %v1050 = vpack.c.b16 %v1020, %v1018
      %v1051 = vpack.c.b16 %v1023, %v1021
      %v1052 = vpack.c.b16 %v1024, %v1022
      %v1053 = vpack.c.b16 %v1027, %v1025
      %v1054 = vpack.c.b16 %v1028, %v1026
      %v1055 = vpack.c.b16 %v1031, %v1029
      %v1056 = vpack.c.b16 %v1032, %v1030
      %v1057 = vpack.c.b16 %v1035, %v1033
      %v1058 = vpack.c.b16 %v1036, %v1034
      %v1059 = vpack.c.b16 %v1039, %v1037
      %v1060 = vpack.c.b16 %v1040, %v1038
      %v1061 = vpack.c.b16 %v1043, %v1041
      %v1062 = vpack.c.b16 %v1044, %v1042
      %v1063 = vpack.c.b16 %v1047, %v1045
      %v1064 = vpack.c.b16 %v1048, %v1046
      %1081 = vmatprep.subr.bf16.mxu0 %v1050
      %1082 = vmatpush1.bf16.msra.mxu0 %v1049
      %1083 = vmatprep.subr.bf16.mxu0 %v1052
      %1084 = vmatpush1.bf16.msra.mxu0 %v1051
      %1085 = vmatprep.subr.bf16.mxu0 %v1054
      %1086 = vmatpush1.bf16.msra.mxu0 %v1053
      %1087 = vmatprep.subr.bf16.mxu0 %v1056
      %1088 = vmatpush1.bf16.msra.mxu0 %v1055
      %1089 = vmatprep.subr.bf16.mxu0 %v1058
      %1090 = vmatpush1.bf16.msra.mxu0 %v1057
      %1091 = vmatprep.subr.bf16.mxu0 %v1060
      %1092 = vmatpush1.bf16.msra.mxu0 %v1059
      %1093 = vmatprep.subr.bf16.mxu0 %v1062
      %1094 = vmatpush1.bf16.msra.mxu0 %v1061
      %1095 = vmatprep.subr.bf16.mxu0 %v1064
      %1096 = vmatpush1.bf16.msra.mxu0 %v1063
      %1097 = vmatprep.subr.bf16.mxu0 0
      %1098 = vmatpush1.bf16.msra.mxu0 0
      %1099 = vmatprep.subr.bf16.mxu0 0
      %1100 = vmatpush1.bf16.msra.mxu0 0
      %1101 = vmatprep.subr.bf16.mxu0 0
      %1102 = vmatpush1.bf16.msra.mxu0 0
      %1103 = vmatprep.subr.bf16.mxu0 0
      %1104 = vmatpush1.bf16.msra.mxu0 0
      %1105 = vmatprep.subr.bf16.mxu0 0
      %1106 = vmatpush1.bf16.msra.mxu0 0
      %1107 = vmatprep.subr.bf16.mxu0 0
      %1108 = vmatpush1.bf16.msra.mxu0 0
      %1109 = vmatprep.subr.bf16.mxu0 0
      %1110 = vmatpush1.bf16.msra.mxu0 0
      %1111 = vmatprep.subr.bf16.mxu0 0
      %1112 = vmatpush1.bf16.msra.mxu0 0
      %1113 = vmatprep.mubr.bf16.mxu0 0
      %1114 = vmatmul.mubr.bf16.gmra.mrb[0].mxu0 %v980
      %v1115 = vpop.f32.mrb[0].mxu0
      %v1116 = vadd.f32 0.0, %v1115
      %v1117 = vpop.f32.mrb[0].mxu0
      %v1118 = vadd.f32 0.0, %v1117
      %v1119 = vpop.f32.mrb[0].mxu0
      %v1120 = vadd.f32 0.0, %v1119
      %v1121 = vpop.f32.mrb[0].mxu0
      %v1122 = vadd.f32 0.0, %v1121
      %1123 = vmatprep.mubr.bf16.mxu0 0
      %1124 = vmatmul.mubr.bf16.gmra.mrb[0].mxu0 %v981
      %v1125 = vpop.f32.mrb[0].mxu0
      %v1126 = vadd.f32 0.0, %v1125
      %v1127 = vpop.f32.mrb[0].mxu0
      %v1128 = vadd.f32 0.0, %v1127
      %v1129 = vpop.f32.mrb[0].mxu0
      %v1130 = vadd.f32 0.0, %v1129
      %v1131 = vpop.f32.mrb[0].mxu0
      %v1132 = vadd.f32 0.0, %v1131
      %1133 = vmatprep.mubr.bf16.mxu0 0
      %1134 = vmatmul.mubr.bf16.gmra.mrb[0].mxu0 %v982
      %v1135 = vpop.f32.mrb[0].mxu0
      %v1136 = vadd.f32 0.0, %v1135
      %v1137 = vpop.f32.mrb[0].mxu0
      %v1138 = vadd.f32 0.0, %v1137
      %v1139 = vpop.f32.mrb[0].mxu0
      %v1140 = vadd.f32 0.0, %v1139
      %v1141 = vpop.f32.mrb[0].mxu0
      %v1142 = vadd.f32 0.0, %v1141
      %1143 = vmatprep.mubr.bf16.mxu0 0
      %1144 = vmatmul.mubr.bf16.gmra.mrb[0].mxu0 %v983
      %v1145 = vpop.f32.mrb[0].mxu0
      %v1146 = vadd.f32 0.0, %v1145
      %v1147 = vpop.f32.mrb[0].mxu0
      %v1148 = vadd.f32 0.0, %v1147
      %v1149 = vpop.f32.mrb[0].mxu0
      %v1150 = vadd.f32 0.0, %v1149
      %v1151 = vpop.f32.mrb[0].mxu0
      %v1152 = vadd.f32 0.0, %v1151
      %1153 = vdwg.mxu0
      %v1154 = vadd.f32 %v958, %v1116
      %v1155 = vadd.f32 %v959, %v1118
      %v1156 = vadd.f32 %v960, %v1120
      %v1157 = vadd.f32 %v961, %v1122
      %v1158 = vadd.f32 %v962, %v1126
      %v1159 = vadd.f32 %v963, %v1128
      %v1160 = vadd.f32 %v964, %v1130
      %v1161 = vadd.f32 %v965, %v1132
      %v1162 = vadd.f32 %v966, %v1136
      %v1163 = vadd.f32 %v967, %v1138
      %v1164 = vadd.f32 %v968, %v1140
      %v1165 = vadd.f32 %v969, %v1142
      %v1166 = vadd.f32 %v970, %v1146
      %v1167 = vadd.f32 %v971, %v1148
      %v1168 = vadd.f32 %v972, %v1150
      %v1169 = vadd.f32 %v973, %v1152
      %v1170 = vrot.slane %v161, 2
      %v1171 = vrot.slane %v162, 2
      %v1172 = vsel %vm561, %v1170, %v1171
      %v1174 = vpack.c.bf16 %v570, %v567
      %v1175 = vpack.c.bf16 %v576, %v573
      %v1176 = vpack.c.bf16 %v582, %v579
      %v1177 = vpack.c.bf16 %v1172, %v585
      %s1178 = scalar_lea.vmem %s1, 640
      %v1179 = vld [vmem:[%s1178] sm:$0xff]
      %v1180 = vld [vmem:[%s1178 + $0x8] sm:$0xff]
      %v1181 = vld [vmem:[%s1178 + $0x10] sm:$0xff]
      %v1182 = vld [vmem:[%s1178 + $0x18] sm:$0xff]
      %v1183 = vld [vmem:[%s1178 + $0x20] sm:$0xff]
      %v1184 = vld [vmem:[%s1178 + $0x28] sm:$0xff]
      %v1185 = vld [vmem:[%s1178 + $0x30] sm:$0xff]
      %v1186 = vld [vmem:[%s1178 + $0x38] sm:$0xff]
      %v1187 = vld [vmem:[%s1178 + $0x40] sm:$0xff]
      %v1188 = vld [vmem:[%s1178 + $0x48] sm:$0xff]
      %v1189 = vld [vmem:[%s1178 + $0x50] sm:$0xff]
      %v1190 = vld [vmem:[%s1178 + $0x58] sm:$0xff]
      %v1191 = vld [vmem:[%s1178 + $0x60] sm:$0xff]
      %v1192 = vld [vmem:[%s1178 + $0x68] sm:$0xff]
      %v1193 = vld [vmem:[%s1178 + $0x70] sm:$0xff]
      %v1194 = vld [vmem:[%s1178 + $0x78] sm:$0xff]
      %v1211 = vunpack.c.l.b16 %v1179
      %v1212 = vunpack.c.h.b16 %v1179
      %v1213 = vunpack.c.l.b16 %v1180
      %v1214 = vunpack.c.h.b16 %v1180
      %v1215 = vunpack.c.l.b16 %v1181
      %v1216 = vunpack.c.h.b16 %v1181
      %v1217 = vunpack.c.l.b16 %v1182
      %v1218 = vunpack.c.h.b16 %v1182
      %v1219 = vunpack.c.l.b16 %v1183
      %v1220 = vunpack.c.h.b16 %v1183
      %v1221 = vunpack.c.l.b16 %v1184
      %v1222 = vunpack.c.h.b16 %v1184
      %v1223 = vunpack.c.l.b16 %v1185
      %v1224 = vunpack.c.h.b16 %v1185
      %v1225 = vunpack.c.l.b16 %v1186
      %v1226 = vunpack.c.h.b16 %v1186
      %v1227 = vunpack.c.l.b16 %v1187
      %v1228 = vunpack.c.h.b16 %v1187
      %v1229 = vunpack.c.l.b16 %v1188
      %v1230 = vunpack.c.h.b16 %v1188
      %v1231 = vunpack.c.l.b16 %v1189
      %v1232 = vunpack.c.h.b16 %v1189
      %v1233 = vunpack.c.l.b16 %v1190
      %v1234 = vunpack.c.h.b16 %v1190
      %v1235 = vunpack.c.l.b16 %v1191
      %v1236 = vunpack.c.h.b16 %v1191
      %v1237 = vunpack.c.l.b16 %v1192
      %v1238 = vunpack.c.h.b16 %v1192
      %v1239 = vunpack.c.l.b16 %v1193
      %v1240 = vunpack.c.h.b16 %v1193
      %v1241 = vunpack.c.l.b16 %v1194
      %v1242 = vunpack.c.h.b16 %v1194
      %v1243 = vpack.c.b16 %v1213, %v1211
      %v1244 = vpack.c.b16 %v1214, %v1212
      %v1245 = vpack.c.b16 %v1217, %v1215
      %v1246 = vpack.c.b16 %v1218, %v1216
      %v1247 = vpack.c.b16 %v1221, %v1219
      %v1248 = vpack.c.b16 %v1222, %v1220
      %v1249 = vpack.c.b16 %v1225, %v1223
      %v1250 = vpack.c.b16 %v1226, %v1224
      %v1251 = vpack.c.b16 %v1229, %v1227
      %v1252 = vpack.c.b16 %v1230, %v1228
      %v1253 = vpack.c.b16 %v1233, %v1231
      %v1254 = vpack.c.b16 %v1234, %v1232
      %v1255 = vpack.c.b16 %v1237, %v1235
      %v1256 = vpack.c.b16 %v1238, %v1236
      %v1257 = vpack.c.b16 %v1241, %v1239
      %v1258 = vpack.c.b16 %v1242, %v1240
      %1275 = vmatprep.subr.bf16.mxu0 %v1244
      %1276 = vmatpush1.bf16.msra.mxu0 %v1243
      %1277 = vmatprep.subr.bf16.mxu0 %v1246
      %1278 = vmatpush1.bf16.msra.mxu0 %v1245
      %1279 = vmatprep.subr.bf16.mxu0 %v1248
      %1280 = vmatpush1.bf16.msra.mxu0 %v1247
      %1281 = vmatprep.subr.bf16.mxu0 %v1250
      %1282 = vmatpush1.bf16.msra.mxu0 %v1249
      %1283 = vmatprep.subr.bf16.mxu0 %v1252
      %1284 = vmatpush1.bf16.msra.mxu0 %v1251
      %1285 = vmatprep.subr.bf16.mxu0 %v1254
      %1286 = vmatpush1.bf16.msra.mxu0 %v1253
      %1287 = vmatprep.subr.bf16.mxu0 %v1256
      %1288 = vmatpush1.bf16.msra.mxu0 %v1255
      %1289 = vmatprep.subr.bf16.mxu0 %v1258
      %1290 = vmatpush1.bf16.msra.mxu0 %v1257
      %1291 = vmatprep.subr.bf16.mxu0 0
      %1292 = vmatpush1.bf16.msra.mxu0 0
      %1293 = vmatprep.subr.bf16.mxu0 0
      %1294 = vmatpush1.bf16.msra.mxu0 0
      %1295 = vmatprep.subr.bf16.mxu0 0
      %1296 = vmatpush1.bf16.msra.mxu0 0
      %1297 = vmatprep.subr.bf16.mxu0 0
      %1298 = vmatpush1.bf16.msra.mxu0 0
      %1299 = vmatprep.subr.bf16.mxu0 0
      %1300 = vmatpush1.bf16.msra.mxu0 0
      %1301 = vmatprep.subr.bf16.mxu0 0
      %1302 = vmatpush1.bf16.msra.mxu0 0
      %1303 = vmatprep.subr.bf16.mxu0 0
      %1304 = vmatpush1.bf16.msra.mxu0 0
      %1305 = vmatprep.subr.bf16.mxu0 0
      %1306 = vmatpush1.bf16.msra.mxu0 0
      %1307 = vmatprep.mubr.bf16.mxu0 0
      %1308 = vmatmul.mubr.bf16.gmra.mrb[0].mxu0 %v1174
      %v1309 = vpop.f32.mrb[0].mxu0
      %v1310 = vadd.f32 0.0, %v1309
      %v1311 = vpop.f32.mrb[0].mxu0
      %v1312 = vadd.f32 0.0, %v1311
      %v1313 = vpop.f32.mrb[0].mxu0
      %v1314 = vadd.f32 0.0, %v1313
      %v1315 = vpop.f32.mrb[0].mxu0
      %v1316 = vadd.f32 0.0, %v1315
      %1317 = vmatprep.mubr.bf16.mxu0 0
      %1318 = vmatmul.mubr.bf16.gmra.mrb[0].mxu0 %v1175
      %v1319 = vpop.f32.mrb[0].mxu0
      %v1320 = vadd.f32 0.0, %v1319
      %v1321 = vpop.f32.mrb[0].mxu0
      %v1322 = vadd.f32 0.0, %v1321
      %v1323 = vpop.f32.mrb[0].mxu0
      %v1324 = vadd.f32 0.0, %v1323
      %v1325 = vpop.f32.mrb[0].mxu0
      %v1326 = vadd.f32 0.0, %v1325
      %1327 = vmatprep.mubr.bf16.mxu0 0
      %1328 = vmatmul.mubr.bf16.gmra.mrb[0].mxu0 %v1176
      %v1329 = vpop.f32.mrb[0].mxu0
      %v1330 = vadd.f32 0.0, %v1329
      %v1331 = vpop.f32.mrb[0].mxu0
      %v1332 = vadd.f32 0.0, %v1331
      %v1333 = vpop.f32.mrb[0].mxu0
      %v1334 = vadd.f32 0.0, %v1333
      %v1335 = vpop.f32.mrb[0].mxu0
      %v1336 = vadd.f32 0.0, %v1335
      %1337 = vmatprep.mubr.bf16.mxu0 0
      %1338 = vmatmul.mubr.bf16.gmra.mrb[0].mxu0 %v1177
      %v1339 = vpop.f32.mrb[0].mxu0
      %v1340 = vadd.f32 0.0, %v1339
      %v1341 = vpop.f32.mrb[0].mxu0
      %v1342 = vadd.f32 0.0, %v1341
      %v1343 = vpop.f32.mrb[0].mxu0
      %v1344 = vadd.f32 0.0, %v1343
      %v1345 = vpop.f32.mrb[0].mxu0
      %v1346 = vadd.f32 0.0, %v1345
      %1347 = vdwg.mxu0
      %v1348 = vadd.f32 %v1154, %v1310
      %v1349 = vadd.f32 %v1155, %v1312
      %v1350 = vadd.f32 %v1156, %v1314
      %v1351 = vadd.f32 %v1157, %v1316
      %v1352 = vadd.f32 %v1158, %v1320
      %v1353 = vadd.f32 %v1159, %v1322
      %v1354 = vadd.f32 %v1160, %v1324
      %v1355 = vadd.f32 %v1161, %v1326
      %v1356 = vadd.f32 %v1162, %v1330
      %v1357 = vadd.f32 %v1163, %v1332
      %v1358 = vadd.f32 %v1164, %v1334
      %v1359 = vadd.f32 %v1165, %v1336
      %v1360 = vadd.f32 %v1166, %v1340
      %v1361 = vadd.f32 %v1167, %v1342
      %v1362 = vadd.f32 %v1168, %v1344
      %v1363 = vadd.f32 %v1169, %v1346
      %v1364 = vpack.c.bf16 %v163, %v161
      %s1365 = scalar_lea.vmem %s1, 768
      %v1366 = vld [vmem:[%s1365] sm:$0xff]
      %v1367 = vld [vmem:[%s1365 + $0x8] sm:$0xff]
      %v1368 = vld [vmem:[%s1365 + $0x10] sm:$0xff]
      %v1369 = vld [vmem:[%s1365 + $0x18] sm:$0xff]
      %v1370 = vld [vmem:[%s1365 + $0x20] sm:$0xff]
      %v1371 = vld [vmem:[%s1365 + $0x28] sm:$0xff]
      %v1372 = vld [vmem:[%s1365 + $0x30] sm:$0xff]
      %v1373 = vld [vmem:[%s1365 + $0x38] sm:$0xff]
      %v1374 = vld [vmem:[%s1365 + $0x40] sm:$0xff]
      %v1375 = vld [vmem:[%s1365 + $0x48] sm:$0xff]
      %v1376 = vld [vmem:[%s1365 + $0x50] sm:$0xff]
      %v1377 = vld [vmem:[%s1365 + $0x58] sm:$0xff]
      %v1378 = vld [vmem:[%s1365 + $0x60] sm:$0xff]
      %v1379 = vld [vmem:[%s1365 + $0x68] sm:$0xff]
      %v1380 = vld [vmem:[%s1365 + $0x70] sm:$0xff]
      %v1381 = vld [vmem:[%s1365 + $0x78] sm:$0xff]
      %v1398 = vunpack.c.l.b16 %v1366
      %v1399 = vunpack.c.h.b16 %v1366
      %v1400 = vunpack.c.l.b16 %v1367
      %v1401 = vunpack.c.h.b16 %v1367
      %v1402 = vunpack.c.l.b16 %v1368
      %v1403 = vunpack.c.h.b16 %v1368
      %v1404 = vunpack.c.l.b16 %v1369
      %v1405 = vunpack.c.h.b16 %v1369
      %v1406 = vunpack.c.l.b16 %v1370
      %v1407 = vunpack.c.h.b16 %v1370
      %v1408 = vunpack.c.l.b16 %v1371
      %v1409 = vunpack.c.h.b16 %v1371
      %v1410 = vunpack.c.l.b16 %v1372
      %v1411 = vunpack.c.h.b16 %v1372
      %v1412 = vunpack.c.l.b16 %v1373
      %v1413 = vunpack.c.h.b16 %v1373
      %v1414 = vunpack.c.l.b16 %v1374
      %v1415 = vunpack.c.h.b16 %v1374
      %v1416 = vunpack.c.l.b16 %v1375
      %v1417 = vunpack.c.h.b16 %v1375
      %v1418 = vunpack.c.l.b16 %v1376
      %v1419 = vunpack.c.h.b16 %v1376
      %v1420 = vunpack.c.l.b16 %v1377
      %v1421 = vunpack.c.h.b16 %v1377
      %v1422 = vunpack.c.l.b16 %v1378
      %v1423 = vunpack.c.h.b16 %v1378
      %v1424 = vunpack.c.l.b16 %v1379
      %v1425 = vunpack.c.h.b16 %v1379
      %v1426 = vunpack.c.l.b16 %v1380
      %v1427 = vunpack.c.h.b16 %v1380
      %v1428 = vunpack.c.l.b16 %v1381
      %v1429 = vunpack.c.h.b16 %v1381
      %v1430 = vpack.c.b16 %v1400, %v1398
      %v1431 = vpack.c.b16 %v1401, %v1399
      %v1432 = vpack.c.b16 %v1404, %v1402
      %v1433 = vpack.c.b16 %v1405, %v1403
      %v1434 = vpack.c.b16 %v1408, %v1406
      %v1435 = vpack.c.b16 %v1409, %v1407
      %v1436 = vpack.c.b16 %v1412, %v1410
      %v1437 = vpack.c.b16 %v1413, %v1411
      %v1438 = vpack.c.b16 %v1416, %v1414
      %v1439 = vpack.c.b16 %v1417, %v1415
      %v1440 = vpack.c.b16 %v1420, %v1418
      %v1441 = vpack.c.b16 %v1421, %v1419
      %v1442 = vpack.c.b16 %v1424, %v1422
      %v1443 = vpack.c.b16 %v1425, %v1423
      %v1444 = vpack.c.b16 %v1428, %v1426
      %v1445 = vpack.c.b16 %v1429, %v1427
      %1462 = vmatprep.subr.bf16.mxu0 %v1431
      %1463 = vmatpush1.bf16.msra.mxu0 %v1430
      %1464 = vmatprep.subr.bf16.mxu0 %v1433
      %1465 = vmatpush1.bf16.msra.mxu0 %v1432
      %1466 = vmatprep.subr.bf16.mxu0 %v1435
      %1467 = vmatpush1.bf16.msra.mxu0 %v1434
      %1468 = vmatprep.subr.bf16.mxu0 %v1437
      %1469 = vmatpush1.bf16.msra.mxu0 %v1436
      %1470 = vmatprep.subr.bf16.mxu0 %v1439
      %1471 = vmatpush1.bf16.msra.mxu0 %v1438
      %1472 = vmatprep.subr.bf16.mxu0 %v1441
      %1473 = vmatpush1.bf16.msra.mxu0 %v1440
      %1474 = vmatprep.subr.bf16.mxu0 %v1443
      %1475 = vmatpush1.bf16.msra.mxu0 %v1442
      %1476 = vmatprep.subr.bf16.mxu0 %v1445
      %1477 = vmatpush1.bf16.msra.mxu0 %v1444
      %1478 = vmatprep.subr.bf16.mxu0 0
      %1479 = vmatpush1.bf16.msra.mxu0 0
      %1480 = vmatprep.subr.bf16.mxu0 0
      %1481 = vmatpush1.bf16.msra.mxu0 0
      %1482 = vmatprep.subr.bf16.mxu0 0
      %1483 = vmatpush1.bf16.msra.mxu0 0
      %1484 = vmatprep.subr.bf16.mxu0 0
      %1485 = vmatpush1.bf16.msra.mxu0 0
      %1486 = vmatprep.subr.bf16.mxu0 0
      %1487 = vmatpush1.bf16.msra.mxu0 0
      %1488 = vmatprep.subr.bf16.mxu0 0
      %1489 = vmatpush1.bf16.msra.mxu0 0
      %1490 = vmatprep.subr.bf16.mxu0 0
      %1491 = vmatpush1.bf16.msra.mxu0 0
      %1492 = vmatprep.subr.bf16.mxu0 0
      %1493 = vmatpush1.bf16.msra.mxu0 0
      %1494 = vmatprep.mubr.bf16.mxu0 0
      %1495 = vmatmul.mubr.bf16.gmra.mrb[0].mxu0 %v166
      %v1496 = vpop.f32.mrb[0].mxu0
      %v1497 = vadd.f32 0.0, %v1496
      %v1498 = vpop.f32.mrb[0].mxu0
      %v1499 = vadd.f32 0.0, %v1498
      %v1500 = vpop.f32.mrb[0].mxu0
      %v1501 = vadd.f32 0.0, %v1500
      %v1502 = vpop.f32.mrb[0].mxu0
      %v1503 = vadd.f32 0.0, %v1502
      %1504 = vmatprep.mubr.bf16.mxu0 0
      %1505 = vmatmul.mubr.bf16.gmra.mrb[0].mxu0 %v167
      %v1506 = vpop.f32.mrb[0].mxu0
      %v1507 = vadd.f32 0.0, %v1506
      %v1508 = vpop.f32.mrb[0].mxu0
      %v1509 = vadd.f32 0.0, %v1508
      %v1510 = vpop.f32.mrb[0].mxu0
      %v1511 = vadd.f32 0.0, %v1510
      %v1512 = vpop.f32.mrb[0].mxu0
      %v1513 = vadd.f32 0.0, %v1512
      %1514 = vmatprep.mubr.bf16.mxu0 0
      %1515 = vmatmul.mubr.bf16.gmra.mrb[0].mxu0 %v168
      %v1516 = vpop.f32.mrb[0].mxu0
      %v1517 = vadd.f32 0.0, %v1516
      %v1518 = vpop.f32.mrb[0].mxu0
      %v1519 = vadd.f32 0.0, %v1518
      %v1520 = vpop.f32.mrb[0].mxu0
      %v1521 = vadd.f32 0.0, %v1520
      %v1522 = vpop.f32.mrb[0].mxu0
      %v1523 = vadd.f32 0.0, %v1522
      %1524 = vmatprep.mubr.bf16.mxu0 0
      %1525 = vmatmul.mubr.bf16.gmra.mrb[0].mxu0 %v1364
      %v1526 = vpop.f32.mrb[0].mxu0
      %v1527 = vadd.f32 0.0, %v1526
      %v1528 = vpop.f32.mrb[0].mxu0
      %v1529 = vadd.f32 0.0, %v1528
      %v1530 = vpop.f32.mrb[0].mxu0
      %v1531 = vadd.f32 0.0, %v1530
      %v1532 = vpop.f32.mrb[0].mxu0
      %v1533 = vadd.f32 0.0, %v1532
      %1534 = vdwg.mxu0
      %v1535 = vadd.f32 %v1348, %v1497
      %v1536 = vadd.f32 %v1349, %v1499
      %v1537 = vadd.f32 %v1350, %v1501
      %v1538 = vadd.f32 %v1351, %v1503
      %v1539 = vadd.f32 %v1352, %v1507
      %v1540 = vadd.f32 %v1353, %v1509
      %v1541 = vadd.f32 %v1354, %v1511
      %v1542 = vadd.f32 %v1355, %v1513
      %v1543 = vadd.f32 %v1356, %v1517
      %v1544 = vadd.f32 %v1357, %v1519
      %v1545 = vadd.f32 %v1358, %v1521
      %v1546 = vadd.f32 %v1359, %v1523
      %v1547 = vadd.f32 %v1360, %v1527
      %v1548 = vadd.f32 %v1361, %v1529
      %v1549 = vadd.f32 %v1362, %v1531
      %v1550 = vadd.f32 %v1363, %v1533
      %v1553 = vrot.slane %v163, 1
      %v1554 = vrot.slane %v164, 1
      %v1555 = vsel %vm201, %v1553, %v1554
      %v1557 = vpack.c.bf16 %v1555, %v978
      %s1558 = scalar_lea.vmem %s1, 896
      %v1559 = vld [vmem:[%s1558] sm:$0xff]
      %v1560 = vld [vmem:[%s1558 + $0x8] sm:$0xff]
      %v1561 = vld [vmem:[%s1558 + $0x10] sm:$0xff]
      %v1562 = vld [vmem:[%s1558 + $0x18] sm:$0xff]
      %v1563 = vld [vmem:[%s1558 + $0x20] sm:$0xff]
      %v1564 = vld [vmem:[%s1558 + $0x28] sm:$0xff]
      %v1565 = vld [vmem:[%s1558 + $0x30] sm:$0xff]
      %v1566 = vld [vmem:[%s1558 + $0x38] sm:$0xff]
      %v1567 = vld [vmem:[%s1558 + $0x40] sm:$0xff]
      %v1568 = vld [vmem:[%s1558 + $0x48] sm:$0xff]
      %v1569 = vld [vmem:[%s1558 + $0x50] sm:$0xff]
      %v1570 = vld [vmem:[%s1558 + $0x58] sm:$0xff]
      %v1571 = vld [vmem:[%s1558 + $0x60] sm:$0xff]
      %v1572 = vld [vmem:[%s1558 + $0x68] sm:$0xff]
      %v1573 = vld [vmem:[%s1558 + $0x70] sm:$0xff]
      %v1574 = vld [vmem:[%s1558 + $0x78] sm:$0xff]
      %v1591 = vunpack.c.l.b16 %v1559
      %v1592 = vunpack.c.h.b16 %v1559
      %v1593 = vunpack.c.l.b16 %v1560
      %v1594 = vunpack.c.h.b16 %v1560
      %v1595 = vunpack.c.l.b16 %v1561
      %v1596 = vunpack.c.h.b16 %v1561
      %v1597 = vunpack.c.l.b16 %v1562
      %v1598 = vunpack.c.h.b16 %v1562
      %v1599 = vunpack.c.l.b16 %v1563
      %v1600 = vunpack.c.h.b16 %v1563
      %v1601 = vunpack.c.l.b16 %v1564
      %v1602 = vunpack.c.h.b16 %v1564
      %v1603 = vunpack.c.l.b16 %v1565
      %v1604 = vunpack.c.h.b16 %v1565
      %v1605 = vunpack.c.l.b16 %v1566
      %v1606 = vunpack.c.h.b16 %v1566
      %v1607 = vunpack.c.l.b16 %v1567
      %v1608 = vunpack.c.h.b16 %v1567
      %v1609 = vunpack.c.l.b16 %v1568
      %v1610 = vunpack.c.h.b16 %v1568
      %v1611 = vunpack.c.l.b16 %v1569
      %v1612 = vunpack.c.h.b16 %v1569
      %v1613 = vunpack.c.l.b16 %v1570
      %v1614 = vunpack.c.h.b16 %v1570
      %v1615 = vunpack.c.l.b16 %v1571
      %v1616 = vunpack.c.h.b16 %v1571
      %v1617 = vunpack.c.l.b16 %v1572
      %v1618 = vunpack.c.h.b16 %v1572
      %v1619 = vunpack.c.l.b16 %v1573
      %v1620 = vunpack.c.h.b16 %v1573
      %v1621 = vunpack.c.l.b16 %v1574
      %v1622 = vunpack.c.h.b16 %v1574
      %v1623 = vpack.c.b16 %v1593, %v1591
      %v1624 = vpack.c.b16 %v1594, %v1592
      %v1625 = vpack.c.b16 %v1597, %v1595
      %v1626 = vpack.c.b16 %v1598, %v1596
      %v1627 = vpack.c.b16 %v1601, %v1599
      %v1628 = vpack.c.b16 %v1602, %v1600
      %v1629 = vpack.c.b16 %v1605, %v1603
      %v1630 = vpack.c.b16 %v1606, %v1604
      %v1631 = vpack.c.b16 %v1609, %v1607
      %v1632 = vpack.c.b16 %v1610, %v1608
      %v1633 = vpack.c.b16 %v1613, %v1611
      %v1634 = vpack.c.b16 %v1614, %v1612
      %v1635 = vpack.c.b16 %v1617, %v1615
      %v1636 = vpack.c.b16 %v1618, %v1616
      %v1637 = vpack.c.b16 %v1621, %v1619
      %v1638 = vpack.c.b16 %v1622, %v1620
      %1655 = vmatprep.subr.bf16.mxu0 %v1624
      %1656 = vmatpush1.bf16.msra.mxu0 %v1623
      %1657 = vmatprep.subr.bf16.mxu0 %v1626
      %1658 = vmatpush1.bf16.msra.mxu0 %v1625
      %1659 = vmatprep.subr.bf16.mxu0 %v1628
      %1660 = vmatpush1.bf16.msra.mxu0 %v1627
      %1661 = vmatprep.subr.bf16.mxu0 %v1630
      %1662 = vmatpush1.bf16.msra.mxu0 %v1629
      %1663 = vmatprep.subr.bf16.mxu0 %v1632
      %1664 = vmatpush1.bf16.msra.mxu0 %v1631
      %1665 = vmatprep.subr.bf16.mxu0 %v1634
      %1666 = vmatpush1.bf16.msra.mxu0 %v1633
      %1667 = vmatprep.subr.bf16.mxu0 %v1636
      %1668 = vmatpush1.bf16.msra.mxu0 %v1635
      %1669 = vmatprep.subr.bf16.mxu0 %v1638
      %1670 = vmatpush1.bf16.msra.mxu0 %v1637
      %1671 = vmatprep.subr.bf16.mxu0 0
      %1672 = vmatpush1.bf16.msra.mxu0 0
      %1673 = vmatprep.subr.bf16.mxu0 0
      %1674 = vmatpush1.bf16.msra.mxu0 0
      %1675 = vmatprep.subr.bf16.mxu0 0
      %1676 = vmatpush1.bf16.msra.mxu0 0
      %1677 = vmatprep.subr.bf16.mxu0 0
      %1678 = vmatpush1.bf16.msra.mxu0 0
      %1679 = vmatprep.subr.bf16.mxu0 0
      %1680 = vmatpush1.bf16.msra.mxu0 0
      %1681 = vmatprep.subr.bf16.mxu0 0
      %1682 = vmatpush1.bf16.msra.mxu0 0
      %1683 = vmatprep.subr.bf16.mxu0 0
      %1684 = vmatpush1.bf16.msra.mxu0 0
      %1685 = vmatprep.subr.bf16.mxu0 0
      %1686 = vmatpush1.bf16.msra.mxu0 0
      %1687 = vmatprep.mubr.bf16.mxu0 0
      %1688 = vmatmul.mubr.bf16.gmra.mrb[0].mxu0 %v235
      %v1689 = vpop.f32.mrb[0].mxu0
      %v1690 = vadd.f32 0.0, %v1689
      %v1691 = vpop.f32.mrb[0].mxu0
      %v1692 = vadd.f32 0.0, %v1691
      %v1693 = vpop.f32.mrb[0].mxu0
      %v1694 = vadd.f32 0.0, %v1693
      %v1695 = vpop.f32.mrb[0].mxu0
      %v1696 = vadd.f32 0.0, %v1695
      %1697 = vmatprep.mubr.bf16.mxu0 0
      %1698 = vmatmul.mubr.bf16.gmra.mrb[0].mxu0 %v236
      %v1699 = vpop.f32.mrb[0].mxu0
      %v1700 = vadd.f32 0.0, %v1699
      %v1701 = vpop.f32.mrb[0].mxu0
      %v1702 = vadd.f32 0.0, %v1701
      %v1703 = vpop.f32.mrb[0].mxu0
      %v1704 = vadd.f32 0.0, %v1703
      %v1705 = vpop.f32.mrb[0].mxu0
      %v1706 = vadd.f32 0.0, %v1705
      %1707 = vmatprep.mubr.bf16.mxu0 0
      %1708 = vmatmul.mubr.bf16.gmra.mrb[0].mxu0 %v237
      %v1709 = vpop.f32.mrb[0].mxu0
      %v1710 = vadd.f32 0.0, %v1709
      %v1711 = vpop.f32.mrb[0].mxu0
      %v1712 = vadd.f32 0.0, %v1711
      %v1713 = vpop.f32.mrb[0].mxu0
      %v1714 = vadd.f32 0.0, %v1713
      %v1715 = vpop.f32.mrb[0].mxu0
      %v1716 = vadd.f32 0.0, %v1715
      %1717 = vmatprep.mubr.bf16.mxu0 0
      %1718 = vmatmul.mubr.bf16.gmra.mrb[0].mxu0 %v1557
      %v1719 = vpop.f32.mrb[0].mxu0
      %v1720 = vadd.f32 0.0, %v1719
      %v1721 = vpop.f32.mrb[0].mxu0
      %v1722 = vadd.f32 0.0, %v1721
      %v1723 = vpop.f32.mrb[0].mxu0
      %v1724 = vadd.f32 0.0, %v1723
      %v1725 = vpop.f32.mrb[0].mxu0
      %v1726 = vadd.f32 0.0, %v1725
      %1727 = vdwg.mxu0
      %v1728 = vadd.f32 %v1535, %v1690
      %v1729 = vadd.f32 %v1536, %v1692
      %v1730 = vadd.f32 %v1537, %v1694
      %v1731 = vadd.f32 %v1538, %v1696
      %v1732 = vadd.f32 %v1539, %v1700
      %v1733 = vadd.f32 %v1540, %v1702
      %v1734 = vadd.f32 %v1541, %v1704
      %v1735 = vadd.f32 %v1542, %v1706
      %v1736 = vadd.f32 %v1543, %v1710
      %v1737 = vadd.f32 %v1544, %v1712
      %v1738 = vadd.f32 %v1545, %v1714
      %v1739 = vadd.f32 %v1546, %v1716
      %v1740 = vadd.f32 %v1547, %v1720
      %v1741 = vadd.f32 %v1548, %v1722
      %v1742 = vadd.f32 %v1549, %v1724
      %v1743 = vadd.f32 %v1550, %v1726
      %v1744 = vrot.slane %v163, 2
      %v1745 = vrot.slane %v164, 2
      %v1746 = vsel %vm561, %v1744, %v1745
      %v1748 = vpack.c.bf16 %v1746, %v1172
      %s1749 = scalar_lea.vmem %s1, 1024
      %v1750 = vld [vmem:[%s1749] sm:$0xff]
      %v1751 = vld [vmem:[%s1749 + $0x8] sm:$0xff]
      %v1752 = vld [vmem:[%s1749 + $0x10] sm:$0xff]
      %v1753 = vld [vmem:[%s1749 + $0x18] sm:$0xff]
      %v1754 = vld [vmem:[%s1749 + $0x20] sm:$0xff]
      %v1755 = vld [vmem:[%s1749 + $0x28] sm:$0xff]
      %v1756 = vld [vmem:[%s1749 + $0x30] sm:$0xff]
      %v1757 = vld [vmem:[%s1749 + $0x38] sm:$0xff]
      %v1758 = vld [vmem:[%s1749 + $0x40] sm:$0xff]
      %v1759 = vld [vmem:[%s1749 + $0x48] sm:$0xff]
      %v1760 = vld [vmem:[%s1749 + $0x50] sm:$0xff]
      %v1761 = vld [vmem:[%s1749 + $0x58] sm:$0xff]
      %v1762 = vld [vmem:[%s1749 + $0x60] sm:$0xff]
      %v1763 = vld [vmem:[%s1749 + $0x68] sm:$0xff]
      %v1764 = vld [vmem:[%s1749 + $0x70] sm:$0xff]
      %v1765 = vld [vmem:[%s1749 + $0x78] sm:$0xff]
      %v1782 = vunpack.c.l.b16 %v1750
      %v1783 = vunpack.c.h.b16 %v1750
      %v1784 = vunpack.c.l.b16 %v1751
      %v1785 = vunpack.c.h.b16 %v1751
      %v1786 = vunpack.c.l.b16 %v1752
      %v1787 = vunpack.c.h.b16 %v1752
      %v1788 = vunpack.c.l.b16 %v1753
      %v1789 = vunpack.c.h.b16 %v1753
      %v1790 = vunpack.c.l.b16 %v1754
      %v1791 = vunpack.c.h.b16 %v1754
      %v1792 = vunpack.c.l.b16 %v1755
      %v1793 = vunpack.c.h.b16 %v1755
      %v1794 = vunpack.c.l.b16 %v1756
      %v1795 = vunpack.c.h.b16 %v1756
      %v1796 = vunpack.c.l.b16 %v1757
      %v1797 = vunpack.c.h.b16 %v1757
      %v1798 = vunpack.c.l.b16 %v1758
      %v1799 = vunpack.c.h.b16 %v1758
      %v1800 = vunpack.c.l.b16 %v1759
      %v1801 = vunpack.c.h.b16 %v1759
      %v1802 = vunpack.c.l.b16 %v1760
      %v1803 = vunpack.c.h.b16 %v1760
      %v1804 = vunpack.c.l.b16 %v1761
      %v1805 = vunpack.c.h.b16 %v1761
      %v1806 = vunpack.c.l.b16 %v1762
      %v1807 = vunpack.c.h.b16 %v1762
      %v1808 = vunpack.c.l.b16 %v1763
      %v1809 = vunpack.c.h.b16 %v1763
      %v1810 = vunpack.c.l.b16 %v1764
      %v1811 = vunpack.c.h.b16 %v1764
      %v1812 = vunpack.c.l.b16 %v1765
      %v1813 = vunpack.c.h.b16 %v1765
      %v1814 = vpack.c.b16 %v1784, %v1782
      %v1815 = vpack.c.b16 %v1785, %v1783
      %v1816 = vpack.c.b16 %v1788, %v1786
      %v1817 = vpack.c.b16 %v1789, %v1787
      %v1818 = vpack.c.b16 %v1792, %v1790
      %v1819 = vpack.c.b16 %v1793, %v1791
      %v1820 = vpack.c.b16 %v1796, %v1794
      %v1821 = vpack.c.b16 %v1797, %v1795
      %v1822 = vpack.c.b16 %v1800, %v1798
      %v1823 = vpack.c.b16 %v1801, %v1799
      %v1824 = vpack.c.b16 %v1804, %v1802
      %v1825 = vpack.c.b16 %v1805, %v1803
      %v1826 = vpack.c.b16 %v1808, %v1806
      %v1827 = vpack.c.b16 %v1809, %v1807
      %v1828 = vpack.c.b16 %v1812, %v1810
      %v1829 = vpack.c.b16 %v1813, %v1811
      %1846 = vmatprep.subr.bf16.mxu0 %v1815
      %1847 = vmatpush1.bf16.msra.mxu0 %v1814
      %1848 = vmatprep.subr.bf16.mxu0 %v1817
      %1849 = vmatpush1.bf16.msra.mxu0 %v1816
      %1850 = vmatprep.subr.bf16.mxu0 %v1819
      %1851 = vmatpush1.bf16.msra.mxu0 %v1818
      %1852 = vmatprep.subr.bf16.mxu0 %v1821
      %1853 = vmatpush1.bf16.msra.mxu0 %v1820
      %1854 = vmatprep.subr.bf16.mxu0 %v1823
      %1855 = vmatpush1.bf16.msra.mxu0 %v1822
      %1856 = vmatprep.subr.bf16.mxu0 %v1825
      %1857 = vmatpush1.bf16.msra.mxu0 %v1824
      %1858 = vmatprep.subr.bf16.mxu0 %v1827
      %1859 = vmatpush1.bf16.msra.mxu0 %v1826
      %1860 = vmatprep.subr.bf16.mxu0 %v1829
      %1861 = vmatpush1.bf16.msra.mxu0 %v1828
      %1862 = vmatprep.subr.bf16.mxu0 0
      %1863 = vmatpush1.bf16.msra.mxu0 0
      %1864 = vmatprep.subr.bf16.mxu0 0
      %1865 = vmatpush1.bf16.msra.mxu0 0
      %1866 = vmatprep.subr.bf16.mxu0 0
      %1867 = vmatpush1.bf16.msra.mxu0 0
      %1868 = vmatprep.subr.bf16.mxu0 0
      %1869 = vmatpush1.bf16.msra.mxu0 0
      %1870 = vmatprep.subr.bf16.mxu0 0
      %1871 = vmatpush1.bf16.msra.mxu0 0
      %1872 = vmatprep.subr.bf16.mxu0 0
      %1873 = vmatpush1.bf16.msra.mxu0 0
      %1874 = vmatprep.subr.bf16.mxu0 0
      %1875 = vmatpush1.bf16.msra.mxu0 0
      %1876 = vmatprep.subr.bf16.mxu0 0
      %1877 = vmatpush1.bf16.msra.mxu0 0
      %1878 = vmatprep.mubr.bf16.mxu0 0
      %1879 = vmatmul.mubr.bf16.gmra.mrb[0].mxu0 %v595
      %v1880 = vpop.f32.mrb[0].mxu0
      %v1881 = vadd.f32 0.0, %v1880
      %v1882 = vpop.f32.mrb[0].mxu0
      %v1883 = vadd.f32 0.0, %v1882
      %v1884 = vpop.f32.mrb[0].mxu0
      %v1885 = vadd.f32 0.0, %v1884
      %v1886 = vpop.f32.mrb[0].mxu0
      %v1887 = vadd.f32 0.0, %v1886
      %1888 = vmatprep.mubr.bf16.mxu0 0
      %1889 = vmatmul.mubr.bf16.gmra.mrb[0].mxu0 %v596
      %v1890 = vpop.f32.mrb[0].mxu0
      %v1891 = vadd.f32 0.0, %v1890
      %v1892 = vpop.f32.mrb[0].mxu0
      %v1893 = vadd.f32 0.0, %v1892
      %v1894 = vpop.f32.mrb[0].mxu0
      %v1895 = vadd.f32 0.0, %v1894
      %v1896 = vpop.f32.mrb[0].mxu0
      %v1897 = vadd.f32 0.0, %v1896
      %1898 = vmatprep.mubr.bf16.mxu0 0
      %1899 = vmatmul.mubr.bf16.gmra.mrb[0].mxu0 %v597
      %v1900 = vpop.f32.mrb[0].mxu0
      %v1901 = vadd.f32 0.0, %v1900
      %v1902 = vpop.f32.mrb[0].mxu0
      %v1903 = vadd.f32 0.0, %v1902
      %v1904 = vpop.f32.mrb[0].mxu0
      %v1905 = vadd.f32 0.0, %v1904
      %v1906 = vpop.f32.mrb[0].mxu0
      %v1907 = vadd.f32 0.0, %v1906
      %1908 = vmatprep.mubr.bf16.mxu0 0
      %1909 = vmatmul.mubr.bf16.gmra.mrb[0].mxu0 %v1748
      %v1910 = vpop.f32.mrb[0].mxu0
      %v1911 = vadd.f32 0.0, %v1910
      %v1912 = vpop.f32.mrb[0].mxu0
      %v1913 = vadd.f32 0.0, %v1912
      %v1914 = vpop.f32.mrb[0].mxu0
      %v1915 = vadd.f32 0.0, %v1914
      %v1916 = vpop.f32.mrb[0].mxu0
      %v1917 = vadd.f32 0.0, %v1916
      %1918 = vdwg.mxu0
      %v1919 = vadd.f32 %v1728, %v1881
      %v1920 = vadd.f32 %v1729, %v1883
      %v1921 = vadd.f32 %v1730, %v1885
      %v1922 = vadd.f32 %v1731, %v1887
      %v1923 = vadd.f32 %v1732, %v1891
      %v1924 = vadd.f32 %v1733, %v1893
      %v1925 = vadd.f32 %v1734, %v1895
      %v1926 = vadd.f32 %v1735, %v1897
      %v1927 = vadd.f32 %v1736, %v1901
      %v1928 = vadd.f32 %v1737, %v1903
      %v1929 = vadd.f32 %v1738, %v1905
      %v1930 = vadd.f32 %v1739, %v1907
      %v1931 = vadd.f32 %v1740, %v1911
      %v1932 = vadd.f32 %v1741, %v1913
      %v1933 = vadd.f32 %v1742, %v1915
      %v1934 = vadd.f32 %v1743, %v1917
      %1935 = vst [vmem:[%s143] sm:$0xff] %v1919
      %1936 = vst [vmem:[%s143 + $0x8] sm:$0xff] %v1920
      %1937 = vst [vmem:[%s143 + $0x10] sm:$0xff] %v1921
      %1938 = vst [vmem:[%s143 + $0x18] sm:$0xff] %v1922
      %1939 = vst [vmem:[%s143 + $0x20] sm:$0xff] %v1923
      %1940 = vst [vmem:[%s143 + $0x28] sm:$0xff] %v1924
      %1941 = vst [vmem:[%s143 + $0x30] sm:$0xff] %v1925
      %1942 = vst [vmem:[%s143 + $0x38] sm:$0xff] %v1926
      %1943 = vst [vmem:[%s143 + $0x40] sm:$0xff] %v1927
      %1944 = vst [vmem:[%s143 + $0x48] sm:$0xff] %v1928
      %1945 = vst [vmem:[%s143 + $0x50] sm:$0xff] %v1929
      %1946 = vst [vmem:[%s143 + $0x58] sm:$0xff] %v1930
      %1947 = vst [vmem:[%s143 + $0x60] sm:$0xff] %v1931
      %1948 = vst [vmem:[%s143 + $0x68] sm:$0xff] %v1932
      %1949 = vst [vmem:[%s143 + $0x70] sm:$0xff] %v1933
      %1950 = vst [vmem:[%s143 + $0x78] sm:$0xff] %v1934
      %p1951 = scmp.lt.s32.totalorder %s13, 1
      %s1952 = scalar_select %p1951, %s13, 1
      %s1953 = smul.addr %s1952, 16
      %s1954 = smul.addr %s1953, 8
      %s1955 = scalar_lea.vmem %s2, %s1954
      // Predicated region
      $region29: #{octave_conv_forward.7} parent=27 // pred_check
        %p1956 = pneg %p78
      $region30: #{octave_conv_forward.7} parent=27 // pred_check_branch
        %1958 = sbr.rel (%p1956) target = $region32
      $region31: #{octave_conv_forward.7} parent=27 // pred_region
        _
      $region32: #{octave_conv_forward.7} parent=27 // pred_fallthru
        _
    $region28: #{octave_conv_forward.7} parent=5 // pred_fallthru
      _
    %p1959 = scmp.le.s32.totalorder 2, %s8
    // Predicated region
    $region33: #{octave_conv_forward.7} parent=5 // pred_check
      %p1960 = pneg %p1959
    $region34: #{octave_conv_forward.7} parent=5 // pred_check_branch
      %1962 = sbr.rel (%p1960) target = $region36
    $region35: #{octave_conv_forward.7} parent=5 // pred_region
      %s1963 = ssub.s32 %s8, 2
      // Predicated region
      $region37: #{octave_conv_forward.7} parent=35 // pred_check
        %p1964 = pneg %p84
      $region38: #{octave_conv_forward.7} parent=35 // pred_check_branch
        %1966 = sbr.rel (%p1964) target = $region40
      $region39: #{octave_conv_forward.7} parent=35 // pred_region
        %p1967 = scmp.lt.s32.totalorder %s14, 1
        %s1968 = scalar_select %p1967, %s14, 1
        %s1969 = smul.addr %s1968, 16
        %s1970 = smul.addr %s1969, 8
        %s1971 = scalar_lea.vmem %s2, %s1970
      $region40: #{octave_conv_forward.7} parent=35 // pred_fallthru
        _
    $region36: #{octave_conv_forward.7} parent=5 // pred_fallthru
      _
  $region6: #{octave_conv_forward.7} parent=0 // loop_footer
    %s12 = sadd.s32 1, %s8
  $region7: #{octave_conv_forward.7} parent=0 // loop_footer_branch
    %7 = sbr.rel target = $region3
  $region8: #{octave_conv_forward.7} parent=0 // loop_exit
    _

// kernel: octave_conv_forward.8
$region0: #{octave_conv_forward.8}
  #allocation0 [shape = 'u32[]', space=smem, size = 0x4, offset = 0x4, fixed_abs, tag = 'smem constant byte address 0x4 - core index']
  #allocation1 [shape = 'u32[144,128]{1,0:T(1,128)}', space=vmem, size = 0x12000, scoped, tag = 'internal scratch']
  %s0 = inlined_call_operand.vmem [shape: f32[2,256,128], index: 0, kind: input, shape index: {}]
  %s1 = inlined_call_operand.vmem [shape: f32[2,256,128], index: 1, kind: input, shape index: {}]
  %s2 = inlined_call_operand.vmem [shape: bf16[128,128], index: 2, kind: input, shape index: {}]
  %s3 = inlined_call_operand.vmem [shape: bf16[128,128], index: 3, kind: input, shape index: {}]
  %s4 = inlined_call_operand.vmem [shape: f32[1,128], index: 4, kind: input, shape index: {}]
  %s5 = inlined_call_operand.vmem [shape: f32[1,128], index: 5, kind: input, shape index: {}]
  %s6 = inlined_call_operand.vmem [shape: f32[1,128], index: 6, kind: input, shape index: {}]
  %s7 = inlined_call_operand.vmem [shape: f32[2,256,128], index: 7, kind: output, shape index: {}]
  %s8 = sld [smem:[#allocation0]]
  $region61: #{octave_conv_forward.8} parent=0
    _
  %s10 = ssub.s32 1, %s8
  %s11 = scalar_select 0, %s10, %s8
  loop: start=0, step=1, limit=4
  $region2: #{octave_conv_forward.8} parent=0 // loop_pre_header
    _
  $region3: #{octave_conv_forward.8} parent=0 // loop_header
    %s13 = sphi 0, %s17
    %p14 = scmp.ge.s32.totalorder %s13, 4
    %s23 = sphi 0, %s25
    %s26 = sphi 0, %s23
    %s27 = sphi 0, %s26
    %s43 = sphi 0, %s27
    %s49 = sphi 0, %s51
    %s52 = sphi 0, %s49
    %s53 = sphi 0, %s52
    %s69 = sphi 0, %s53
    %s73 = sphi 0, %s73
    %s75 = sphi 0, %s73
    %s76 = sphi 0, %s75
    %s90 = sphi 0, %s76
    %s94 = sphi 0, %s94
    %s96 = sphi 0, %s94
    %s97 = sphi 0, %s96
    %s111 = sphi 0, %s97
    %s115 = sphi 0, %s115
    %s117 = sphi 0, %s115
    %s118 = sphi 0, %s117
    %s132 = sphi 0, %s118
    %s136 = sphi 0, %s136
    %s138 = sphi 0, %s136
    %s139 = sphi 0, %s138
    %s153 = sphi 0, %s139
    %s157 = sphi 0, %s157
    %s159 = sphi 0, %s157
    %s160 = sphi 0, %s159
    %s174 = sphi 0, %s160
    %s180 = sphi 0, %s182
    %s183 = sphi 0, %s180
    %s184 = sphi 0, %s183
    %s200 = sphi 0, %s184
  $region4: #{octave_conv_forward.8} parent=0 // loop_header_branch
    %16 = sbr.rel (%p14) target = $region8
  $region5: #{octave_conv_forward.8} parent=0 // loop_body
    %s18 = ssub.s32 %s13, 1
    %s19 = ssub.s32 %s13, 2
    %s20 = sadd.s32 %s13, 1
    %s21 = ssub.s32 %s13, %s20
    %p22 = scmp.eq.s32.totalorder %s21, 0
    %s24 = sadd.s32 %s23, 1
    %s25 = scalar_select %p22, %s23, %s24
    %p28 = pneg %p22
    %p29 = scmp.eq.s32.totalorder %s13, 1
    %p30 = por %p28, %p29
    %p31 = scmp.ne.s32.totalorder %s23, %s26
    %p32 = scmp.eq.s32.totalorder %s13, 0
    %p33 = por %p31, %p32
    %p34 = scmp.ne.s32.totalorder %s23, %s26
    %p35 = scmp.eq.s32.totalorder %s18, 1
    %p36 = por %p34, %p35
    %p37 = scmp.ne.s32.totalorder %s26, %s27
    %p38 = scmp.eq.s32.totalorder %s18, 0
    %p39 = por %p37, %p38
    %p40 = scmp.ne.s32.totalorder %s26, %s27
    %p41 = scmp.eq.s32.totalorder %s19, 1
    %p42 = por %p40, %p41
    %p44 = scmp.ne.s32.totalorder %s27, %s43
    %p45 = scmp.eq.s32.totalorder %s19, 0
    %p46 = por %p44, %p45
    %s47 = ssub.s32 %s13, %s20
    %p48 = scmp.eq.s32.totalorder %s47, 0
    %s50 = sadd.s32 %s49, 1
    %s51 = scalar_select %p48, %s49, %s50
    %p54 = pneg %p48
    %p55 = scmp.eq.s32.totalorder %s13, 1
    %p56 = por %p54, %p55
    %p57 = scmp.ne.s32.totalorder %s49, %s52
    %p58 = scmp.eq.s32.totalorder %s13, 0
    %p59 = por %p57, %p58
    %p60 = scmp.ne.s32.totalorder %s49, %s52
    %p61 = scmp.eq.s32.totalorder %s18, 1
    %p62 = por %p60, %p61
    %p63 = scmp.ne.s32.totalorder %s52, %s53
    %p64 = scmp.eq.s32.totalorder %s18, 0
    %p65 = por %p63, %p64
    %p66 = scmp.ne.s32.totalorder %s52, %s53
    %p67 = scmp.eq.s32.totalorder %s19, 1
    %p68 = por %p66, %p67
    %p70 = scmp.ne.s32.totalorder %s53, %s69
    %p71 = scmp.eq.s32.totalorder %s19, 0
    %p72 = por %p70, %p71
    %s74 = sadd.s32 %s73, 1
    %p77 = scmp.eq.s32.totalorder %s13, 1
    %p78 = scmp.ne.s32.totalorder %s73, %s75
    %p79 = scmp.eq.s32.totalorder %s13, 0
    %p80 = por %p78, %p79
    %p81 = scmp.ne.s32.totalorder %s73, %s75
    %p82 = scmp.eq.s32.totalorder %s18, 1
    %p83 = por %p81, %p82
    %p84 = scmp.ne.s32.totalorder %s75, %s76
    %p85 = scmp.eq.s32.totalorder %s18, 0
    %p86 = por %p84, %p85
    %p87 = scmp.ne.s32.totalorder %s75, %s76
    %p88 = scmp.eq.s32.totalorder %s19, 1
    %p89 = por %p87, %p88
    %p91 = scmp.ne.s32.totalorder %s76, %s90
    %p92 = scmp.eq.s32.totalorder %s19, 0
    %p93 = por %p91, %p92
    %s95 = sadd.s32 %s94, 1
    %p98 = scmp.eq.s32.totalorder %s13, 1
    %p99 = scmp.ne.s32.totalorder %s94, %s96
    %p100 = scmp.eq.s32.totalorder %s13, 0
    %p101 = por %p99, %p100
    %p102 = scmp.ne.s32.totalorder %s94, %s96
    %p103 = scmp.eq.s32.totalorder %s18, 1
    %p104 = por %p102, %p103
    %p105 = scmp.ne.s32.totalorder %s96, %s97
    %p106 = scmp.eq.s32.totalorder %s18, 0
    %p107 = por %p105, %p106
    %p108 = scmp.ne.s32.totalorder %s96, %s97
    %p109 = scmp.eq.s32.totalorder %s19, 1
    %p110 = por %p108, %p109
    %p112 = scmp.ne.s32.totalorder %s97, %s111
    %p113 = scmp.eq.s32.totalorder %s19, 0
    %p114 = por %p112, %p113
    %s116 = sadd.s32 %s115, 1
    %p119 = scmp.eq.s32.totalorder %s13, 1
    %p120 = scmp.ne.s32.totalorder %s115, %s117
    %p121 = scmp.eq.s32.totalorder %s13, 0
    %p122 = por %p120, %p121
    %p123 = scmp.ne.s32.totalorder %s115, %s117
    %p124 = scmp.eq.s32.totalorder %s18, 1
    %p125 = por %p123, %p124
    %p126 = scmp.ne.s32.totalorder %s117, %s118
    %p127 = scmp.eq.s32.totalorder %s18, 0
    %p128 = por %p126, %p127
    %p129 = scmp.ne.s32.totalorder %s117, %s118
    %p130 = scmp.eq.s32.totalorder %s19, 1
    %p131 = por %p129, %p130
    %p133 = scmp.ne.s32.totalorder %s118, %s132
    %p134 = scmp.eq.s32.totalorder %s19, 0
    %p135 = por %p133, %p134
    %s137 = sadd.s32 %s136, 1
    %p140 = scmp.eq.s32.totalorder %s13, 1
    %p141 = scmp.ne.s32.totalorder %s136, %s138
    %p142 = scmp.eq.s32.totalorder %s13, 0
    %p143 = por %p141, %p142
    %p144 = scmp.ne.s32.totalorder %s136, %s138
    %p145 = scmp.eq.s32.totalorder %s18, 1
    %p146 = por %p144, %p145
    %p147 = scmp.ne.s32.totalorder %s138, %s139
    %p148 = scmp.eq.s32.totalorder %s18, 0
    %p149 = por %p147, %p148
    %p150 = scmp.ne.s32.totalorder %s138, %s139
    %p151 = scmp.eq.s32.totalorder %s19, 1
    %p152 = por %p150, %p151
    %p154 = scmp.ne.s32.totalorder %s139, %s153
    %p155 = scmp.eq.s32.totalorder %s19, 0
    %p156 = por %p154, %p155
    %s158 = sadd.s32 %s157, 1
    %p161 = scmp.eq.s32.totalorder %s13, 1
    %p162 = scmp.ne.s32.totalorder %s157, %s159
    %p163 = scmp.eq.s32.totalorder %s13, 0
    %p164 = por %p162, %p163
    %p165 = scmp.ne.s32.totalorder %s157, %s159
    %p166 = scmp.eq.s32.totalorder %s18, 1
    %p167 = por %p165, %p166
    %p168 = scmp.ne.s32.totalorder %s159, %s160
    %p169 = scmp.eq.s32.totalorder %s18, 0
    %p170 = por %p168, %p169
    %p171 = scmp.ne.s32.totalorder %s159, %s160
    %p172 = scmp.eq.s32.totalorder %s19, 1
    %p173 = por %p171, %p172
    %p175 = scmp.ne.s32.totalorder %s160, %s174
    %p176 = scmp.eq.s32.totalorder %s19, 0
    %p177 = por %p175, %p176
    %s178 = ssub.s32 %s13, %s20
    %p179 = scmp.eq.s32.totalorder %s178, 0
    %s181 = sadd.s32 %s180, 1
    %s182 = scalar_select %p179, %s180, %s181
    %p185 = pneg %p179
    %p186 = scmp.eq.s32.totalorder %s13, 1
    %p187 = por %p185, %p186
    %p188 = scmp.ne.s32.totalorder %s180, %s183
    %p189 = scmp.eq.s32.totalorder %s13, 0
    %p190 = por %p188, %p189
    %p191 = scmp.ne.s32.totalorder %s180, %s183
    %p192 = scmp.eq.s32.totalorder %s18, 1
    %p193 = por %p191, %p192
    %p194 = scmp.ne.s32.totalorder %s183, %s184
    %p195 = scmp.eq.s32.totalorder %s18, 0
    %p196 = por %p194, %p195
    %p197 = scmp.ne.s32.totalorder %s183, %s184
    %p198 = scmp.eq.s32.totalorder %s19, 1
    %p199 = por %p197, %p198
    %p201 = scmp.ne.s32.totalorder %s184, %s200
    %p202 = scmp.eq.s32.totalorder %s19, 0
    %p203 = por %p201, %p202
    %p204 = scmp.le.s32.totalorder 1, %s13
    %p205 = scmp.lt.s32.totalorder %s13, 3
    %p206 = pnand %p204, %p205
    %p207 = pneg %p206
    // Predicated region
    $region9: #{octave_conv_forward.8} parent=5 // pred_check
      _
    $region10: #{octave_conv_forward.8} parent=5 // pred_check_branch
      %209 = sbr.rel (%p206) target = $region12
    $region11: #{octave_conv_forward.8} parent=5 // pred_region
      %s210 = ssub.s32 %s13, 1
      // Predicated region
      $region13: #{octave_conv_forward.8} parent=11 // pred_check
        %p211 = pneg %p86
      $region14: #{octave_conv_forward.8} parent=11 // pred_check_branch
        %213 = sbr.rel (%p211) target = $region16
      $region15: #{octave_conv_forward.8} parent=11 // pred_region
        _
      $region16: #{octave_conv_forward.8} parent=11 // pred_fallthru
        _
      // Predicated region
      $region17: #{octave_conv_forward.8} parent=11 // pred_check
        %p214 = pneg %p107
      $region18: #{octave_conv_forward.8} parent=11 // pred_check_branch
        %216 = sbr.rel (%p214) target = $region20
      $region19: #{octave_conv_forward.8} parent=11 // pred_region
        _
      $region20: #{octave_conv_forward.8} parent=11 // pred_fallthru
        _
      // Predicated region
      $region21: #{octave_conv_forward.8} parent=11 // pred_check
        %p217 = pneg %p128
      $region22: #{octave_conv_forward.8} parent=11 // pred_check_branch
        %219 = sbr.rel (%p217) target = $region24
      $region23: #{octave_conv_forward.8} parent=11 // pred_region
        _
      $region24: #{octave_conv_forward.8} parent=11 // pred_fallthru
        _
      // Predicated region
      $region25: #{octave_conv_forward.8} parent=11 // pred_check
        %p220 = pneg %p149
      $region26: #{octave_conv_forward.8} parent=11 // pred_check_branch
        %222 = sbr.rel (%p220) target = $region28
      $region27: #{octave_conv_forward.8} parent=11 // pred_region
        _
      $region28: #{octave_conv_forward.8} parent=11 // pred_fallthru
        _
      // Predicated region
      $region29: #{octave_conv_forward.8} parent=11 // pred_check
        %p223 = pneg %p170
      $region30: #{octave_conv_forward.8} parent=11 // pred_check_branch
        %225 = sbr.rel (%p223) target = $region32
      $region31: #{octave_conv_forward.8} parent=11 // pred_region
        _
      $region32: #{octave_conv_forward.8} parent=11 // pred_fallthru
        _
    $region12: #{octave_conv_forward.8} parent=5 // pred_fallthru
      _
    %p226 = scmp.lt.s32.totalorder %s13, 2
    // Predicated region
    $region33: #{octave_conv_forward.8} parent=5 // pred_check
      %p227 = pneg %p226
    $region34: #{octave_conv_forward.8} parent=5 // pred_check_branch
      %229 = sbr.rel (%p227) target = $region36
    $region35: #{octave_conv_forward.8} parent=5 // pred_region
      // Predicated region
      $region37: #{octave_conv_forward.8} parent=35 // pred_check
        %p230 = pneg %p33
      $region38: #{octave_conv_forward.8} parent=35 // pred_check_branch
        %232 = sbr.rel (%p230) target = $region40
      $region39: #{octave_conv_forward.8} parent=35 // pred_region
        %p233 = scmp.lt.s32.totalorder %s13, 1
        %s234 = scalar_select %p233, %s13, 1
        %s235 = smul.addr %s234, 32
        %s236 = smul.addr %s235, 8
        %s237 = scalar_lea.vmem %s0, %s236
      $region40: #{octave_conv_forward.8} parent=35 // pred_fallthru
        _
      // Predicated region
      $region41: #{octave_conv_forward.8} parent=35 // pred_check
        %p238 = pneg %p59
      $region42: #{octave_conv_forward.8} parent=35 // pred_check_branch
        %240 = sbr.rel (%p238) target = $region44
      $region43: #{octave_conv_forward.8} parent=35 // pred_region
        %p241 = scmp.lt.s32.totalorder %s13, 1
        %s242 = scalar_select %p241, %s13, 1
        %s243 = smul.addr %s242, 32
        %s244 = smul.addr %s243, 8
        %s245 = scalar_lea.vmem %s1, %s244
      $region44: #{octave_conv_forward.8} parent=35 // pred_fallthru
        _
    $region36: #{octave_conv_forward.8} parent=5 // pred_fallthru
      _
    %p246 = scmp.le.s32.totalorder 1, %s13
    %p247 = scmp.lt.s32.totalorder %s13, 3
    %p248 = pnand %p246, %p247
    %p249 = pneg %p248
    // Predicated region
    $region45: #{octave_conv_forward.8} parent=5 // pred_check
      _
    $region46: #{octave_conv_forward.8} parent=5 // pred_check_branch
      %251 = sbr.rel (%p248) target = $region48
    $region47: #{octave_conv_forward.8} parent=5 // pred_region
      %s252 = ssub.s32 %s13, 1
      %p253 = scmp.lt.s32.totalorder %s18, 1
      %s254 = scalar_select %p253, %s18, 1
      %s255 = smul.addr %s254, 32
      %s256 = smul.addr %s255, 8
      %s257 = scalar_lea.vmem %s0, %s256
      %p258 = pneg %p39
      %p259 = pneg %p36
      %p260 = scmp.lt.s32.totalorder %s18, 1
      %s261 = scalar_select %p260, %s18, 1
      %s262 = smul.addr %s261, 32
      %s263 = smul.addr %s262, 8
      %s264 = scalar_lea.vmem %s1, %s263
      %p265 = pneg %p65
      %p266 = pneg %p62
      %p267 = pneg %p86
      %p268 = pneg %p83
      %p269 = pneg %p107
      %p270 = pneg %p104
      %p271 = pneg %p128
      %p272 = pneg %p125
      %p273 = pneg %p149
      %p274 = pneg %p146
      %p275 = pneg %p170
      %p276 = pneg %p167
      %p277 = pneg %p196
      %p278 = pneg %p193
      %p279 = scmp.lt.s32.totalorder %s18, 1
      %s280 = scalar_select %p279, %s18, 1
      %s281 = smul.addr %s280, 32
      %s282 = smul.addr %s281, 8
      %s283 = scalar_lea.vmem %s7, %s282
      %p284 = scmp.lt.s32.totalorder %s18, 1
      %s285 = scalar_select %p284, %s18, 1
      %s286 = smul.addr %s285, 32
      %s287 = smul.addr %s286, 8
      %s288 = scalar_lea.vmem %s0, %s287
      %p289 = scmp.lt.s32.totalorder %s18, 1
      %s290 = scalar_select %p289, %s18, 1
      %s291 = smul.addr %s290, 32
      %s292 = smul.addr %s291, 8
      %s293 = scalar_lea.vmem %s1, %s292
      %p294 = scmp.lt.s32.totalorder %s18, 1
      %s295 = scalar_select %p294, %s18, 1
      %s296 = smul.addr %s295, 32
      %s297 = smul.addr %s296, 8
      %s298 = scalar_lea.vmem %s7, %s297
      %v300 = vld [vmem:[%s288] sm:$0xff]
      %v301 = vld [vmem:[%s288 + $0x8] sm:$0xff]
      %v302 = vld [vmem:[%s288 + $0x10] sm:$0xff]
      %v303 = vld [vmem:[%s288 + $0x18] sm:$0xff]
      %v304 = vld [vmem:[%s288 + $0x20] sm:$0xff]
      %v305 = vld [vmem:[%s288 + $0x28] sm:$0xff]
      %v306 = vld [vmem:[%s288 + $0x30] sm:$0xff]
      %v307 = vld [vmem:[%s288 + $0x38] sm:$0xff]
      %v308 = vld [vmem:[%s288 + $0x40] sm:$0xff]
      %v309 = vld [vmem:[%s288 + $0x48] sm:$0xff]
      %v310 = vld [vmem:[%s288 + $0x50] sm:$0xff]
      %v311 = vld [vmem:[%s288 + $0x58] sm:$0xff]
      %v312 = vld [vmem:[%s288 + $0x60] sm:$0xff]
      %v313 = vld [vmem:[%s288 + $0x68] sm:$0xff]
      %v314 = vld [vmem:[%s288 + $0x70] sm:$0xff]
      %v315 = vld [vmem:[%s288 + $0x78] sm:$0xff]
      %v316 = vld [vmem:[%s288 + $0x80] sm:$0xff]
      %v317 = vld [vmem:[%s288 + $0x88] sm:$0xff]
      %v318 = vld [vmem:[%s288 + $0x90] sm:$0xff]
      %v319 = vld [vmem:[%s288 + $0x98] sm:$0xff]
      %v320 = vld [vmem:[%s288 + $0xa0] sm:$0xff]
      %v321 = vld [vmem:[%s288 + $0xa8] sm:$0xff]
      %v322 = vld [vmem:[%s288 + $0xb0] sm:$0xff]
      %v323 = vld [vmem:[%s288 + $0xb8] sm:$0xff]
      %v324 = vld [vmem:[%s288 + $0xc0] sm:$0xff]
      %v325 = vld [vmem:[%s288 + $0xc8] sm:$0xff]
      %v326 = vld [vmem:[%s288 + $0xd0] sm:$0xff]
      %v327 = vld [vmem:[%s288 + $0xd8] sm:$0xff]
      %v328 = vld [vmem:[%s288 + $0xe0] sm:$0xff]
      %v329 = vld [vmem:[%s288 + $0xe8] sm:$0xff]
      %v330 = vld [vmem:[%s288 + $0xf0] sm:$0xff]
      %v331 = vld [vmem:[%s288 + $0xf8] sm:$0xff]
      %v332 = vld [vmem:[%s293] sm:$0xff]
      %v333 = vld [vmem:[%s293 + $0x8] sm:$0xff]
      %v334 = vld [vmem:[%s293 + $0x10] sm:$0xff]
      %v335 = vld [vmem:[%s293 + $0x18] sm:$0xff]
      %v336 = vld [vmem:[%s293 + $0x20] sm:$0xff]
      %v337 = vld [vmem:[%s293 + $0x28] sm:$0xff]
      %v338 = vld [vmem:[%s293 + $0x30] sm:$0xff]
      %v339 = vld [vmem:[%s293 + $0x38] sm:$0xff]
      %v340 = vld [vmem:[%s293 + $0x40] sm:$0xff]
      %v341 = vld [vmem:[%s293 + $0x48] sm:$0xff]
      %v342 = vld [vmem:[%s293 + $0x50] sm:$0xff]
      %v343 = vld [vmem:[%s293 + $0x58] sm:$0xff]
      %v344 = vld [vmem:[%s293 + $0x60] sm:$0xff]
      %v345 = vld [vmem:[%s293 + $0x68] sm:$0xff]
      %v346 = vld [vmem:[%s293 + $0x70] sm:$0xff]
      %v347 = vld [vmem:[%s293 + $0x78] sm:$0xff]
      %v348 = vld [vmem:[%s293 + $0x80] sm:$0xff]
      %v349 = vld [vmem:[%s293 + $0x88] sm:$0xff]
      %v350 = vld [vmem:[%s293 + $0x90] sm:$0xff]
      %v351 = vld [vmem:[%s293 + $0x98] sm:$0xff]
      %v352 = vld [vmem:[%s293 + $0xa0] sm:$0xff]
      %v353 = vld [vmem:[%s293 + $0xa8] sm:$0xff]
      %v354 = vld [vmem:[%s293 + $0xb0] sm:$0xff]
      %v355 = vld [vmem:[%s293 + $0xb8] sm:$0xff]
      %v356 = vld [vmem:[%s293 + $0xc0] sm:$0xff]
      %v357 = vld [vmem:[%s293 + $0xc8] sm:$0xff]
      %v358 = vld [vmem:[%s293 + $0xd0] sm:$0xff]
      %v359 = vld [vmem:[%s293 + $0xd8] sm:$0xff]
      %v360 = vld [vmem:[%s293 + $0xe0] sm:$0xff]
      %v361 = vld [vmem:[%s293 + $0xe8] sm:$0xff]
      %v362 = vld [vmem:[%s293 + $0xf0] sm:$0xff]
      %v363 = vld [vmem:[%s293 + $0xf8] sm:$0xff]
      %v364 = vpack.c.bf16 %v301, %v300
      %v365 = vpack.c.bf16 %v303, %v302
      %v366 = vpack.c.bf16 %v305, %v304
      %v367 = vpack.c.bf16 %v307, %v306
      %v368 = vpack.c.bf16 %v309, %v308
      %v369 = vpack.c.bf16 %v311, %v310
      %v370 = vpack.c.bf16 %v313, %v312
      %v371 = vpack.c.bf16 %v315, %v314
      %v372 = vpack.c.bf16 %v317, %v316
      %v373 = vpack.c.bf16 %v319, %v318
      %v374 = vpack.c.bf16 %v321, %v320
      %v375 = vpack.c.bf16 %v323, %v322
      %v376 = vpack.c.bf16 %v325, %v324
      %v377 = vpack.c.bf16 %v327, %v326
      %v378 = vpack.c.bf16 %v329, %v328
      %v379 = vpack.c.bf16 %v331, %v330
      %v380 = vld [vmem:[%s2] sm:$0xf]
      %v381 = vld [vmem:[%s2 + $0x4] sm:$0xf]
      %v382 = vld [vmem:[%s2 + $0x8] sm:$0xf]
      %v383 = vld [vmem:[%s2 + $0xc] sm:$0xf]
      %v384 = vld [vmem:[%s2 + $0x10] sm:$0xf]
      %v385 = vld [vmem:[%s2 + $0x14] sm:$0xf]
      %v386 = vld [vmem:[%s2 + $0x18] sm:$0xf]
      %v387 = vld [vmem:[%s2 + $0x1c] sm:$0xf]
      %v388 = vld [vmem:[%s2 + $0x20] sm:$0xf]
      %v389 = vld [vmem:[%s2 + $0x24] sm:$0xf]
      %v390 = vld [vmem:[%s2 + $0x28] sm:$0xf]
      %v391 = vld [vmem:[%s2 + $0x2c] sm:$0xf]
      %v392 = vld [vmem:[%s2 + $0x30] sm:$0xf]
      %v393 = vld [vmem:[%s2 + $0x34] sm:$0xf]
      %v394 = vld [vmem:[%s2 + $0x38] sm:$0xf]
      %v395 = vld [vmem:[%s2 + $0x3c] sm:$0xf]
      %v396 = vpack.c.bf16 %v333, %v332
      %v397 = vpack.c.bf16 %v335, %v334
      %v398 = vpack.c.bf16 %v337, %v336
      %v399 = vpack.c.bf16 %v339, %v338
      %v400 = vpack.c.bf16 %v341, %v340
      %v401 = vpack.c.bf16 %v343, %v342
      %v402 = vpack.c.bf16 %v345, %v344
      %v403 = vpack.c.bf16 %v347, %v346
      %v404 = vpack.c.bf16 %v349, %v348
      %v405 = vpack.c.bf16 %v351, %v350
      %v406 = vpack.c.bf16 %v353, %v352
      %v407 = vpack.c.bf16 %v355, %v354
      %v408 = vpack.c.bf16 %v357, %v356
      %v409 = vpack.c.bf16 %v359, %v358
      %v410 = vpack.c.bf16 %v361, %v360
      %v411 = vpack.c.bf16 %v363, %v362
      %v412 = vld [vmem:[%s3] sm:$0xf]
      %v413 = vld [vmem:[%s3 + $0x4] sm:$0xf]
      %v414 = vld [vmem:[%s3 + $0x8] sm:$0xf]
      %v415 = vld [vmem:[%s3 + $0xc] sm:$0xf]
      %v416 = vld [vmem:[%s3 + $0x10] sm:$0xf]
      %v417 = vld [vmem:[%s3 + $0x14] sm:$0xf]
      %v418 = vld [vmem:[%s3 + $0x18] sm:$0xf]
      %v419 = vld [vmem:[%s3 + $0x1c] sm:$0xf]
      %v420 = vld [vmem:[%s3 + $0x20] sm:$0xf]
      %v421 = vld [vmem:[%s3 + $0x24] sm:$0xf]
      %v422 = vld [vmem:[%s3 + $0x28] sm:$0xf]
      %v423 = vld [vmem:[%s3 + $0x2c] sm:$0xf]
      %v424 = vld [vmem:[%s3 + $0x30] sm:$0xf]
      %v425 = vld [vmem:[%s3 + $0x34] sm:$0xf]
      %v426 = vld [vmem:[%s3 + $0x38] sm:$0xf]
      %v427 = vld [vmem:[%s3 + $0x3c] sm:$0xf]
      %v444 = vunpack.c.l.b16 %v412
      %v445 = vunpack.c.l.b16 %v413
      %v446 = vunpack.c.l.b16 %v414
      %v447 = vunpack.c.l.b16 %v415
      %v448 = vunpack.c.l.b16 %v416
      %v449 = vunpack.c.l.b16 %v417
      %v450 = vunpack.c.l.b16 %v418
      %v451 = vunpack.c.l.b16 %v419
      %v452 = vunpack.c.l.b16 %v420
      %v453 = vunpack.c.l.b16 %v421
      %v454 = vunpack.c.l.b16 %v422
      %v455 = vunpack.c.l.b16 %v423
      %v456 = vunpack.c.l.b16 %v424
      %v457 = vunpack.c.l.b16 %v425
      %v458 = vunpack.c.l.b16 %v426
      %v459 = vunpack.c.l.b16 %v427
      %v460 = vpack.c.b16 %v445, %v444
      %v461 = vpack.c.b16 %v447, %v446
      %v462 = vpack.c.b16 %v449, %v448
      %v463 = vpack.c.b16 %v451, %v450
      %v464 = vpack.c.b16 %v453, %v452
      %v465 = vpack.c.b16 %v455, %v454
      %v466 = vpack.c.b16 %v457, %v456
      %v467 = vpack.c.b16 %v459, %v458
      %476 = vmatprep.subr.bf16.mxu0 0
      %477 = vmatpush1.bf16.msra.mxu0 %v460
      %478 = vmatprep.subr.bf16.mxu0 0
      %479 = vmatpush1.bf16.msra.mxu0 %v461
      %480 = vmatprep.subr.bf16.mxu0 0
      %481 = vmatpush1.bf16.msra.mxu0 %v462
      %482 = vmatprep.subr.bf16.mxu0 0
      %483 = vmatpush1.bf16.msra.mxu0 %v463
      %484 = vmatprep.subr.bf16.mxu0 0
      %485 = vmatpush1.bf16.msra.mxu0 %v464
      %486 = vmatprep.subr.bf16.mxu0 0
      %487 = vmatpush1.bf16.msra.mxu0 %v465
      %488 = vmatprep.subr.bf16.mxu0 0
      %489 = vmatpush1.bf16.msra.mxu0 %v466
      %490 = vmatprep.subr.bf16.mxu0 0
      %491 = vmatpush1.bf16.msra.mxu0 %v467
      %492 = vmatprep.subr.bf16.mxu0 0
      %493 = vmatpush1.bf16.msra.mxu0 0
      %494 = vmatprep.subr.bf16.mxu0 0
      %495 = vmatpush1.bf16.msra.mxu0 0
      %496 = vmatprep.subr.bf16.mxu0 0
      %497 = vmatpush1.bf16.msra.mxu0 0
      %498 = vmatprep.subr.bf16.mxu0 0
      %499 = vmatpush1.bf16.msra.mxu0 0
      %500 = vmatprep.subr.bf16.mxu0 0
      %501 = vmatpush1.bf16.msra.mxu0 0
      %502 = vmatprep.subr.bf16.mxu0 0
      %503 = vmatpush1.bf16.msra.mxu0 0
      %504 = vmatprep.subr.bf16.mxu0 0
      %505 = vmatpush1.bf16.msra.mxu0 0
      %506 = vmatprep.subr.bf16.mxu0 0
      %507 = vmatpush1.bf16.msra.mxu0 0
      %508 = vmatprep.mubr.bf16.mxu0 0
      %509 = vmatmul.mubr.bf16.gmra.mrb[0].mxu0 %v396
      %v510 = vpop.f32.mrb[0].mxu0
      %v511 = vadd.f32 0.0, %v510
      %v512 = vpop.f32.mrb[0].mxu0
      %v513 = vpop.f32.mrb[0].mxu0
      %v514 = vadd.f32 0.0, %v513
      %v515 = vpop.f32.mrb[0].mxu0
      %516 = vmatprep.mubr.bf16.mxu0 0
      %517 = vmatmul.mubr.bf16.gmra.mrb[0].mxu0 %v397
      %v518 = vpop.f32.mrb[0].mxu0
      %v519 = vadd.f32 0.0, %v518
      %v520 = vpop.f32.mrb[0].mxu0
      %v521 = vpop.f32.mrb[0].mxu0
      %v522 = vadd.f32 0.0, %v521
      %v523 = vpop.f32.mrb[0].mxu0
      %524 = vmatprep.mubr.bf16.mxu0 0
      %525 = vmatmul.mubr.bf16.gmra.mrb[0].mxu0 %v398
      %v526 = vpop.f32.mrb[0].mxu0
      %v527 = vadd.f32 0.0, %v526
      %v528 = vpop.f32.mrb[0].mxu0
      %v529 = vpop.f32.mrb[0].mxu0
      %v530 = vadd.f32 0.0, %v529
      %v531 = vpop.f32.mrb[0].mxu0
      %532 = vmatprep.mubr.bf16.mxu0 0
      %533 = vmatmul.mubr.bf16.gmra.mrb[0].mxu0 %v399
      %v534 = vpop.f32.mrb[0].mxu0
      %v535 = vadd.f32 0.0, %v534
      %v536 = vpop.f32.mrb[0].mxu0
      %v537 = vpop.f32.mrb[0].mxu0
      %v538 = vadd.f32 0.0, %v537
      %v539 = vpop.f32.mrb[0].mxu0
      %540 = vmatprep.mubr.bf16.mxu0 0
      %541 = vmatmul.mubr.bf16.gmra.mrb[0].mxu0 %v400
      %v542 = vpop.f32.mrb[0].mxu0
      %v543 = vadd.f32 0.0, %v542
      %v544 = vpop.f32.mrb[0].mxu0
      %v545 = vpop.f32.mrb[0].mxu0
      %v546 = vadd.f32 0.0, %v545
      %v547 = vpop.f32.mrb[0].mxu0
      %548 = vmatprep.mubr.bf16.mxu0 0
      %549 = vmatmul.mubr.bf16.gmra.mrb[0].mxu0 %v401
      %v550 = vpop.f32.mrb[0].mxu0
      %v551 = vadd.f32 0.0, %v550
      %v552 = vpop.f32.mrb[0].mxu0
      %v553 = vpop.f32.mrb[0].mxu0
      %v554 = vadd.f32 0.0, %v553
      %v555 = vpop.f32.mrb[0].mxu0
      %556 = vmatprep.mubr.bf16.mxu0 0
      %557 = vmatmul.mubr.bf16.gmra.mrb[0].mxu0 %v402
      %v558 = vpop.f32.mrb[0].mxu0
      %v559 = vadd.f32 0.0, %v558
      %v560 = vpop.f32.mrb[0].mxu0
      %v561 = vpop.f32.mrb[0].mxu0
      %v562 = vadd.f32 0.0, %v561
      %v563 = vpop.f32.mrb[0].mxu0
      %564 = vmatprep.mubr.bf16.mxu0 0
      %565 = vmatmul.mubr.bf16.gmra.mrb[0].mxu0 %v403
      %v566 = vpop.f32.mrb[0].mxu0
      %v567 = vadd.f32 0.0, %v566
      %v568 = vpop.f32.mrb[0].mxu0
      %v569 = vpop.f32.mrb[0].mxu0
      %v570 = vadd.f32 0.0, %v569
      %v571 = vpop.f32.mrb[0].mxu0
      %572 = vmatprep.mubr.bf16.mxu0 0
      %573 = vmatmul.mubr.bf16.gmra.mrb[0].mxu0 %v404
      %v574 = vpop.f32.mrb[0].mxu0
      %v575 = vadd.f32 0.0, %v574
      %v576 = vpop.f32.mrb[0].mxu0
      %v577 = vpop.f32.mrb[0].mxu0
      %v578 = vadd.f32 0.0, %v577
      %v579 = vpop.f32.mrb[0].mxu0
      %580 = vmatprep.mubr.bf16.mxu0 0
      %581 = vmatmul.mubr.bf16.gmra.mrb[0].mxu0 %v405
      %v582 = vpop.f32.mrb[0].mxu0
      %v583 = vadd.f32 0.0, %v582
      %v584 = vpop.f32.mrb[0].mxu0
      %v585 = vpop.f32.mrb[0].mxu0
      %v586 = vadd.f32 0.0, %v585
      %v587 = vpop.f32.mrb[0].mxu0
      %588 = vmatprep.mubr.bf16.mxu0 0
      %589 = vmatmul.mubr.bf16.gmra.mrb[0].mxu0 %v406
      %v590 = vpop.f32.mrb[0].mxu0
      %v591 = vadd.f32 0.0, %v590
      %v592 = vpop.f32.mrb[0].mxu0
      %v593 = vpop.f32.mrb[0].mxu0
      %v594 = vadd.f32 0.0, %v593
      %v595 = vpop.f32.mrb[0].mxu0
      %596 = vmatprep.mubr.bf16.mxu0 0
      %597 = vmatmul.mubr.bf16.gmra.mrb[0].mxu0 %v407
      %v598 = vpop.f32.mrb[0].mxu0
      %v599 = vadd.f32 0.0, %v598
      %v600 = vpop.f32.mrb[0].mxu0
      %v601 = vpop.f32.mrb[0].mxu0
      %v602 = vadd.f32 0.0, %v601
      %v603 = vpop.f32.mrb[0].mxu0
      %604 = vmatprep.mubr.bf16.mxu0 0
      %605 = vmatmul.mubr.bf16.gmra.mrb[0].mxu0 %v408
      %v606 = vpop.f32.mrb[0].mxu0
      %v607 = vadd.f32 0.0, %v606
      %v608 = vpop.f32.mrb[0].mxu0
      %v609 = vpop.f32.mrb[0].mxu0
      %v610 = vadd.f32 0.0, %v609
      %v611 = vpop.f32.mrb[0].mxu0
      %612 = vmatprep.mubr.bf16.mxu0 0
      %613 = vmatmul.mubr.bf16.gmra.mrb[0].mxu0 %v409
      %v614 = vpop.f32.mrb[0].mxu0
      %v615 = vadd.f32 0.0, %v614
      %v616 = vpop.f32.mrb[0].mxu0
      %v617 = vpop.f32.mrb[0].mxu0
      %v618 = vadd.f32 0.0, %v617
      %v619 = vpop.f32.mrb[0].mxu0
      %620 = vmatprep.mubr.bf16.mxu0 0
      %621 = vmatmul.mubr.bf16.gmra.mrb[0].mxu0 %v410
      %v622 = vpop.f32.mrb[0].mxu0
      %v623 = vadd.f32 0.0, %v622
      %v624 = vpop.f32.mrb[0].mxu0
      %v625 = vpop.f32.mrb[0].mxu0
      %v626 = vadd.f32 0.0, %v625
      %v627 = vpop.f32.mrb[0].mxu0
      %628 = vmatprep.mubr.bf16.mxu0 0
      %629 = vmatmul.mubr.bf16.gmra.mrb[0].mxu0 %v411
      %v630 = vpop.f32.mrb[0].mxu0
      %v631 = vadd.f32 0.0, %v630
      %v632 = vpop.f32.mrb[0].mxu0
      %v633 = vpop.f32.mrb[0].mxu0
      %v634 = vadd.f32 0.0, %v633
      %v635 = vpop.f32.mrb[0].mxu0
      %636 = vdwg.mxu0
      %v653 = vunpack.c.l.b16 %v380
      %v654 = vunpack.c.l.b16 %v381
      %v655 = vunpack.c.l.b16 %v382
      %v656 = vunpack.c.l.b16 %v383
      %v657 = vunpack.c.l.b16 %v384
      %v658 = vunpack.c.l.b16 %v385
      %v659 = vunpack.c.l.b16 %v386
      %v660 = vunpack.c.l.b16 %v387
      %v661 = vunpack.c.l.b16 %v388
      %v662 = vunpack.c.l.b16 %v389
      %v663 = vunpack.c.l.b16 %v390
      %v664 = vunpack.c.l.b16 %v391
      %v665 = vunpack.c.l.b16 %v392
      %v666 = vunpack.c.l.b16 %v393
      %v667 = vunpack.c.l.b16 %v394
      %v668 = vunpack.c.l.b16 %v395
      %v669 = vpack.c.b16 %v654, %v653
      %v670 = vpack.c.b16 %v656, %v655
      %v671 = vpack.c.b16 %v658, %v657
      %v672 = vpack.c.b16 %v660, %v659
      %v673 = vpack.c.b16 %v662, %v661
      %v674 = vpack.c.b16 %v664, %v663
      %v675 = vpack.c.b16 %v666, %v665
      %v676 = vpack.c.b16 %v668, %v667
      %685 = vmatprep.subr.bf16.mxu0 0
      %686 = vmatpush1.bf16.msra.mxu0 %v669
      %687 = vmatprep.subr.bf16.mxu0 0
      %688 = vmatpush1.bf16.msra.mxu0 %v670
      %689 = vmatprep.subr.bf16.mxu0 0
      %690 = vmatpush1.bf16.msra.mxu0 %v671
      %691 = vmatprep.subr.bf16.mxu0 0
      %692 = vmatpush1.bf16.msra.mxu0 %v672
      %693 = vmatprep.subr.bf16.mxu0 0
      %694 = vmatpush1.bf16.msra.mxu0 %v673
      %695 = vmatprep.subr.bf16.mxu0 0
      %696 = vmatpush1.bf16.msra.mxu0 %v674
      %697 = vmatprep.subr.bf16.mxu0 0
      %698 = vmatpush1.bf16.msra.mxu0 %v675
      %699 = vmatprep.subr.bf16.mxu0 0
      %700 = vmatpush1.bf16.msra.mxu0 %v676
      %701 = vmatprep.subr.bf16.mxu0 0
      %702 = vmatpush1.bf16.msra.mxu0 0
      %703 = vmatprep.subr.bf16.mxu0 0
      %704 = vmatpush1.bf16.msra.mxu0 0
      %705 = vmatprep.subr.bf16.mxu0 0
      %706 = vmatpush1.bf16.msra.mxu0 0
      %707 = vmatprep.subr.bf16.mxu0 0
      %708 = vmatpush1.bf16.msra.mxu0 0
      %709 = vmatprep.subr.bf16.mxu0 0
      %710 = vmatpush1.bf16.msra.mxu0 0
      %711 = vmatprep.subr.bf16.mxu0 0
      %712 = vmatpush1.bf16.msra.mxu0 0
      %713 = vmatprep.subr.bf16.mxu0 0
      %714 = vmatpush1.bf16.msra.mxu0 0
      %715 = vmatprep.subr.bf16.mxu0 0
      %716 = vmatpush1.bf16.msra.mxu0 0
      %717 = vmatprep.mubr.bf16.mxu0 0
      %718 = vmatmul.mubr.bf16.gmra.mrb[0].mxu0 %v364
      %v719 = vpop.f32.mrb[0].mxu0
      %v720 = vadd.f32 %v511, %v719
      %v721 = vpop.f32.mrb[0].mxu0
      %v722 = vpop.f32.mrb[0].mxu0
      %v723 = vadd.f32 %v514, %v722
      %v724 = vpop.f32.mrb[0].mxu0
      %725 = vmatprep.mubr.bf16.mxu0 0
      %726 = vmatmul.mubr.bf16.gmra.mrb[0].mxu0 %v365
      %v727 = vpop.f32.mrb[0].mxu0
      %v728 = vadd.f32 %v519, %v727
      %v729 = vpop.f32.mrb[0].mxu0
      %v730 = vpop.f32.mrb[0].mxu0
      %v731 = vadd.f32 %v522, %v730
      %v732 = vpop.f32.mrb[0].mxu0
      %733 = vmatprep.mubr.bf16.mxu0 0
      %734 = vmatmul.mubr.bf16.gmra.mrb[0].mxu0 %v366
      %v735 = vpop.f32.mrb[0].mxu0
      %v736 = vadd.f32 %v527, %v735
      %v737 = vpop.f32.mrb[0].mxu0
      %v738 = vpop.f32.mrb[0].mxu0
      %v739 = vadd.f32 %v530, %v738
      %v740 = vpop.f32.mrb[0].mxu0
      %741 = vmatprep.mubr.bf16.mxu0 0
      %742 = vmatmul.mubr.bf16.gmra.mrb[0].mxu0 %v367
      %v743 = vpop.f32.mrb[0].mxu0
      %v744 = vadd.f32 %v535, %v743
      %v745 = vpop.f32.mrb[0].mxu0
      %v746 = vpop.f32.mrb[0].mxu0
      %v747 = vadd.f32 %v538, %v746
      %v748 = vpop.f32.mrb[0].mxu0
      %749 = vmatprep.mubr.bf16.mxu0 0
      %750 = vmatmul.mubr.bf16.gmra.mrb[0].mxu0 %v368
      %v751 = vpop.f32.mrb[0].mxu0
      %v752 = vadd.f32 %v543, %v751
      %v753 = vpop.f32.mrb[0].mxu0
      %v754 = vpop.f32.mrb[0].mxu0
      %v755 = vadd.f32 %v546, %v754
      %v756 = vpop.f32.mrb[0].mxu0
      %757 = vmatprep.mubr.bf16.mxu0 0
      %758 = vmatmul.mubr.bf16.gmra.mrb[0].mxu0 %v369
      %v759 = vpop.f32.mrb[0].mxu0
      %v760 = vadd.f32 %v551, %v759
      %v761 = vpop.f32.mrb[0].mxu0
      %v762 = vpop.f32.mrb[0].mxu0
      %v763 = vadd.f32 %v554, %v762
      %v764 = vpop.f32.mrb[0].mxu0
      %765 = vmatprep.mubr.bf16.mxu0 0
      %766 = vmatmul.mubr.bf16.gmra.mrb[0].mxu0 %v370
      %v767 = vpop.f32.mrb[0].mxu0
      %v768 = vadd.f32 %v559, %v767
      %v769 = vpop.f32.mrb[0].mxu0
      %v770 = vpop.f32.mrb[0].mxu0
      %v771 = vadd.f32 %v562, %v770
      %v772 = vpop.f32.mrb[0].mxu0
      %773 = vmatprep.mubr.bf16.mxu0 0
      %774 = vmatmul.mubr.bf16.gmra.mrb[0].mxu0 %v371
      %v775 = vpop.f32.mrb[0].mxu0
      %v776 = vadd.f32 %v567, %v775
      %v777 = vpop.f32.mrb[0].mxu0
      %v778 = vpop.f32.mrb[0].mxu0
      %v779 = vadd.f32 %v570, %v778
      %v780 = vpop.f32.mrb[0].mxu0
      %781 = vmatprep.mubr.bf16.mxu0 0
      %782 = vmatmul.mubr.bf16.gmra.mrb[0].mxu0 %v372
      %v783 = vpop.f32.mrb[0].mxu0
      %v784 = vadd.f32 %v575, %v783
      %v785 = vpop.f32.mrb[0].mxu0
      %v786 = vpop.f32.mrb[0].mxu0
      %v787 = vadd.f32 %v578, %v786
      %v788 = vpop.f32.mrb[0].mxu0
      %789 = vmatprep.mubr.bf16.mxu0 0
      %790 = vmatmul.mubr.bf16.gmra.mrb[0].mxu0 %v373
      %v791 = vpop.f32.mrb[0].mxu0
      %v792 = vadd.f32 %v583, %v791
      %v793 = vpop.f32.mrb[0].mxu0
      %v794 = vpop.f32.mrb[0].mxu0
      %v795 = vadd.f32 %v586, %v794
      %v796 = vpop.f32.mrb[0].mxu0
      %797 = vmatprep.mubr.bf16.mxu0 0
      %798 = vmatmul.mubr.bf16.gmra.mrb[0].mxu0 %v374
      %v799 = vpop.f32.mrb[0].mxu0
      %v800 = vadd.f32 %v591, %v799
      %v801 = vpop.f32.mrb[0].mxu0
      %v802 = vpop.f32.mrb[0].mxu0
      %v803 = vadd.f32 %v594, %v802
      %v804 = vpop.f32.mrb[0].mxu0
      %805 = vmatprep.mubr.bf16.mxu0 0
      %806 = vmatmul.mubr.bf16.gmra.mrb[0].mxu0 %v375
      %v807 = vpop.f32.mrb[0].mxu0
      %v808 = vadd.f32 %v599, %v807
      %v809 = vpop.f32.mrb[0].mxu0
      %v810 = vpop.f32.mrb[0].mxu0
      %v811 = vadd.f32 %v602, %v810
      %v812 = vpop.f32.mrb[0].mxu0
      %813 = vmatprep.mubr.bf16.mxu0 0
      %814 = vmatmul.mubr.bf16.gmra.mrb[0].mxu0 %v376
      %v815 = vpop.f32.mrb[0].mxu0
      %v816 = vadd.f32 %v607, %v815
      %v817 = vpop.f32.mrb[0].mxu0
      %v818 = vpop.f32.mrb[0].mxu0
      %v819 = vadd.f32 %v610, %v818
      %v820 = vpop.f32.mrb[0].mxu0
      %821 = vmatprep.mubr.bf16.mxu0 0
      %822 = vmatmul.mubr.bf16.gmra.mrb[0].mxu0 %v377
      %v823 = vpop.f32.mrb[0].mxu0
      %v824 = vadd.f32 %v615, %v823
      %v825 = vpop.f32.mrb[0].mxu0
      %v826 = vpop.f32.mrb[0].mxu0
      %v827 = vadd.f32 %v618, %v826
      %v828 = vpop.f32.mrb[0].mxu0
      %829 = vmatprep.mubr.bf16.mxu0 0
      %830 = vmatmul.mubr.bf16.gmra.mrb[0].mxu0 %v378
      %v831 = vpop.f32.mrb[0].mxu0
      %v832 = vadd.f32 %v623, %v831
      %v833 = vpop.f32.mrb[0].mxu0
      %v834 = vpop.f32.mrb[0].mxu0
      %v835 = vadd.f32 %v626, %v834
      %v836 = vpop.f32.mrb[0].mxu0
      %837 = vmatprep.mubr.bf16.mxu0 0
      %838 = vmatmul.mubr.bf16.gmra.mrb[0].mxu0 %v379
      %v839 = vpop.f32.mrb[0].mxu0
      %v840 = vadd.f32 %v631, %v839
      %v841 = vpop.f32.mrb[0].mxu0
      %v842 = vpop.f32.mrb[0].mxu0
      %v843 = vadd.f32 %v634, %v842
      %v844 = vpop.f32.mrb[0].mxu0
      %845 = vdwg.mxu0
      %v846 = vld [vmem:[%s4] sm:$0x1]
      %v848 = vlaneseq
      %v849 = vshrl.u32 %v848, 7
      %v850 = vsub.s32 0, %v849
      %v851 = vrot.slane %v846, %v850
      %v853 = vadd.f32 %v720, %v851
      %v854 = vadd.f32 %v723, %v851
      %v855 = vadd.f32 %v728, %v851
      %v856 = vadd.f32 %v731, %v851
      %v857 = vadd.f32 %v736, %v851
      %v858 = vadd.f32 %v739, %v851
      %v859 = vadd.f32 %v744, %v851
      %v860 = vadd.f32 %v747, %v851
      %v861 = vadd.f32 %v752, %v851
      %v862 = vadd.f32 %v755, %v851
      %v863 = vadd.f32 %v760, %v851
      %v864 = vadd.f32 %v763, %v851
      %v865 = vadd.f32 %v768, %v851
      %v866 = vadd.f32 %v771, %v851
      %v867 = vadd.f32 %v776, %v851
      %v868 = vadd.f32 %v779, %v851
      %v869 = vadd.f32 %v784, %v851
      %v870 = vadd.f32 %v787, %v851
      %v871 = vadd.f32 %v792, %v851
      %v872 = vadd.f32 %v795, %v851
      %v873 = vadd.f32 %v800, %v851
      %v874 = vadd.f32 %v803, %v851
      %v875 = vadd.f32 %v808, %v851
      %v876 = vadd.f32 %v811, %v851
      %v877 = vadd.f32 %v816, %v851
      %v878 = vadd.f32 %v819, %v851
      %v879 = vadd.f32 %v824, %v851
      %v880 = vadd.f32 %v827, %v851
      %v881 = vadd.f32 %v832, %v851
      %v882 = vadd.f32 %v835, %v851
      %v883 = vadd.f32 %v840, %v851
      %v884 = vadd.f32 %v843, %v851
      %v885 = vsub.f32 0.0, %v853
      %v886 = vsub.f32 0.0, %v854
      %v887 = vsub.f32 0.0, %v855
      %v888 = vsub.f32 0.0, %v856
      %v889 = vsub.f32 0.0, %v857
      %v890 = vsub.f32 0.0, %v858
      %v891 = vsub.f32 0.0, %v859
      %v892 = vsub.f32 0.0, %v860
      %v893 = vsub.f32 0.0, %v861
      %v894 = vsub.f32 0.0, %v862
      %v895 = vsub.f32 0.0, %v863
      %v896 = vsub.f32 0.0, %v864
      %v897 = vsub.f32 0.0, %v865
      %v898 = vsub.f32 0.0, %v866
      %v899 = vsub.f32 0.0, %v867
      %v900 = vsub.f32 0.0, %v868
      %v901 = vsub.f32 0.0, %v869
      %v902 = vsub.f32 0.0, %v870
      %v903 = vsub.f32 0.0, %v871
      %v904 = vsub.f32 0.0, %v872
      %v905 = vsub.f32 0.0, %v873
      %v906 = vsub.f32 0.0, %v874
      %v907 = vsub.f32 0.0, %v875
      %v908 = vsub.f32 0.0, %v876
      %v909 = vsub.f32 0.0, %v877
      %v910 = vsub.f32 0.0, %v878
      %v911 = vsub.f32 0.0, %v879
      %v912 = vsub.f32 0.0, %v880
      %v913 = vsub.f32 0.0, %v881
      %v914 = vsub.f32 0.0, %v882
      %v915 = vsub.f32 0.0, %v883
      %v916 = vsub.f32 0.0, %v884
      %v917 = vmul.f32 %v885, 1.442695
      %v918 = vpow.pop %v917
      %v919 = vmul.f32 %v886, 1.442695
      %v920 = vpow.pop %v919
      %v921 = vmul.f32 %v887, 1.442695
      %v922 = vpow.pop %v921
      %v923 = vmul.f32 %v888, 1.442695
      %v924 = vpow.pop %v923
      %v925 = vmul.f32 %v889, 1.442695
      %v926 = vpow.pop %v925
      %v927 = vmul.f32 %v890, 1.442695
      %v928 = vpow.pop %v927
      %v929 = vmul.f32 %v891, 1.442695
      %v930 = vpow.pop %v929
      %v931 = vmul.f32 %v892, 1.442695
      %v932 = vpow.pop %v931
      %v933 = vmul.f32 %v893, 1.442695
      %v934 = vpow.pop %v933
      %v935 = vmul.f32 %v894, 1.442695
      %v936 = vpow.pop %v935
      %v937 = vmul.f32 %v895, 1.442695
      %v938 = vpow.pop %v937
      %v939 = vmul.f32 %v896, 1.442695
      %v940 = vpow.pop %v939
      %v941 = vmul.f32 %v897, 1.442695
      %v942 = vpow.pop %v941
      %v943 = vmul.f32 %v898, 1.442695
      %v944 = vpow.pop %v943
      %v945 = vmul.f32 %v899, 1.442695
      %v946 = vpow.pop %v945
      %v947 = vmul.f32 %v900, 1.442695
      %v948 = vpow.pop %v947
      %v949 = vmul.f32 %v901, 1.442695
      %v950 = vpow.pop %v949
      %v951 = vmul.f32 %v902, 1.442695
      %v952 = vpow.pop %v951
      %v953 = vmul.f32 %v903, 1.442695
      %v954 = vpow.pop %v953
      %v955 = vmul.f32 %v904, 1.442695
      %v956 = vpow.pop %v955
      %v957 = vmul.f32 %v905, 1.442695
      %v958 = vpow.pop %v957
      %v959 = vmul.f32 %v906, 1.442695
      %v960 = vpow.pop %v959
      %v961 = vmul.f32 %v907, 1.442695
      %v962 = vpow.pop %v961
      %v963 = vmul.f32 %v908, 1.442695
      %v964 = vpow.pop %v963
      %v965 = vmul.f32 %v909, 1.442695
      %v966 = vpow.pop %v965
      %v967 = vmul.f32 %v910, 1.442695
      %v968 = vpow.pop %v967
      %v969 = vmul.f32 %v911, 1.442695
      %v970 = vpow.pop %v969
      %v971 = vmul.f32 %v912, 1.442695
      %v972 = vpow.pop %v971
      %v973 = vmul.f32 %v913, 1.442695
      %v974 = vpow.pop %v973
      %v975 = vmul.f32 %v914, 1.442695
      %v976 = vpow.pop %v975
      %v977 = vmul.f32 %v915, 1.442695
      %v978 = vpow.pop %v977
      %v979 = vmul.f32 %v916, 1.442695
      %v980 = vpow.pop %v979
      %v981 = vadd.f32 %v918, 1.0
      %v982 = vadd.f32 %v920, 1.0
      %v983 = vadd.f32 %v922, 1.0
      %v984 = vadd.f32 %v924, 1.0
      %v985 = vadd.f32 %v926, 1.0
      %v986 = vadd.f32 %v928, 1.0
      %v987 = vadd.f32 %v930, 1.0
      %v988 = vadd.f32 %v932, 1.0
      %v989 = vadd.f32 %v934, 1.0
      %v990 = vadd.f32 %v936, 1.0
      %v991 = vadd.f32 %v938, 1.0
      %v992 = vadd.f32 %v940, 1.0
      %v993 = vadd.f32 %v942, 1.0
      %v994 = vadd.f32 %v944, 1.0
      %v995 = vadd.f32 %v946, 1.0
      %v996 = vadd.f32 %v948, 1.0
      %v997 = vadd.f32 %v950, 1.0
      %v998 = vadd.f32 %v952, 1.0
      %v999 = vadd.f32 %v954, 1.0
      %v1000 = vadd.f32 %v956, 1.0
      %v1001 = vadd.f32 %v958, 1.0
      %v1002 = vadd.f32 %v960, 1.0
      %v1003 = vadd.f32 %v962, 1.0
      %v1004 = vadd.f32 %v964, 1.0
      %v1005 = vadd.f32 %v966, 1.0
      %v1006 = vadd.f32 %v968, 1.0
      %v1007 = vadd.f32 %v970, 1.0
      %v1008 = vadd.f32 %v972, 1.0
      %v1009 = vadd.f32 %v974, 1.0
      %v1010 = vadd.f32 %v976, 1.0
      %v1011 = vadd.f32 %v978, 1.0
      %v1012 = vadd.f32 %v980, 1.0
      %v1013 = vrcp.pop %v981
      %v1014 = vrcp.pop %v982
      %v1015 = vrcp.pop %v983
      %v1016 = vrcp.pop %v984
      %v1017 = vrcp.pop %v985
      %v1018 = vrcp.pop %v986
      %v1019 = vrcp.pop %v987
      %v1020 = vrcp.pop %v988
      %v1021 = vrcp.pop %v989
      %v1022 = vrcp.pop %v990
      %v1023 = vrcp.pop %v991
      %v1024 = vrcp.pop %v992
      %v1025 = vrcp.pop %v993
      %v1026 = vrcp.pop %v994
      %v1027 = vrcp.pop %v995
      %v1028 = vrcp.pop %v996
      %v1029 = vrcp.pop %v997
      %v1030 = vrcp.pop %v998
      %v1031 = vrcp.pop %v999
      %v1032 = vrcp.pop %v1000
      %v1033 = vrcp.pop %v1001
      %v1034 = vrcp.pop %v1002
      %v1035 = vrcp.pop %v1003
      %v1036 = vrcp.pop %v1004
      %v1037 = vrcp.pop %v1005
      %v1038 = vrcp.pop %v1006
      %v1039 = vrcp.pop %v1007
      %v1040 = vrcp.pop %v1008
      %v1041 = vrcp.pop %v1009
      %v1042 = vrcp.pop %v1010
      %v1043 = vrcp.pop %v1011
      %v1044 = vrcp.pop %v1012
      %v1045 = vmul.f32 %v1013, %v300
      %v1046 = vmul.f32 %v1014, %v301
      %v1047 = vmul.f32 %v1015, %v302
      %v1048 = vmul.f32 %v1016, %v303
      %v1049 = vmul.f32 %v1017, %v304
      %v1050 = vmul.f32 %v1018, %v305
      %v1051 = vmul.f32 %v1019, %v306
      %v1052 = vmul.f32 %v1020, %v307
      %v1053 = vmul.f32 %v1021, %v308
      %v1054 = vmul.f32 %v1022, %v309
      %v1055 = vmul.f32 %v1023, %v310
      %v1056 = vmul.f32 %v1024, %v311
      %v1057 = vmul.f32 %v1025, %v312
      %v1058 = vmul.f32 %v1026, %v313
      %v1059 = vmul.f32 %v1027, %v314
      %v1060 = vmul.f32 %v1028, %v315
      %v1061 = vmul.f32 %v1029, %v316
      %v1062 = vmul.f32 %v1030, %v317
      %v1063 = vmul.f32 %v1031, %v318
      %v1064 = vmul.f32 %v1032, %v319
      %v1065 = vmul.f32 %v1033, %v320
      %v1066 = vmul.f32 %v1034, %v321
      %v1067 = vmul.f32 %v1035, %v322
      %v1068 = vmul.f32 %v1036, %v323
      %v1069 = vmul.f32 %v1037, %v324
      %v1070 = vmul.f32 %v1038, %v325
      %v1071 = vmul.f32 %v1039, %v326
      %v1072 = vmul.f32 %v1040, %v327
      %v1073 = vmul.f32 %v1041, %v328
      %v1074 = vmul.f32 %v1042, %v329
      %v1075 = vmul.f32 %v1043, %v330
      %v1076 = vmul.f32 %v1044, %v331
      %v1077 = vsub.f32 1.0, %v1013
      %v1078 = vsub.f32 1.0, %v1014
      %v1079 = vsub.f32 1.0, %v1015
      %v1080 = vsub.f32 1.0, %v1016
      %v1081 = vsub.f32 1.0, %v1017
      %v1082 = vsub.f32 1.0, %v1018
      %v1083 = vsub.f32 1.0, %v1019
      %v1084 = vsub.f32 1.0, %v1020
      %v1085 = vsub.f32 1.0, %v1021
      %v1086 = vsub.f32 1.0, %v1022
      %v1087 = vsub.f32 1.0, %v1023
      %v1088 = vsub.f32 1.0, %v1024
      %v1089 = vsub.f32 1.0, %v1025
      %v1090 = vsub.f32 1.0, %v1026
      %v1091 = vsub.f32 1.0, %v1027
      %v1092 = vsub.f32 1.0, %v1028
      %v1093 = vsub.f32 1.0, %v1029
      %v1094 = vsub.f32 1.0, %v1030
      %v1095 = vsub.f32 1.0, %v1031
      %v1096 = vsub.f32 1.0, %v1032
      %v1097 = vsub.f32 1.0, %v1033
      %v1098 = vsub.f32 1.0, %v1034
      %v1099 = vsub.f32 1.0, %v1035
      %v1100 = vsub.f32 1.0, %v1036
      %v1101 = vsub.f32 1.0, %v1037
      %v1102 = vsub.f32 1.0, %v1038
      %v1103 = vsub.f32 1.0, %v1039
      %v1104 = vsub.f32 1.0, %v1040
      %v1105 = vsub.f32 1.0, %v1041
      %v1106 = vsub.f32 1.0, %v1042
      %v1107 = vsub.f32 1.0, %v1043
      %v1108 = vsub.f32 1.0, %v1044
      %v1109 = vmul.f32 %v1077, %v332
      %v1110 = vmul.f32 %v1078, %v333
      %v1111 = vmul.f32 %v1079, %v334
      %v1112 = vmul.f32 %v1080, %v335
      %v1113 = vmul.f32 %v1081, %v336
      %v1114 = vmul.f32 %v1082, %v337
      %v1115 = vmul.f32 %v1083, %v338
      %v1116 = vmul.f32 %v1084, %v339
      %v1117 = vmul.f32 %v1085, %v340
      %v1118 = vmul.f32 %v1086, %v341
      %v1119 = vmul.f32 %v1087, %v342
      %v1120 = vmul.f32 %v1088, %v343
      %v1121 = vmul.f32 %v1089, %v344
      %v1122 = vmul.f32 %v1090, %v345
      %v1123 = vmul.f32 %v1091, %v346
      %v1124 = vmul.f32 %v1092, %v347
      %v1125 = vmul.f32 %v1093, %v348
      %v1126 = vmul.f32 %v1094, %v349
      %v1127 = vmul.f32 %v1095, %v350
      %v1128 = vmul.f32 %v1096, %v351
      %v1129 = vmul.f32 %v1097, %v352
      %v1130 = vmul.f32 %v1098, %v353
      %v1131 = vmul.f32 %v1099, %v354
      %v1132 = vmul.f32 %v1100, %v355
      %v1133 = vmul.f32 %v1101, %v356
      %v1134 = vmul.f32 %v1102, %v357
      %v1135 = vmul.f32 %v1103, %v358
      %v1136 = vmul.f32 %v1104, %v359
      %v1137 = vmul.f32 %v1105, %v360
      %v1138 = vmul.f32 %v1106, %v361
      %v1139 = vmul.f32 %v1107, %v362
      %v1140 = vmul.f32 %v1108, %v363
      %v1141 = vadd.f32 %v1045, %v1109
      %v1142 = vadd.f32 %v1046, %v1110
      %v1143 = vadd.f32 %v1047, %v1111
      %v1144 = vadd.f32 %v1048, %v1112
      %v1145 = vadd.f32 %v1049, %v1113
      %v1146 = vadd.f32 %v1050, %v1114
      %v1147 = vadd.f32 %v1051, %v1115
      %v1148 = vadd.f32 %v1052, %v1116
      %v1149 = vadd.f32 %v1053, %v1117
      %v1150 = vadd.f32 %v1054, %v1118
      %v1151 = vadd.f32 %v1055, %v1119
      %v1152 = vadd.f32 %v1056, %v1120
      %v1153 = vadd.f32 %v1057, %v1121
      %v1154 = vadd.f32 %v1058, %v1122
      %v1155 = vadd.f32 %v1059, %v1123
      %v1156 = vadd.f32 %v1060, %v1124
      %v1157 = vadd.f32 %v1061, %v1125
      %v1158 = vadd.f32 %v1062, %v1126
      %v1159 = vadd.f32 %v1063, %v1127
      %v1160 = vadd.f32 %v1064, %v1128
      %v1161 = vadd.f32 %v1065, %v1129
      %v1162 = vadd.f32 %v1066, %v1130
      %v1163 = vadd.f32 %v1067, %v1131
      %v1164 = vadd.f32 %v1068, %v1132
      %v1165 = vadd.f32 %v1069, %v1133
      %v1166 = vadd.f32 %v1070, %v1134
      %v1167 = vadd.f32 %v1071, %v1135
      %v1168 = vadd.f32 %v1072, %v1136
      %v1169 = vadd.f32 %v1073, %v1137
      %v1170 = vadd.f32 %v1074, %v1138
      %v1171 = vadd.f32 %v1075, %v1139
      %v1172 = vadd.f32 %v1076, %v1140
      %v1173 = vadd.f32 %v1141, %v1142
      %v1174 = vadd.f32 %v1173, %v1143
      %v1175 = vadd.f32 %v1174, %v1144
      %v1176 = vadd.f32 %v1175, %v1145
      %v1177 = vadd.f32 %v1176, %v1146
      %v1178 = vadd.f32 %v1177, %v1147
      %v1179 = vadd.f32 %v1178, %v1148
      %v1180 = vadd.f32 %v1179, %v1149
      %v1181 = vadd.f32 %v1180, %v1150
      %v1182 = vadd.f32 %v1181, %v1151
      %v1183 = vadd.f32 %v1182, %v1152
      %v1184 = vadd.f32 %v1183, %v1153
      %v1185 = vadd.f32 %v1184, %v1154
      %v1186 = vadd.f32 %v1185, %v1155
      %v1187 = vadd.f32 %v1186, %v1156
      %v1188 = vadd.f32 %v1187, %v1157
      %v1189 = vadd.f32 %v1188, %v1158
      %v1190 = vadd.f32 %v1189, %v1159
      %v1191 = vadd.f32 %v1190, %v1160
      %v1192 = vadd.f32 %v1191, %v1161
      %v1193 = vadd.f32 %v1192, %v1162
      %v1194 = vadd.f32 %v1193, %v1163
      %v1195 = vadd.f32 %v1194, %v1164
      %v1196 = vadd.f32 %v1195, %v1165
      %v1197 = vadd.f32 %v1196, %v1166
      %v1198 = vadd.f32 %v1197, %v1167
      %v1199 = vadd.f32 %v1198, %v1168
      %v1200 = vadd.f32 %v1199, %v1169
      %v1201 = vadd.f32 %v1200, %v1170
      %v1202 = vadd.f32 %v1201, %v1171
      %v1203 = vadd.f32 %v1202, %v1172
      %1204 = vadd.xlane.f32.xlu0 %v1203
      %v1205 = vpop.xlane.xlu0 %1204
      %v1206 = vrot.slane %v1205, 4
      %v1207 = vadd.f32 %v1205, %v1206
      %v1208 = vrot.slane %v1207, 2
      %v1209 = vadd.f32 %v1207, %v1208
      %v1210 = vrot.slane %v1209, 1
      %v1211 = vadd.f32 %v1209, %v1210
      %s1212 = vtos %v1211
      %s1213 = smul.f32 %s1212, 0.001953125
      %v1214 = vmul.f32 %v1141, %v1141
      %v1215 = vmul.f32 %v1142, %v1142
      %v1216 = vmul.f32 %v1143, %v1143
      %v1217 = vmul.f32 %v1144, %v1144
      %v1218 = vmul.f32 %v1145, %v1145
      %v1219 = vmul.f32 %v1146, %v1146
      %v1220 = vmul.f32 %v1147, %v1147
      %v1221 = vmul.f32 %v1148, %v1148
      %v1222 = vmul.f32 %v1149, %v1149
      %v1223 = vmul.f32 %v1150, %v1150
      %v1224 = vmul.f32 %v1151, %v1151
      %v1225 = vmul.f32 %v1152, %v1152
      %v1226 = vmul.f32 %v1153, %v1153
      %v1227 = vmul.f32 %v1154, %v1154
      %v1228 = vmul.f32 %v1155, %v1155
      %v1229 = vmul.f32 %v1156, %v1156
      %v1230 = vmul.f32 %v1157, %v1157
      %v1231 = vmul.f32 %v1158, %v1158
      %v1232 = vmul.f32 %v1159, %v1159
      %v1233 = vmul.f32 %v1160, %v1160
      %v1234 = vmul.f32 %v1161, %v1161
      %v1235 = vmul.f32 %v1162, %v1162
      %v1236 = vmul.f32 %v1163, %v1163
      %v1237 = vmul.f32 %v1164, %v1164
      %v1238 = vmul.f32 %v1165, %v1165
      %v1239 = vmul.f32 %v1166, %v1166
      %v1240 = vmul.f32 %v1167, %v1167
      %v1241 = vmul.f32 %v1168, %v1168
      %v1242 = vmul.f32 %v1169, %v1169
      %v1243 = vmul.f32 %v1170, %v1170
      %v1244 = vmul.f32 %v1171, %v1171
      %v1245 = vmul.f32 %v1172, %v1172
      %v1246 = vadd.f32 %v1214, %v1215
      %v1247 = vadd.f32 %v1246, %v1216
      %v1248 = vadd.f32 %v1247, %v1217
      %v1249 = vadd.f32 %v1248, %v1218
      %v1250 = vadd.f32 %v1249, %v1219
      %v1251 = vadd.f32 %v1250, %v1220
      %v1252 = vadd.f32 %v1251, %v1221
      %v1253 = vadd.f32 %v1252, %v1222
      %v1254 = vadd.f32 %v1253, %v1223
      %v1255 = vadd.f32 %v1254, %v1224
      %v1256 = vadd.f32 %v1255, %v1225
      %v1257 = vadd.f32 %v1256, %v1226
      %v1258 = vadd.f32 %v1257, %v1227
      %v1259 = vadd.f32 %v1258, %v1228
      %v1260 = vadd.f32 %v1259, %v1229
      %v1261 = vadd.f32 %v1260, %v1230
      %v1262 = vadd.f32 %v1261, %v1231
      %v1263 = vadd.f32 %v1262, %v1232
      %v1264 = vadd.f32 %v1263, %v1233
      %v1265 = vadd.f32 %v1264, %v1234
      %v1266 = vadd.f32 %v1265, %v1235
      %v1267 = vadd.f32 %v1266, %v1236
      %v1268 = vadd.f32 %v1267, %v1237
      %v1269 = vadd.f32 %v1268, %v1238
      %v1270 = vadd.f32 %v1269, %v1239
      %v1271 = vadd.f32 %v1270, %v1240
      %v1272 = vadd.f32 %v1271, %v1241
      %v1273 = vadd.f32 %v1272, %v1242
      %v1274 = vadd.f32 %v1273, %v1243
      %v1275 = vadd.f32 %v1274, %v1244
      %v1276 = vadd.f32 %v1275, %v1245
      %1277 = vadd.xlane.f32.xlu0 %v1276
      %v1278 = vpop.xlane.xlu0 %1277
      %v1279 = vrot.slane %v1278, 4
      %v1280 = vadd.f32 %v1278, %v1279
      %v1281 = vrot.slane %v1280, 2
      %v1282 = vadd.f32 %v1280, %v1281
      %v1283 = vrot.slane %v1282, 1
      %v1284 = vadd.f32 %v1282, %v1283
      %s1285 = vtos %v1284
      %s1286 = smul.f32 %s1285, 0.001953125
      %s1287 = smul.f32 %s1213, %s1213
      %s1288 = ssub.f32 %s1286, %s1287
      %s1289 = smax.f32 %s1288, 0.0
      %v1290 = vstv %s1213
      %v1291 = vsub.f32 %v1141, %v1290
      %v1292 = vsub.f32 %v1142, %v1290
      %v1293 = vsub.f32 %v1143, %v1290
      %v1294 = vsub.f32 %v1144, %v1290
      %v1295 = vsub.f32 %v1145, %v1290
      %v1296 = vsub.f32 %v1146, %v1290
      %v1297 = vsub.f32 %v1147, %v1290
      %v1298 = vsub.f32 %v1148, %v1290
      %v1299 = vsub.f32 %v1149, %v1290
      %v1300 = vsub.f32 %v1150, %v1290
      %v1301 = vsub.f32 %v1151, %v1290
      %v1302 = vsub.f32 %v1152, %v1290
      %v1303 = vsub.f32 %v1153, %v1290
      %v1304 = vsub.f32 %v1154, %v1290
      %v1305 = vsub.f32 %v1155, %v1290
      %v1306 = vsub.f32 %v1156, %v1290
      %v1307 = vsub.f32 %v1157, %v1290
      %v1308 = vsub.f32 %v1158, %v1290
      %v1309 = vsub.f32 %v1159, %v1290
      %v1310 = vsub.f32 %v1160, %v1290
      %v1311 = vsub.f32 %v1161, %v1290
      %v1312 = vsub.f32 %v1162, %v1290
      %v1313 = vsub.f32 %v1163, %v1290
      %v1314 = vsub.f32 %v1164, %v1290
      %v1315 = vsub.f32 %v1165, %v1290
      %v1316 = vsub.f32 %v1166, %v1290
      %v1317 = vsub.f32 %v1167, %v1290
      %v1318 = vsub.f32 %v1168, %v1290
      %v1319 = vsub.f32 %v1169, %v1290
      %v1320 = vsub.f32 %v1170, %v1290
      %v1321 = vsub.f32 %v1171, %v1290
      %v1322 = vsub.f32 %v1172, %v1290
      %s1323 = sadd.f32 %s1289, 1e-05
      %v1324 = vstv %s1323
      %v1325 = vrsqrt.pop %v1324
      %s1326 = vtos %v1325
      %v1327 = vstv %s1326
      %v1328 = vmul.f32 %v1291, %v1327
      %v1329 = vmul.f32 %v1292, %v1327
      %v1330 = vmul.f32 %v1293, %v1327
      %v1331 = vmul.f32 %v1294, %v1327
      %v1332 = vmul.f32 %v1295, %v1327
      %v1333 = vmul.f32 %v1296, %v1327
      %v1334 = vmul.f32 %v1297, %v1327
      %v1335 = vmul.f32 %v1298, %v1327
      %v1336 = vmul.f32 %v1299, %v1327
      %v1337 = vmul.f32 %v1300, %v1327
      %v1338 = vmul.f32 %v1301, %v1327
      %v1339 = vmul.f32 %v1302, %v1327
      %v1340 = vmul.f32 %v1303, %v1327
      %v1341 = vmul.f32 %v1304, %v1327
      %v1342 = vmul.f32 %v1305, %v1327
      %v1343 = vmul.f32 %v1306, %v1327
      %v1344 = vmul.f32 %v1307, %v1327
      %v1345 = vmul.f32 %v1308, %v1327
      %v1346 = vmul.f32 %v1309, %v1327
      %v1347 = vmul.f32 %v1310, %v1327
      %v1348 = vmul.f32 %v1311, %v1327
      %v1349 = vmul.f32 %v1312, %v1327
      %v1350 = vmul.f32 %v1313, %v1327
      %v1351 = vmul.f32 %v1314, %v1327
      %v1352 = vmul.f32 %v1315, %v1327
      %v1353 = vmul.f32 %v1316, %v1327
      %v1354 = vmul.f32 %v1317, %v1327
      %v1355 = vmul.f32 %v1318, %v1327
      %v1356 = vmul.f32 %v1319, %v1327
      %v1357 = vmul.f32 %v1320, %v1327
      %v1358 = vmul.f32 %v1321, %v1327
      %v1359 = vmul.f32 %v1322, %v1327
      %v1360 = vld [vmem:[%s5] sm:$0x1]
      %v1362 = vlaneseq
      %v1363 = vshrl.u32 %v1362, 7
      %v1364 = vsub.s32 0, %v1363
      %v1365 = vrot.slane %v1360, %v1364
      %v1367 = vmul.f32 %v1328, %v1365
      %v1368 = vmul.f32 %v1329, %v1365
      %v1369 = vmul.f32 %v1330, %v1365
      %v1370 = vmul.f32 %v1331, %v1365
      %v1371 = vmul.f32 %v1332, %v1365
      %v1372 = vmul.f32 %v1333, %v1365
      %v1373 = vmul.f32 %v1334, %v1365
      %v1374 = vmul.f32 %v1335, %v1365
      %v1375 = vmul.f32 %v1336, %v1365
      %v1376 = vmul.f32 %v1337, %v1365
      %v1377 = vmul.f32 %v1338, %v1365
      %v1378 = vmul.f32 %v1339, %v1365
      %v1379 = vmul.f32 %v1340, %v1365
      %v1380 = vmul.f32 %v1341, %v1365
      %v1381 = vmul.f32 %v1342, %v1365
      %v1382 = vmul.f32 %v1343, %v1365
      %v1383 = vmul.f32 %v1344, %v1365
      %v1384 = vmul.f32 %v1345, %v1365
      %v1385 = vmul.f32 %v1346, %v1365
      %v1386 = vmul.f32 %v1347, %v1365
      %v1387 = vmul.f32 %v1348, %v1365
      %v1388 = vmul.f32 %v1349, %v1365
      %v1389 = vmul.f32 %v1350, %v1365
      %v1390 = vmul.f32 %v1351, %v1365
      %v1391 = vmul.f32 %v1352, %v1365
      %v1392 = vmul.f32 %v1353, %v1365
      %v1393 = vmul.f32 %v1354, %v1365
      %v1394 = vmul.f32 %v1355, %v1365
      %v1395 = vmul.f32 %v1356, %v1365
      %v1396 = vmul.f32 %v1357, %v1365
      %v1397 = vmul.f32 %v1358, %v1365
      %v1398 = vmul.f32 %v1359, %v1365
      %v1399 = vld [vmem:[%s6] sm:$0x1]
      %v1401 = vlaneseq
      %v1402 = vshrl.u32 %v1401, 7
      %v1403 = vsub.s32 0, %v1402
      %v1404 = vrot.slane %v1399, %v1403
      %v1406 = vadd.f32 %v1367, %v1404
      %v1407 = vadd.f32 %v1368, %v1404
      %v1408 = vadd.f32 %v1369, %v1404
      %v1409 = vadd.f32 %v1370, %v1404
      %v1410 = vadd.f32 %v1371, %v1404
      %v1411 = vadd.f32 %v1372, %v1404
      %v1412 = vadd.f32 %v1373, %v1404
      %v1413 = vadd.f32 %v1374, %v1404
      %v1414 = vadd.f32 %v1375, %v1404
      %v1415 = vadd.f32 %v1376, %v1404
      %v1416 = vadd.f32 %v1377, %v1404
      %v1417 = vadd.f32 %v1378, %v1404
      %v1418 = vadd.f32 %v1379, %v1404
      %v1419 = vadd.f32 %v1380, %v1404
      %v1420 = vadd.f32 %v1381, %v1404
      %v1421 = vadd.f32 %v1382, %v1404
      %v1422 = vadd.f32 %v1383, %v1404
      %v1423 = vadd.f32 %v1384, %v1404
      %v1424 = vadd.f32 %v1385, %v1404
      %v1425 = vadd.f32 %v1386, %v1404
      %v1426 = vadd.f32 %v1387, %v1404
      %v1427 = vadd.f32 %v1388, %v1404
      %v1428 = vadd.f32 %v1389, %v1404
      %v1429 = vadd.f32 %v1390, %v1404
      %v1430 = vadd.f32 %v1391, %v1404
      %v1431 = vadd.f32 %v1392, %v1404
      %v1432 = vadd.f32 %v1393, %v1404
      %v1433 = vadd.f32 %v1394, %v1404
      %v1434 = vadd.f32 %v1395, %v1404
      %v1435 = vadd.f32 %v1396, %v1404
      %v1436 = vadd.f32 %v1397, %v1404
      %v1437 = vadd.f32 %v1398, %v1404
      %v1438 = vmax.f32 %v1406, 0.0
      %v1439 = vmax.f32 %v1407, 0.0
      %v1440 = vmax.f32 %v1408, 0.0
      %v1441 = vmax.f32 %v1409, 0.0
      %v1442 = vmax.f32 %v1410, 0.0
      %v1443 = vmax.f32 %v1411, 0.0
      %v1444 = vmax.f32 %v1412, 0.0
      %v1445 = vmax.f32 %v1413, 0.0
      %v1446 = vmax.f32 %v1414, 0.0
      %v1447 = vmax.f32 %v1415, 0.0
      %v1448 = vmax.f32 %v1416, 0.0
      %v1449 = vmax.f32 %v1417, 0.0
      %v1450 = vmax.f32 %v1418, 0.0
      %v1451 = vmax.f32 %v1419, 0.0
      %v1452 = vmax.f32 %v1420, 0.0
      %v1453 = vmax.f32 %v1421, 0.0
      %v1454 = vmax.f32 %v1422, 0.0
      %v1455 = vmax.f32 %v1423, 0.0
      %v1456 = vmax.f32 %v1424, 0.0
      %v1457 = vmax.f32 %v1425, 0.0
      %v1458 = vmax.f32 %v1426, 0.0
      %v1459 = vmax.f32 %v1427, 0.0
      %v1460 = vmax.f32 %v1428, 0.0
      %v1461 = vmax.f32 %v1429, 0.0
      %v1462 = vmax.f32 %v1430, 0.0
      %v1463 = vmax.f32 %v1431, 0.0
      %v1464 = vmax.f32 %v1432, 0.0
      %v1465 = vmax.f32 %v1433, 0.0
      %v1466 = vmax.f32 %v1434, 0.0
      %v1467 = vmax.f32 %v1435, 0.0
      %v1468 = vmax.f32 %v1436, 0.0
      %v1469 = vmax.f32 %v1437, 0.0
      %1470 = vst [vmem:[%s298] sm:$0xff] %v1438
      %1471 = vst [vmem:[%s298 + $0x8] sm:$0xff] %v1439
      %1472 = vst [vmem:[%s298 + $0x10] sm:$0xff] %v1440
      %1473 = vst [vmem:[%s298 + $0x18] sm:$0xff] %v1441
      %1474 = vst [vmem:[%s298 + $0x20] sm:$0xff] %v1442
      %1475 = vst [vmem:[%s298 + $0x28] sm:$0xff] %v1443
      %1476 = vst [vmem:[%s298 + $0x30] sm:$0xff] %v1444
      %1477 = vst [vmem:[%s298 + $0x38] sm:$0xff] %v1445
      %1478 = vst [vmem:[%s298 + $0x40] sm:$0xff] %v1446
      %1479 = vst [vmem:[%s298 + $0x48] sm:$0xff] %v1447
      %1480 = vst [vmem:[%s298 + $0x50] sm:$0xff] %v1448
      %1481 = vst [vmem:[%s298 + $0x58] sm:$0xff] %v1449
      %1482 = vst [vmem:[%s298 + $0x60] sm:$0xff] %v1450
      %1483 = vst [vmem:[%s298 + $0x68] sm:$0xff] %v1451
      %1484 = vst [vmem:[%s298 + $0x70] sm:$0xff] %v1452
      %1485 = vst [vmem:[%s298 + $0x78] sm:$0xff] %v1453
      %1486 = vst [vmem:[%s298 + $0x80] sm:$0xff] %v1454
      %1487 = vst [vmem:[%s298 + $0x88] sm:$0xff] %v1455
      %1488 = vst [vmem:[%s298 + $0x90] sm:$0xff] %v1456
      %1489 = vst [vmem:[%s298 + $0x98] sm:$0xff] %v1457
      %1490 = vst [vmem:[%s298 + $0xa0] sm:$0xff] %v1458
      %1491 = vst [vmem:[%s298 + $0xa8] sm:$0xff] %v1459
      %1492 = vst [vmem:[%s298 + $0xb0] sm:$0xff] %v1460
      %1493 = vst [vmem:[%s298 + $0xb8] sm:$0xff] %v1461
      %1494 = vst [vmem:[%s298 + $0xc0] sm:$0xff] %v1462
      %1495 = vst [vmem:[%s298 + $0xc8] sm:$0xff] %v1463
      %1496 = vst [vmem:[%s298 + $0xd0] sm:$0xff] %v1464
      %1497 = vst [vmem:[%s298 + $0xd8] sm:$0xff] %v1465
      %1498 = vst [vmem:[%s298 + $0xe0] sm:$0xff] %v1466
      %1499 = vst [vmem:[%s298 + $0xe8] sm:$0xff] %v1467
      %1500 = vst [vmem:[%s298 + $0xf0] sm:$0xff] %v1468
      %1501 = vst [vmem:[%s298 + $0xf8] sm:$0xff] %v1469
      %p1502 = scmp.lt.s32.totalorder %s18, 1
      %s1503 = scalar_select %p1502, %s18, 1
      %s1504 = smul.addr %s1503, 32
      %s1505 = smul.addr %s1504, 8
      %s1506 = scalar_lea.vmem %s7, %s1505
      // Predicated region
      $region49: #{octave_conv_forward.8} parent=47 // pred_check
        %p1507 = pneg %p193
      $region50: #{octave_conv_forward.8} parent=47 // pred_check_branch
        %1509 = sbr.rel (%p1507) target = $region52
      $region51: #{octave_conv_forward.8} parent=47 // pred_region
        _
      $region52: #{octave_conv_forward.8} parent=47 // pred_fallthru
        _
    $region48: #{octave_conv_forward.8} parent=5 // pred_fallthru
      _
    %p1510 = scmp.le.s32.totalorder 2, %s13
    // Predicated region
    $region53: #{octave_conv_forward.8} parent=5 // pred_check
      %p1511 = pneg %p1510
    $region54: #{octave_conv_forward.8} parent=5 // pred_check_branch
      %1513 = sbr.rel (%p1511) target = $region56
    $region55: #{octave_conv_forward.8} parent=5 // pred_region
      %s1514 = ssub.s32 %s13, 2
      // Predicated region
      $region57: #{octave_conv_forward.8} parent=55 // pred_check
        %p1515 = pneg %p199
      $region58: #{octave_conv_forward.8} parent=55 // pred_check_branch
        %1517 = sbr.rel (%p1515) target = $region60
      $region59: #{octave_conv_forward.8} parent=55 // pred_region
        %p1518 = scmp.lt.s32.totalorder %s19, 1
        %s1519 = scalar_select %p1518, %s19, 1
        %s1520 = smul.addr %s1519, 32
        %s1521 = smul.addr %s1520, 8
        %s1522 = scalar_lea.vmem %s7, %s1521
      $region60: #{octave_conv_forward.8} parent=55 // pred_fallthru
        _
    $region56: #{octave_conv_forward.8} parent=5 // pred_fallthru
      _
  $region6: #{octave_conv_forward.8} parent=0 // loop_footer
    %s17 = sadd.s32 1, %s13
  $region7: #{octave_conv_forward.8} parent=0 // loop_footer_branch
    %12 = sbr.rel target = $region3
  $region8: #{octave_conv_forward.8} parent=0 // loop_exit
    _

// kernel: octave_conv_forward.5
$region0: #{octave_conv_forward.5}
  #allocation0 [shape = 'u32[]', space=smem, size = 0x4, offset = 0x4, fixed_abs, tag = 'smem constant byte address 0x4 - core index']
  #allocation1 [shape = 'u32[144,128]{1,0:T(1,128)}', space=vmem, size = 0x12000, scoped, tag = 'internal scratch']
  %s0 = inlined_call_operand.vmem [shape: f32[2,18,18,128], index: 0, kind: input, shape index: {}]
  %s1 = inlined_call_operand.vmem [shape: bf16[9,128,128], index: 1, kind: input, shape index: {}]
  %s2 = inlined_call_operand.vmem [shape: f32[2,256,128], index: 2, kind: output, shape index: {}]
  %s3 = sld [smem:[#allocation0]]
  $region41: #{octave_conv_forward.5} parent=0
    _
  %s5 = ssub.s32 1, %s3
  %s6 = scalar_select 0, %s5, %s3
  loop: start=0, step=1, limit=4
  $region2: #{octave_conv_forward.5} parent=0 // loop_pre_header
    _
  $region3: #{octave_conv_forward.5} parent=0 // loop_header
    %s8 = sphi 0, %s12
    %p9 = scmp.ge.s32.totalorder %s8, 4
    %s18 = sphi 0, %s20
    %s21 = sphi 0, %s18
    %s22 = sphi 0, %s21
    %s38 = sphi 0, %s22
    %s42 = sphi 0, %s42
    %s44 = sphi 0, %s42
    %s45 = sphi 0, %s44
    %s59 = sphi 0, %s45
    %s65 = sphi 0, %s67
    %s68 = sphi 0, %s65
    %s69 = sphi 0, %s68
    %s85 = sphi 0, %s69
  $region4: #{octave_conv_forward.5} parent=0 // loop_header_branch
    %11 = sbr.rel (%p9) target = $region8
  $region5: #{octave_conv_forward.5} parent=0 // loop_body
    %s13 = ssub.s32 %s8, 1
    %s14 = ssub.s32 %s8, 2
    %s15 = sadd.s32 %s8, 1
    %s16 = ssub.s32 %s8, %s15
    %p17 = scmp.eq.s32.totalorder %s16, 0
    %s19 = sadd.s32 %s18, 1
    %s20 = scalar_select %p17, %s18, %s19
    %p23 = pneg %p17
    %p24 = scmp.eq.s32.totalorder %s8, 1
    %p25 = por %p23, %p24
    %p26 = scmp.ne.s32.totalorder %s18, %s21
    %p27 = scmp.eq.s32.totalorder %s8, 0
    %p28 = por %p26, %p27
    %p29 = scmp.ne.s32.totalorder %s18, %s21
    %p30 = scmp.eq.s32.totalorder %s13, 1
    %p31 = por %p29, %p30
    %p32 = scmp.ne.s32.totalorder %s21, %s22
    %p33 = scmp.eq.s32.totalorder %s13, 0
    %p34 = por %p32, %p33
    %p35 = scmp.ne.s32.totalorder %s21, %s22
    %p36 = scmp.eq.s32.totalorder %s14, 1
    %p37 = por %p35, %p36
    %p39 = scmp.ne.s32.totalorder %s22, %s38
    %p40 = scmp.eq.s32.totalorder %s14, 0
    %p41 = por %p39, %p40
    %s43 = sadd.s32 %s42, 1
    %p46 = scmp.eq.s32.totalorder %s8, 1
    %p47 = scmp.ne.s32.totalorder %s42, %s44
    %p48 = scmp.eq.s32.totalorder %s8, 0
    %p49 = por %p47, %p48
    %p50 = scmp.ne.s32.totalorder %s42, %s44
    %p51 = scmp.eq.s32.totalorder %s13, 1
    %p52 = por %p50, %p51
    %p53 = scmp.ne.s32.totalorder %s44, %s45
    %p54 = scmp.eq.s32.totalorder %s13, 0
    %p55 = por %p53, %p54
    %p56 = scmp.ne.s32.totalorder %s44, %s45
    %p57 = scmp.eq.s32.totalorder %s14, 1
    %p58 = por %p56, %p57
    %p60 = scmp.ne.s32.totalorder %s45, %s59
    %p61 = scmp.eq.s32.totalorder %s14, 0
    %p62 = por %p60, %p61
    %s63 = ssub.s32 %s8, %s15
    %p64 = scmp.eq.s32.totalorder %s63, 0
    %s66 = sadd.s32 %s65, 1
    %s67 = scalar_select %p64, %s65, %s66
    %p70 = pneg %p64
    %p71 = scmp.eq.s32.totalorder %s8, 1
    %p72 = por %p70, %p71
    %p73 = scmp.ne.s32.totalorder %s65, %s68
    %p74 = scmp.eq.s32.totalorder %s8, 0
    %p75 = por %p73, %p74
    %p76 = scmp.ne.s32.totalorder %s65, %s68
    %p77 = scmp.eq.s32.totalorder %s13, 1
    %p78 = por %p76, %p77
    %p79 = scmp.ne.s32.totalorder %s68, %s69
    %p80 = scmp.eq.s32.totalorder %s13, 0
    %p81 = por %p79, %p80
    %p82 = scmp.ne.s32.totalorder %s68, %s69
    %p83 = scmp.eq.s32.totalorder %s14, 1
    %p84 = por %p82, %p83
    %p86 = scmp.ne.s32.totalorder %s69, %s85
    %p87 = scmp.eq.s32.totalorder %s14, 0
    %p88 = por %p86, %p87
    %p89 = scmp.le.s32.totalorder 1, %s8
    %p90 = scmp.lt.s32.totalorder %s8, 3
    %p91 = pnand %p89, %p90
    %p92 = pneg %p91
    // Predicated region
    $region9: #{octave_conv_forward.5} parent=5 // pred_check
      _
    $region10: #{octave_conv_forward.5} parent=5 // pred_check_branch
      %94 = sbr.rel (%p91) target = $region12
    $region11: #{octave_conv_forward.5} parent=5 // pred_region
      %s95 = ssub.s32 %s8, 1
      // Predicated region
      $region13: #{octave_conv_forward.5} parent=11 // pred_check
        %p96 = pneg %p55
      $region14: #{octave_conv_forward.5} parent=11 // pred_check_branch
        %98 = sbr.rel (%p96) target = $region16
      $region15: #{octave_conv_forward.5} parent=11 // pred_region
        _
      $region16: #{octave_conv_forward.5} parent=11 // pred_fallthru
        _
    $region12: #{octave_conv_forward.5} parent=5 // pred_fallthru
      _
    %p99 = scmp.lt.s32.totalorder %s8, 2
    // Predicated region
    $region17: #{octave_conv_forward.5} parent=5 // pred_check
      %p100 = pneg %p99
    $region18: #{octave_conv_forward.5} parent=5 // pred_check_branch
      %102 = sbr.rel (%p100) target = $region20
    $region19: #{octave_conv_forward.5} parent=5 // pred_region
      // Predicated region
      $region21: #{octave_conv_forward.5} parent=19 // pred_check
        %p103 = pneg %p28
      $region22: #{octave_conv_forward.5} parent=19 // pred_check_branch
        %105 = sbr.rel (%p103) target = $region24
      $region23: #{octave_conv_forward.5} parent=19 // pred_region
        %p106 = scmp.lt.s32.totalorder %s8, 1
        %s107 = scalar_select %p106, %s8, 1
        %s108 = smul.addr %s107, 54
        %s109 = smul.addr %s108, 8
        %s110 = scalar_lea.vmem %s0, %s109
      $region24: #{octave_conv_forward.5} parent=19 // pred_fallthru
        _
    $region20: #{octave_conv_forward.5} parent=5 // pred_fallthru
      _
    %p111 = scmp.le.s32.totalorder 1, %s8
    %p112 = scmp.lt.s32.totalorder %s8, 3
    %p113 = pnand %p111, %p112
    %p114 = pneg %p113
    // Predicated region
    $region25: #{octave_conv_forward.5} parent=5 // pred_check
      _
    $region26: #{octave_conv_forward.5} parent=5 // pred_check_branch
      %116 = sbr.rel (%p113) target = $region28
    $region27: #{octave_conv_forward.5} parent=5 // pred_region
      %s117 = ssub.s32 %s8, 1
      %p118 = scmp.lt.s32.totalorder %s13, 1
      %s119 = scalar_select %p118, %s13, 1
      %s120 = smul.addr %s119, 54
      %s121 = smul.addr %s120, 8
      %s122 = scalar_lea.vmem %s0, %s121
      %p123 = pneg %p34
      %p124 = pneg %p31
      %p125 = pneg %p55
      %p126 = pneg %p52
      %p127 = pneg %p81
      %p128 = pneg %p78
      %p129 = scmp.lt.s32.totalorder %s13, 1
      %s130 = scalar_select %p129, %s13, 1
      %s131 = smul.addr %s130, 32
      %s132 = smul.addr %s131, 8
      %s133 = scalar_lea.vmem %s2, %s132
      %p134 = scmp.lt.s32.totalorder %s13, 1
      %s135 = scalar_select %p134, %s13, 1
      %s136 = smul.addr %s135, 54
      %s137 = smul.addr %s136, 8
      %s138 = scalar_lea.vmem %s0, %s137
      %p139 = scmp.lt.s32.totalorder %s13, 1
      %s140 = scalar_select %p139, %s13, 1
      %s141 = smul.addr %s140, 32
      %s142 = smul.addr %s141, 8
      %s143 = scalar_lea.vmem %s2, %s142
      %v145 = vld [vmem:[%s138] sm:$0xff]
      %v146 = vld [vmem:[%s138 + $0x8] sm:$0xff]
      %v147 = vld [vmem:[%s138 + $0x10] sm:$0x3]
      %v148 = vld [vmem:[%s138 + $0x18] sm:$0xff]
      %v149 = vld [vmem:[%s138 + $0x20] sm:$0xff]
      %v150 = vld [vmem:[%s138 + $0x28] sm:$0x3]
      %v151 = vld [vmem:[%s138 + $0x30] sm:$0xff]
      %v152 = vld [vmem:[%s138 + $0x38] sm:$0xff]
      %v153 = vld [vmem:[%s138 + $0x40] sm:$0x3]
      %v154 = vld [vmem:[%s138 + $0x48] sm:$0xff]
      %v155 = vld [vmem:[%s138 + $0x50] sm:$0xff]
      %v156 = vld [vmem:[%s138 + $0x58] sm:$0x3]
      %v157 = vld [vmem:[%s138 + $0x60] sm:$0xff]
      %v158 = vld [vmem:[%s138 + $0x68] sm:$0xff]
      %v159 = vld [vmem:[%s138 + $0x70] sm:$0x3]
      %v160 = vld [vmem:[%s138 + $0x78] sm:$0xff]
      %v161 = vld [vmem:[%s138 + $0x80] sm:$0xff]
      %v162 = vld [vmem:[%s138 + $0x88] sm:$0x3]
      %v163 = vld [vmem:[%s138 + $0x90] sm:$0xff]
      %v164 = vld [vmem:[%s138 + $0x98] sm:$0xff]
      %v165 = vld [vmem:[%s138 + $0xa0] sm:$0x3]
      %v166 = vld [vmem:[%s138 + $0xa8] sm:$0xff]
      %v167 = vld [vmem:[%s138 + $0xb0] sm:$0xff]
      %v168 = vld [vmem:[%s138 + $0xb8] sm:$0x3]
      %v169 = vld [vmem:[%s138 + $0xc0] sm:$0xff]
      %v170 = vld [vmem:[%s138 + $0xc8] sm:$0xff]
      %v171 = vld [vmem:[%s138 + $0xd0] sm:$0x3]
      %v172 = vld [vmem:[%s138 + $0xd8] sm:$0xff]
      %v173 = vld [vmem:[%s138 + $0xe0] sm:$0xff]
      %v174 = vld [vmem:[%s138 + $0xe8] sm:$0x3]
      %v175 = vld [vmem:[%s138 + $0xf0] sm:$0xff]
      %v176 = vld [vmem:[%s138 + $0xf8] sm:$0xff]
      %v177 = vld [vmem:[%s138 + $0x100] sm:$0x3]
      %v178 = vld [vmem:[%s138 + $0x108] sm:$0xff]
      %v179 = vld [vmem:[%s138 + $0x110] sm:$0xff]
      %v180 = vld [vmem:[%s138 + $0x118] sm:$0x3]
      %v181 = vld [vmem:[%s138 + $0x120] sm:$0xff]
      %v182 = vld [vmem:[%s138 + $0x128] sm:$0xff]
      %v183 = vld [vmem:[%s138 + $0x130] sm:$0x3]
      %v184 = vld [vmem:[%s138 + $0x138] sm:$0xff]
      %v185 = vld [vmem:[%s138 + $0x140] sm:$0xff]
      %v186 = vld [vmem:[%s138 + $0x148] sm:$0x3]
      %v187 = vld [vmem:[%s138 + $0x150] sm:$0xff]
      %v188 = vld [vmem:[%s138 + $0x158] sm:$0xff]
      %v189 = vld [vmem:[%s138 + $0x160] sm:$0x3]
      %v190 = vld [vmem:[%s138 + $0x168] sm:$0xff]
      %v191 = vld [vmem:[%s138 + $0x170] sm:$0xff]
      %v192 = vld [vmem:[%s138 + $0x178] sm:$0x3]
      %v193 = vld [vmem:[%s138 + $0x180] sm:$0xff]
      %v194 = vld [vmem:[%s138 + $0x188] sm:$0xff]
      %v195 = vld [vmem:[%s138 + $0x190] sm:$0x3]
      %v196 = vld [vmem:[%s138 + $0x198] sm:$0xff]
      %v197 = vld [vmem:[%s138 + $0x1a0] sm:$0xff]
      %v198 = vld [vmem:[%s138 + $0x1a8] sm:$0x3]
      %v199 = vpack.c.bf16 %v146, %v145
      %v200 = vpack.c.bf16 %v149, %v148
      %v201 = vpack.c.bf16 %v152, %v151
      %v202 = vpack.c.bf16 %v155, %v154
      %v203 = vpack.c.bf16 %v158, %v157
      %v204 = vpack.c.bf16 %v161, %v160
      %v205 = vpack.c.bf16 %v164, %v163
      %v206 = vpack.c.bf16 %v167, %v166
      %v207 = vpack.c.bf16 %v170, %v169
      %v208 = vpack.c.bf16 %v173, %v172
      %v209 = vpack.c.bf16 %v176, %v175
      %v210 = vpack.c.bf16 %v179, %v178
      %v211 = vpack.c.bf16 %v182, %v181
      %v212 = vpack.c.bf16 %v185, %v184
      %v213 = vpack.c.bf16 %v188, %v187
      %v214 = vpack.c.bf16 %v191, %v190
      %v215 = vld [vmem:[%s1] sm:$0xf]
      %v216 = vld [vmem:[%s1 + $0x4] sm:$0xf]
      %v217 = vld [vmem:[%s1 + $0x8] sm:$0xf]
      %v218 = vld [vmem:[%s1 + $0xc] sm:$0xf]
      %v219 = vld [vmem:[%s1 + $0x10] sm:$0xf]
      %v220 = vld [vmem:[%s1 + $0x14] sm:$0xf]
      %v221 = vld [vmem:[%s1 + $0x18] sm:$0xf]
      %v222 = vld [vmem:[%s1 + $0x1c] sm:$0xf]
      %v223 = vld [vmem:[%s1 + $0x20] sm:$0xf]
      %v224 = vld [vmem:[%s1 + $0x24] sm:$0xf]
      %v225 = vld [vmem:[%s1 + $0x28] sm:$0xf]
      %v226 = vld [vmem:[%s1 + $0x2c] sm:$0xf]
      %v227 = vld [vmem:[%s1 + $0x30] sm:$0xf]
      %v228 = vld [vmem:[%s1 + $0x34] sm:$0xf]
      %v229 = vld [vmem:[%s1 + $0x38] sm:$0xf]
      %v230 = vld [vmem:[%s1 + $0x3c] sm:$0xf]
      %vm279 = vcmask 1046528
      %v280 = vrot.slane %v145, 1
      %v281 = vrot.slane %v146, 1
      %v282 = vsel %vm279, %v280, %v281
      %v283 = vrot.slane %v147, 1
      %v284 = vsel %vm279, %v281, %v283
      %v285 = vrot.slane %v148, 1
      %v286 = vrot.slane %v149, 1
      %v287 = vsel %vm279, %v285, %v286
      %v288 = vrot.slane %v150, 1
      %v289 = vsel %vm279, %v286, %v288
      %v290 = vrot.slane %v151, 1
      %v291 = vrot.slane %v152, 1
      %v292 = vsel %vm279, %v290, %v291
      %v293 = vrot.slane %v153, 1
      %v294 = vsel %vm279, %v291, %v293
      %v295 = vrot.slane %v154, 1
      %v296 = vrot.slane %v155, 1
      %v297 = vsel %vm279, %v295, %v296
      %v298 = vrot.slane %v156, 1
      %v299 = vsel %vm279, %v296, %v298
      %v300 = vrot.slane %v157, 1
      %v301 = vrot.slane %v158, 1
      %v302 = vsel %vm279, %v300, %v301
      %v303 = vrot.slane %v159, 1
      %v304 = vsel %vm279, %v301, %v303
      %v305 = vrot.slane %v160, 1
      %v306 = vrot.slane %v161, 1
      %v307 = vsel %vm279, %v305, %v306
      %v308 = vrot.slane %v162, 1
      %v309 = vsel %vm279, %v306, %v308
      %v310 = vrot.slane %v163, 1
      %v311 = vrot.slane %v164, 1
      %v312 = vsel %vm279, %v310, %v311
      %v313 = vrot.slane %v165, 1
      %v314 = vsel %vm279, %v311, %v313
      %v315 = vrot.slane %v166, 1
      %v316 = vrot.slane %v167, 1
      %v317 = vsel %vm279, %v315, %v316
      %v318 = vrot.slane %v168, 1
      %v319 = vsel %vm279, %v316, %v318
      %v320 = vrot.slane %v169, 1
      %v321 = vrot.slane %v170, 1
      %v322 = vsel %vm279, %v320, %v321
      %v323 = vrot.slane %v171, 1
      %v324 = vsel %vm279, %v321, %v323
      %v325 = vrot.slane %v172, 1
      %v326 = vrot.slane %v173, 1
      %v327 = vsel %vm279, %v325, %v326
      %v328 = vrot.slane %v174, 1
      %v329 = vsel %vm279, %v326, %v328
      %v330 = vrot.slane %v175, 1
      %v331 = vrot.slane %v176, 1
      %v332 = vsel %vm279, %v330, %v331
      %v333 = vrot.slane %v177, 1
      %v334 = vsel %vm279, %v331, %v333
      %v335 = vrot.slane %v178, 1
      %v336 = vrot.slane %v179, 1
      %v337 = vsel %vm279, %v335, %v336
      %v338 = vrot.slane %v180, 1
      %v339 = vsel %vm279, %v336, %v338
      %v340 = vrot.slane %v181, 1
      %v341 = vrot.slane %v182, 1
      %v342 = vsel %vm279, %v340, %v341
      %v343 = vrot.slane %v183, 1
      %v344 = vsel %vm279, %v341, %v343
      %v345 = vrot.slane %v184, 1
      %v346 = vrot.slane %v185, 1
      %v347 = vsel %vm279, %v345, %v346
      %v348 = vrot.slane %v186, 1
      %v349 = vsel %vm279, %v346, %v348
      %v350 = vrot.slane %v187, 1
      %v351 = vrot.slane %v188, 1
      %v352 = vsel %vm279, %v350, %v351
      %v353 = vrot.slane %v189, 1
      %v354 = vsel %vm279, %v351, %v353
      %v355 = vrot.slane %v190, 1
      %v356 = vrot.slane %v191, 1
      %v357 = vsel %vm279, %v355, %v356
      %v358 = vrot.slane %v192, 1
      %v359 = vsel %vm279, %v356, %v358
      %v392 = vpack.c.bf16 %v284, %v282
      %v393 = vpack.c.bf16 %v289, %v287
      %v394 = vpack.c.bf16 %v294, %v292
      %v395 = vpack.c.bf16 %v299, %v297
      %v396 = vpack.c.bf16 %v304, %v302
      %v397 = vpack.c.bf16 %v309, %v307
      %v398 = vpack.c.bf16 %v314, %v312
      %v399 = vpack.c.bf16 %v319, %v317
      %v400 = vpack.c.bf16 %v324, %v322
      %v401 = vpack.c.bf16 %v329, %v327
      %v402 = vpack.c.bf16 %v334, %v332
      %v403 = vpack.c.bf16 %v339, %v337
      %v404 = vpack.c.bf16 %v344, %v342
      %v405 = vpack.c.bf16 %v349, %v347
      %v406 = vpack.c.bf16 %v354, %v352
      %v407 = vpack.c.bf16 %v359, %v357
      %s408 = scalar_lea.vmem %s1, 64
      %v409 = vld [vmem:[%s408] sm:$0xf]
      %v410 = vld [vmem:[%s408 + $0x4] sm:$0xf]
      %v411 = vld [vmem:[%s408 + $0x8] sm:$0xf]
      %v412 = vld [vmem:[%s408 + $0xc] sm:$0xf]
      %v413 = vld [vmem:[%s408 + $0x10] sm:$0xf]
      %v414 = vld [vmem:[%s408 + $0x14] sm:$0xf]
      %v415 = vld [vmem:[%s408 + $0x18] sm:$0xf]
      %v416 = vld [vmem:[%s408 + $0x1c] sm:$0xf]
      %v417 = vld [vmem:[%s408 + $0x20] sm:$0xf]
      %v418 = vld [vmem:[%s408 + $0x24] sm:$0xf]
      %v419 = vld [vmem:[%s408 + $0x28] sm:$0xf]
      %v420 = vld [vmem:[%s408 + $0x2c] sm:$0xf]
      %v421 = vld [vmem:[%s408 + $0x30] sm:$0xf]
      %v422 = vld [vmem:[%s408 + $0x34] sm:$0xf]
      %v423 = vld [vmem:[%s408 + $0x38] sm:$0xf]
      %v424 = vld [vmem:[%s408 + $0x3c] sm:$0xf]
      %v441 = vunpack.c.l.b16 %v409
      %v442 = vunpack.c.l.b16 %v410
      %v443 = vunpack.c.l.b16 %v411
      %v444 = vunpack.c.l.b16 %v412
      %v445 = vunpack.c.l.b16 %v413
      %v446 = vunpack.c.l.b16 %v414
      %v447 = vunpack.c.l.b16 %v415
      %v448 = vunpack.c.l.b16 %v416
      %v449 = vunpack.c.l.b16 %v417
      %v450 = vunpack.c.l.b16 %v418
      %v451 = vunpack.c.l.b16 %v419
      %v452 = vunpack.c.l.b16 %v420
      %v453 = vunpack.c.l.b16 %v421
      %v454 = vunpack.c.l.b16 %v422
      %v455 = vunpack.c.l.b16 %v423
      %v456 = vunpack.c.l.b16 %v424
      %v457 = vpack.c.b16 %v442, %v441
      %v458 = vpack.c.b16 %v444, %v443
      %v459 = vpack.c.b16 %v446, %v445
      %v460 = vpack.c.b16 %v448, %v447
      %v461 = vpack.c.b16 %v450, %v449
      %v462 = vpack.c.b16 %v452, %v451
      %v463 = vpack.c.b16 %v454, %v453
      %v464 = vpack.c.b16 %v456, %v455
      %473 = vmatprep.subr.bf16.mxu0 0
      %474 = vmatpush1.bf16.msra.mxu0 %v457
      %475 = vmatprep.subr.bf16.mxu0 0
      %476 = vmatpush1.bf16.msra.mxu0 %v458
      %477 = vmatprep.subr.bf16.mxu0 0
      %478 = vmatpush1.bf16.msra.mxu0 %v459
      %479 = vmatprep.subr.bf16.mxu0 0
      %480 = vmatpush1.bf16.msra.mxu0 %v460
      %481 = vmatprep.subr.bf16.mxu0 0
      %482 = vmatpush1.bf16.msra.mxu0 %v461
      %483 = vmatprep.subr.bf16.mxu0 0
      %484 = vmatpush1.bf16.msra.mxu0 %v462
      %485 = vmatprep.subr.bf16.mxu0 0
      %486 = vmatpush1.bf16.msra.mxu0 %v463
      %487 = vmatprep.subr.bf16.mxu0 0
      %488 = vmatpush1.bf16.msra.mxu0 %v464
      %489 = vmatprep.subr.bf16.mxu0 0
      %490 = vmatpush1.bf16.msra.mxu0 0
      %491 = vmatprep.subr.bf16.mxu0 0
      %492 = vmatpush1.bf16.msra.mxu0 0
      %493 = vmatprep.subr.bf16.mxu0 0
      %494 = vmatpush1.bf16.msra.mxu0 0
      %495 = vmatprep.subr.bf16.mxu0 0
      %496 = vmatpush1.bf16.msra.mxu0 0
      %497 = vmatprep.subr.bf16.mxu0 0
      %498 = vmatpush1.bf16.msra.mxu0 0
      %499 = vmatprep.subr.bf16.mxu0 0
      %500 = vmatpush1.bf16.msra.mxu0 0
      %501 = vmatprep.subr.bf16.mxu0 0
      %502 = vmatpush1.bf16.msra.mxu0 0
      %503 = vmatprep.subr.bf16.mxu0 0
      %504 = vmatpush1.bf16.msra.mxu0 0
      %505 = vmatprep.mubr.bf16.mxu0 0
      %506 = vmatmul.mubr.bf16.gmra.mrb[0].mxu0 %v392
      %v507 = vpop.f32.mrb[0].mxu0
      %v508 = vadd.f32 0.0, %v507
      %v509 = vpop.f32.mrb[0].mxu0
      %v510 = vpop.f32.mrb[0].mxu0
      %v511 = vadd.f32 0.0, %v510
      %v512 = vpop.f32.mrb[0].mxu0
      %513 = vmatprep.mubr.bf16.mxu0 0
      %514 = vmatmul.mubr.bf16.gmra.mrb[0].mxu0 %v393
      %v515 = vpop.f32.mrb[0].mxu0
      %v516 = vadd.f32 0.0, %v515
      %v517 = vpop.f32.mrb[0].mxu0
      %v518 = vpop.f32.mrb[0].mxu0
      %v519 = vadd.f32 0.0, %v518
      %v520 = vpop.f32.mrb[0].mxu0
      %521 = vmatprep.mubr.bf16.mxu0 0
      %522 = vmatmul.mubr.bf16.gmra.mrb[0].mxu0 %v394
      %v523 = vpop.f32.mrb[0].mxu0
      %v524 = vadd.f32 0.0, %v523
      %v525 = vpop.f32.mrb[0].mxu0
      %v526 = vpop.f32.mrb[0].mxu0
      %v527 = vadd.f32 0.0, %v526
      %v528 = vpop.f32.mrb[0].mxu0
      %529 = vmatprep.mubr.bf16.mxu0 0
      %530 = vmatmul.mubr.bf16.gmra.mrb[0].mxu0 %v395
      %v531 = vpop.f32.mrb[0].mxu0
      %v532 = vadd.f32 0.0, %v531
      %v533 = vpop.f32.mrb[0].mxu0
      %v534 = vpop.f32.mrb[0].mxu0
      %v535 = vadd.f32 0.0, %v534
      %v536 = vpop.f32.mrb[0].mxu0
      %537 = vmatprep.mubr.bf16.mxu0 0
      %538 = vmatmul.mubr.bf16.gmra.mrb[0].mxu0 %v396
      %v539 = vpop.f32.mrb[0].mxu0
      %v540 = vadd.f32 0.0, %v539
      %v541 = vpop.f32.mrb[0].mxu0
      %v542 = vpop.f32.mrb[0].mxu0
      %v543 = vadd.f32 0.0, %v542
      %v544 = vpop.f32.mrb[0].mxu0
      %545 = vmatprep.mubr.bf16.mxu0 0
      %546 = vmatmul.mubr.bf16.gmra.mrb[0].mxu0 %v397
      %v547 = vpop.f32.mrb[0].mxu0
      %v548 = vadd.f32 0.0, %v547
      %v549 = vpop.f32.mrb[0].mxu0
      %v550 = vpop.f32.mrb[0].mxu0
      %v551 = vadd.f32 0.0, %v550
      %v552 = vpop.f32.mrb[0].mxu0
      %553 = vmatprep.mubr.bf16.mxu0 0
      %554 = vmatmul.mubr.bf16.gmra.mrb[0].mxu0 %v398
      %v555 = vpop.f32.mrb[0].mxu0
      %v556 = vadd.f32 0.0, %v555
      %v557 = vpop.f32.mrb[0].mxu0
      %v558 = vpop.f32.mrb[0].mxu0
      %v559 = vadd.f32 0.0, %v558
      %v560 = vpop.f32.mrb[0].mxu0
      %561 = vmatprep.mubr.bf16.mxu0 0
      %562 = vmatmul.mubr.bf16.gmra.mrb[0].mxu0 %v399
      %v563 = vpop.f32.mrb[0].mxu0
      %v564 = vadd.f32 0.0, %v563
      %v565 = vpop.f32.mrb[0].mxu0
      %v566 = vpop.f32.mrb[0].mxu0
      %v567 = vadd.f32 0.0, %v566
      %v568 = vpop.f32.mrb[0].mxu0
      %569 = vmatprep.mubr.bf16.mxu0 0
      %570 = vmatmul.mubr.bf16.gmra.mrb[0].mxu0 %v400
      %v571 = vpop.f32.mrb[0].mxu0
      %v572 = vadd.f32 0.0, %v571
      %v573 = vpop.f32.mrb[0].mxu0
      %v574 = vpop.f32.mrb[0].mxu0
      %v575 = vadd.f32 0.0, %v574
      %v576 = vpop.f32.mrb[0].mxu0
      %577 = vmatprep.mubr.bf16.mxu0 0
      %578 = vmatmul.mubr.bf16.gmra.mrb[0].mxu0 %v401
      %v579 = vpop.f32.mrb[0].mxu0
      %v580 = vadd.f32 0.0, %v579
      %v581 = vpop.f32.mrb[0].mxu0
      %v582 = vpop.f32.mrb[0].mxu0
      %v583 = vadd.f32 0.0, %v582
      %v584 = vpop.f32.mrb[0].mxu0
      %585 = vmatprep.mubr.bf16.mxu0 0
      %586 = vmatmul.mubr.bf16.gmra.mrb[0].mxu0 %v402
      %v587 = vpop.f32.mrb[0].mxu0
      %v588 = vadd.f32 0.0, %v587
      %v589 = vpop.f32.mrb[0].mxu0
      %v590 = vpop.f32.mrb[0].mxu0
      %v591 = vadd.f32 0.0, %v590
      %v592 = vpop.f32.mrb[0].mxu0
      %593 = vmatprep.mubr.bf16.mxu0 0
      %594 = vmatmul.mubr.bf16.gmra.mrb[0].mxu0 %v403
      %v595 = vpop.f32.mrb[0].mxu0
      %v596 = vadd.f32 0.0, %v595
      %v597 = vpop.f32.mrb[0].mxu0
      %v598 = vpop.f32.mrb[0].mxu0
      %v599 = vadd.f32 0.0, %v598
      %v600 = vpop.f32.mrb[0].mxu0
      %601 = vmatprep.mubr.bf16.mxu0 0
      %602 = vmatmul.mubr.bf16.gmra.mrb[0].mxu0 %v404
      %v603 = vpop.f32.mrb[0].mxu0
      %v604 = vadd.f32 0.0, %v603
      %v605 = vpop.f32.mrb[0].mxu0
      %v606 = vpop.f32.mrb[0].mxu0
      %v607 = vadd.f32 0.0, %v606
      %v608 = vpop.f32.mrb[0].mxu0
      %609 = vmatprep.mubr.bf16.mxu0 0
      %610 = vmatmul.mubr.bf16.gmra.mrb[0].mxu0 %v405
      %v611 = vpop.f32.mrb[0].mxu0
      %v612 = vadd.f32 0.0, %v611
      %v613 = vpop.f32.mrb[0].mxu0
      %v614 = vpop.f32.mrb[0].mxu0
      %v615 = vadd.f32 0.0, %v614
      %v616 = vpop.f32.mrb[0].mxu0
      %617 = vmatprep.mubr.bf16.mxu0 0
      %618 = vmatmul.mubr.bf16.gmra.mrb[0].mxu0 %v406
      %v619 = vpop.f32.mrb[0].mxu0
      %v620 = vadd.f32 0.0, %v619
      %v621 = vpop.f32.mrb[0].mxu0
      %v622 = vpop.f32.mrb[0].mxu0
      %v623 = vadd.f32 0.0, %v622
      %v624 = vpop.f32.mrb[0].mxu0
      %625 = vmatprep.mubr.bf16.mxu0 0
      %626 = vmatmul.mubr.bf16.gmra.mrb[0].mxu0 %v407
      %v627 = vpop.f32.mrb[0].mxu0
      %v628 = vadd.f32 0.0, %v627
      %v629 = vpop.f32.mrb[0].mxu0
      %v630 = vpop.f32.mrb[0].mxu0
      %v631 = vadd.f32 0.0, %v630
      %v632 = vpop.f32.mrb[0].mxu0
      %633 = vdwg.mxu0
      %v650 = vunpack.c.l.b16 %v215
      %v651 = vunpack.c.l.b16 %v216
      %v652 = vunpack.c.l.b16 %v217
      %v653 = vunpack.c.l.b16 %v218
      %v654 = vunpack.c.l.b16 %v219
      %v655 = vunpack.c.l.b16 %v220
      %v656 = vunpack.c.l.b16 %v221
      %v657 = vunpack.c.l.b16 %v222
      %v658 = vunpack.c.l.b16 %v223
      %v659 = vunpack.c.l.b16 %v224
      %v660 = vunpack.c.l.b16 %v225
      %v661 = vunpack.c.l.b16 %v226
      %v662 = vunpack.c.l.b16 %v227
      %v663 = vunpack.c.l.b16 %v228
      %v664 = vunpack.c.l.b16 %v229
      %v665 = vunpack.c.l.b16 %v230
      %v666 = vpack.c.b16 %v651, %v650
      %v667 = vpack.c.b16 %v653, %v652
      %v668 = vpack.c.b16 %v655, %v654
      %v669 = vpack.c.b16 %v657, %v656
      %v670 = vpack.c.b16 %v659, %v658
      %v671 = vpack.c.b16 %v661, %v660
      %v672 = vpack.c.b16 %v663, %v662
      %v673 = vpack.c.b16 %v665, %v664
      %682 = vmatprep.subr.bf16.mxu0 0
      %683 = vmatpush1.bf16.msra.mxu0 %v666
      %684 = vmatprep.subr.bf16.mxu0 0
      %685 = vmatpush1.bf16.msra.mxu0 %v667
      %686 = vmatprep.subr.bf16.mxu0 0
      %687 = vmatpush1.bf16.msra.mxu0 %v668
      %688 = vmatprep.subr.bf16.mxu0 0
      %689 = vmatpush1.bf16.msra.mxu0 %v669
      %690 = vmatprep.subr.bf16.mxu0 0
      %691 = vmatpush1.bf16.msra.mxu0 %v670
      %692 = vmatprep.subr.bf16.mxu0 0
      %693 = vmatpush1.bf16.msra.mxu0 %v671
      %694 = vmatprep.subr.bf16.mxu0 0
      %695 = vmatpush1.bf16.msra.mxu0 %v672
      %696 = vmatprep.subr.bf16.mxu0 0
      %697 = vmatpush1.bf16.msra.mxu0 %v673
      %698 = vmatprep.subr.bf16.mxu0 0
      %699 = vmatpush1.bf16.msra.mxu0 0
      %700 = vmatprep.subr.bf16.mxu0 0
      %701 = vmatpush1.bf16.msra.mxu0 0
      %702 = vmatprep.subr.bf16.mxu0 0
      %703 = vmatpush1.bf16.msra.mxu0 0
      %704 = vmatprep.subr.bf16.mxu0 0
      %705 = vmatpush1.bf16.msra.mxu0 0
      %706 = vmatprep.subr.bf16.mxu0 0
      %707 = vmatpush1.bf16.msra.mxu0 0
      %708 = vmatprep.subr.bf16.mxu0 0
      %709 = vmatpush1.bf16.msra.mxu0 0
      %710 = vmatprep.subr.bf16.mxu0 0
      %711 = vmatpush1.bf16.msra.mxu0 0
      %712 = vmatprep.subr.bf16.mxu0 0
      %713 = vmatpush1.bf16.msra.mxu0 0
      %714 = vmatprep.mubr.bf16.mxu0 0
      %715 = vmatmul.mubr.bf16.gmra.mrb[0].mxu0 %v199
      %v716 = vpop.f32.mrb[0].mxu0
      %v717 = vadd.f32 %v508, %v716
      %v718 = vpop.f32.mrb[0].mxu0
      %v719 = vpop.f32.mrb[0].mxu0
      %v720 = vadd.f32 %v511, %v719
      %v721 = vpop.f32.mrb[0].mxu0
      %722 = vmatprep.mubr.bf16.mxu0 0
      %723 = vmatmul.mubr.bf16.gmra.mrb[0].mxu0 %v200
      %v724 = vpop.f32.mrb[0].mxu0
      %v725 = vadd.f32 %v516, %v724
      %v726 = vpop.f32.mrb[0].mxu0
      %v727 = vpop.f32.mrb[0].mxu0
      %v728 = vadd.f32 %v519, %v727
      %v729 = vpop.f32.mrb[0].mxu0
      %730 = vmatprep.mubr.bf16.mxu0 0
      %731 = vmatmul.mubr.bf16.gmra.mrb[0].mxu0 %v201
      %v732 = vpop.f32.mrb[0].mxu0
      %v733 = vadd.f32 %v524, %v732
      %v734 = vpop.f32.mrb[0].mxu0
      %v735 = vpop.f32.mrb[0].mxu0
      %v736 = vadd.f32 %v527, %v735
      %v737 = vpop.f32.mrb[0].mxu0
      %738 = vmatprep.mubr.bf16.mxu0 0
      %739 = vmatmul.mubr.bf16.gmra.mrb[0].mxu0 %v202
      %v740 = vpop.f32.mrb[0].mxu0
      %v741 = vadd.f32 %v532, %v740
      %v742 = vpop.f32.mrb[0].mxu0
      %v743 = vpop.f32.mrb[0].mxu0
      %v744 = vadd.f32 %v535, %v743
      %v745 = vpop.f32.mrb[0].mxu0
      %746 = vmatprep.mubr.bf16.mxu0 0
      %747 = vmatmul.mubr.bf16.gmra.mrb[0].mxu0 %v203
      %v748 = vpop.f32.mrb[0].mxu0
      %v749 = vadd.f32 %v540, %v748
      %v750 = vpop.f32.mrb[0].mxu0
      %v751 = vpop.f32.mrb[0].mxu0
      %v752 = vadd.f32 %v543, %v751
      %v753 = vpop.f32.mrb[0].mxu0
      %754 = vmatprep.mubr.bf16.mxu0 0
      %755 = vmatmul.mubr.bf16.gmra.mrb[0].mxu0 %v204
      %v756 = vpop.f32.mrb[0].mxu0
      %v757 = vadd.f32 %v548, %v756
      %v758 = vpop.f32.mrb[0].mxu0
      %v759 = vpop.f32.mrb[0].mxu0
      %v760 = vadd.f32 %v551, %v759
      %v761 = vpop.f32.mrb[0].mxu0
      %762 = vmatprep.mubr.bf16.mxu0 0
      %763 = vmatmul.mubr.bf16.gmra.mrb[0].mxu0 %v205
      %v764 = vpop.f32.mrb[0].mxu0
      %v765 = vadd.f32 %v556, %v764
      %v766 = vpop.f32.mrb[0].mxu0
      %v767 = vpop.f32.mrb[0].mxu0
      %v768 = vadd.f32 %v559, %v767
      %v769 = vpop.f32.mrb[0].mxu0
      %770 = vmatprep.mubr.bf16.mxu0 0
      %771 = vmatmul.mubr.bf16.gmra.mrb[0].mxu0 %v206
      %v772 = vpop.f32.mrb[0].mxu0
      %v773 = vadd.f32 %v564, %v772
      %v774 = vpop.f32.mrb[0].mxu0
      %v775 = vpop.f32.mrb[0].mxu0
      %v776 = vadd.f32 %v567, %v775
      %v777 = vpop.f32.mrb[0].mxu0
      %778 = vmatprep.mubr.bf16.mxu0 0
      %779 = vmatmul.mubr.bf16.gmra.mrb[0].mxu0 %v207
      %v780 = vpop.f32.mrb[0].mxu0
      %v781 = vadd.f32 %v572, %v780
      %v782 = vpop.f32.mrb[0].mxu0
      %v783 = vpop.f32.mrb[0].mxu0
      %v784 = vadd.f32 %v575, %v783
      %v785 = vpop.f32.mrb[0].mxu0
      %786 = vmatprep.mubr.bf16.mxu0 0
      %787 = vmatmul.mubr.bf16.gmra.mrb[0].mxu0 %v208
      %v788 = vpop.f32.mrb[0].mxu0
      %v789 = vadd.f32 %v580, %v788
      %v790 = vpop.f32.mrb[0].mxu0
      %v791 = vpop.f32.mrb[0].mxu0
      %v792 = vadd.f32 %v583, %v791
      %v793 = vpop.f32.mrb[0].mxu0
      %794 = vmatprep.mubr.bf16.mxu0 0
      %795 = vmatmul.mubr.bf16.gmra.mrb[0].mxu0 %v209
      %v796 = vpop.f32.mrb[0].mxu0
      %v797 = vadd.f32 %v588, %v796
      %v798 = vpop.f32.mrb[0].mxu0
      %v799 = vpop.f32.mrb[0].mxu0
      %v800 = vadd.f32 %v591, %v799
      %v801 = vpop.f32.mrb[0].mxu0
      %802 = vmatprep.mubr.bf16.mxu0 0
      %803 = vmatmul.mubr.bf16.gmra.mrb[0].mxu0 %v210
      %v804 = vpop.f32.mrb[0].mxu0
      %v805 = vadd.f32 %v596, %v804
      %v806 = vpop.f32.mrb[0].mxu0
      %v807 = vpop.f32.mrb[0].mxu0
      %v808 = vadd.f32 %v599, %v807
      %v809 = vpop.f32.mrb[0].mxu0
      %810 = vmatprep.mubr.bf16.mxu0 0
      %811 = vmatmul.mubr.bf16.gmra.mrb[0].mxu0 %v211
      %v812 = vpop.f32.mrb[0].mxu0
      %v813 = vadd.f32 %v604, %v812
      %v814 = vpop.f32.mrb[0].mxu0
      %v815 = vpop.f32.mrb[0].mxu0
      %v816 = vadd.f32 %v607, %v815
      %v817 = vpop.f32.mrb[0].mxu0
      %818 = vmatprep.mubr.bf16.mxu0 0
      %819 = vmatmul.mubr.bf16.gmra.mrb[0].mxu0 %v212
      %v820 = vpop.f32.mrb[0].mxu0
      %v821 = vadd.f32 %v612, %v820
      %v822 = vpop.f32.mrb[0].mxu0
      %v823 = vpop.f32.mrb[0].mxu0
      %v824 = vadd.f32 %v615, %v823
      %v825 = vpop.f32.mrb[0].mxu0
      %826 = vmatprep.mubr.bf16.mxu0 0
      %827 = vmatmul.mubr.bf16.gmra.mrb[0].mxu0 %v213
      %v828 = vpop.f32.mrb[0].mxu0
      %v829 = vadd.f32 %v620, %v828
      %v830 = vpop.f32.mrb[0].mxu0
      %v831 = vpop.f32.mrb[0].mxu0
      %v832 = vadd.f32 %v623, %v831
      %v833 = vpop.f32.mrb[0].mxu0
      %834 = vmatprep.mubr.bf16.mxu0 0
      %835 = vmatmul.mubr.bf16.gmra.mrb[0].mxu0 %v214
      %v836 = vpop.f32.mrb[0].mxu0
      %v837 = vadd.f32 %v628, %v836
      %v838 = vpop.f32.mrb[0].mxu0
      %v839 = vpop.f32.mrb[0].mxu0
      %v840 = vadd.f32 %v631, %v839
      %v841 = vpop.f32.mrb[0].mxu0
      %842 = vdwg.mxu0
      %vm843 = vcmask 1045504
      %v844 = vrot.slane %v145, 2
      %v845 = vrot.slane %v146, 2
      %v846 = vsel %vm843, %v844, %v845
      %v847 = vrot.slane %v147, 2
      %v848 = vsel %vm843, %v845, %v847
      %v849 = vrot.slane %v148, 2
      %v850 = vrot.slane %v149, 2
      %v851 = vsel %vm843, %v849, %v850
      %v852 = vrot.slane %v150, 2
      %v853 = vsel %vm843, %v850, %v852
      %v854 = vrot.slane %v151, 2
      %v855 = vrot.slane %v152, 2
      %v856 = vsel %vm843, %v854, %v855
      %v857 = vrot.slane %v153, 2
      %v858 = vsel %vm843, %v855, %v857
      %v859 = vrot.slane %v154, 2
      %v860 = vrot.slane %v155, 2
      %v861 = vsel %vm843, %v859, %v860
      %v862 = vrot.slane %v156, 2
      %v863 = vsel %vm843, %v860, %v862
      %v864 = vrot.slane %v157, 2
      %v865 = vrot.slane %v158, 2
      %v866 = vsel %vm843, %v864, %v865
      %v867 = vrot.slane %v159, 2
      %v868 = vsel %vm843, %v865, %v867
      %v869 = vrot.slane %v160, 2
      %v870 = vrot.slane %v161, 2
      %v871 = vsel %vm843, %v869, %v870
      %v872 = vrot.slane %v162, 2
      %v873 = vsel %vm843, %v870, %v872
      %v874 = vrot.slane %v163, 2
      %v875 = vrot.slane %v164, 2
      %v876 = vsel %vm843, %v874, %v875
      %v877 = vrot.slane %v165, 2
      %v878 = vsel %vm843, %v875, %v877
      %v879 = vrot.slane %v166, 2
      %v880 = vrot.slane %v167, 2
      %v881 = vsel %vm843, %v879, %v880
      %v882 = vrot.slane %v168, 2
      %v883 = vsel %vm843, %v880, %v882
      %v884 = vrot.slane %v169, 2
      %v885 = vrot.slane %v170, 2
      %v886 = vsel %vm843, %v884, %v885
      %v887 = vrot.slane %v171, 2
      %v888 = vsel %vm843, %v885, %v887
      %v889 = vrot.slane %v172, 2
      %v890 = vrot.slane %v173, 2
      %v891 = vsel %vm843, %v889, %v890
      %v892 = vrot.slane %v174, 2
      %v893 = vsel %vm843, %v890, %v892
      %v894 = vrot.slane %v175, 2
      %v895 = vrot.slane %v176, 2
      %v896 = vsel %vm843, %v894, %v895
      %v897 = vrot.slane %v177, 2
      %v898 = vsel %vm843, %v895, %v897
      %v899 = vrot.slane %v178, 2
      %v900 = vrot.slane %v179, 2
      %v901 = vsel %vm843, %v899, %v900
      %v902 = vrot.slane %v180, 2
      %v903 = vsel %vm843, %v900, %v902
      %v904 = vrot.slane %v181, 2
      %v905 = vrot.slane %v182, 2
      %v906 = vsel %vm843, %v904, %v905
      %v907 = vrot.slane %v183, 2
      %v908 = vsel %vm843, %v905, %v907
      %v909 = vrot.slane %v184, 2
      %v910 = vrot.slane %v185, 2
      %v911 = vsel %vm843, %v909, %v910
      %v912 = vrot.slane %v186, 2
      %v913 = vsel %vm843, %v910, %v912
      %v914 = vrot.slane %v187, 2
      %v915 = vrot.slane %v188, 2
      %v916 = vsel %vm843, %v914, %v915
      %v917 = vrot.slane %v189, 2
      %v918 = vsel %vm843, %v915, %v917
      %v919 = vrot.slane %v190, 2
      %v920 = vrot.slane %v191, 2
      %v921 = vsel %vm843, %v919, %v920
      %v922 = vrot.slane %v192, 2
      %v923 = vsel %vm843, %v920, %v922
      %v956 = vpack.c.bf16 %v848, %v846
      %v957 = vpack.c.bf16 %v853, %v851
      %v958 = vpack.c.bf16 %v858, %v856
      %v959 = vpack.c.bf16 %v863, %v861
      %v960 = vpack.c.bf16 %v868, %v866
      %v961 = vpack.c.bf16 %v873, %v871
      %v962 = vpack.c.bf16 %v878, %v876
      %v963 = vpack.c.bf16 %v883, %v881
      %v964 = vpack.c.bf16 %v888, %v886
      %v965 = vpack.c.bf16 %v893, %v891
      %v966 = vpack.c.bf16 %v898, %v896
      %v967 = vpack.c.bf16 %v903, %v901
      %v968 = vpack.c.bf16 %v908, %v906
      %v969 = vpack.c.bf16 %v913, %v911
      %v970 = vpack.c.bf16 %v918, %v916
      %v971 = vpack.c.bf16 %v923, %v921
      %s972 = scalar_lea.vmem %s1, 128
      %v973 = vld [vmem:[%s972] sm:$0xf]
      %v974 = vld [vmem:[%s972 + $0x4] sm:$0xf]
      %v975 = vld [vmem:[%s972 + $0x8] sm:$0xf]
      %v976 = vld [vmem:[%s972 + $0xc] sm:$0xf]
      %v977 = vld [vmem:[%s972 + $0x10] sm:$0xf]
      %v978 = vld [vmem:[%s972 + $0x14] sm:$0xf]
      %v979 = vld [vmem:[%s972 + $0x18] sm:$0xf]
      %v980 = vld [vmem:[%s972 + $0x1c] sm:$0xf]
      %v981 = vld [vmem:[%s972 + $0x20] sm:$0xf]
      %v982 = vld [vmem:[%s972 + $0x24] sm:$0xf]
      %v983 = vld [vmem:[%s972 + $0x28] sm:$0xf]
      %v984 = vld [vmem:[%s972 + $0x2c] sm:$0xf]
      %v985 = vld [vmem:[%s972 + $0x30] sm:$0xf]
      %v986 = vld [vmem:[%s972 + $0x34] sm:$0xf]
      %v987 = vld [vmem:[%s972 + $0x38] sm:$0xf]
      %v988 = vld [vmem:[%s972 + $0x3c] sm:$0xf]
      %v1005 = vunpack.c.l.b16 %v973
      %v1006 = vunpack.c.l.b16 %v974
      %v1007 = vunpack.c.l.b16 %v975
      %v1008 = vunpack.c.l.b16 %v976
      %v1009 = vunpack.c.l.b16 %v977
      %v1010 = vunpack.c.l.b16 %v978
      %v1011 = vunpack.c.l.b16 %v979
      %v1012 = vunpack.c.l.b16 %v980
      %v1013 = vunpack.c.l.b16 %v981
      %v1014 = vunpack.c.l.b16 %v982
      %v1015 = vunpack.c.l.b16 %v983
      %v1016 = vunpack.c.l.b16 %v984
      %v1017 = vunpack.c.l.b16 %v985
      %v1018 = vunpack.c.l.b16 %v986
      %v1019 = vunpack.c.l.b16 %v987
      %v1020 = vunpack.c.l.b16 %v988
      %v1021 = vpack.c.b16 %v1006, %v1005
      %v1022 = vpack.c.b16 %v1008, %v1007
      %v1023 = vpack.c.b16 %v1010, %v1009
      %v1024 = vpack.c.b16 %v1012, %v1011
      %v1025 = vpack.c.b16 %v1014, %v1013
      %v1026 = vpack.c.b16 %v1016, %v1015
      %v1027 = vpack.c.b16 %v1018, %v1017
      %v1028 = vpack.c.b16 %v1020, %v1019
      %1037 = vmatprep.subr.bf16.mxu0 0
      %1038 = vmatpush1.bf16.msra.mxu0 %v1021
      %1039 = vmatprep.subr.bf16.mxu0 0
      %1040 = vmatpush1.bf16.msra.mxu0 %v1022
      %1041 = vmatprep.subr.bf16.mxu0 0
      %1042 = vmatpush1.bf16.msra.mxu0 %v1023
      %1043 = vmatprep.subr.bf16.mxu0 0
      %1044 = vmatpush1.bf16.msra.mxu0 %v1024
      %1045 = vmatprep.subr.bf16.mxu0 0
      %1046 = vmatpush1.bf16.msra.mxu0 %v1025
      %1047 = vmatprep.subr.bf16.mxu0 0
      %1048 = vmatpush1.bf16.msra.mxu0 %v1026
      %1049 = vmatprep.subr.bf16.mxu0 0
      %1050 = vmatpush1.bf16.msra.mxu0 %v1027
      %1051 = vmatprep.subr.bf16.mxu0 0
      %1052 = vmatpush1.bf16.msra.mxu0 %v1028
      %1053 = vmatprep.subr.bf16.mxu0 0
      %1054 = vmatpush1.bf16.msra.mxu0 0
      %1055 = vmatprep.subr.bf16.mxu0 0
      %1056 = vmatpush1.bf16.msra.mxu0 0
      %1057 = vmatprep.subr.bf16.mxu0 0
      %1058 = vmatpush1.bf16.msra.mxu0 0
      %1059 = vmatprep.subr.bf16.mxu0 0
      %1060 = vmatpush1.bf16.msra.mxu0 0
      %1061 = vmatprep.subr.bf16.mxu0 0
      %1062 = vmatpush1.bf16.msra.mxu0 0
      %1063 = vmatprep.subr.bf16.mxu0 0
      %1064 = vmatpush1.bf16.msra.mxu0 0
      %1065 = vmatprep.subr.bf16.mxu0 0
      %1066 = vmatpush1.bf16.msra.mxu0 0
      %1067 = vmatprep.subr.bf16.mxu0 0
      %1068 = vmatpush1.bf16.msra.mxu0 0
      %1069 = vmatprep.mubr.bf16.mxu0 0
      %1070 = vmatmul.mubr.bf16.gmra.mrb[0].mxu0 %v956
      %v1071 = vpop.f32.mrb[0].mxu0
      %v1072 = vadd.f32 0.0, %v1071
      %v1073 = vpop.f32.mrb[0].mxu0
      %v1074 = vpop.f32.mrb[0].mxu0
      %v1075 = vadd.f32 0.0, %v1074
      %v1076 = vpop.f32.mrb[0].mxu0
      %1077 = vmatprep.mubr.bf16.mxu0 0
      %1078 = vmatmul.mubr.bf16.gmra.mrb[0].mxu0 %v957
      %v1079 = vpop.f32.mrb[0].mxu0
      %v1080 = vadd.f32 0.0, %v1079
      %v1081 = vpop.f32.mrb[0].mxu0
      %v1082 = vpop.f32.mrb[0].mxu0
      %v1083 = vadd.f32 0.0, %v1082
      %v1084 = vpop.f32.mrb[0].mxu0
      %1085 = vmatprep.mubr.bf16.mxu0 0
      %1086 = vmatmul.mubr.bf16.gmra.mrb[0].mxu0 %v958
      %v1087 = vpop.f32.mrb[0].mxu0
      %v1088 = vadd.f32 0.0, %v1087
      %v1089 = vpop.f32.mrb[0].mxu0
      %v1090 = vpop.f32.mrb[0].mxu0
      %v1091 = vadd.f32 0.0, %v1090
      %v1092 = vpop.f32.mrb[0].mxu0
      %1093 = vmatprep.mubr.bf16.mxu0 0
      %1094 = vmatmul.mubr.bf16.gmra.mrb[0].mxu0 %v959
      %v1095 = vpop.f32.mrb[0].mxu0
      %v1096 = vadd.f32 0.0, %v1095
      %v1097 = vpop.f32.mrb[0].mxu0
      %v1098 = vpop.f32.mrb[0].mxu0
      %v1099 = vadd.f32 0.0, %v1098
      %v1100 = vpop.f32.mrb[0].mxu0
      %1101 = vmatprep.mubr.bf16.mxu0 0
      %1102 = vmatmul.mubr.bf16.gmra.mrb[0].mxu0 %v960
      %v1103 = vpop.f32.mrb[0].mxu0
      %v1104 = vadd.f32 0.0, %v1103
      %v1105 = vpop.f32.mrb[0].mxu0
      %v1106 = vpop.f32.mrb[0].mxu0
      %v1107 = vadd.f32 0.0, %v1106
      %v1108 = vpop.f32.mrb[0].mxu0
      %1109 = vmatprep.mubr.bf16.mxu0 0
      %1110 = vmatmul.mubr.bf16.gmra.mrb[0].mxu0 %v961
      %v1111 = vpop.f32.mrb[0].mxu0
      %v1112 = vadd.f32 0.0, %v1111
      %v1113 = vpop.f32.mrb[0].mxu0
      %v1114 = vpop.f32.mrb[0].mxu0
      %v1115 = vadd.f32 0.0, %v1114
      %v1116 = vpop.f32.mrb[0].mxu0
      %1117 = vmatprep.mubr.bf16.mxu0 0
      %1118 = vmatmul.mubr.bf16.gmra.mrb[0].mxu0 %v962
      %v1119 = vpop.f32.mrb[0].mxu0
      %v1120 = vadd.f32 0.0, %v1119
      %v1121 = vpop.f32.mrb[0].mxu0
      %v1122 = vpop.f32.mrb[0].mxu0
      %v1123 = vadd.f32 0.0, %v1122
      %v1124 = vpop.f32.mrb[0].mxu0
      %1125 = vmatprep.mubr.bf16.mxu0 0
      %1126 = vmatmul.mubr.bf16.gmra.mrb[0].mxu0 %v963
      %v1127 = vpop.f32.mrb[0].mxu0
      %v1128 = vadd.f32 0.0, %v1127
      %v1129 = vpop.f32.mrb[0].mxu0
      %v1130 = vpop.f32.mrb[0].mxu0
      %v1131 = vadd.f32 0.0, %v1130
      %v1132 = vpop.f32.mrb[0].mxu0
      %1133 = vmatprep.mubr.bf16.mxu0 0
      %1134 = vmatmul.mubr.bf16.gmra.mrb[0].mxu0 %v964
      %v1135 = vpop.f32.mrb[0].mxu0
      %v1136 = vadd.f32 0.0, %v1135
      %v1137 = vpop.f32.mrb[0].mxu0
      %v1138 = vpop.f32.mrb[0].mxu0
      %v1139 = vadd.f32 0.0, %v1138
      %v1140 = vpop.f32.mrb[0].mxu0
      %1141 = vmatprep.mubr.bf16.mxu0 0
      %1142 = vmatmul.mubr.bf16.gmra.mrb[0].mxu0 %v965
      %v1143 = vpop.f32.mrb[0].mxu0
      %v1144 = vadd.f32 0.0, %v1143
      %v1145 = vpop.f32.mrb[0].mxu0
      %v1146 = vpop.f32.mrb[0].mxu0
      %v1147 = vadd.f32 0.0, %v1146
      %v1148 = vpop.f32.mrb[0].mxu0
      %1149 = vmatprep.mubr.bf16.mxu0 0
      %1150 = vmatmul.mubr.bf16.gmra.mrb[0].mxu0 %v966
      %v1151 = vpop.f32.mrb[0].mxu0
      %v1152 = vadd.f32 0.0, %v1151
      %v1153 = vpop.f32.mrb[0].mxu0
      %v1154 = vpop.f32.mrb[0].mxu0
      %v1155 = vadd.f32 0.0, %v1154
      %v1156 = vpop.f32.mrb[0].mxu0
      %1157 = vmatprep.mubr.bf16.mxu0 0
      %1158 = vmatmul.mubr.bf16.gmra.mrb[0].mxu0 %v967
      %v1159 = vpop.f32.mrb[0].mxu0
      %v1160 = vadd.f32 0.0, %v1159
      %v1161 = vpop.f32.mrb[0].mxu0
      %v1162 = vpop.f32.mrb[0].mxu0
      %v1163 = vadd.f32 0.0, %v1162
      %v1164 = vpop.f32.mrb[0].mxu0
      %1165 = vmatprep.mubr.bf16.mxu0 0
      %1166 = vmatmul.mubr.bf16.gmra.mrb[0].mxu0 %v968
      %v1167 = vpop.f32.mrb[0].mxu0
      %v1168 = vadd.f32 0.0, %v1167
      %v1169 = vpop.f32.mrb[0].mxu0
      %v1170 = vpop.f32.mrb[0].mxu0
      %v1171 = vadd.f32 0.0, %v1170
      %v1172 = vpop.f32.mrb[0].mxu0
      %1173 = vmatprep.mubr.bf16.mxu0 0
      %1174 = vmatmul.mubr.bf16.gmra.mrb[0].mxu0 %v969
      %v1175 = vpop.f32.mrb[0].mxu0
      %v1176 = vadd.f32 0.0, %v1175
      %v1177 = vpop.f32.mrb[0].mxu0
      %v1178 = vpop.f32.mrb[0].mxu0
      %v1179 = vadd.f32 0.0, %v1178
      %v1180 = vpop.f32.mrb[0].mxu0
      %1181 = vmatprep.mubr.bf16.mxu0 0
      %1182 = vmatmul.mubr.bf16.gmra.mrb[0].mxu0 %v970
      %v1183 = vpop.f32.mrb[0].mxu0
      %v1184 = vadd.f32 0.0, %v1183
      %v1185 = vpop.f32.mrb[0].mxu0
      %v1186 = vpop.f32.mrb[0].mxu0
      %v1187 = vadd.f32 0.0, %v1186
      %v1188 = vpop.f32.mrb[0].mxu0
      %1189 = vmatprep.mubr.bf16.mxu0 0
      %1190 = vmatmul.mubr.bf16.gmra.mrb[0].mxu0 %v971
      %v1191 = vpop.f32.mrb[0].mxu0
      %v1192 = vadd.f32 0.0, %v1191
      %v1193 = vpop.f32.mrb[0].mxu0
      %v1194 = vpop.f32.mrb[0].mxu0
      %v1195 = vadd.f32 0.0, %v1194
      %v1196 = vpop.f32.mrb[0].mxu0
      %1197 = vdwg.mxu0
      %v1198 = vadd.f32 %v717, %v1072
      %v1199 = vadd.f32 %v720, %v1075
      %v1200 = vadd.f32 %v725, %v1080
      %v1201 = vadd.f32 %v728, %v1083
      %v1202 = vadd.f32 %v733, %v1088
      %v1203 = vadd.f32 %v736, %v1091
      %v1204 = vadd.f32 %v741, %v1096
      %v1205 = vadd.f32 %v744, %v1099
      %v1206 = vadd.f32 %v749, %v1104
      %v1207 = vadd.f32 %v752, %v1107
      %v1208 = vadd.f32 %v757, %v1112
      %v1209 = vadd.f32 %v760, %v1115
      %v1210 = vadd.f32 %v765, %v1120
      %v1211 = vadd.f32 %v768, %v1123
      %v1212 = vadd.f32 %v773, %v1128
      %v1213 = vadd.f32 %v776, %v1131
      %v1214 = vadd.f32 %v781, %v1136
      %v1215 = vadd.f32 %v784, %v1139
      %v1216 = vadd.f32 %v789, %v1144
      %v1217 = vadd.f32 %v792, %v1147
      %v1218 = vadd.f32 %v797, %v1152
      %v1219 = vadd.f32 %v800, %v1155
      %v1220 = vadd.f32 %v805, %v1160
      %v1221 = vadd.f32 %v808, %v1163
      %v1222 = vadd.f32 %v813, %v1168
      %v1223 = vadd.f32 %v816, %v1171
      %v1224 = vadd.f32 %v821, %v1176
      %v1225 = vadd.f32 %v824, %v1179
      %v1226 = vadd.f32 %v829, %v1184
      %v1227 = vadd.f32 %v832, %v1187
      %v1228 = vadd.f32 %v837, %v1192
      %v1229 = vadd.f32 %v840, %v1195
      %v1230 = vpack.c.bf16 %v194, %v193
      %s1231 = scalar_lea.vmem %s1, 192
      %v1232 = vld [vmem:[%s1231] sm:$0xf]
      %v1233 = vld [vmem:[%s1231 + $0x4] sm:$0xf]
      %v1234 = vld [vmem:[%s1231 + $0x8] sm:$0xf]
      %v1235 = vld [vmem:[%s1231 + $0xc] sm:$0xf]
      %v1236 = vld [vmem:[%s1231 + $0x10] sm:$0xf]
      %v1237 = vld [vmem:[%s1231 + $0x14] sm:$0xf]
      %v1238 = vld [vmem:[%s1231 + $0x18] sm:$0xf]
      %v1239 = vld [vmem:[%s1231 + $0x1c] sm:$0xf]
      %v1240 = vld [vmem:[%s1231 + $0x20] sm:$0xf]
      %v1241 = vld [vmem:[%s1231 + $0x24] sm:$0xf]
      %v1242 = vld [vmem:[%s1231 + $0x28] sm:$0xf]
      %v1243 = vld [vmem:[%s1231 + $0x2c] sm:$0xf]
      %v1244 = vld [vmem:[%s1231 + $0x30] sm:$0xf]
      %v1245 = vld [vmem:[%s1231 + $0x34] sm:$0xf]
      %v1246 = vld [vmem:[%s1231 + $0x38] sm:$0xf]
      %v1247 = vld [vmem:[%s1231 + $0x3c] sm:$0xf]
      %v1264 = vunpack.c.l.b16 %v1232
      %v1265 = vunpack.c.l.b16 %v1233
      %v1266 = vunpack.c.l.b16 %v1234
      %v1267 = vunpack.c.l.b16 %v1235
      %v1268 = vunpack.c.l.b16 %v1236
      %v1269 = vunpack.c.l.b16 %v1237
      %v1270 = vunpack.c.l.b16 %v1238
      %v1271 = vunpack.c.l.b16 %v1239
      %v1272 = vunpack.c.l.b16 %v1240
      %v1273 = vunpack.c.l.b16 %v1241
      %v1274 = vunpack.c.l.b16 %v1242
      %v1275 = vunpack.c.l.b16 %v1243
      %v1276 = vunpack.c.l.b16 %v1244
      %v1277 = vunpack.c.l.b16 %v1245
      %v1278 = vunpack.c.l.b16 %v1246
      %v1279 = vunpack.c.l.b16 %v1247
      %v1280 = vpack.c.b16 %v1265, %v1264
      %v1281 = vpack.c.b16 %v1267, %v1266
      %v1282 = vpack.c.b16 %v1269, %v1268
      %v1283 = vpack.c.b16 %v1271, %v1270
      %v1284 = vpack.c.b16 %v1273, %v1272
      %v1285 = vpack.c.b16 %v1275, %v1274
      %v1286 = vpack.c.b16 %v1277, %v1276
      %v1287 = vpack.c.b16 %v1279, %v1278
      %1296 = vmatprep.subr.bf16.mxu0 0
      %1297 = vmatpush1.bf16.msra.mxu0 %v1280
      %1298 = vmatprep.subr.bf16.mxu0 0
      %1299 = vmatpush1.bf16.msra.mxu0 %v1281
      %1300 = vmatprep.subr.bf16.mxu0 0
      %1301 = vmatpush1.bf16.msra.mxu0 %v1282
      %1302 = vmatprep.subr.bf16.mxu0 0
      %1303 = vmatpush1.bf16.msra.mxu0 %v1283
      %1304 = vmatprep.subr.bf16.mxu0 0
      %1305 = vmatpush1.bf16.msra.mxu0 %v1284
      %1306 = vmatprep.subr.bf16.mxu0 0
      %1307 = vmatpush1.bf16.msra.mxu0 %v1285
      %1308 = vmatprep.subr.bf16.mxu0 0
      %1309 = vmatpush1.bf16.msra.mxu0 %v1286
      %1310 = vmatprep.subr.bf16.mxu0 0
      %1311 = vmatpush1.bf16.msra.mxu0 %v1287
      %1312 = vmatprep.subr.bf16.mxu0 0
      %1313 = vmatpush1.bf16.msra.mxu0 0
      %1314 = vmatprep.subr.bf16.mxu0 0
      %1315 = vmatpush1.bf16.msra.mxu0 0
      %1316 = vmatprep.subr.bf16.mxu0 0
      %1317 = vmatpush1.bf16.msra.mxu0 0
      %1318 = vmatprep.subr.bf16.mxu0 0
      %1319 = vmatpush1.bf16.msra.mxu0 0
      %1320 = vmatprep.subr.bf16.mxu0 0
      %1321 = vmatpush1.bf16.msra.mxu0 0
      %1322 = vmatprep.subr.bf16.mxu0 0
      %1323 = vmatpush1.bf16.msra.mxu0 0
      %1324 = vmatprep.subr.bf16.mxu0 0
      %1325 = vmatpush1.bf16.msra.mxu0 0
      %1326 = vmatprep.subr.bf16.mxu0 0
      %1327 = vmatpush1.bf16.msra.mxu0 0
      %1328 = vmatprep.mubr.bf16.mxu0 0
      %1329 = vmatmul.mubr.bf16.gmra.mrb[0].mxu0 %v200
      %v1330 = vpop.f32.mrb[0].mxu0
      %v1331 = vadd.f32 0.0, %v1330
      %v1332 = vpop.f32.mrb[0].mxu0
      %v1333 = vpop.f32.mrb[0].mxu0
      %v1334 = vadd.f32 0.0, %v1333
      %v1335 = vpop.f32.mrb[0].mxu0
      %1336 = vmatprep.mubr.bf16.mxu0 0
      %1337 = vmatmul.mubr.bf16.gmra.mrb[0].mxu0 %v201
      %v1338 = vpop.f32.mrb[0].mxu0
      %v1339 = vadd.f32 0.0, %v1338
      %v1340 = vpop.f32.mrb[0].mxu0
      %v1341 = vpop.f32.mrb[0].mxu0
      %v1342 = vadd.f32 0.0, %v1341
      %v1343 = vpop.f32.mrb[0].mxu0
      %1344 = vmatprep.mubr.bf16.mxu0 0
      %1345 = vmatmul.mubr.bf16.gmra.mrb[0].mxu0 %v202
      %v1346 = vpop.f32.mrb[0].mxu0
      %v1347 = vadd.f32 0.0, %v1346
      %v1348 = vpop.f32.mrb[0].mxu0
      %v1349 = vpop.f32.mrb[0].mxu0
      %v1350 = vadd.f32 0.0, %v1349
      %v1351 = vpop.f32.mrb[0].mxu0
      %1352 = vmatprep.mubr.bf16.mxu0 0
      %1353 = vmatmul.mubr.bf16.gmra.mrb[0].mxu0 %v203
      %v1354 = vpop.f32.mrb[0].mxu0
      %v1355 = vadd.f32 0.0, %v1354
      %v1356 = vpop.f32.mrb[0].mxu0
      %v1357 = vpop.f32.mrb[0].mxu0
      %v1358 = vadd.f32 0.0, %v1357
      %v1359 = vpop.f32.mrb[0].mxu0
      %1360 = vmatprep.mubr.bf16.mxu0 0
      %1361 = vmatmul.mubr.bf16.gmra.mrb[0].mxu0 %v204
      %v1362 = vpop.f32.mrb[0].mxu0
      %v1363 = vadd.f32 0.0, %v1362
      %v1364 = vpop.f32.mrb[0].mxu0
      %v1365 = vpop.f32.mrb[0].mxu0
      %v1366 = vadd.f32 0.0, %v1365
      %v1367 = vpop.f32.mrb[0].mxu0
      %1368 = vmatprep.mubr.bf16.mxu0 0
      %1369 = vmatmul.mubr.bf16.gmra.mrb[0].mxu0 %v205
      %v1370 = vpop.f32.mrb[0].mxu0
      %v1371 = vadd.f32 0.0, %v1370
      %v1372 = vpop.f32.mrb[0].mxu0
      %v1373 = vpop.f32.mrb[0].mxu0
      %v1374 = vadd.f32 0.0, %v1373
      %v1375 = vpop.f32.mrb[0].mxu0
      %1376 = vmatprep.mubr.bf16.mxu0 0
      %1377 = vmatmul.mubr.bf16.gmra.mrb[0].mxu0 %v206
      %v1378 = vpop.f32.mrb[0].mxu0
      %v1379 = vadd.f32 0.0, %v1378
      %v1380 = vpop.f32.mrb[0].mxu0
      %v1381 = vpop.f32.mrb[0].mxu0
      %v1382 = vadd.f32 0.0, %v1381
      %v1383 = vpop.f32.mrb[0].mxu0
      %1384 = vmatprep.mubr.bf16.mxu0 0
      %1385 = vmatmul.mubr.bf16.gmra.mrb[0].mxu0 %v207
      %v1386 = vpop.f32.mrb[0].mxu0
      %v1387 = vadd.f32 0.0, %v1386
      %v1388 = vpop.f32.mrb[0].mxu0
      %v1389 = vpop.f32.mrb[0].mxu0
      %v1390 = vadd.f32 0.0, %v1389
      %v1391 = vpop.f32.mrb[0].mxu0
      %1392 = vmatprep.mubr.bf16.mxu0 0
      %1393 = vmatmul.mubr.bf16.gmra.mrb[0].mxu0 %v208
      %v1394 = vpop.f32.mrb[0].mxu0
      %v1395 = vadd.f32 0.0, %v1394
      %v1396 = vpop.f32.mrb[0].mxu0
      %v1397 = vpop.f32.mrb[0].mxu0
      %v1398 = vadd.f32 0.0, %v1397
      %v1399 = vpop.f32.mrb[0].mxu0
      %1400 = vmatprep.mubr.bf16.mxu0 0
      %1401 = vmatmul.mubr.bf16.gmra.mrb[0].mxu0 %v209
      %v1402 = vpop.f32.mrb[0].mxu0
      %v1403 = vadd.f32 0.0, %v1402
      %v1404 = vpop.f32.mrb[0].mxu0
      %v1405 = vpop.f32.mrb[0].mxu0
      %v1406 = vadd.f32 0.0, %v1405
      %v1407 = vpop.f32.mrb[0].mxu0
      %1408 = vmatprep.mubr.bf16.mxu0 0
      %1409 = vmatmul.mubr.bf16.gmra.mrb[0].mxu0 %v210
      %v1410 = vpop.f32.mrb[0].mxu0
      %v1411 = vadd.f32 0.0, %v1410
      %v1412 = vpop.f32.mrb[0].mxu0
      %v1413 = vpop.f32.mrb[0].mxu0
      %v1414 = vadd.f32 0.0, %v1413
      %v1415 = vpop.f32.mrb[0].mxu0
      %1416 = vmatprep.mubr.bf16.mxu0 0
      %1417 = vmatmul.mubr.bf16.gmra.mrb[0].mxu0 %v211
      %v1418 = vpop.f32.mrb[0].mxu0
      %v1419 = vadd.f32 0.0, %v1418
      %v1420 = vpop.f32.mrb[0].mxu0
      %v1421 = vpop.f32.mrb[0].mxu0
      %v1422 = vadd.f32 0.0, %v1421
      %v1423 = vpop.f32.mrb[0].mxu0
      %1424 = vmatprep.mubr.bf16.mxu0 0
      %1425 = vmatmul.mubr.bf16.gmra.mrb[0].mxu0 %v212
      %v1426 = vpop.f32.mrb[0].mxu0
      %v1427 = vadd.f32 0.0, %v1426
      %v1428 = vpop.f32.mrb[0].mxu0
      %v1429 = vpop.f32.mrb[0].mxu0
      %v1430 = vadd.f32 0.0, %v1429
      %v1431 = vpop.f32.mrb[0].mxu0
      %1432 = vmatprep.mubr.bf16.mxu0 0
      %1433 = vmatmul.mubr.bf16.gmra.mrb[0].mxu0 %v213
      %v1434 = vpop.f32.mrb[0].mxu0
      %v1435 = vadd.f32 0.0, %v1434
      %v1436 = vpop.f32.mrb[0].mxu0
      %v1437 = vpop.f32.mrb[0].mxu0
      %v1438 = vadd.f32 0.0, %v1437
      %v1439 = vpop.f32.mrb[0].mxu0
      %1440 = vmatprep.mubr.bf16.mxu0 0
      %1441 = vmatmul.mubr.bf16.gmra.mrb[0].mxu0 %v214
      %v1442 = vpop.f32.mrb[0].mxu0
      %v1443 = vadd.f32 0.0, %v1442
      %v1444 = vpop.f32.mrb[0].mxu0
      %v1445 = vpop.f32.mrb[0].mxu0
      %v1446 = vadd.f32 0.0, %v1445
      %v1447 = vpop.f32.mrb[0].mxu0
      %1448 = vmatprep.mubr.bf16.mxu0 0
      %1449 = vmatmul.mubr.bf16.gmra.mrb[0].mxu0 %v1230
      %v1450 = vpop.f32.mrb[0].mxu0
      %v1451 = vadd.f32 0.0, %v1450
      %v1452 = vpop.f32.mrb[0].mxu0
      %v1453 = vpop.f32.mrb[0].mxu0
      %v1454 = vadd.f32 0.0, %v1453
      %v1455 = vpop.f32.mrb[0].mxu0
      %1456 = vdwg.mxu0
      %v1457 = vadd.f32 %v1198, %v1331
      %v1458 = vadd.f32 %v1199, %v1334
      %v1459 = vadd.f32 %v1200, %v1339
      %v1460 = vadd.f32 %v1201, %v1342
      %v1461 = vadd.f32 %v1202, %v1347
      %v1462 = vadd.f32 %v1203, %v1350
      %v1463 = vadd.f32 %v1204, %v1355
      %v1464 = vadd.f32 %v1205, %v1358
      %v1465 = vadd.f32 %v1206, %v1363
      %v1466 = vadd.f32 %v1207, %v1366
      %v1467 = vadd.f32 %v1208, %v1371
      %v1468 = vadd.f32 %v1209, %v1374
      %v1469 = vadd.f32 %v1210, %v1379
      %v1470 = vadd.f32 %v1211, %v1382
      %v1471 = vadd.f32 %v1212, %v1387
      %v1472 = vadd.f32 %v1213, %v1390
      %v1473 = vadd.f32 %v1214, %v1395
      %v1474 = vadd.f32 %v1215, %v1398
      %v1475 = vadd.f32 %v1216, %v1403
      %v1476 = vadd.f32 %v1217, %v1406
      %v1477 = vadd.f32 %v1218, %v1411
      %v1478 = vadd.f32 %v1219, %v1414
      %v1479 = vadd.f32 %v1220, %v1419
      %v1480 = vadd.f32 %v1221, %v1422
      %v1481 = vadd.f32 %v1222, %v1427
      %v1482 = vadd.f32 %v1223, %v1430
      %v1483 = vadd.f32 %v1224, %v1435
      %v1484 = vadd.f32 %v1225, %v1438
      %v1485 = vadd.f32 %v1226, %v1443
      %v1486 = vadd.f32 %v1227, %v1446
      %v1487 = vadd.f32 %v1228, %v1451
      %v1488 = vadd.f32 %v1229, %v1454
      %v1492 = vrot.slane %v193, 1
      %v1493 = vrot.slane %v194, 1
      %v1494 = vsel %vm279, %v1492, %v1493
      %v1495 = vrot.slane %v195, 1
      %v1496 = vsel %vm279, %v1493, %v1495
      %v1499 = vpack.c.bf16 %v1496, %v1494
      %s1500 = scalar_lea.vmem %s1, 256
      %v1501 = vld [vmem:[%s1500] sm:$0xf]
      %v1502 = vld [vmem:[%s1500 + $0x4] sm:$0xf]
      %v1503 = vld [vmem:[%s1500 + $0x8] sm:$0xf]
      %v1504 = vld [vmem:[%s1500 + $0xc] sm:$0xf]
      %v1505 = vld [vmem:[%s1500 + $0x10] sm:$0xf]
      %v1506 = vld [vmem:[%s1500 + $0x14] sm:$0xf]
      %v1507 = vld [vmem:[%s1500 + $0x18] sm:$0xf]
      %v1508 = vld [vmem:[%s1500 + $0x1c] sm:$0xf]
      %v1509 = vld [vmem:[%s1500 + $0x20] sm:$0xf]
      %v1510 = vld [vmem:[%s1500 + $0x24] sm:$0xf]
      %v1511 = vld [vmem:[%s1500 + $0x28] sm:$0xf]
      %v1512 = vld [vmem:[%s1500 + $0x2c] sm:$0xf]
      %v1513 = vld [vmem:[%s1500 + $0x30] sm:$0xf]
      %v1514 = vld [vmem:[%s1500 + $0x34] sm:$0xf]
      %v1515 = vld [vmem:[%s1500 + $0x38] sm:$0xf]
      %v1516 = vld [vmem:[%s1500 + $0x3c] sm:$0xf]
      %v1533 = vunpack.c.l.b16 %v1501
      %v1534 = vunpack.c.l.b16 %v1502
      %v1535 = vunpack.c.l.b16 %v1503
      %v1536 = vunpack.c.l.b16 %v1504
      %v1537 = vunpack.c.l.b16 %v1505
      %v1538 = vunpack.c.l.b16 %v1506
      %v1539 = vunpack.c.l.b16 %v1507
      %v1540 = vunpack.c.l.b16 %v1508
      %v1541 = vunpack.c.l.b16 %v1509
      %v1542 = vunpack.c.l.b16 %v1510
      %v1543 = vunpack.c.l.b16 %v1511
      %v1544 = vunpack.c.l.b16 %v1512
      %v1545 = vunpack.c.l.b16 %v1513
      %v1546 = vunpack.c.l.b16 %v1514
      %v1547 = vunpack.c.l.b16 %v1515
      %v1548 = vunpack.c.l.b16 %v1516
      %v1549 = vpack.c.b16 %v1534, %v1533
      %v1550 = vpack.c.b16 %v1536, %v1535
      %v1551 = vpack.c.b16 %v1538, %v1537
      %v1552 = vpack.c.b16 %v1540, %v1539
      %v1553 = vpack.c.b16 %v1542, %v1541
      %v1554 = vpack.c.b16 %v1544, %v1543
      %v1555 = vpack.c.b16 %v1546, %v1545
      %v1556 = vpack.c.b16 %v1548, %v1547
      %1565 = vmatprep.subr.bf16.mxu0 0
      %1566 = vmatpush1.bf16.msra.mxu0 %v1549
      %1567 = vmatprep.subr.bf16.mxu0 0
      %1568 = vmatpush1.bf16.msra.mxu0 %v1550
      %1569 = vmatprep.subr.bf16.mxu0 0
      %1570 = vmatpush1.bf16.msra.mxu0 %v1551
      %1571 = vmatprep.subr.bf16.mxu0 0
      %1572 = vmatpush1.bf16.msra.mxu0 %v1552
      %1573 = vmatprep.subr.bf16.mxu0 0
      %1574 = vmatpush1.bf16.msra.mxu0 %v1553
      %1575 = vmatprep.subr.bf16.mxu0 0
      %1576 = vmatpush1.bf16.msra.mxu0 %v1554
      %1577 = vmatprep.subr.bf16.mxu0 0
      %1578 = vmatpush1.bf16.msra.mxu0 %v1555
      %1579 = vmatprep.subr.bf16.mxu0 0
      %1580 = vmatpush1.bf16.msra.mxu0 %v1556
      %1581 = vmatprep.subr.bf16.mxu0 0
      %1582 = vmatpush1.bf16.msra.mxu0 0
      %1583 = vmatprep.subr.bf16.mxu0 0
      %1584 = vmatpush1.bf16.msra.mxu0 0
      %1585 = vmatprep.subr.bf16.mxu0 0
      %1586 = vmatpush1.bf16.msra.mxu0 0
      %1587 = vmatprep.subr.bf16.mxu0 0
      %1588 = vmatpush1.bf16.msra.mxu0 0
      %1589 = vmatprep.subr.bf16.mxu0 0
      %1590 = vmatpush1.bf16.msra.mxu0 0
      %1591 = vmatprep.subr.bf16.mxu0 0
      %1592 = vmatpush1.bf16.msra.mxu0 0
      %1593 = vmatprep.subr.bf16.mxu0 0
      %1594 = vmatpush1.bf16.msra.mxu0 0
      %1595 = vmatprep.subr.bf16.mxu0 0
      %1596 = vmatpush1.bf16.msra.mxu0 0
      %1597 = vmatprep.mubr.bf16.mxu0 0
      %1598 = vmatmul.mubr.bf16.gmra.mrb[0].mxu0 %v393
      %v1599 = vpop.f32.mrb[0].mxu0
      %v1600 = vadd.f32 0.0, %v1599
      %v1601 = vpop.f32.mrb[0].mxu0
      %v1602 = vpop.f32.mrb[0].mxu0
      %v1603 = vadd.f32 0.0, %v1602
      %v1604 = vpop.f32.mrb[0].mxu0
      %1605 = vmatprep.mubr.bf16.mxu0 0
      %1606 = vmatmul.mubr.bf16.gmra.mrb[0].mxu0 %v394
      %v1607 = vpop.f32.mrb[0].mxu0
      %v1608 = vadd.f32 0.0, %v1607
      %v1609 = vpop.f32.mrb[0].mxu0
      %v1610 = vpop.f32.mrb[0].mxu0
      %v1611 = vadd.f32 0.0, %v1610
      %v1612 = vpop.f32.mrb[0].mxu0
      %1613 = vmatprep.mubr.bf16.mxu0 0
      %1614 = vmatmul.mubr.bf16.gmra.mrb[0].mxu0 %v395
      %v1615 = vpop.f32.mrb[0].mxu0
      %v1616 = vadd.f32 0.0, %v1615
      %v1617 = vpop.f32.mrb[0].mxu0
      %v1618 = vpop.f32.mrb[0].mxu0
      %v1619 = vadd.f32 0.0, %v1618
      %v1620 = vpop.f32.mrb[0].mxu0
      %1621 = vmatprep.mubr.bf16.mxu0 0
      %1622 = vmatmul.mubr.bf16.gmra.mrb[0].mxu0 %v396
      %v1623 = vpop.f32.mrb[0].mxu0
      %v1624 = vadd.f32 0.0, %v1623
      %v1625 = vpop.f32.mrb[0].mxu0
      %v1626 = vpop.f32.mrb[0].mxu0
      %v1627 = vadd.f32 0.0, %v1626
      %v1628 = vpop.f32.mrb[0].mxu0
      %1629 = vmatprep.mubr.bf16.mxu0 0
      %1630 = vmatmul.mubr.bf16.gmra.mrb[0].mxu0 %v397
      %v1631 = vpop.f32.mrb[0].mxu0
      %v1632 = vadd.f32 0.0, %v1631
      %v1633 = vpop.f32.mrb[0].mxu0
      %v1634 = vpop.f32.mrb[0].mxu0
      %v1635 = vadd.f32 0.0, %v1634
      %v1636 = vpop.f32.mrb[0].mxu0
      %1637 = vmatprep.mubr.bf16.mxu0 0
      %1638 = vmatmul.mubr.bf16.gmra.mrb[0].mxu0 %v398
      %v1639 = vpop.f32.mrb[0].mxu0
      %v1640 = vadd.f32 0.0, %v1639
      %v1641 = vpop.f32.mrb[0].mxu0
      %v1642 = vpop.f32.mrb[0].mxu0
      %v1643 = vadd.f32 0.0, %v1642
      %v1644 = vpop.f32.mrb[0].mxu0
      %1645 = vmatprep.mubr.bf16.mxu0 0
      %1646 = vmatmul.mubr.bf16.gmra.mrb[0].mxu0 %v399
      %v1647 = vpop.f32.mrb[0].mxu0
      %v1648 = vadd.f32 0.0, %v1647
      %v1649 = vpop.f32.mrb[0].mxu0
      %v1650 = vpop.f32.mrb[0].mxu0
      %v1651 = vadd.f32 0.0, %v1650
      %v1652 = vpop.f32.mrb[0].mxu0
      %1653 = vmatprep.mubr.bf16.mxu0 0
      %1654 = vmatmul.mubr.bf16.gmra.mrb[0].mxu0 %v400
      %v1655 = vpop.f32.mrb[0].mxu0
      %v1656 = vadd.f32 0.0, %v1655
      %v1657 = vpop.f32.mrb[0].mxu0
      %v1658 = vpop.f32.mrb[0].mxu0
      %v1659 = vadd.f32 0.0, %v1658
      %v1660 = vpop.f32.mrb[0].mxu0
      %1661 = vmatprep.mubr.bf16.mxu0 0
      %1662 = vmatmul.mubr.bf16.gmra.mrb[0].mxu0 %v401
      %v1663 = vpop.f32.mrb[0].mxu0
      %v1664 = vadd.f32 0.0, %v1663
      %v1665 = vpop.f32.mrb[0].mxu0
      %v1666 = vpop.f32.mrb[0].mxu0
      %v1667 = vadd.f32 0.0, %v1666
      %v1668 = vpop.f32.mrb[0].mxu0
      %1669 = vmatprep.mubr.bf16.mxu0 0
      %1670 = vmatmul.mubr.bf16.gmra.mrb[0].mxu0 %v402
      %v1671 = vpop.f32.mrb[0].mxu0
      %v1672 = vadd.f32 0.0, %v1671
      %v1673 = vpop.f32.mrb[0].mxu0
      %v1674 = vpop.f32.mrb[0].mxu0
      %v1675 = vadd.f32 0.0, %v1674
      %v1676 = vpop.f32.mrb[0].mxu0
      %1677 = vmatprep.mubr.bf16.mxu0 0
      %1678 = vmatmul.mubr.bf16.gmra.mrb[0].mxu0 %v403
      %v1679 = vpop.f32.mrb[0].mxu0
      %v1680 = vadd.f32 0.0, %v1679
      %v1681 = vpop.f32.mrb[0].mxu0
      %v1682 = vpop.f32.mrb[0].mxu0
      %v1683 = vadd.f32 0.0, %v1682
      %v1684 = vpop.f32.mrb[0].mxu0
      %1685 = vmatprep.mubr.bf16.mxu0 0
      %1686 = vmatmul.mubr.bf16.gmra.mrb[0].mxu0 %v404
      %v1687 = vpop.f32.mrb[0].mxu0
      %v1688 = vadd.f32 0.0, %v1687
      %v1689 = vpop.f32.mrb[0].mxu0
      %v1690 = vpop.f32.mrb[0].mxu0
      %v1691 = vadd.f32 0.0, %v1690
      %v1692 = vpop.f32.mrb[0].mxu0
      %1693 = vmatprep.mubr.bf16.mxu0 0
      %1694 = vmatmul.mubr.bf16.gmra.mrb[0].mxu0 %v405
      %v1695 = vpop.f32.mrb[0].mxu0
      %v1696 = vadd.f32 0.0, %v1695
      %v1697 = vpop.f32.mrb[0].mxu0
      %v1698 = vpop.f32.mrb[0].mxu0
      %v1699 = vadd.f32 0.0, %v1698
      %v1700 = vpop.f32.mrb[0].mxu0
      %1701 = vmatprep.mubr.bf16.mxu0 0
      %1702 = vmatmul.mubr.bf16.gmra.mrb[0].mxu0 %v406
      %v1703 = vpop.f32.mrb[0].mxu0
      %v1704 = vadd.f32 0.0, %v1703
      %v1705 = vpop.f32.mrb[0].mxu0
      %v1706 = vpop.f32.mrb[0].mxu0
      %v1707 = vadd.f32 0.0, %v1706
      %v1708 = vpop.f32.mrb[0].mxu0
      %1709 = vmatprep.mubr.bf16.mxu0 0
      %1710 = vmatmul.mubr.bf16.gmra.mrb[0].mxu0 %v407
      %v1711 = vpop.f32.mrb[0].mxu0
      %v1712 = vadd.f32 0.0, %v1711
      %v1713 = vpop.f32.mrb[0].mxu0
      %v1714 = vpop.f32.mrb[0].mxu0
      %v1715 = vadd.f32 0.0, %v1714
      %v1716 = vpop.f32.mrb[0].mxu0
      %1717 = vmatprep.mubr.bf16.mxu0 0
      %1718 = vmatmul.mubr.bf16.gmra.mrb[0].mxu0 %v1499
      %v1719 = vpop.f32.mrb[0].mxu0
      %v1720 = vadd.f32 0.0, %v1719
      %v1721 = vpop.f32.mrb[0].mxu0
      %v1722 = vpop.f32.mrb[0].mxu0
      %v1723 = vadd.f32 0.0, %v1722
      %v1724 = vpop.f32.mrb[0].mxu0
      %1725 = vdwg.mxu0
      %v1726 = vadd.f32 %v1457, %v1600
      %v1727 = vadd.f32 %v1458, %v1603
      %v1728 = vadd.f32 %v1459, %v1608
      %v1729 = vadd.f32 %v1460, %v1611
      %v1730 = vadd.f32 %v1461, %v1616
      %v1731 = vadd.f32 %v1462, %v1619
      %v1732 = vadd.f32 %v1463, %v1624
      %v1733 = vadd.f32 %v1464, %v1627
      %v1734 = vadd.f32 %v1465, %v1632
      %v1735 = vadd.f32 %v1466, %v1635
      %v1736 = vadd.f32 %v1467, %v1640
      %v1737 = vadd.f32 %v1468, %v1643
      %v1738 = vadd.f32 %v1469, %v1648
      %v1739 = vadd.f32 %v1470, %v1651
      %v1740 = vadd.f32 %v1471, %v1656
      %v1741 = vadd.f32 %v1472, %v1659
      %v1742 = vadd.f32 %v1473, %v1664
      %v1743 = vadd.f32 %v1474, %v1667
      %v1744 = vadd.f32 %v1475, %v1672
      %v1745 = vadd.f32 %v1476, %v1675
      %v1746 = vadd.f32 %v1477, %v1680
      %v1747 = vadd.f32 %v1478, %v1683
      %v1748 = vadd.f32 %v1479, %v1688
      %v1749 = vadd.f32 %v1480, %v1691
      %v1750 = vadd.f32 %v1481, %v1696
      %v1751 = vadd.f32 %v1482, %v1699
      %v1752 = vadd.f32 %v1483, %v1704
      %v1753 = vadd.f32 %v1484, %v1707
      %v1754 = vadd.f32 %v1485, %v1712
      %v1755 = vadd.f32 %v1486, %v1715
      %v1756 = vadd.f32 %v1487, %v1720
      %v1757 = vadd.f32 %v1488, %v1723
      %v1758 = vrot.slane %v193, 2
      %v1759 = vrot.slane %v194, 2
      %v1760 = vsel %vm843, %v1758, %v1759
      %v1761 = vrot.slane %v195, 2
      %v1762 = vsel %vm843, %v1759, %v1761
      %v1765 = vpack.c.bf16 %v1762, %v1760
      %s1766 = scalar_lea.vmem %s1, 320
      %v1767 = vld [vmem:[%s1766] sm:$0xf]
      %v1768 = vld [vmem:[%s1766 + $0x4] sm:$0xf]
      %v1769 = vld [vmem:[%s1766 + $0x8] sm:$0xf]
      %v1770 = vld [vmem:[%s1766 + $0xc] sm:$0xf]
      %v1771 = vld [vmem:[%s1766 + $0x10] sm:$0xf]
      %v1772 = vld [vmem:[%s1766 + $0x14] sm:$0xf]
      %v1773 = vld [vmem:[%s1766 + $0x18] sm:$0xf]
      %v1774 = vld [vmem:[%s1766 + $0x1c] sm:$0xf]
      %v1775 = vld [vmem:[%s1766 + $0x20] sm:$0xf]
      %v1776 = vld [vmem:[%s1766 + $0x24] sm:$0xf]
      %v1777 = vld [vmem:[%s1766 + $0x28] sm:$0xf]
      %v1778 = vld [vmem:[%s1766 + $0x2c] sm:$0xf]
      %v1779 = vld [vmem:[%s1766 + $0x30] sm:$0xf]
      %v1780 = vld [vmem:[%s1766 + $0x34] sm:$0xf]
      %v1781 = vld [vmem:[%s1766 + $0x38] sm:$0xf]
      %v1782 = vld [vmem:[%s1766 + $0x3c] sm:$0xf]
      %v1799 = vunpack.c.l.b16 %v1767
      %v1800 = vunpack.c.l.b16 %v1768
      %v1801 = vunpack.c.l.b16 %v1769
      %v1802 = vunpack.c.l.b16 %v1770
      %v1803 = vunpack.c.l.b16 %v1771
      %v1804 = vunpack.c.l.b16 %v1772
      %v1805 = vunpack.c.l.b16 %v1773
      %v1806 = vunpack.c.l.b16 %v1774
      %v1807 = vunpack.c.l.b16 %v1775
      %v1808 = vunpack.c.l.b16 %v1776
      %v1809 = vunpack.c.l.b16 %v1777
      %v1810 = vunpack.c.l.b16 %v1778
      %v1811 = vunpack.c.l.b16 %v1779
      %v1812 = vunpack.c.l.b16 %v1780
      %v1813 = vunpack.c.l.b16 %v1781
      %v1814 = vunpack.c.l.b16 %v1782
      %v1815 = vpack.c.b16 %v1800, %v1799
      %v1816 = vpack.c.b16 %v1802, %v1801
      %v1817 = vpack.c.b16 %v1804, %v1803
      %v1818 = vpack.c.b16 %v1806, %v1805
      %v1819 = vpack.c.b16 %v1808, %v1807
      %v1820 = vpack.c.b16 %v1810, %v1809
      %v1821 = vpack.c.b16 %v1812, %v1811
      %v1822 = vpack.c.b16 %v1814, %v1813
      %1831 = vmatprep.subr.bf16.mxu0 0
      %1832 = vmatpush1.bf16.msra.mxu0 %v1815
      %1833 = vmatprep.subr.bf16.mxu0 0
      %1834 = vmatpush1.bf16.msra.mxu0 %v1816
      %1835 = vmatprep.subr.bf16.mxu0 0
      %1836 = vmatpush1.bf16.msra.mxu0 %v1817
      %1837 = vmatprep.subr.bf16.mxu0 0
      %1838 = vmatpush1.bf16.msra.mxu0 %v1818
      %1839 = vmatprep.subr.bf16.mxu0 0
      %1840 = vmatpush1.bf16.msra.mxu0 %v1819
      %1841 = vmatprep.subr.bf16.mxu0 0
      %1842 = vmatpush1.bf16.msra.mxu0 %v1820
      %1843 = vmatprep.subr.bf16.mxu0 0
      %1844 = vmatpush1.bf16.msra.mxu0 %v1821
      %1845 = vmatprep.subr.bf16.mxu0 0
      %1846 = vmatpush1.bf16.msra.mxu0 %v1822
      %1847 = vmatprep.subr.bf16.mxu0 0
      %1848 = vmatpush1.bf16.msra.mxu0 0
      %1849 = vmatprep.subr.bf16.mxu0 0
      %1850 = vmatpush1.bf16.msra.mxu0 0
      %1851 = vmatprep.subr.bf16.mxu0 0
      %1852 = vmatpush1.bf16.msra.mxu0 0
      %1853 = vmatprep.subr.bf16.mxu0 0
      %1854 = vmatpush1.bf16.msra.mxu0 0
      %1855 = vmatprep.subr.bf16.mxu0 0
      %1856 = vmatpush1.bf16.msra.mxu0 0
      %1857 = vmatprep.subr.bf16.mxu0 0
      %1858 = vmatpush1.bf16.msra.mxu0 0
      %1859 = vmatprep.subr.bf16.mxu0 0
      %1860 = vmatpush1.bf16.msra.mxu0 0
      %1861 = vmatprep.subr.bf16.mxu0 0
      %1862 = vmatpush1.bf16.msra.mxu0 0
      %1863 = vmatprep.mubr.bf16.mxu0 0
      %1864 = vmatmul.mubr.bf16.gmra.mrb[0].mxu0 %v957
      %v1865 = vpop.f32.mrb[0].mxu0
      %v1866 = vadd.f32 0.0, %v1865
      %v1867 = vpop.f32.mrb[0].mxu0
      %v1868 = vpop.f32.mrb[0].mxu0
      %v1869 = vadd.f32 0.0, %v1868
      %v1870 = vpop.f32.mrb[0].mxu0
      %1871 = vmatprep.mubr.bf16.mxu0 0
      %1872 = vmatmul.mubr.bf16.gmra.mrb[0].mxu0 %v958
      %v1873 = vpop.f32.mrb[0].mxu0
      %v1874 = vadd.f32 0.0, %v1873
      %v1875 = vpop.f32.mrb[0].mxu0
      %v1876 = vpop.f32.mrb[0].mxu0
      %v1877 = vadd.f32 0.0, %v1876
      %v1878 = vpop.f32.mrb[0].mxu0
      %1879 = vmatprep.mubr.bf16.mxu0 0
      %1880 = vmatmul.mubr.bf16.gmra.mrb[0].mxu0 %v959
      %v1881 = vpop.f32.mrb[0].mxu0
      %v1882 = vadd.f32 0.0, %v1881
      %v1883 = vpop.f32.mrb[0].mxu0
      %v1884 = vpop.f32.mrb[0].mxu0
      %v1885 = vadd.f32 0.0, %v1884
      %v1886 = vpop.f32.mrb[0].mxu0
      %1887 = vmatprep.mubr.bf16.mxu0 0
      %1888 = vmatmul.mubr.bf16.gmra.mrb[0].mxu0 %v960
      %v1889 = vpop.f32.mrb[0].mxu0
      %v1890 = vadd.f32 0.0, %v1889
      %v1891 = vpop.f32.mrb[0].mxu0
      %v1892 = vpop.f32.mrb[0].mxu0
      %v1893 = vadd.f32 0.0, %v1892
      %v1894 = vpop.f32.mrb[0].mxu0
      %1895 = vmatprep.mubr.bf16.mxu0 0
      %1896 = vmatmul.mubr.bf16.gmra.mrb[0].mxu0 %v961
      %v1897 = vpop.f32.mrb[0].mxu0
      %v1898 = vadd.f32 0.0, %v1897
      %v1899 = vpop.f32.mrb[0].mxu0
      %v1900 = vpop.f32.mrb[0].mxu0
      %v1901 = vadd.f32 0.0, %v1900
      %v1902 = vpop.f32.mrb[0].mxu0
      %1903 = vmatprep.mubr.bf16.mxu0 0
      %1904 = vmatmul.mubr.bf16.gmra.mrb[0].mxu0 %v962
      %v1905 = vpop.f32.mrb[0].mxu0
      %v1906 = vadd.f32 0.0, %v1905
      %v1907 = vpop.f32.mrb[0].mxu0
      %v1908 = vpop.f32.mrb[0].mxu0
      %v1909 = vadd.f32 0.0, %v1908
      %v1910 = vpop.f32.mrb[0].mxu0
      %1911 = vmatprep.mubr.bf16.mxu0 0
      %1912 = vmatmul.mubr.bf16.gmra.mrb[0].mxu0 %v963
      %v1913 = vpop.f32.mrb[0].mxu0
      %v1914 = vadd.f32 0.0, %v1913
      %v1915 = vpop.f32.mrb[0].mxu0
      %v1916 = vpop.f32.mrb[0].mxu0
      %v1917 = vadd.f32 0.0, %v1916
      %v1918 = vpop.f32.mrb[0].mxu0
      %1919 = vmatprep.mubr.bf16.mxu0 0
      %1920 = vmatmul.mubr.bf16.gmra.mrb[0].mxu0 %v964
      %v1921 = vpop.f32.mrb[0].mxu0
      %v1922 = vadd.f32 0.0, %v1921
      %v1923 = vpop.f32.mrb[0].mxu0
      %v1924 = vpop.f32.mrb[0].mxu0
      %v1925 = vadd.f32 0.0, %v1924
      %v1926 = vpop.f32.mrb[0].mxu0
      %1927 = vmatprep.mubr.bf16.mxu0 0
      %1928 = vmatmul.mubr.bf16.gmra.mrb[0].mxu0 %v965
      %v1929 = vpop.f32.mrb[0].mxu0
      %v1930 = vadd.f32 0.0, %v1929
      %v1931 = vpop.f32.mrb[0].mxu0
      %v1932 = vpop.f32.mrb[0].mxu0
      %v1933 = vadd.f32 0.0, %v1932
      %v1934 = vpop.f32.mrb[0].mxu0
      %1935 = vmatprep.mubr.bf16.mxu0 0
      %1936 = vmatmul.mubr.bf16.gmra.mrb[0].mxu0 %v966
      %v1937 = vpop.f32.mrb[0].mxu0
      %v1938 = vadd.f32 0.0, %v1937
      %v1939 = vpop.f32.mrb[0].mxu0
      %v1940 = vpop.f32.mrb[0].mxu0
      %v1941 = vadd.f32 0.0, %v1940
      %v1942 = vpop.f32.mrb[0].mxu0
      %1943 = vmatprep.mubr.bf16.mxu0 0
      %1944 = vmatmul.mubr.bf16.gmra.mrb[0].mxu0 %v967
      %v1945 = vpop.f32.mrb[0].mxu0
      %v1946 = vadd.f32 0.0, %v1945
      %v1947 = vpop.f32.mrb[0].mxu0
      %v1948 = vpop.f32.mrb[0].mxu0
      %v1949 = vadd.f32 0.0, %v1948
      %v1950 = vpop.f32.mrb[0].mxu0
      %1951 = vmatprep.mubr.bf16.mxu0 0
      %1952 = vmatmul.mubr.bf16.gmra.mrb[0].mxu0 %v968
      %v1953 = vpop.f32.mrb[0].mxu0
      %v1954 = vadd.f32 0.0, %v1953
      %v1955 = vpop.f32.mrb[0].mxu0
      %v1956 = vpop.f32.mrb[0].mxu0
      %v1957 = vadd.f32 0.0, %v1956
      %v1958 = vpop.f32.mrb[0].mxu0
      %1959 = vmatprep.mubr.bf16.mxu0 0
      %1960 = vmatmul.mubr.bf16.gmra.mrb[0].mxu0 %v969
      %v1961 = vpop.f32.mrb[0].mxu0
      %v1962 = vadd.f32 0.0, %v1961
      %v1963 = vpop.f32.mrb[0].mxu0
      %v1964 = vpop.f32.mrb[0].mxu0
      %v1965 = vadd.f32 0.0, %v1964
      %v1966 = vpop.f32.mrb[0].mxu0
      %1967 = vmatprep.mubr.bf16.mxu0 0
      %1968 = vmatmul.mubr.bf16.gmra.mrb[0].mxu0 %v970
      %v1969 = vpop.f32.mrb[0].mxu0
      %v1970 = vadd.f32 0.0, %v1969
      %v1971 = vpop.f32.mrb[0].mxu0
      %v1972 = vpop.f32.mrb[0].mxu0
      %v1973 = vadd.f32 0.0, %v1972
      %v1974 = vpop.f32.mrb[0].mxu0
      %1975 = vmatprep.mubr.bf16.mxu0 0
      %1976 = vmatmul.mubr.bf16.gmra.mrb[0].mxu0 %v971
      %v1977 = vpop.f32.mrb[0].mxu0
      %v1978 = vadd.f32 0.0, %v1977
      %v1979 = vpop.f32.mrb[0].mxu0
      %v1980 = vpop.f32.mrb[0].mxu0
      %v1981 = vadd.f32 0.0, %v1980
      %v1982 = vpop.f32.mrb[0].mxu0
      %1983 = vmatprep.mubr.bf16.mxu0 0
      %1984 = vmatmul.mubr.bf16.gmra.mrb[0].mxu0 %v1765
      %v1985 = vpop.f32.mrb[0].mxu0
      %v1986 = vadd.f32 0.0, %v1985
      %v1987 = vpop.f32.mrb[0].mxu0
      %v1988 = vpop.f32.mrb[0].mxu0
      %v1989 = vadd.f32 0.0, %v1988
      %v1990 = vpop.f32.mrb[0].mxu0
      %1991 = vdwg.mxu0
      %v1992 = vadd.f32 %v1726, %v1866
      %v1993 = vadd.f32 %v1727, %v1869
      %v1994 = vadd.f32 %v1728, %v1874
      %v1995 = vadd.f32 %v1729, %v1877
      %v1996 = vadd.f32 %v1730, %v1882
      %v1997 = vadd.f32 %v1731, %v1885
      %v1998 = vadd.f32 %v1732, %v1890
      %v1999 = vadd.f32 %v1733, %v1893
      %v2000 = vadd.f32 %v1734, %v1898
      %v2001 = vadd.f32 %v1735, %v1901
      %v2002 = vadd.f32 %v1736, %v1906
      %v2003 = vadd.f32 %v1737, %v1909
      %v2004 = vadd.f32 %v1738, %v1914
      %v2005 = vadd.f32 %v1739, %v1917
      %v2006 = vadd.f32 %v1740, %v1922
      %v2007 = vadd.f32 %v1741, %v1925
      %v2008 = vadd.f32 %v1742, %v1930
      %v2009 = vadd.f32 %v1743, %v1933
      %v2010 = vadd.f32 %v1744, %v1938
      %v2011 = vadd.f32 %v1745, %v1941
      %v2012 = vadd.f32 %v1746, %v1946
      %v2013 = vadd.f32 %v1747, %v1949
      %v2014 = vadd.f32 %v1748, %v1954
      %v2015 = vadd.f32 %v1749, %v1957
      %v2016 = vadd.f32 %v1750, %v1962
      %v2017 = vadd.f32 %v1751, %v1965
      %v2018 = vadd.f32 %v1752, %v1970
      %v2019 = vadd.f32 %v1753, %v1973
      %v2020 = vadd.f32 %v1754, %v1978
      %v2021 = vadd.f32 %v1755, %v1981
      %v2022 = vadd.f32 %v1756, %v1986
      %v2023 = vadd.f32 %v1757, %v1989
      %v2024 = vpack.c.bf16 %v197, %v196
      %s2025 = scalar_lea.vmem %s1, 384
      %v2026 = vld [vmem:[%s2025] sm:$0xf]
      %v2027 = vld [vmem:[%s2025 + $0x4] sm:$0xf]
      %v2028 = vld [vmem:[%s2025 + $0x8] sm:$0xf]
      %v2029 = vld [vmem:[%s2025 + $0xc] sm:$0xf]
      %v2030 = vld [vmem:[%s2025 + $0x10] sm:$0xf]
      %v2031 = vld [vmem:[%s2025 + $0x14] sm:$0xf]
      %v2032 = vld [vmem:[%s2025 + $0x18] sm:$0xf]
      %v2033 = vld [vmem:[%s2025 + $0x1c] sm:$0xf]
      %v2034 = vld [vmem:[%s2025 + $0x20] sm:$0xf]
      %v2035 = vld [vmem:[%s2025 + $0x24] sm:$0xf]
      %v2036 = vld [vmem:[%s2025 + $0x28] sm:$0xf]
      %v2037 = vld [vmem:[%s2025 + $0x2c] sm:$0xf]
      %v2038 = vld [vmem:[%s2025 + $0x30] sm:$0xf]
      %v2039 = vld [vmem:[%s2025 + $0x34] sm:$0xf]
      %v2040 = vld [vmem:[%s2025 + $0x38] sm:$0xf]
      %v2041 = vld [vmem:[%s2025 + $0x3c] sm:$0xf]
      %v2058 = vunpack.c.l.b16 %v2026
      %v2059 = vunpack.c.l.b16 %v2027
      %v2060 = vunpack.c.l.b16 %v2028
      %v2061 = vunpack.c.l.b16 %v2029
      %v2062 = vunpack.c.l.b16 %v2030
      %v2063 = vunpack.c.l.b16 %v2031
      %v2064 = vunpack.c.l.b16 %v2032
      %v2065 = vunpack.c.l.b16 %v2033
      %v2066 = vunpack.c.l.b16 %v2034
      %v2067 = vunpack.c.l.b16 %v2035
      %v2068 = vunpack.c.l.b16 %v2036
      %v2069 = vunpack.c.l.b16 %v2037
      %v2070 = vunpack.c.l.b16 %v2038
      %v2071 = vunpack.c.l.b16 %v2039
      %v2072 = vunpack.c.l.b16 %v2040
      %v2073 = vunpack.c.l.b16 %v2041
      %v2074 = vpack.c.b16 %v2059, %v2058
      %v2075 = vpack.c.b16 %v2061, %v2060
      %v2076 = vpack.c.b16 %v2063, %v2062
      %v2077 = vpack.c.b16 %v2065, %v2064
      %v2078 = vpack.c.b16 %v2067, %v2066
      %v2079 = vpack.c.b16 %v2069, %v2068
      %v2080 = vpack.c.b16 %v2071, %v2070
      %v2081 = vpack.c.b16 %v2073, %v2072
      %2090 = vmatprep.subr.bf16.mxu0 0
      %2091 = vmatpush1.bf16.msra.mxu0 %v2074
      %2092 = vmatprep.subr.bf16.mxu0 0
      %2093 = vmatpush1.bf16.msra.mxu0 %v2075
      %2094 = vmatprep.subr.bf16.mxu0 0
      %2095 = vmatpush1.bf16.msra.mxu0 %v2076
      %2096 = vmatprep.subr.bf16.mxu0 0
      %2097 = vmatpush1.bf16.msra.mxu0 %v2077
      %2098 = vmatprep.subr.bf16.mxu0 0
      %2099 = vmatpush1.bf16.msra.mxu0 %v2078
      %2100 = vmatprep.subr.bf16.mxu0 0
      %2101 = vmatpush1.bf16.msra.mxu0 %v2079
      %2102 = vmatprep.subr.bf16.mxu0 0
      %2103 = vmatpush1.bf16.msra.mxu0 %v2080
      %2104 = vmatprep.subr.bf16.mxu0 0
      %2105 = vmatpush1.bf16.msra.mxu0 %v2081
      %2106 = vmatprep.subr.bf16.mxu0 0
      %2107 = vmatpush1.bf16.msra.mxu0 0
      %2108 = vmatprep.subr.bf16.mxu0 0
      %2109 = vmatpush1.bf16.msra.mxu0 0
      %2110 = vmatprep.subr.bf16.mxu0 0
      %2111 = vmatpush1.bf16.msra.mxu0 0
      %2112 = vmatprep.subr.bf16.mxu0 0
      %2113 = vmatpush1.bf16.msra.mxu0 0
      %2114 = vmatprep.subr.bf16.mxu0 0
      %2115 = vmatpush1.bf16.msra.mxu0 0
      %2116 = vmatprep.subr.bf16.mxu0 0
      %2117 = vmatpush1.bf16.msra.mxu0 0
      %2118 = vmatprep.subr.bf16.mxu0 0
      %2119 = vmatpush1.bf16.msra.mxu0 0
      %2120 = vmatprep.subr.bf16.mxu0 0
      %2121 = vmatpush1.bf16.msra.mxu0 0
      %2122 = vmatprep.mubr.bf16.mxu0 0
      %2123 = vmatmul.mubr.bf16.gmra.mrb[0].mxu0 %v201
      %v2124 = vpop.f32.mrb[0].mxu0
      %v2125 = vadd.f32 0.0, %v2124
      %v2126 = vpop.f32.mrb[0].mxu0
      %v2127 = vpop.f32.mrb[0].mxu0
      %v2128 = vadd.f32 0.0, %v2127
      %v2129 = vpop.f32.mrb[0].mxu0
      %2130 = vmatprep.mubr.bf16.mxu0 0
      %2131 = vmatmul.mubr.bf16.gmra.mrb[0].mxu0 %v202
      %v2132 = vpop.f32.mrb[0].mxu0
      %v2133 = vadd.f32 0.0, %v2132
      %v2134 = vpop.f32.mrb[0].mxu0
      %v2135 = vpop.f32.mrb[0].mxu0
      %v2136 = vadd.f32 0.0, %v2135
      %v2137 = vpop.f32.mrb[0].mxu0
      %2138 = vmatprep.mubr.bf16.mxu0 0
      %2139 = vmatmul.mubr.bf16.gmra.mrb[0].mxu0 %v203
      %v2140 = vpop.f32.mrb[0].mxu0
      %v2141 = vadd.f32 0.0, %v2140
      %v2142 = vpop.f32.mrb[0].mxu0
      %v2143 = vpop.f32.mrb[0].mxu0
      %v2144 = vadd.f32 0.0, %v2143
      %v2145 = vpop.f32.mrb[0].mxu0
      %2146 = vmatprep.mubr.bf16.mxu0 0
      %2147 = vmatmul.mubr.bf16.gmra.mrb[0].mxu0 %v204
      %v2148 = vpop.f32.mrb[0].mxu0
      %v2149 = vadd.f32 0.0, %v2148
      %v2150 = vpop.f32.mrb[0].mxu0
      %v2151 = vpop.f32.mrb[0].mxu0
      %v2152 = vadd.f32 0.0, %v2151
      %v2153 = vpop.f32.mrb[0].mxu0
      %2154 = vmatprep.mubr.bf16.mxu0 0
      %2155 = vmatmul.mubr.bf16.gmra.mrb[0].mxu0 %v205
      %v2156 = vpop.f32.mrb[0].mxu0
      %v2157 = vadd.f32 0.0, %v2156
      %v2158 = vpop.f32.mrb[0].mxu0
      %v2159 = vpop.f32.mrb[0].mxu0
      %v2160 = vadd.f32 0.0, %v2159
      %v2161 = vpop.f32.mrb[0].mxu0
      %2162 = vmatprep.mubr.bf16.mxu0 0
      %2163 = vmatmul.mubr.bf16.gmra.mrb[0].mxu0 %v206
      %v2164 = vpop.f32.mrb[0].mxu0
      %v2165 = vadd.f32 0.0, %v2164
      %v2166 = vpop.f32.mrb[0].mxu0
      %v2167 = vpop.f32.mrb[0].mxu0
      %v2168 = vadd.f32 0.0, %v2167
      %v2169 = vpop.f32.mrb[0].mxu0
      %2170 = vmatprep.mubr.bf16.mxu0 0
      %2171 = vmatmul.mubr.bf16.gmra.mrb[0].mxu0 %v207
      %v2172 = vpop.f32.mrb[0].mxu0
      %v2173 = vadd.f32 0.0, %v2172
      %v2174 = vpop.f32.mrb[0].mxu0
      %v2175 = vpop.f32.mrb[0].mxu0
      %v2176 = vadd.f32 0.0, %v2175
      %v2177 = vpop.f32.mrb[0].mxu0
      %2178 = vmatprep.mubr.bf16.mxu0 0
      %2179 = vmatmul.mubr.bf16.gmra.mrb[0].mxu0 %v208
      %v2180 = vpop.f32.mrb[0].mxu0
      %v2181 = vadd.f32 0.0, %v2180
      %v2182 = vpop.f32.mrb[0].mxu0
      %v2183 = vpop.f32.mrb[0].mxu0
      %v2184 = vadd.f32 0.0, %v2183
      %v2185 = vpop.f32.mrb[0].mxu0
      %2186 = vmatprep.mubr.bf16.mxu0 0
      %2187 = vmatmul.mubr.bf16.gmra.mrb[0].mxu0 %v209
      %v2188 = vpop.f32.mrb[0].mxu0
      %v2189 = vadd.f32 0.0, %v2188
      %v2190 = vpop.f32.mrb[0].mxu0
      %v2191 = vpop.f32.mrb[0].mxu0
      %v2192 = vadd.f32 0.0, %v2191
      %v2193 = vpop.f32.mrb[0].mxu0
      %2194 = vmatprep.mubr.bf16.mxu0 0
      %2195 = vmatmul.mubr.bf16.gmra.mrb[0].mxu0 %v210
      %v2196 = vpop.f32.mrb[0].mxu0
      %v2197 = vadd.f32 0.0, %v2196
      %v2198 = vpop.f32.mrb[0].mxu0
      %v2199 = vpop.f32.mrb[0].mxu0
      %v2200 = vadd.f32 0.0, %v2199
      %v2201 = vpop.f32.mrb[0].mxu0
      %2202 = vmatprep.mubr.bf16.mxu0 0
      %2203 = vmatmul.mubr.bf16.gmra.mrb[0].mxu0 %v211
      %v2204 = vpop.f32.mrb[0].mxu0
      %v2205 = vadd.f32 0.0, %v2204
      %v2206 = vpop.f32.mrb[0].mxu0
      %v2207 = vpop.f32.mrb[0].mxu0
      %v2208 = vadd.f32 0.0, %v2207
      %v2209 = vpop.f32.mrb[0].mxu0
      %2210 = vmatprep.mubr.bf16.mxu0 0
      %2211 = vmatmul.mubr.bf16.gmra.mrb[0].mxu0 %v212
      %v2212 = vpop.f32.mrb[0].mxu0
      %v2213 = vadd.f32 0.0, %v2212
      %v2214 = vpop.f32.mrb[0].mxu0
      %v2215 = vpop.f32.mrb[0].mxu0
      %v2216 = vadd.f32 0.0, %v2215
      %v2217 = vpop.f32.mrb[0].mxu0
      %2218 = vmatprep.mubr.bf16.mxu0 0
      %2219 = vmatmul.mubr.bf16.gmra.mrb[0].mxu0 %v213
      %v2220 = vpop.f32.mrb[0].mxu0
      %v2221 = vadd.f32 0.0, %v2220
      %v2222 = vpop.f32.mrb[0].mxu0
      %v2223 = vpop.f32.mrb[0].mxu0
      %v2224 = vadd.f32 0.0, %v2223
      %v2225 = vpop.f32.mrb[0].mxu0
      %2226 = vmatprep.mubr.bf16.mxu0 0
      %2227 = vmatmul.mubr.bf16.gmra.mrb[0].mxu0 %v214
      %v2228 = vpop.f32.mrb[0].mxu0
      %v2229 = vadd.f32 0.0, %v2228
      %v2230 = vpop.f32.mrb[0].mxu0
      %v2231 = vpop.f32.mrb[0].mxu0
      %v2232 = vadd.f32 0.0, %v2231
      %v2233 = vpop.f32.mrb[0].mxu0
      %2234 = vmatprep.mubr.bf16.mxu0 0
      %2235 = vmatmul.mubr.bf16.gmra.mrb[0].mxu0 %v1230
      %v2236 = vpop.f32.mrb[0].mxu0
      %v2237 = vadd.f32 0.0, %v2236
      %v2238 = vpop.f32.mrb[0].mxu0
      %v2239 = vpop.f32.mrb[0].mxu0
      %v2240 = vadd.f32 0.0, %v2239
      %v2241 = vpop.f32.mrb[0].mxu0
      %2242 = vmatprep.mubr.bf16.mxu0 0
      %2243 = vmatmul.mubr.bf16.gmra.mrb[0].mxu0 %v2024
      %v2244 = vpop.f32.mrb[0].mxu0
      %v2245 = vadd.f32 0.0, %v2244
      %v2246 = vpop.f32.mrb[0].mxu0
      %v2247 = vpop.f32.mrb[0].mxu0
      %v2248 = vadd.f32 0.0, %v2247
      %v2249 = vpop.f32.mrb[0].mxu0
      %2250 = vdwg.mxu0
      %v2251 = vadd.f32 %v1992, %v2125
      %v2252 = vadd.f32 %v1993, %v2128
      %v2253 = vadd.f32 %v1994, %v2133
      %v2254 = vadd.f32 %v1995, %v2136
      %v2255 = vadd.f32 %v1996, %v2141
      %v2256 = vadd.f32 %v1997, %v2144
      %v2257 = vadd.f32 %v1998, %v2149
      %v2258 = vadd.f32 %v1999, %v2152
      %v2259 = vadd.f32 %v2000, %v2157
      %v2260 = vadd.f32 %v2001, %v2160
      %v2261 = vadd.f32 %v2002, %v2165
      %v2262 = vadd.f32 %v2003, %v2168
      %v2263 = vadd.f32 %v2004, %v2173
      %v2264 = vadd.f32 %v2005, %v2176
      %v2265 = vadd.f32 %v2006, %v2181
      %v2266 = vadd.f32 %v2007, %v2184
      %v2267 = vadd.f32 %v2008, %v2189
      %v2268 = vadd.f32 %v2009, %v2192
      %v2269 = vadd.f32 %v2010, %v2197
      %v2270 = vadd.f32 %v2011, %v2200
      %v2271 = vadd.f32 %v2012, %v2205
      %v2272 = vadd.f32 %v2013, %v2208
      %v2273 = vadd.f32 %v2014, %v2213
      %v2274 = vadd.f32 %v2015, %v2216
      %v2275 = vadd.f32 %v2016, %v2221
      %v2276 = vadd.f32 %v2017, %v2224
      %v2277 = vadd.f32 %v2018, %v2229
      %v2278 = vadd.f32 %v2019, %v2232
      %v2279 = vadd.f32 %v2020, %v2237
      %v2280 = vadd.f32 %v2021, %v2240
      %v2281 = vadd.f32 %v2022, %v2245
      %v2282 = vadd.f32 %v2023, %v2248
      %v2286 = vrot.slane %v196, 1
      %v2287 = vrot.slane %v197, 1
      %v2288 = vsel %vm279, %v2286, %v2287
      %v2289 = vrot.slane %v198, 1
      %v2290 = vsel %vm279, %v2287, %v2289
      %v2293 = vpack.c.bf16 %v2290, %v2288
      %s2294 = scalar_lea.vmem %s1, 448
      %v2295 = vld [vmem:[%s2294] sm:$0xf]
      %v2296 = vld [vmem:[%s2294 + $0x4] sm:$0xf]
      %v2297 = vld [vmem:[%s2294 + $0x8] sm:$0xf]
      %v2298 = vld [vmem:[%s2294 + $0xc] sm:$0xf]
      %v2299 = vld [vmem:[%s2294 + $0x10] sm:$0xf]
      %v2300 = vld [vmem:[%s2294 + $0x14] sm:$0xf]
      %v2301 = vld [vmem:[%s2294 + $0x18] sm:$0xf]
      %v2302 = vld [vmem:[%s2294 + $0x1c] sm:$0xf]
      %v2303 = vld [vmem:[%s2294 + $0x20] sm:$0xf]
      %v2304 = vld [vmem:[%s2294 + $0x24] sm:$0xf]
      %v2305 = vld [vmem:[%s2294 + $0x28] sm:$0xf]
      %v2306 = vld [vmem:[%s2294 + $0x2c] sm:$0xf]
      %v2307 = vld [vmem:[%s2294 + $0x30] sm:$0xf]
      %v2308 = vld [vmem:[%s2294 + $0x34] sm:$0xf]
      %v2309 = vld [vmem:[%s2294 + $0x38] sm:$0xf]
      %v2310 = vld [vmem:[%s2294 + $0x3c] sm:$0xf]
      %v2327 = vunpack.c.l.b16 %v2295
      %v2328 = vunpack.c.l.b16 %v2296
      %v2329 = vunpack.c.l.b16 %v2297
      %v2330 = vunpack.c.l.b16 %v2298
      %v2331 = vunpack.c.l.b16 %v2299
      %v2332 = vunpack.c.l.b16 %v2300
      %v2333 = vunpack.c.l.b16 %v2301
      %v2334 = vunpack.c.l.b16 %v2302
      %v2335 = vunpack.c.l.b16 %v2303
      %v2336 = vunpack.c.l.b16 %v2304
      %v2337 = vunpack.c.l.b16 %v2305
      %v2338 = vunpack.c.l.b16 %v2306
      %v2339 = vunpack.c.l.b16 %v2307
      %v2340 = vunpack.c.l.b16 %v2308
      %v2341 = vunpack.c.l.b16 %v2309
      %v2342 = vunpack.c.l.b16 %v2310
      %v2343 = vpack.c.b16 %v2328, %v2327
      %v2344 = vpack.c.b16 %v2330, %v2329
      %v2345 = vpack.c.b16 %v2332, %v2331
      %v2346 = vpack.c.b16 %v2334, %v2333
      %v2347 = vpack.c.b16 %v2336, %v2335
      %v2348 = vpack.c.b16 %v2338, %v2337
      %v2349 = vpack.c.b16 %v2340, %v2339
      %v2350 = vpack.c.b16 %v2342, %v2341
      %2359 = vmatprep.subr.bf16.mxu0 0
      %2360 = vmatpush1.bf16.msra.mxu0 %v2343
      %2361 = vmatprep.subr.bf16.mxu0 0
      %2362 = vmatpush1.bf16.msra.mxu0 %v2344
      %2363 = vmatprep.subr.bf16.mxu0 0
      %2364 = vmatpush1.bf16.msra.mxu0 %v2345
      %2365 = vmatprep.subr.bf16.mxu0 0
      %2366 = vmatpush1.bf16.msra.mxu0 %v2346
      %2367 = vmatprep.subr.bf16.mxu0 0
      %2368 = vmatpush1.bf16.msra.mxu0 %v2347
      %2369 = vmatprep.subr.bf16.mxu0 0
      %2370 = vmatpush1.bf16.msra.mxu0 %v2348
      %2371 = vmatprep.subr.bf16.mxu0 0
      %2372 = vmatpush1.bf16.msra.mxu0 %v2349
      %2373 = vmatprep.subr.bf16.mxu0 0
      %2374 = vmatpush1.bf16.msra.mxu0 %v2350
      %2375 = vmatprep.subr.bf16.mxu0 0
      %2376 = vmatpush1.bf16.msra.mxu0 0
      %2377 = vmatprep.subr.bf16.mxu0 0
      %2378 = vmatpush1.bf16.msra.mxu0 0
      %2379 = vmatprep.subr.bf16.mxu0 0
      %2380 = vmatpush1.bf16.msra.mxu0 0
      %2381 = vmatprep.subr.bf16.mxu0 0
      %2382 = vmatpush1.bf16.msra.mxu0 0
      %2383 = vmatprep.subr.bf16.mxu0 0
      %2384 = vmatpush1.bf16.msra.mxu0 0
      %2385 = vmatprep.subr.bf16.mxu0 0
      %2386 = vmatpush1.bf16.msra.mxu0 0
      %2387 = vmatprep.subr.bf16.mxu0 0
      %2388 = vmatpush1.bf16.msra.mxu0 0
      %2389 = vmatprep.subr.bf16.mxu0 0
      %2390 = vmatpush1.bf16.msra.mxu0 0
      %2391 = vmatprep.mubr.bf16.mxu0 0
      %2392 = vmatmul.mubr.bf16.gmra.mrb[0].mxu0 %v394
      %v2393 = vpop.f32.mrb[0].mxu0
      %v2394 = vadd.f32 0.0, %v2393
      %v2395 = vpop.f32.mrb[0].mxu0
      %v2396 = vpop.f32.mrb[0].mxu0
      %v2397 = vadd.f32 0.0, %v2396
      %v2398 = vpop.f32.mrb[0].mxu0
      %2399 = vmatprep.mubr.bf16.mxu0 0
      %2400 = vmatmul.mubr.bf16.gmra.mrb[0].mxu0 %v395
      %v2401 = vpop.f32.mrb[0].mxu0
      %v2402 = vadd.f32 0.0, %v2401
      %v2403 = vpop.f32.mrb[0].mxu0
      %v2404 = vpop.f32.mrb[0].mxu0
      %v2405 = vadd.f32 0.0, %v2404
      %v2406 = vpop.f32.mrb[0].mxu0
      %2407 = vmatprep.mubr.bf16.mxu0 0
      %2408 = vmatmul.mubr.bf16.gmra.mrb[0].mxu0 %v396
      %v2409 = vpop.f32.mrb[0].mxu0
      %v2410 = vadd.f32 0.0, %v2409
      %v2411 = vpop.f32.mrb[0].mxu0
      %v2412 = vpop.f32.mrb[0].mxu0
      %v2413 = vadd.f32 0.0, %v2412
      %v2414 = vpop.f32.mrb[0].mxu0
      %2415 = vmatprep.mubr.bf16.mxu0 0
      %2416 = vmatmul.mubr.bf16.gmra.mrb[0].mxu0 %v397
      %v2417 = vpop.f32.mrb[0].mxu0
      %v2418 = vadd.f32 0.0, %v2417
      %v2419 = vpop.f32.mrb[0].mxu0
      %v2420 = vpop.f32.mrb[0].mxu0
      %v2421 = vadd.f32 0.0, %v2420
      %v2422 = vpop.f32.mrb[0].mxu0
      %2423 = vmatprep.mubr.bf16.mxu0 0
      %2424 = vmatmul.mubr.bf16.gmra.mrb[0].mxu0 %v398
      %v2425 = vpop.f32.mrb[0].mxu0
      %v2426 = vadd.f32 0.0, %v2425
      %v2427 = vpop.f32.mrb[0].mxu0
      %v2428 = vpop.f32.mrb[0].mxu0
      %v2429 = vadd.f32 0.0, %v2428
      %v2430 = vpop.f32.mrb[0].mxu0
      %2431 = vmatprep.mubr.bf16.mxu0 0
      %2432 = vmatmul.mubr.bf16.gmra.mrb[0].mxu0 %v399
      %v2433 = vpop.f32.mrb[0].mxu0
      %v2434 = vadd.f32 0.0, %v2433
      %v2435 = vpop.f32.mrb[0].mxu0
      %v2436 = vpop.f32.mrb[0].mxu0
      %v2437 = vadd.f32 0.0, %v2436
      %v2438 = vpop.f32.mrb[0].mxu0
      %2439 = vmatprep.mubr.bf16.mxu0 0
      %2440 = vmatmul.mubr.bf16.gmra.mrb[0].mxu0 %v400
      %v2441 = vpop.f32.mrb[0].mxu0
      %v2442 = vadd.f32 0.0, %v2441
      %v2443 = vpop.f32.mrb[0].mxu0
      %v2444 = vpop.f32.mrb[0].mxu0
      %v2445 = vadd.f32 0.0, %v2444
      %v2446 = vpop.f32.mrb[0].mxu0
      %2447 = vmatprep.mubr.bf16.mxu0 0
      %2448 = vmatmul.mubr.bf16.gmra.mrb[0].mxu0 %v401
      %v2449 = vpop.f32.mrb[0].mxu0
      %v2450 = vadd.f32 0.0, %v2449
      %v2451 = vpop.f32.mrb[0].mxu0
      %v2452 = vpop.f32.mrb[0].mxu0
      %v2453 = vadd.f32 0.0, %v2452
      %v2454 = vpop.f32.mrb[0].mxu0
      %2455 = vmatprep.mubr.bf16.mxu0 0
      %2456 = vmatmul.mubr.bf16.gmra.mrb[0].mxu0 %v402
      %v2457 = vpop.f32.mrb[0].mxu0
      %v2458 = vadd.f32 0.0, %v2457
      %v2459 = vpop.f32.mrb[0].mxu0
      %v2460 = vpop.f32.mrb[0].mxu0
      %v2461 = vadd.f32 0.0, %v2460
      %v2462 = vpop.f32.mrb[0].mxu0
      %2463 = vmatprep.mubr.bf16.mxu0 0
      %2464 = vmatmul.mubr.bf16.gmra.mrb[0].mxu0 %v403
      %v2465 = vpop.f32.mrb[0].mxu0
      %v2466 = vadd.f32 0.0, %v2465
      %v2467 = vpop.f32.mrb[0].mxu0
      %v2468 = vpop.f32.mrb[0].mxu0
      %v2469 = vadd.f32 0.0, %v2468
      %v2470 = vpop.f32.mrb[0].mxu0
      %2471 = vmatprep.mubr.bf16.mxu0 0
      %2472 = vmatmul.mubr.bf16.gmra.mrb[0].mxu0 %v404
      %v2473 = vpop.f32.mrb[0].mxu0
      %v2474 = vadd.f32 0.0, %v2473
      %v2475 = vpop.f32.mrb[0].mxu0
      %v2476 = vpop.f32.mrb[0].mxu0
      %v2477 = vadd.f32 0.0, %v2476
      %v2478 = vpop.f32.mrb[0].mxu0
      %2479 = vmatprep.mubr.bf16.mxu0 0
      %2480 = vmatmul.mubr.bf16.gmra.mrb[0].mxu0 %v405
      %v2481 = vpop.f32.mrb[0].mxu0
      %v2482 = vadd.f32 0.0, %v2481
      %v2483 = vpop.f32.mrb[0].mxu0
      %v2484 = vpop.f32.mrb[0].mxu0
      %v2485 = vadd.f32 0.0, %v2484
      %v2486 = vpop.f32.mrb[0].mxu0
      %2487 = vmatprep.mubr.bf16.mxu0 0
      %2488 = vmatmul.mubr.bf16.gmra.mrb[0].mxu0 %v406
      %v2489 = vpop.f32.mrb[0].mxu0
      %v2490 = vadd.f32 0.0, %v2489
      %v2491 = vpop.f32.mrb[0].mxu0
      %v2492 = vpop.f32.mrb[0].mxu0
      %v2493 = vadd.f32 0.0, %v2492
      %v2494 = vpop.f32.mrb[0].mxu0
      %2495 = vmatprep.mubr.bf16.mxu0 0
      %2496 = vmatmul.mubr.bf16.gmra.mrb[0].mxu0 %v407
      %v2497 = vpop.f32.mrb[0].mxu0
      %v2498 = vadd.f32 0.0, %v2497
      %v2499 = vpop.f32.mrb[0].mxu0
      %v2500 = vpop.f32.mrb[0].mxu0
      %v2501 = vadd.f32 0.0, %v2500
      %v2502 = vpop.f32.mrb[0].mxu0
      %2503 = vmatprep.mubr.bf16.mxu0 0
      %2504 = vmatmul.mubr.bf16.gmra.mrb[0].mxu0 %v1499
      %v2505 = vpop.f32.mrb[0].mxu0
      %v2506 = vadd.f32 0.0, %v2505
      %v2507 = vpop.f32.mrb[0].mxu0
      %v2508 = vpop.f32.mrb[0].mxu0
      %v2509 = vadd.f32 0.0, %v2508
      %v2510 = vpop.f32.mrb[0].mxu0
      %2511 = vmatprep.mubr.bf16.mxu0 0
      %2512 = vmatmul.mubr.bf16.gmra.mrb[0].mxu0 %v2293
      %v2513 = vpop.f32.mrb[0].mxu0
      %v2514 = vadd.f32 0.0, %v2513
      %v2515 = vpop.f32.mrb[0].mxu0
      %v2516 = vpop.f32.mrb[0].mxu0
      %v2517 = vadd.f32 0.0, %v2516
      %v2518 = vpop.f32.mrb[0].mxu0
      %2519 = vdwg.mxu0
      %v2520 = vadd.f32 %v2251, %v2394
      %v2521 = vadd.f32 %v2252, %v2397
      %v2522 = vadd.f32 %v2253, %v2402
      %v2523 = vadd.f32 %v2254, %v2405
      %v2524 = vadd.f32 %v2255, %v2410
      %v2525 = vadd.f32 %v2256, %v2413
      %v2526 = vadd.f32 %v2257, %v2418
      %v2527 = vadd.f32 %v2258, %v2421
      %v2528 = vadd.f32 %v2259, %v2426
      %v2529 = vadd.f32 %v2260, %v2429
      %v2530 = vadd.f32 %v2261, %v2434
      %v2531 = vadd.f32 %v2262, %v2437
      %v2532 = vadd.f32 %v2263, %v2442
      %v2533 = vadd.f32 %v2264, %v2445
      %v2534 = vadd.f32 %v2265, %v2450
      %v2535 = vadd.f32 %v2266, %v2453
      %v2536 = vadd.f32 %v2267, %v2458
      %v2537 = vadd.f32 %v2268, %v2461
      %v2538 = vadd.f32 %v2269, %v2466
      %v2539 = vadd.f32 %v2270, %v2469
      %v2540 = vadd.f32 %v2271, %v2474
      %v2541 = vadd.f32 %v2272, %v2477
      %v2542 = vadd.f32 %v2273, %v2482
      %v2543 = vadd.f32 %v2274, %v2485
      %v2544 = vadd.f32 %v2275, %v2490
      %v2545 = vadd.f32 %v2276, %v2493
      %v2546 = vadd.f32 %v2277, %v2498
      %v2547 = vadd.f32 %v2278, %v2501
      %v2548 = vadd.f32 %v2279, %v2506
      %v2549 = vadd.f32 %v2280, %v2509
      %v2550 = vadd.f32 %v2281, %v2514
      %v2551 = vadd.f32 %v2282, %v2517
      %v2552 = vrot.slane %v196, 2
      %v2553 = vrot.slane %v197, 2
      %v2554 = vsel %vm843, %v2552, %v2553
      %v2555 = vrot.slane %v198, 2
      %v2556 = vsel %vm843, %v2553, %v2555
      %v2559 = vpack.c.bf16 %v2556, %v2554
      %s2560 = scalar_lea.vmem %s1, 512
      %v2561 = vld [vmem:[%s2560] sm:$0xf]
      %v2562 = vld [vmem:[%s2560 + $0x4] sm:$0xf]
      %v2563 = vld [vmem:[%s2560 + $0x8] sm:$0xf]
      %v2564 = vld [vmem:[%s2560 + $0xc] sm:$0xf]
      %v2565 = vld [vmem:[%s2560 + $0x10] sm:$0xf]
      %v2566 = vld [vmem:[%s2560 + $0x14] sm:$0xf]
      %v2567 = vld [vmem:[%s2560 + $0x18] sm:$0xf]
      %v2568 = vld [vmem:[%s2560 + $0x1c] sm:$0xf]
      %v2569 = vld [vmem:[%s2560 + $0x20] sm:$0xf]
      %v2570 = vld [vmem:[%s2560 + $0x24] sm:$0xf]
      %v2571 = vld [vmem:[%s2560 + $0x28] sm:$0xf]
      %v2572 = vld [vmem:[%s2560 + $0x2c] sm:$0xf]
      %v2573 = vld [vmem:[%s2560 + $0x30] sm:$0xf]
      %v2574 = vld [vmem:[%s2560 + $0x34] sm:$0xf]
      %v2575 = vld [vmem:[%s2560 + $0x38] sm:$0xf]
      %v2576 = vld [vmem:[%s2560 + $0x3c] sm:$0xf]
      %v2593 = vunpack.c.l.b16 %v2561
      %v2594 = vunpack.c.l.b16 %v2562
      %v2595 = vunpack.c.l.b16 %v2563
      %v2596 = vunpack.c.l.b16 %v2564
      %v2597 = vunpack.c.l.b16 %v2565
      %v2598 = vunpack.c.l.b16 %v2566
      %v2599 = vunpack.c.l.b16 %v2567
      %v2600 = vunpack.c.l.b16 %v2568
      %v2601 = vunpack.c.l.b16 %v2569
      %v2602 = vunpack.c.l.b16 %v2570
      %v2603 = vunpack.c.l.b16 %v2571
      %v2604 = vunpack.c.l.b16 %v2572
      %v2605 = vunpack.c.l.b16 %v2573
      %v2606 = vunpack.c.l.b16 %v2574
      %v2607 = vunpack.c.l.b16 %v2575
      %v2608 = vunpack.c.l.b16 %v2576
      %v2609 = vpack.c.b16 %v2594, %v2593
      %v2610 = vpack.c.b16 %v2596, %v2595
      %v2611 = vpack.c.b16 %v2598, %v2597
      %v2612 = vpack.c.b16 %v2600, %v2599
      %v2613 = vpack.c.b16 %v2602, %v2601
      %v2614 = vpack.c.b16 %v2604, %v2603
      %v2615 = vpack.c.b16 %v2606, %v2605
      %v2616 = vpack.c.b16 %v2608, %v2607
      %2625 = vmatprep.subr.bf16.mxu0 0
      %2626 = vmatpush1.bf16.msra.mxu0 %v2609
      %2627 = vmatprep.subr.bf16.mxu0 0
      %2628 = vmatpush1.bf16.msra.mxu0 %v2610
      %2629 = vmatprep.subr.bf16.mxu0 0
      %2630 = vmatpush1.bf16.msra.mxu0 %v2611
      %2631 = vmatprep.subr.bf16.mxu0 0
      %2632 = vmatpush1.bf16.msra.mxu0 %v2612
      %2633 = vmatprep.subr.bf16.mxu0 0
      %2634 = vmatpush1.bf16.msra.mxu0 %v2613
      %2635 = vmatprep.subr.bf16.mxu0 0
      %2636 = vmatpush1.bf16.msra.mxu0 %v2614
      %2637 = vmatprep.subr.bf16.mxu0 0
      %2638 = vmatpush1.bf16.msra.mxu0 %v2615
      %2639 = vmatprep.subr.bf16.mxu0 0
      %2640 = vmatpush1.bf16.msra.mxu0 %v2616
      %2641 = vmatprep.subr.bf16.mxu0 0
      %2642 = vmatpush1.bf16.msra.mxu0 0
      %2643 = vmatprep.subr.bf16.mxu0 0
      %2644 = vmatpush1.bf16.msra.mxu0 0
      %2645 = vmatprep.subr.bf16.mxu0 0
      %2646 = vmatpush1.bf16.msra.mxu0 0
      %2647 = vmatprep.subr.bf16.mxu0 0
      %2648 = vmatpush1.bf16.msra.mxu0 0
      %2649 = vmatprep.subr.bf16.mxu0 0
      %2650 = vmatpush1.bf16.msra.mxu0 0
      %2651 = vmatprep.subr.bf16.mxu0 0
      %2652 = vmatpush1.bf16.msra.mxu0 0
      %2653 = vmatprep.subr.bf16.mxu0 0
      %2654 = vmatpush1.bf16.msra.mxu0 0
      %2655 = vmatprep.subr.bf16.mxu0 0
      %2656 = vmatpush1.bf16.msra.mxu0 0
      %2657 = vmatprep.mubr.bf16.mxu0 0
      %2658 = vmatmul.mubr.bf16.gmra.mrb[0].mxu0 %v958
      %v2659 = vpop.f32.mrb[0].mxu0
      %v2660 = vadd.f32 0.0, %v2659
      %v2661 = vpop.f32.mrb[0].mxu0
      %v2662 = vpop.f32.mrb[0].mxu0
      %v2663 = vadd.f32 0.0, %v2662
      %v2664 = vpop.f32.mrb[0].mxu0
      %2665 = vmatprep.mubr.bf16.mxu0 0
      %2666 = vmatmul.mubr.bf16.gmra.mrb[0].mxu0 %v959
      %v2667 = vpop.f32.mrb[0].mxu0
      %v2668 = vadd.f32 0.0, %v2667
      %v2669 = vpop.f32.mrb[0].mxu0
      %v2670 = vpop.f32.mrb[0].mxu0
      %v2671 = vadd.f32 0.0, %v2670
      %v2672 = vpop.f32.mrb[0].mxu0
      %2673 = vmatprep.mubr.bf16.mxu0 0
      %2674 = vmatmul.mubr.bf16.gmra.mrb[0].mxu0 %v960
      %v2675 = vpop.f32.mrb[0].mxu0
      %v2676 = vadd.f32 0.0, %v2675
      %v2677 = vpop.f32.mrb[0].mxu0
      %v2678 = vpop.f32.mrb[0].mxu0
      %v2679 = vadd.f32 0.0, %v2678
      %v2680 = vpop.f32.mrb[0].mxu0
      %2681 = vmatprep.mubr.bf16.mxu0 0
      %2682 = vmatmul.mubr.bf16.gmra.mrb[0].mxu0 %v961
      %v2683 = vpop.f32.mrb[0].mxu0
      %v2684 = vadd.f32 0.0, %v2683
      %v2685 = vpop.f32.mrb[0].mxu0
      %v2686 = vpop.f32.mrb[0].mxu0
      %v2687 = vadd.f32 0.0, %v2686
      %v2688 = vpop.f32.mrb[0].mxu0
      %2689 = vmatprep.mubr.bf16.mxu0 0
      %2690 = vmatmul.mubr.bf16.gmra.mrb[0].mxu0 %v962
      %v2691 = vpop.f32.mrb[0].mxu0
      %v2692 = vadd.f32 0.0, %v2691
      %v2693 = vpop.f32.mrb[0].mxu0
      %v2694 = vpop.f32.mrb[0].mxu0
      %v2695 = vadd.f32 0.0, %v2694
      %v2696 = vpop.f32.mrb[0].mxu0
      %2697 = vmatprep.mubr.bf16.mxu0 0
      %2698 = vmatmul.mubr.bf16.gmra.mrb[0].mxu0 %v963
      %v2699 = vpop.f32.mrb[0].mxu0
      %v2700 = vadd.f32 0.0, %v2699
      %v2701 = vpop.f32.mrb[0].mxu0
      %v2702 = vpop.f32.mrb[0].mxu0
      %v2703 = vadd.f32 0.0, %v2702
      %v2704 = vpop.f32.mrb[0].mxu0
      %2705 = vmatprep.mubr.bf16.mxu0 0
      %2706 = vmatmul.mubr.bf16.gmra.mrb[0].mxu0 %v964
      %v2707 = vpop.f32.mrb[0].mxu0
      %v2708 = vadd.f32 0.0, %v2707
      %v2709 = vpop.f32.mrb[0].mxu0
      %v2710 = vpop.f32.mrb[0].mxu0
      %v2711 = vadd.f32 0.0, %v2710
      %v2712 = vpop.f32.mrb[0].mxu0
      %2713 = vmatprep.mubr.bf16.mxu0 0
      %2714 = vmatmul.mubr.bf16.gmra.mrb[0].mxu0 %v965
      %v2715 = vpop.f32.mrb[0].mxu0
      %v2716 = vadd.f32 0.0, %v2715
      %v2717 = vpop.f32.mrb[0].mxu0
      %v2718 = vpop.f32.mrb[0].mxu0
      %v2719 = vadd.f32 0.0, %v2718
      %v2720 = vpop.f32.mrb[0].mxu0
      %2721 = vmatprep.mubr.bf16.mxu0 0
      %2722 = vmatmul.mubr.bf16.gmra.mrb[0].mxu0 %v966
      %v2723 = vpop.f32.mrb[0].mxu0
      %v2724 = vadd.f32 0.0, %v2723
      %v2725 = vpop.f32.mrb[0].mxu0
      %v2726 = vpop.f32.mrb[0].mxu0
      %v2727 = vadd.f32 0.0, %v2726
      %v2728 = vpop.f32.mrb[0].mxu0
      %2729 = vmatprep.mubr.bf16.mxu0 0
      %2730 = vmatmul.mubr.bf16.gmra.mrb[0].mxu0 %v967
      %v2731 = vpop.f32.mrb[0].mxu0
      %v2732 = vadd.f32 0.0, %v2731
      %v2733 = vpop.f32.mrb[0].mxu0
      %v2734 = vpop.f32.mrb[0].mxu0
      %v2735 = vadd.f32 0.0, %v2734
      %v2736 = vpop.f32.mrb[0].mxu0
      %2737 = vmatprep.mubr.bf16.mxu0 0
      %2738 = vmatmul.mubr.bf16.gmra.mrb[0].mxu0 %v968
      %v2739 = vpop.f32.mrb[0].mxu0
      %v2740 = vadd.f32 0.0, %v2739
      %v2741 = vpop.f32.mrb[0].mxu0
      %v2742 = vpop.f32.mrb[0].mxu0
      %v2743 = vadd.f32 0.0, %v2742
      %v2744 = vpop.f32.mrb[0].mxu0
      %2745 = vmatprep.mubr.bf16.mxu0 0
      %2746 = vmatmul.mubr.bf16.gmra.mrb[0].mxu0 %v969
      %v2747 = vpop.f32.mrb[0].mxu0
      %v2748 = vadd.f32 0.0, %v2747
      %v2749 = vpop.f32.mrb[0].mxu0
      %v2750 = vpop.f32.mrb[0].mxu0
      %v2751 = vadd.f32 0.0, %v2750
      %v2752 = vpop.f32.mrb[0].mxu0
      %2753 = vmatprep.mubr.bf16.mxu0 0
      %2754 = vmatmul.mubr.bf16.gmra.mrb[0].mxu0 %v970
      %v2755 = vpop.f32.mrb[0].mxu0
      %v2756 = vadd.f32 0.0, %v2755
      %v2757 = vpop.f32.mrb[0].mxu0
      %v2758 = vpop.f32.mrb[0].mxu0
      %v2759 = vadd.f32 0.0, %v2758
      %v2760 = vpop.f32.mrb[0].mxu0
      %2761 = vmatprep.mubr.bf16.mxu0 0
      %2762 = vmatmul.mubr.bf16.gmra.mrb[0].mxu0 %v971
      %v2763 = vpop.f32.mrb[0].mxu0
      %v2764 = vadd.f32 0.0, %v2763
      %v2765 = vpop.f32.mrb[0].mxu0
      %v2766 = vpop.f32.mrb[0].mxu0
      %v2767 = vadd.f32 0.0, %v2766
      %v2768 = vpop.f32.mrb[0].mxu0
      %2769 = vmatprep.mubr.bf16.mxu0 0
      %2770 = vmatmul.mubr.bf16.gmra.mrb[0].mxu0 %v1765
      %v2771 = vpop.f32.mrb[0].mxu0
      %v2772 = vadd.f32 0.0, %v2771
      %v2773 = vpop.f32.mrb[0].mxu0
      %v2774 = vpop.f32.mrb[0].mxu0
      %v2775 = vadd.f32 0.0, %v2774
      %v2776 = vpop.f32.mrb[0].mxu0
      %2777 = vmatprep.mubr.bf16.mxu0 0
      %2778 = vmatmul.mubr.bf16.gmra.mrb[0].mxu0 %v2559
      %v2779 = vpop.f32.mrb[0].mxu0
      %v2780 = vadd.f32 0.0, %v2779
      %v2781 = vpop.f32.mrb[0].mxu0
      %v2782 = vpop.f32.mrb[0].mxu0
      %v2783 = vadd.f32 0.0, %v2782
      %v2784 = vpop.f32.mrb[0].mxu0
      %2785 = vdwg.mxu0
      %v2786 = vadd.f32 %v2520, %v2660
      %v2787 = vadd.f32 %v2521, %v2663
      %v2788 = vadd.f32 %v2522, %v2668
      %v2789 = vadd.f32 %v2523, %v2671
      %v2790 = vadd.f32 %v2524, %v2676
      %v2791 = vadd.f32 %v2525, %v2679
      %v2792 = vadd.f32 %v2526, %v2684
      %v2793 = vadd.f32 %v2527, %v2687
      %v2794 = vadd.f32 %v2528, %v2692
      %v2795 = vadd.f32 %v2529, %v2695
      %v2796 = vadd.f32 %v2530, %v2700
      %v2797 = vadd.f32 %v2531, %v2703
      %v2798 = vadd.f32 %v2532, %v2708
      %v2799 = vadd.f32 %v2533, %v2711
      %v2800 = vadd.f32 %v2534, %v2716
      %v2801 = vadd.f32 %v2535, %v2719
      %v2802 = vadd.f32 %v2536, %v2724
      %v2803 = vadd.f32 %v2537, %v2727
      %v2804 = vadd.f32 %v2538, %v2732
      %v2805 = vadd.f32 %v2539, %v2735
      %v2806 = vadd.f32 %v2540, %v2740
      %v2807 = vadd.f32 %v2541, %v2743
      %v2808 = vadd.f32 %v2542, %v2748
      %v2809 = vadd.f32 %v2543, %v2751
      %v2810 = vadd.f32 %v2544, %v2756
      %v2811 = vadd.f32 %v2545, %v2759
      %v2812 = vadd.f32 %v2546, %v2764
      %v2813 = vadd.f32 %v2547, %v2767
      %v2814 = vadd.f32 %v2548, %v2772
      %v2815 = vadd.f32 %v2549, %v2775
      %v2816 = vadd.f32 %v2550, %v2780
      %v2817 = vadd.f32 %v2551, %v2783
      %2818 = vst [vmem:[%s143] sm:$0xff] %v2786
      %2819 = vst [vmem:[%s143 + $0x8] sm:$0xff] %v2787
      %2820 = vst [vmem:[%s143 + $0x10] sm:$0xff] %v2788
      %2821 = vst [vmem:[%s143 + $0x18] sm:$0xff] %v2789
      %2822 = vst [vmem:[%s143 + $0x20] sm:$0xff] %v2790
      %2823 = vst [vmem:[%s143 + $0x28] sm:$0xff] %v2791
      %2824 = vst [vmem:[%s143 + $0x30] sm:$0xff] %v2792
      %2825 = vst [vmem:[%s143 + $0x38] sm:$0xff] %v2793
      %2826 = vst [vmem:[%s143 + $0x40] sm:$0xff] %v2794
      %2827 = vst [vmem:[%s143 + $0x48] sm:$0xff] %v2795
      %2828 = vst [vmem:[%s143 + $0x50] sm:$0xff] %v2796
      %2829 = vst [vmem:[%s143 + $0x58] sm:$0xff] %v2797
      %2830 = vst [vmem:[%s143 + $0x60] sm:$0xff] %v2798
      %2831 = vst [vmem:[%s143 + $0x68] sm:$0xff] %v2799
      %2832 = vst [vmem:[%s143 + $0x70] sm:$0xff] %v2800
      %2833 = vst [vmem:[%s143 + $0x78] sm:$0xff] %v2801
      %2834 = vst [vmem:[%s143 + $0x80] sm:$0xff] %v2802
      %2835 = vst [vmem:[%s143 + $0x88] sm:$0xff] %v2803
      %2836 = vst [vmem:[%s143 + $0x90] sm:$0xff] %v2804
      %2837 = vst [vmem:[%s143 + $0x98] sm:$0xff] %v2805
      %2838 = vst [vmem:[%s143 + $0xa0] sm:$0xff] %v2806
      %2839 = vst [vmem:[%s143 + $0xa8] sm:$0xff] %v2807
      %2840 = vst [vmem:[%s143 + $0xb0] sm:$0xff] %v2808
      %2841 = vst [vmem:[%s143 + $0xb8] sm:$0xff] %v2809
      %2842 = vst [vmem:[%s143 + $0xc0] sm:$0xff] %v2810
      %2843 = vst [vmem:[%s143 + $0xc8] sm:$0xff] %v2811
      %2844 = vst [vmem:[%s143 + $0xd0] sm:$0xff] %v2812
      %2845 = vst [vmem:[%s143 + $0xd8] sm:$0xff] %v2813
      %2846 = vst [vmem:[%s143 + $0xe0] sm:$0xff] %v2814
      %2847 = vst [vmem:[%s143 + $0xe8] sm:$0xff] %v2815
      %2848 = vst [vmem:[%s143 + $0xf0] sm:$0xff] %v2816
      %2849 = vst [vmem:[%s143 + $0xf8] sm:$0xff] %v2817
      %p2850 = scmp.lt.s32.totalorder %s13, 1
      %s2851 = scalar_select %p2850, %s13, 1
      %s2852 = smul.addr %s2851, 32
      %s2853 = smul.addr %s2852, 8
      %s2854 = scalar_lea.vmem %s2, %s2853
      // Predicated region
      $region29: #{octave_conv_forward.5} parent=27 // pred_check
        %p2855 = pneg %p78
      $region30: #{octave_conv_forward.5} parent=27 // pred_check_branch
        %2857 = sbr.rel (%p2855) target = $region32
      $region31: #{octave_conv_forward.5} parent=27 // pred_region
        _
      $region32: #{octave_conv_forward.5} parent=27 // pred_fallthru
        _
    $region28: #{octave_conv_forward.5} parent=5 // pred_fallthru
      _
    %p2858 = scmp.le.s32.totalorder 2, %s8
    // Predicated region
    $region33: #{octave_conv_forward.5} parent=5 // pred_check
      %p2859 = pneg %p2858
    $region34: #{octave_conv_forward.5} parent=5 // pred_check_branch
      %2861 = sbr.rel (%p2859) target = $region36
    $region35: #{octave_conv_forward.5} parent=5 // pred_region
      %s2862 = ssub.s32 %s8, 2
      // Predicated region
      $region37: #{octave_conv_forward.5} parent=35 // pred_check
        %p2863 = pneg %p84
      $region38: #{octave_conv_forward.5} parent=35 // pred_check_branch
        %2865 = sbr.rel (%p2863) target = $region40
      $region39: #{octave_conv_forward.5} parent=35 // pred_region
        %p2866 = scmp.lt.s32.totalorder %s14, 1
        %s2867 = scalar_select %p2866, %s14, 1
        %s2868 = smul.addr %s2867, 32
        %s2869 = smul.addr %s2868, 8
        %s2870 = scalar_lea.vmem %s2, %s2869
      $region40: #{octave_conv_forward.5} parent=35 // pred_fallthru
        _
    $region36: #{octave_conv_forward.5} parent=5 // pred_fallthru
      _
  $region6: #{octave_conv_forward.5} parent=0 // loop_footer
    %s12 = sadd.s32 1, %s8
  $region7: #{octave_conv_forward.5} parent=0 // loop_footer_branch
    %7 = sbr.rel target = $region3
  $region8: #{octave_conv_forward.5} parent=0 // loop_exit
    _

// kernel: octave_conv_forward.9
$region0: #{octave_conv_forward.9}
  #allocation0 [shape = 'u32[]', space=smem, size = 0x4, offset = 0x4, fixed_abs, tag = 'smem constant byte address 0x4 - core index']
  #allocation1 [shape = 'u32[144,128]{1,0:T(1,128)}', space=vmem, size = 0x12000, scoped, tag = 'internal scratch']
  %s0 = inlined_call_operand.vmem [shape: f32[2,64,128], index: 0, kind: input, shape index: {}]
  %s1 = inlined_call_operand.vmem [shape: f32[2,64,128], index: 1, kind: input, shape index: {}]
  %s2 = inlined_call_operand.vmem [shape: bf16[128,128], index: 2, kind: input, shape index: {}]
  %s3 = inlined_call_operand.vmem [shape: bf16[128,128], index: 3, kind: input, shape index: {}]
  %s4 = inlined_call_operand.vmem [shape: f32[1,128], index: 4, kind: input, shape index: {}]
  %s5 = inlined_call_operand.vmem [shape: f32[1,128], index: 5, kind: input, shape index: {}]
  %s6 = inlined_call_operand.vmem [shape: f32[1,128], index: 6, kind: input, shape index: {}]
  %s7 = inlined_call_operand.vmem [shape: f32[2,64,128], index: 7, kind: output, shape index: {}]
  %s8 = sld [smem:[#allocation0]]
  $region61: #{octave_conv_forward.9} parent=0
    _
  %s10 = ssub.s32 1, %s8
  %s11 = scalar_select 0, %s10, %s8
  loop: start=0, step=1, limit=4
  $region2: #{octave_conv_forward.9} parent=0 // loop_pre_header
    _
  $region3: #{octave_conv_forward.9} parent=0 // loop_header
    %s13 = sphi 0, %s17
    %p14 = scmp.ge.s32.totalorder %s13, 4
    %s23 = sphi 0, %s25
    %s26 = sphi 0, %s23
    %s27 = sphi 0, %s26
    %s43 = sphi 0, %s27
    %s49 = sphi 0, %s51
    %s52 = sphi 0, %s49
    %s53 = sphi 0, %s52
    %s69 = sphi 0, %s53
    %s73 = sphi 0, %s73
    %s75 = sphi 0, %s73
    %s76 = sphi 0, %s75
    %s90 = sphi 0, %s76
    %s94 = sphi 0, %s94
    %s96 = sphi 0, %s94
    %s97 = sphi 0, %s96
    %s111 = sphi 0, %s97
    %s115 = sphi 0, %s115
    %s117 = sphi 0, %s115
    %s118 = sphi 0, %s117
    %s132 = sphi 0, %s118
    %s136 = sphi 0, %s136
    %s138 = sphi 0, %s136
    %s139 = sphi 0, %s138
    %s153 = sphi 0, %s139
    %s157 = sphi 0, %s157
    %s159 = sphi 0, %s157
    %s160 = sphi 0, %s159
    %s174 = sphi 0, %s160
    %s180 = sphi 0, %s182
    %s183 = sphi 0, %s180
    %s184 = sphi 0, %s183
    %s200 = sphi 0, %s184
  $region4: #{octave_conv_forward.9} parent=0 // loop_header_branch
    %16 = sbr.rel (%p14) target = $region8
  $region5: #{octave_conv_forward.9} parent=0 // loop_body
    %s18 = ssub.s32 %s13, 1
    %s19 = ssub.s32 %s13, 2
    %s20 = sadd.s32 %s13, 1
    %s21 = ssub.s32 %s13, %s20
    %p22 = scmp.eq.s32.totalorder %s21, 0
    %s24 = sadd.s32 %s23, 1
    %s25 = scalar_select %p22, %s23, %s24
    %p28 = pneg %p22
    %p29 = scmp.eq.s32.totalorder %s13, 1
    %p30 = por %p28, %p29
    %p31 = scmp.ne.s32.totalorder %s23, %s26
    %p32 = scmp.eq.s32.totalorder %s13, 0
    %p33 = por %p31, %p32
    %p34 = scmp.ne.s32.totalorder %s23, %s26
    %p35 = scmp.eq.s32.totalorder %s18, 1
    %p36 = por %p34, %p35
    %p37 = scmp.ne.s32.totalorder %s26, %s27
    %p38 = scmp.eq.s32.totalorder %s18, 0
    %p39 = por %p37, %p38
    %p40 = scmp.ne.s32.totalorder %s26, %s27
    %p41 = scmp.eq.s32.totalorder %s19, 1
    %p42 = por %p40, %p41
    %p44 = scmp.ne.s32.totalorder %s27, %s43
    %p45 = scmp.eq.s32.totalorder %s19, 0
    %p46 = por %p44, %p45
    %s47 = ssub.s32 %s13, %s20
    %p48 = scmp.eq.s32.totalorder %s47, 0
    %s50 = sadd.s32 %s49, 1
    %s51 = scalar_select %p48, %s49, %s50
    %p54 = pneg %p48
    %p55 = scmp.eq.s32.totalorder %s13, 1
    %p56 = por %p54, %p55
    %p57 = scmp.ne.s32.totalorder %s49, %s52
    %p58 = scmp.eq.s32.totalorder %s13, 0
    %p59 = por %p57, %p58
    %p60 = scmp.ne.s32.totalorder %s49, %s52
    %p61 = scmp.eq.s32.totalorder %s18, 1
    %p62 = por %p60, %p61
    %p63 = scmp.ne.s32.totalorder %s52, %s53
    %p64 = scmp.eq.s32.totalorder %s18, 0
    %p65 = por %p63, %p64
    %p66 = scmp.ne.s32.totalorder %s52, %s53
    %p67 = scmp.eq.s32.totalorder %s19, 1
    %p68 = por %p66, %p67
    %p70 = scmp.ne.s32.totalorder %s53, %s69
    %p71 = scmp.eq.s32.totalorder %s19, 0
    %p72 = por %p70, %p71
    %s74 = sadd.s32 %s73, 1
    %p77 = scmp.eq.s32.totalorder %s13, 1
    %p78 = scmp.ne.s32.totalorder %s73, %s75
    %p79 = scmp.eq.s32.totalorder %s13, 0
    %p80 = por %p78, %p79
    %p81 = scmp.ne.s32.totalorder %s73, %s75
    %p82 = scmp.eq.s32.totalorder %s18, 1
    %p83 = por %p81, %p82
    %p84 = scmp.ne.s32.totalorder %s75, %s76
    %p85 = scmp.eq.s32.totalorder %s18, 0
    %p86 = por %p84, %p85
    %p87 = scmp.ne.s32.totalorder %s75, %s76
    %p88 = scmp.eq.s32.totalorder %s19, 1
    %p89 = por %p87, %p88
    %p91 = scmp.ne.s32.totalorder %s76, %s90
    %p92 = scmp.eq.s32.totalorder %s19, 0
    %p93 = por %p91, %p92
    %s95 = sadd.s32 %s94, 1
    %p98 = scmp.eq.s32.totalorder %s13, 1
    %p99 = scmp.ne.s32.totalorder %s94, %s96
    %p100 = scmp.eq.s32.totalorder %s13, 0
    %p101 = por %p99, %p100
    %p102 = scmp.ne.s32.totalorder %s94, %s96
    %p103 = scmp.eq.s32.totalorder %s18, 1
    %p104 = por %p102, %p103
    %p105 = scmp.ne.s32.totalorder %s96, %s97
    %p106 = scmp.eq.s32.totalorder %s18, 0
    %p107 = por %p105, %p106
    %p108 = scmp.ne.s32.totalorder %s96, %s97
    %p109 = scmp.eq.s32.totalorder %s19, 1
    %p110 = por %p108, %p109
    %p112 = scmp.ne.s32.totalorder %s97, %s111
    %p113 = scmp.eq.s32.totalorder %s19, 0
    %p114 = por %p112, %p113
    %s116 = sadd.s32 %s115, 1
    %p119 = scmp.eq.s32.totalorder %s13, 1
    %p120 = scmp.ne.s32.totalorder %s115, %s117
    %p121 = scmp.eq.s32.totalorder %s13, 0
    %p122 = por %p120, %p121
    %p123 = scmp.ne.s32.totalorder %s115, %s117
    %p124 = scmp.eq.s32.totalorder %s18, 1
    %p125 = por %p123, %p124
    %p126 = scmp.ne.s32.totalorder %s117, %s118
    %p127 = scmp.eq.s32.totalorder %s18, 0
    %p128 = por %p126, %p127
    %p129 = scmp.ne.s32.totalorder %s117, %s118
    %p130 = scmp.eq.s32.totalorder %s19, 1
    %p131 = por %p129, %p130
    %p133 = scmp.ne.s32.totalorder %s118, %s132
    %p134 = scmp.eq.s32.totalorder %s19, 0
    %p135 = por %p133, %p134
    %s137 = sadd.s32 %s136, 1
    %p140 = scmp.eq.s32.totalorder %s13, 1
    %p141 = scmp.ne.s32.totalorder %s136, %s138
    %p142 = scmp.eq.s32.totalorder %s13, 0
    %p143 = por %p141, %p142
    %p144 = scmp.ne.s32.totalorder %s136, %s138
    %p145 = scmp.eq.s32.totalorder %s18, 1
    %p146 = por %p144, %p145
    %p147 = scmp.ne.s32.totalorder %s138, %s139
    %p148 = scmp.eq.s32.totalorder %s18, 0
    %p149 = por %p147, %p148
    %p150 = scmp.ne.s32.totalorder %s138, %s139
    %p151 = scmp.eq.s32.totalorder %s19, 1
    %p152 = por %p150, %p151
    %p154 = scmp.ne.s32.totalorder %s139, %s153
    %p155 = scmp.eq.s32.totalorder %s19, 0
    %p156 = por %p154, %p155
    %s158 = sadd.s32 %s157, 1
    %p161 = scmp.eq.s32.totalorder %s13, 1
    %p162 = scmp.ne.s32.totalorder %s157, %s159
    %p163 = scmp.eq.s32.totalorder %s13, 0
    %p164 = por %p162, %p163
    %p165 = scmp.ne.s32.totalorder %s157, %s159
    %p166 = scmp.eq.s32.totalorder %s18, 1
    %p167 = por %p165, %p166
    %p168 = scmp.ne.s32.totalorder %s159, %s160
    %p169 = scmp.eq.s32.totalorder %s18, 0
    %p170 = por %p168, %p169
    %p171 = scmp.ne.s32.totalorder %s159, %s160
    %p172 = scmp.eq.s32.totalorder %s19, 1
    %p173 = por %p171, %p172
    %p175 = scmp.ne.s32.totalorder %s160, %s174
    %p176 = scmp.eq.s32.totalorder %s19, 0
    %p177 = por %p175, %p176
    %s178 = ssub.s32 %s13, %s20
    %p179 = scmp.eq.s32.totalorder %s178, 0
    %s181 = sadd.s32 %s180, 1
    %s182 = scalar_select %p179, %s180, %s181
    %p185 = pneg %p179
    %p186 = scmp.eq.s32.totalorder %s13, 1
    %p187 = por %p185, %p186
    %p188 = scmp.ne.s32.totalorder %s180, %s183
    %p189 = scmp.eq.s32.totalorder %s13, 0
    %p190 = por %p188, %p189
    %p191 = scmp.ne.s32.totalorder %s180, %s183
    %p192 = scmp.eq.s32.totalorder %s18, 1
    %p193 = por %p191, %p192
    %p194 = scmp.ne.s32.totalorder %s183, %s184
    %p195 = scmp.eq.s32.totalorder %s18, 0
    %p196 = por %p194, %p195
    %p197 = scmp.ne.s32.totalorder %s183, %s184
    %p198 = scmp.eq.s32.totalorder %s19, 1
    %p199 = por %p197, %p198
    %p201 = scmp.ne.s32.totalorder %s184, %s200
    %p202 = scmp.eq.s32.totalorder %s19, 0
    %p203 = por %p201, %p202
    %p204 = scmp.le.s32.totalorder 1, %s13
    %p205 = scmp.lt.s32.totalorder %s13, 3
    %p206 = pnand %p204, %p205
    %p207 = pneg %p206
    // Predicated region
    $region9: #{octave_conv_forward.9} parent=5 // pred_check
      _
    $region10: #{octave_conv_forward.9} parent=5 // pred_check_branch
      %209 = sbr.rel (%p206) target = $region12
    $region11: #{octave_conv_forward.9} parent=5 // pred_region
      %s210 = ssub.s32 %s13, 1
      // Predicated region
      $region13: #{octave_conv_forward.9} parent=11 // pred_check
        %p211 = pneg %p86
      $region14: #{octave_conv_forward.9} parent=11 // pred_check_branch
        %213 = sbr.rel (%p211) target = $region16
      $region15: #{octave_conv_forward.9} parent=11 // pred_region
        _
      $region16: #{octave_conv_forward.9} parent=11 // pred_fallthru
        _
      // Predicated region
      $region17: #{octave_conv_forward.9} parent=11 // pred_check
        %p214 = pneg %p107
      $region18: #{octave_conv_forward.9} parent=11 // pred_check_branch
        %216 = sbr.rel (%p214) target = $region20
      $region19: #{octave_conv_forward.9} parent=11 // pred_region
        _
      $region20: #{octave_conv_forward.9} parent=11 // pred_fallthru
        _
      // Predicated region
      $region21: #{octave_conv_forward.9} parent=11 // pred_check
        %p217 = pneg %p128
      $region22: #{octave_conv_forward.9} parent=11 // pred_check_branch
        %219 = sbr.rel (%p217) target = $region24
      $region23: #{octave_conv_forward.9} parent=11 // pred_region
        _
      $region24: #{octave_conv_forward.9} parent=11 // pred_fallthru
        _
      // Predicated region
      $region25: #{octave_conv_forward.9} parent=11 // pred_check
        %p220 = pneg %p149
      $region26: #{octave_conv_forward.9} parent=11 // pred_check_branch
        %222 = sbr.rel (%p220) target = $region28
      $region27: #{octave_conv_forward.9} parent=11 // pred_region
        _
      $region28: #{octave_conv_forward.9} parent=11 // pred_fallthru
        _
      // Predicated region
      $region29: #{octave_conv_forward.9} parent=11 // pred_check
        %p223 = pneg %p170
      $region30: #{octave_conv_forward.9} parent=11 // pred_check_branch
        %225 = sbr.rel (%p223) target = $region32
      $region31: #{octave_conv_forward.9} parent=11 // pred_region
        _
      $region32: #{octave_conv_forward.9} parent=11 // pred_fallthru
        _
    $region12: #{octave_conv_forward.9} parent=5 // pred_fallthru
      _
    %p226 = scmp.lt.s32.totalorder %s13, 2
    // Predicated region
    $region33: #{octave_conv_forward.9} parent=5 // pred_check
      %p227 = pneg %p226
    $region34: #{octave_conv_forward.9} parent=5 // pred_check_branch
      %229 = sbr.rel (%p227) target = $region36
    $region35: #{octave_conv_forward.9} parent=5 // pred_region
      // Predicated region
      $region37: #{octave_conv_forward.9} parent=35 // pred_check
        %p230 = pneg %p33
      $region38: #{octave_conv_forward.9} parent=35 // pred_check_branch
        %232 = sbr.rel (%p230) target = $region40
      $region39: #{octave_conv_forward.9} parent=35 // pred_region
        %p233 = scmp.lt.s32.totalorder %s13, 1
        %s234 = scalar_select %p233, %s13, 1
        %s235 = smul.addr %s234, 8
        %s236 = smul.addr %s235, 8
        %s237 = scalar_lea.vmem %s0, %s236
      $region40: #{octave_conv_forward.9} parent=35 // pred_fallthru
        _
      // Predicated region
      $region41: #{octave_conv_forward.9} parent=35 // pred_check
        %p238 = pneg %p59
      $region42: #{octave_conv_forward.9} parent=35 // pred_check_branch
        %240 = sbr.rel (%p238) target = $region44
      $region43: #{octave_conv_forward.9} parent=35 // pred_region
        %p241 = scmp.lt.s32.totalorder %s13, 1
        %s242 = scalar_select %p241, %s13, 1
        %s243 = smul.addr %s242, 8
        %s244 = smul.addr %s243, 8
        %s245 = scalar_lea.vmem %s1, %s244
      $region44: #{octave_conv_forward.9} parent=35 // pred_fallthru
        _
    $region36: #{octave_conv_forward.9} parent=5 // pred_fallthru
      _
    %p246 = scmp.le.s32.totalorder 1, %s13
    %p247 = scmp.lt.s32.totalorder %s13, 3
    %p248 = pnand %p246, %p247
    %p249 = pneg %p248
    // Predicated region
    $region45: #{octave_conv_forward.9} parent=5 // pred_check
      _
    $region46: #{octave_conv_forward.9} parent=5 // pred_check_branch
      %251 = sbr.rel (%p248) target = $region48
    $region47: #{octave_conv_forward.9} parent=5 // pred_region
      %s252 = ssub.s32 %s13, 1
      %p253 = scmp.lt.s32.totalorder %s18, 1
      %s254 = scalar_select %p253, %s18, 1
      %s255 = smul.addr %s254, 8
      %s256 = smul.addr %s255, 8
      %s257 = scalar_lea.vmem %s0, %s256
      %p258 = pneg %p39
      %p259 = pneg %p36
      %p260 = scmp.lt.s32.totalorder %s18, 1
      %s261 = scalar_select %p260, %s18, 1
      %s262 = smul.addr %s261, 8
      %s263 = smul.addr %s262, 8
      %s264 = scalar_lea.vmem %s1, %s263
      %p265 = pneg %p65
      %p266 = pneg %p62
      %p267 = pneg %p86
      %p268 = pneg %p83
      %p269 = pneg %p107
      %p270 = pneg %p104
      %p271 = pneg %p128
      %p272 = pneg %p125
      %p273 = pneg %p149
      %p274 = pneg %p146
      %p275 = pneg %p170
      %p276 = pneg %p167
      %p277 = pneg %p196
      %p278 = pneg %p193
      %p279 = scmp.lt.s32.totalorder %s18, 1
      %s280 = scalar_select %p279, %s18, 1
      %s281 = smul.addr %s280, 8
      %s282 = smul.addr %s281, 8
      %s283 = scalar_lea.vmem %s7, %s282
      %p284 = scmp.lt.s32.totalorder %s18, 1
      %s285 = scalar_select %p284, %s18, 1
      %s286 = smul.addr %s285, 8
      %s287 = smul.addr %s286, 8
      %s288 = scalar_lea.vmem %s0, %s287
      %p289 = scmp.lt.s32.totalorder %s18, 1
      %s290 = scalar_select %p289, %s18, 1
      %s291 = smul.addr %s290, 8
      %s292 = smul.addr %s291, 8
      %s293 = scalar_lea.vmem %s1, %s292
      %p294 = scmp.lt.s32.totalorder %s18, 1
      %s295 = scalar_select %p294, %s18, 1
      %s296 = smul.addr %s295, 8
      %s297 = smul.addr %s296, 8
      %s298 = scalar_lea.vmem %s7, %s297
      %v300 = vld [vmem:[%s288] sm:$0xff]
      %v301 = vld [vmem:[%s288 + $0x8] sm:$0xff]
      %v302 = vld [vmem:[%s288 + $0x10] sm:$0xff]
      %v303 = vld [vmem:[%s288 + $0x18] sm:$0xff]
      %v304 = vld [vmem:[%s288 + $0x20] sm:$0xff]
      %v305 = vld [vmem:[%s288 + $0x28] sm:$0xff]
      %v306 = vld [vmem:[%s288 + $0x30] sm:$0xff]
      %v307 = vld [vmem:[%s288 + $0x38] sm:$0xff]
      %v308 = vld [vmem:[%s293] sm:$0xff]
      %v309 = vld [vmem:[%s293 + $0x8] sm:$0xff]
      %v310 = vld [vmem:[%s293 + $0x10] sm:$0xff]
      %v311 = vld [vmem:[%s293 + $0x18] sm:$0xff]
      %v312 = vld [vmem:[%s293 + $0x20] sm:$0xff]
      %v313 = vld [vmem:[%s293 + $0x28] sm:$0xff]
      %v314 = vld [vmem:[%s293 + $0x30] sm:$0xff]
      %v315 = vld [vmem:[%s293 + $0x38] sm:$0xff]
      %v316 = vpack.c.bf16 %v301, %v300
      %v317 = vpack.c.bf16 %v303, %v302
      %v318 = vpack.c.bf16 %v305, %v304
      %v319 = vpack.c.bf16 %v307, %v306
      %v320 = vld [vmem:[%s2] sm:$0xf]
      %v321 = vld [vmem:[%s2 + $0x4] sm:$0xf]
      %v322 = vld [vmem:[%s2 + $0x8] sm:$0xf]
      %v323 = vld [vmem:[%s2 + $0xc] sm:$0xf]
      %v324 = vld [vmem:[%s2 + $0x10] sm:$0xf]
      %v325 = vld [vmem:[%s2 + $0x14] sm:$0xf]
      %v326 = vld [vmem:[%s2 + $0x18] sm:$0xf]
      %v327 = vld [vmem:[%s2 + $0x1c] sm:$0xf]
      %v328 = vld [vmem:[%s2 + $0x20] sm:$0xf]
      %v329 = vld [vmem:[%s2 + $0x24] sm:$0xf]
      %v330 = vld [vmem:[%s2 + $0x28] sm:$0xf]
      %v331 = vld [vmem:[%s2 + $0x2c] sm:$0xf]
      %v332 = vld [vmem:[%s2 + $0x30] sm:$0xf]
      %v333 = vld [vmem:[%s2 + $0x34] sm:$0xf]
      %v334 = vld [vmem:[%s2 + $0x38] sm:$0xf]
      %v335 = vld [vmem:[%s2 + $0x3c] sm:$0xf]
      %v336 = vpack.c.bf16 %v309, %v308
      %v337 = vpack.c.bf16 %v311, %v310
      %v338 = vpack.c.bf16 %v313, %v312
      %v339 = vpack.c.bf16 %v315, %v314
      %v340 = vld [vmem:[%s3] sm:$0xf]
      %v341 = vld [vmem:[%s3 + $0x4] sm:$0xf]
      %v342 = vld [vmem:[%s3 + $0x8] sm:$0xf]
      %v343 = vld [vmem:[%s3 + $0xc] sm:$0xf]
      %v344 = vld [vmem:[%s3 + $0x10] sm:$0xf]
      %v345 = vld [vmem:[%s3 + $0x14] sm:$0xf]
      %v346 = vld [vmem:[%s3 + $0x18] sm:$0xf]
      %v347 = vld [vmem:[%s3 + $0x1c] sm:$0xf]
      %v348 = vld [vmem:[%s3 + $0x20] sm:$0xf]
      %v349 = vld [vmem:[%s3 + $0x24] sm:$0xf]
      %v350 = vld [vmem:[%s3 + $0x28] sm:$0xf]
      %v351 = vld [vmem:[%s3 + $0x2c] sm:$0xf]
      %v352 = vld [vmem:[%s3 + $0x30] sm:$0xf]
      %v353 = vld [vmem:[%s3 + $0x34] sm:$0xf]
      %v354 = vld [vmem:[%s3 + $0x38] sm:$0xf]
      %v355 = vld [vmem:[%s3 + $0x3c] sm:$0xf]
      %v372 = vunpack.c.l.b16 %v340
      %v373 = vunpack.c.l.b16 %v341
      %v374 = vunpack.c.l.b16 %v342
      %v375 = vunpack.c.l.b16 %v343
      %v376 = vunpack.c.l.b16 %v344
      %v377 = vunpack.c.l.b16 %v345
      %v378 = vunpack.c.l.b16 %v346
      %v379 = vunpack.c.l.b16 %v347
      %v380 = vunpack.c.l.b16 %v348
      %v381 = vunpack.c.l.b16 %v349
      %v382 = vunpack.c.l.b16 %v350
      %v383 = vunpack.c.l.b16 %v351
      %v384 = vunpack.c.l.b16 %v352
      %v385 = vunpack.c.l.b16 %v353
      %v386 = vunpack.c.l.b16 %v354
      %v387 = vunpack.c.l.b16 %v355
      %v388 = vpack.c.b16 %v373, %v372
      %v389 = vpack.c.b16 %v375, %v374
      %v390 = vpack.c.b16 %v377, %v376
      %v391 = vpack.c.b16 %v379, %v378
      %v392 = vpack.c.b16 %v381, %v380
      %v393 = vpack.c.b16 %v383, %v382
      %v394 = vpack.c.b16 %v385, %v384
      %v395 = vpack.c.b16 %v387, %v386
      %404 = vmatprep.subr.bf16.mxu0 0
      %405 = vmatpush1.bf16.msra.mxu0 %v388
      %406 = vmatprep.subr.bf16.mxu0 0
      %407 = vmatpush1.bf16.msra.mxu0 %v389
      %408 = vmatprep.subr.bf16.mxu0 0
      %409 = vmatpush1.bf16.msra.mxu0 %v390
      %410 = vmatprep.subr.bf16.mxu0 0
      %411 = vmatpush1.bf16.msra.mxu0 %v391
      %412 = vmatprep.subr.bf16.mxu0 0
      %413 = vmatpush1.bf16.msra.mxu0 %v392
      %414 = vmatprep.subr.bf16.mxu0 0
      %415 = vmatpush1.bf16.msra.mxu0 %v393
      %416 = vmatprep.subr.bf16.mxu0 0
      %417 = vmatpush1.bf16.msra.mxu0 %v394
      %418 = vmatprep.subr.bf16.mxu0 0
      %419 = vmatpush1.bf16.msra.mxu0 %v395
      %420 = vmatprep.subr.bf16.mxu0 0
      %421 = vmatpush1.bf16.msra.mxu0 0
      %422 = vmatprep.subr.bf16.mxu0 0
      %423 = vmatpush1.bf16.msra.mxu0 0
      %424 = vmatprep.subr.bf16.mxu0 0
      %425 = vmatpush1.bf16.msra.mxu0 0
      %426 = vmatprep.subr.bf16.mxu0 0
      %427 = vmatpush1.bf16.msra.mxu0 0
      %428 = vmatprep.subr.bf16.mxu0 0
      %429 = vmatpush1.bf16.msra.mxu0 0
      %430 = vmatprep.subr.bf16.mxu0 0
      %431 = vmatpush1.bf16.msra.mxu0 0
      %432 = vmatprep.subr.bf16.mxu0 0
      %433 = vmatpush1.bf16.msra.mxu0 0
      %434 = vmatprep.subr.bf16.mxu0 0
      %435 = vmatpush1.bf16.msra.mxu0 0
      %436 = vmatprep.mubr.bf16.mxu0 0
      %437 = vmatmul.mubr.bf16.gmra.mrb[0].mxu0 %v336
      %v438 = vpop.f32.mrb[0].mxu0
      %v439 = vadd.f32 0.0, %v438
      %v440 = vpop.f32.mrb[0].mxu0
      %v441 = vpop.f32.mrb[0].mxu0
      %v442 = vadd.f32 0.0, %v441
      %v443 = vpop.f32.mrb[0].mxu0
      %444 = vmatprep.mubr.bf16.mxu0 0
      %445 = vmatmul.mubr.bf16.gmra.mrb[0].mxu0 %v337
      %v446 = vpop.f32.mrb[0].mxu0
      %v447 = vadd.f32 0.0, %v446
      %v448 = vpop.f32.mrb[0].mxu0
      %v449 = vpop.f32.mrb[0].mxu0
      %v450 = vadd.f32 0.0, %v449
      %v451 = vpop.f32.mrb[0].mxu0
      %452 = vmatprep.mubr.bf16.mxu0 0
      %453 = vmatmul.mubr.bf16.gmra.mrb[0].mxu0 %v338
      %v454 = vpop.f32.mrb[0].mxu0
      %v455 = vadd.f32 0.0, %v454
      %v456 = vpop.f32.mrb[0].mxu0
      %v457 = vpop.f32.mrb[0].mxu0
      %v458 = vadd.f32 0.0, %v457
      %v459 = vpop.f32.mrb[0].mxu0
      %460 = vmatprep.mubr.bf16.mxu0 0
      %461 = vmatmul.mubr.bf16.gmra.mrb[0].mxu0 %v339
      %v462 = vpop.f32.mrb[0].mxu0
      %v463 = vadd.f32 0.0, %v462
      %v464 = vpop.f32.mrb[0].mxu0
      %v465 = vpop.f32.mrb[0].mxu0
      %v466 = vadd.f32 0.0, %v465
      %v467 = vpop.f32.mrb[0].mxu0
      %468 = vdwg.mxu0
      %v485 = vunpack.c.l.b16 %v320
      %v486 = vunpack.c.l.b16 %v321
      %v487 = vunpack.c.l.b16 %v322
      %v488 = vunpack.c.l.b16 %v323
      %v489 = vunpack.c.l.b16 %v324
      %v490 = vunpack.c.l.b16 %v325
      %v491 = vunpack.c.l.b16 %v326
      %v492 = vunpack.c.l.b16 %v327
      %v493 = vunpack.c.l.b16 %v328
      %v494 = vunpack.c.l.b16 %v329
      %v495 = vunpack.c.l.b16 %v330
      %v496 = vunpack.c.l.b16 %v331
      %v497 = vunpack.c.l.b16 %v332
      %v498 = vunpack.c.l.b16 %v333
      %v499 = vunpack.c.l.b16 %v334
      %v500 = vunpack.c.l.b16 %v335
      %v501 = vpack.c.b16 %v486, %v485
      %v502 = vpack.c.b16 %v488, %v487
      %v503 = vpack.c.b16 %v490, %v489
      %v504 = vpack.c.b16 %v492, %v491
      %v505 = vpack.c.b16 %v494, %v493
      %v506 = vpack.c.b16 %v496, %v495
      %v507 = vpack.c.b16 %v498, %v497
      %v508 = vpack.c.b16 %v500, %v499
      %517 = vmatprep.subr.bf16.mxu0 0
      %518 = vmatpush1.bf16.msra.mxu0 %v501
      %519 = vmatprep.subr.bf16.mxu0 0
      %520 = vmatpush1.bf16.msra.mxu0 %v502
      %521 = vmatprep.subr.bf16.mxu0 0
      %522 = vmatpush1.bf16.msra.mxu0 %v503
      %523 = vmatprep.subr.bf16.mxu0 0
      %524 = vmatpush1.bf16.msra.mxu0 %v504
      %525 = vmatprep.subr.bf16.mxu0 0
      %526 = vmatpush1.bf16.msra.mxu0 %v505
      %527 = vmatprep.subr.bf16.mxu0 0
      %528 = vmatpush1.bf16.msra.mxu0 %v506
      %529 = vmatprep.subr.bf16.mxu0 0
      %530 = vmatpush1.bf16.msra.mxu0 %v507
      %531 = vmatprep.subr.bf16.mxu0 0
      %532 = vmatpush1.bf16.msra.mxu0 %v508
      %533 = vmatprep.subr.bf16.mxu0 0
      %534 = vmatpush1.bf16.msra.mxu0 0
      %535 = vmatprep.subr.bf16.mxu0 0
      %536 = vmatpush1.bf16.msra.mxu0 0
      %537 = vmatprep.subr.bf16.mxu0 0
      %538 = vmatpush1.bf16.msra.mxu0 0
      %539 = vmatprep.subr.bf16.mxu0 0
      %540 = vmatpush1.bf16.msra.mxu0 0
      %541 = vmatprep.subr.bf16.mxu0 0
      %542 = vmatpush1.bf16.msra.mxu0 0
      %543 = vmatprep.subr.bf16.mxu0 0
      %544 = vmatpush1.bf16.msra.mxu0 0
      %545 = vmatprep.subr.bf16.mxu0 0
      %546 = vmatpush1.bf16.msra.mxu0 0
      %547 = vmatprep.subr.bf16.mxu0 0
      %548 = vmatpush1.bf16.msra.mxu0 0
      %549 = vmatprep.mubr.bf16.mxu0 0
      %550 = vmatmul.mubr.bf16.gmra.mrb[0].mxu0 %v316
      %v551 = vpop.f32.mrb[0].mxu0
      %v552 = vadd.f32 %v439, %v551
      %v553 = vpop.f32.mrb[0].mxu0
      %v554 = vpop.f32.mrb[0].mxu0
      %v555 = vadd.f32 %v442, %v554
      %v556 = vpop.f32.mrb[0].mxu0
      %557 = vmatprep.mubr.bf16.mxu0 0
      %558 = vmatmul.mubr.bf16.gmra.mrb[0].mxu0 %v317
      %v559 = vpop.f32.mrb[0].mxu0
      %v560 = vadd.f32 %v447, %v559
      %v561 = vpop.f32.mrb[0].mxu0
      %v562 = vpop.f32.mrb[0].mxu0
      %v563 = vadd.f32 %v450, %v562
      %v564 = vpop.f32.mrb[0].mxu0
      %565 = vmatprep.mubr.bf16.mxu0 0
      %566 = vmatmul.mubr.bf16.gmra.mrb[0].mxu0 %v318
      %v567 = vpop.f32.mrb[0].mxu0
      %v568 = vadd.f32 %v455, %v567
      %v569 = vpop.f32.mrb[0].mxu0
      %v570 = vpop.f32.mrb[0].mxu0
      %v571 = vadd.f32 %v458, %v570
      %v572 = vpop.f32.mrb[0].mxu0
      %573 = vmatprep.mubr.bf16.mxu0 0
      %574 = vmatmul.mubr.bf16.gmra.mrb[0].mxu0 %v319
      %v575 = vpop.f32.mrb[0].mxu0
      %v576 = vadd.f32 %v463, %v575
      %v577 = vpop.f32.mrb[0].mxu0
      %v578 = vpop.f32.mrb[0].mxu0
      %v579 = vadd.f32 %v466, %v578
      %v580 = vpop.f32.mrb[0].mxu0
      %581 = vdwg.mxu0
      %v582 = vld [vmem:[%s4] sm:$0x1]
      %v584 = vlaneseq
      %v585 = vshrl.u32 %v584, 7
      %v586 = vsub.s32 0, %v585
      %v587 = vrot.slane %v582, %v586
      %v589 = vadd.f32 %v552, %v587
      %v590 = vadd.f32 %v555, %v587
      %v591 = vadd.f32 %v560, %v587
      %v592 = vadd.f32 %v563, %v587
      %v593 = vadd.f32 %v568, %v587
      %v594 = vadd.f32 %v571, %v587
      %v595 = vadd.f32 %v576, %v587
      %v596 = vadd.f32 %v579, %v587
      %v597 = vsub.f32 0.0, %v589
      %v598 = vsub.f32 0.0, %v590
      %v599 = vsub.f32 0.0, %v591
      %v600 = vsub.f32 0.0, %v592
      %v601 = vsub.f32 0.0, %v593
      %v602 = vsub.f32 0.0, %v594
      %v603 = vsub.f32 0.0, %v595
      %v604 = vsub.f32 0.0, %v596
      %v605 = vmul.f32 %v597, 1.442695
      %v606 = vpow.pop %v605
      %v607 = vmul.f32 %v598, 1.442695
      %v608 = vpow.pop %v607
      %v609 = vmul.f32 %v599, 1.442695
      %v610 = vpow.pop %v609
      %v611 = vmul.f32 %v600, 1.442695
      %v612 = vpow.pop %v611
      %v613 = vmul.f32 %v601, 1.442695
      %v614 = vpow.pop %v613
      %v615 = vmul.f32 %v602, 1.442695
      %v616 = vpow.pop %v615
      %v617 = vmul.f32 %v603, 1.442695
      %v618 = vpow.pop %v617
      %v619 = vmul.f32 %v604, 1.442695
      %v620 = vpow.pop %v619
      %v621 = vadd.f32 %v606, 1.0
      %v622 = vadd.f32 %v608, 1.0
      %v623 = vadd.f32 %v610, 1.0
      %v624 = vadd.f32 %v612, 1.0
      %v625 = vadd.f32 %v614, 1.0
      %v626 = vadd.f32 %v616, 1.0
      %v627 = vadd.f32 %v618, 1.0
      %v628 = vadd.f32 %v620, 1.0
      %v629 = vrcp.pop %v621
      %v630 = vrcp.pop %v622
      %v631 = vrcp.pop %v623
      %v632 = vrcp.pop %v624
      %v633 = vrcp.pop %v625
      %v634 = vrcp.pop %v626
      %v635 = vrcp.pop %v627
      %v636 = vrcp.pop %v628
      %v637 = vmul.f32 %v629, %v300
      %v638 = vmul.f32 %v630, %v301
      %v639 = vmul.f32 %v631, %v302
      %v640 = vmul.f32 %v632, %v303
      %v641 = vmul.f32 %v633, %v304
      %v642 = vmul.f32 %v634, %v305
      %v643 = vmul.f32 %v635, %v306
      %v644 = vmul.f32 %v636, %v307
      %v645 = vsub.f32 1.0, %v629
      %v646 = vsub.f32 1.0, %v630
      %v647 = vsub.f32 1.0, %v631
      %v648 = vsub.f32 1.0, %v632
      %v649 = vsub.f32 1.0, %v633
      %v650 = vsub.f32 1.0, %v634
      %v651 = vsub.f32 1.0, %v635
      %v652 = vsub.f32 1.0, %v636
      %v653 = vmul.f32 %v645, %v308
      %v654 = vmul.f32 %v646, %v309
      %v655 = vmul.f32 %v647, %v310
      %v656 = vmul.f32 %v648, %v311
      %v657 = vmul.f32 %v649, %v312
      %v658 = vmul.f32 %v650, %v313
      %v659 = vmul.f32 %v651, %v314
      %v660 = vmul.f32 %v652, %v315
      %v661 = vadd.f32 %v637, %v653
      %v662 = vadd.f32 %v638, %v654
      %v663 = vadd.f32 %v639, %v655
      %v664 = vadd.f32 %v640, %v656
      %v665 = vadd.f32 %v641, %v657
      %v666 = vadd.f32 %v642, %v658
      %v667 = vadd.f32 %v643, %v659
      %v668 = vadd.f32 %v644, %v660
      %v669 = vadd.f32 %v661, %v662
      %v670 = vadd.f32 %v669, %v663
      %v671 = vadd.f32 %v670, %v664
      %v672 = vadd.f32 %v671, %v665
      %v673 = vadd.f32 %v672, %v666
      %v674 = vadd.f32 %v673, %v667
      %v675 = vadd.f32 %v674, %v668
      %676 = vadd.xlane.f32.xlu0 %v675
      %v677 = vpop.xlane.xlu0 %676
      %v678 = vrot.slane %v677, 4
      %v679 = vadd.f32 %v677, %v678
      %v680 = vrot.slane %v679, 2
      %v681 = vadd.f32 %v679, %v680
      %v682 = vrot.slane %v681, 1
      %v683 = vadd.f32 %v681, %v682
      %s684 = vtos %v683
      %s685 = smul.f32 %s684, 0.0078125
      %v686 = vmul.f32 %v661, %v661
      %v687 = vmul.f32 %v662, %v662
      %v688 = vmul.f32 %v663, %v663
      %v689 = vmul.f32 %v664, %v664
      %v690 = vmul.f32 %v665, %v665
      %v691 = vmul.f32 %v666, %v666
      %v692 = vmul.f32 %v667, %v667
      %v693 = vmul.f32 %v668, %v668
      %v694 = vadd.f32 %v686, %v687
      %v695 = vadd.f32 %v694, %v688
      %v696 = vadd.f32 %v695, %v689
      %v697 = vadd.f32 %v696, %v690
      %v698 = vadd.f32 %v697, %v691
      %v699 = vadd.f32 %v698, %v692
      %v700 = vadd.f32 %v699, %v693
      %701 = vadd.xlane.f32.xlu0 %v700
      %v702 = vpop.xlane.xlu0 %701
      %v703 = vrot.slane %v702, 4
      %v704 = vadd.f32 %v702, %v703
      %v705 = vrot.slane %v704, 2
      %v706 = vadd.f32 %v704, %v705
      %v707 = vrot.slane %v706, 1
      %v708 = vadd.f32 %v706, %v707
      %s709 = vtos %v708
      %s710 = smul.f32 %s709, 0.0078125
      %s711 = smul.f32 %s685, %s685
      %s712 = ssub.f32 %s710, %s711
      %s713 = smax.f32 %s712, 0.0
      %v714 = vstv %s685
      %v715 = vsub.f32 %v661, %v714
      %v716 = vsub.f32 %v662, %v714
      %v717 = vsub.f32 %v663, %v714
      %v718 = vsub.f32 %v664, %v714
      %v719 = vsub.f32 %v665, %v714
      %v720 = vsub.f32 %v666, %v714
      %v721 = vsub.f32 %v667, %v714
      %v722 = vsub.f32 %v668, %v714
      %s723 = sadd.f32 %s713, 1e-05
      %v724 = vstv %s723
      %v725 = vrsqrt.pop %v724
      %s726 = vtos %v725
      %v727 = vstv %s726
      %v728 = vmul.f32 %v715, %v727
      %v729 = vmul.f32 %v716, %v727
      %v730 = vmul.f32 %v717, %v727
      %v731 = vmul.f32 %v718, %v727
      %v732 = vmul.f32 %v719, %v727
      %v733 = vmul.f32 %v720, %v727
      %v734 = vmul.f32 %v721, %v727
      %v735 = vmul.f32 %v722, %v727
      %v736 = vld [vmem:[%s5] sm:$0x1]
      %v738 = vlaneseq
      %v739 = vshrl.u32 %v738, 7
      %v740 = vsub.s32 0, %v739
      %v741 = vrot.slane %v736, %v740
      %v743 = vmul.f32 %v728, %v741
      %v744 = vmul.f32 %v729, %v741
      %v745 = vmul.f32 %v730, %v741
      %v746 = vmul.f32 %v731, %v741
      %v747 = vmul.f32 %v732, %v741
      %v748 = vmul.f32 %v733, %v741
      %v749 = vmul.f32 %v734, %v741
      %v750 = vmul.f32 %v735, %v741
      %v751 = vld [vmem:[%s6] sm:$0x1]
      %v753 = vlaneseq
      %v754 = vshrl.u32 %v753, 7
      %v755 = vsub.s32 0, %v754
      %v756 = vrot.slane %v751, %v755
      %v758 = vadd.f32 %v743, %v756
      %v759 = vadd.f32 %v744, %v756
      %v760 = vadd.f32 %v745, %v756
      %v761 = vadd.f32 %v746, %v756
      %v762 = vadd.f32 %v747, %v756
      %v763 = vadd.f32 %v748, %v756
      %v764 = vadd.f32 %v749, %v756
      %v765 = vadd.f32 %v750, %v756
      %v766 = vmax.f32 %v758, 0.0
      %v767 = vmax.f32 %v759, 0.0
      %v768 = vmax.f32 %v760, 0.0
      %v769 = vmax.f32 %v761, 0.0
      %v770 = vmax.f32 %v762, 0.0
      %v771 = vmax.f32 %v763, 0.0
      %v772 = vmax.f32 %v764, 0.0
      %v773 = vmax.f32 %v765, 0.0
      %774 = vst [vmem:[%s298] sm:$0xff] %v766
      %775 = vst [vmem:[%s298 + $0x8] sm:$0xff] %v767
      %776 = vst [vmem:[%s298 + $0x10] sm:$0xff] %v768
      %777 = vst [vmem:[%s298 + $0x18] sm:$0xff] %v769
      %778 = vst [vmem:[%s298 + $0x20] sm:$0xff] %v770
      %779 = vst [vmem:[%s298 + $0x28] sm:$0xff] %v771
      %780 = vst [vmem:[%s298 + $0x30] sm:$0xff] %v772
      %781 = vst [vmem:[%s298 + $0x38] sm:$0xff] %v773
      %p782 = scmp.lt.s32.totalorder %s18, 1
      %s783 = scalar_select %p782, %s18, 1
      %s784 = smul.addr %s783, 8
      %s785 = smul.addr %s784, 8
      %s786 = scalar_lea.vmem %s7, %s785
      // Predicated region
      $region49: #{octave_conv_forward.9} parent=47 // pred_check
        %p787 = pneg %p193
      $region50: #{octave_conv_forward.9} parent=47 // pred_check_branch
        %789 = sbr.rel (%p787) target = $region52
      $region51: #{octave_conv_forward.9} parent=47 // pred_region
        _
      $region52: #{octave_conv_forward.9} parent=47 // pred_fallthru
        _
    $region48: #{octave_conv_forward.9} parent=5 // pred_fallthru
      _
    %p790 = scmp.le.s32.totalorder 2, %s13
    // Predicated region
    $region53: #{octave_conv_forward.9} parent=5 // pred_check
      %p791 = pneg %p790
    $region54: #{octave_conv_forward.9} parent=5 // pred_check_branch
      %793 = sbr.rel (%p791) target = $region56
    $region55: #{octave_conv_forward.9} parent=5 // pred_region
      %s794 = ssub.s32 %s13, 2
      // Predicated region
      $region57: #{octave_conv_forward.9} parent=55 // pred_check
        %p795 = pneg %p199
      $region58: #{octave_conv_forward.9} parent=55 // pred_check_branch
        %797 = sbr.rel (%p795) target = $region60
      $region59: #{octave_conv_forward.9} parent=55 // pred_region
        %p798 = scmp.lt.s32.totalorder %s19, 1
        %s799 = scalar_select %p798, %s19, 1
        %s800 = smul.addr %s799, 8
        %s801 = smul.addr %s800, 8
        %s802 = scalar_lea.vmem %s7, %s801
      $region60: #{octave_conv_forward.9} parent=55 // pred_fallthru
        _
    $region56: #{octave_conv_forward.9} parent=5 // pred_fallthru
      _
  $region6: #{octave_conv_forward.9} parent=0 // loop_footer
    %s17 = sadd.s32 1, %s13
  $region7: #{octave_conv_forward.9} parent=0 // loop_footer_branch
    %12 = sbr.rel target = $region3
  $region8: #{octave_conv_forward.9} parent=0 // loop_exit
    _

// kernel: octave_conv_forward.6
$region0: #{octave_conv_forward.6}
  #allocation0 [shape = 'u32[]', space=smem, size = 0x4, offset = 0x4, fixed_abs, tag = 'smem constant byte address 0x4 - core index']
  #allocation1 [shape = 'u32[144,128]{1,0:T(1,128)}', space=vmem, size = 0x12000, scoped, tag = 'internal scratch']
  %s0 = inlined_call_operand.vmem [shape: f32[2,10,10,128], index: 0, kind: input, shape index: {}]
  %s1 = inlined_call_operand.vmem [shape: bf16[9,128,128], index: 1, kind: input, shape index: {}]
  %s2 = inlined_call_operand.vmem [shape: f32[2,64,128], index: 2, kind: output, shape index: {}]
  %s3 = sld [smem:[#allocation0]]
  $region41: #{octave_conv_forward.6} parent=0
    _
  %s5 = ssub.s32 1, %s3
  %s6 = scalar_select 0, %s5, %s3
  loop: start=0, step=1, limit=4
  $region2: #{octave_conv_forward.6} parent=0 // loop_pre_header
    _
  $region3: #{octave_conv_forward.6} parent=0 // loop_header
    %s8 = sphi 0, %s12
    %p9 = scmp.ge.s32.totalorder %s8, 4
    %s18 = sphi 0, %s20
    %s21 = sphi 0, %s18
    %s22 = sphi 0, %s21
    %s38 = sphi 0, %s22
    %s42 = sphi 0, %s42
    %s44 = sphi 0, %s42
    %s45 = sphi 0, %s44
    %s59 = sphi 0, %s45
    %s65 = sphi 0, %s67
    %s68 = sphi 0, %s65
    %s69 = sphi 0, %s68
    %s85 = sphi 0, %s69
  $region4: #{octave_conv_forward.6} parent=0 // loop_header_branch
    %11 = sbr.rel (%p9) target = $region8
  $region5: #{octave_conv_forward.6} parent=0 // loop_body
    %s13 = ssub.s32 %s8, 1
    %s14 = ssub.s32 %s8, 2
    %s15 = sadd.s32 %s8, 1
    %s16 = ssub.s32 %s8, %s15
    %p17 = scmp.eq.s32.totalorder %s16, 0
    %s19 = sadd.s32 %s18, 1
    %s20 = scalar_select %p17, %s18, %s19
    %p23 = pneg %p17
    %p24 = scmp.eq.s32.totalorder %s8, 1
    %p25 = por %p23, %p24
    %p26 = scmp.ne.s32.totalorder %s18, %s21
    %p27 = scmp.eq.s32.totalorder %s8, 0
    %p28 = por %p26, %p27
    %p29 = scmp.ne.s32.totalorder %s18, %s21
    %p30 = scmp.eq.s32.totalorder %s13, 1
    %p31 = por %p29, %p30
    %p32 = scmp.ne.s32.totalorder %s21, %s22
    %p33 = scmp.eq.s32.totalorder %s13, 0
    %p34 = por %p32, %p33
    %p35 = scmp.ne.s32.totalorder %s21, %s22
    %p36 = scmp.eq.s32.totalorder %s14, 1
    %p37 = por %p35, %p36
    %p39 = scmp.ne.s32.totalorder %s22, %s38
    %p40 = scmp.eq.s32.totalorder %s14, 0
    %p41 = por %p39, %p40
    %s43 = sadd.s32 %s42, 1
    %p46 = scmp.eq.s32.totalorder %s8, 1
    %p47 = scmp.ne.s32.totalorder %s42, %s44
    %p48 = scmp.eq.s32.totalorder %s8, 0
    %p49 = por %p47, %p48
    %p50 = scmp.ne.s32.totalorder %s42, %s44
    %p51 = scmp.eq.s32.totalorder %s13, 1
    %p52 = por %p50, %p51
    %p53 = scmp.ne.s32.totalorder %s44, %s45
    %p54 = scmp.eq.s32.totalorder %s13, 0
    %p55 = por %p53, %p54
    %p56 = scmp.ne.s32.totalorder %s44, %s45
    %p57 = scmp.eq.s32.totalorder %s14, 1
    %p58 = por %p56, %p57
    %p60 = scmp.ne.s32.totalorder %s45, %s59
    %p61 = scmp.eq.s32.totalorder %s14, 0
    %p62 = por %p60, %p61
    %s63 = ssub.s32 %s8, %s15
    %p64 = scmp.eq.s32.totalorder %s63, 0
    %s66 = sadd.s32 %s65, 1
    %s67 = scalar_select %p64, %s65, %s66
    %p70 = pneg %p64
    %p71 = scmp.eq.s32.totalorder %s8, 1
    %p72 = por %p70, %p71
    %p73 = scmp.ne.s32.totalorder %s65, %s68
    %p74 = scmp.eq.s32.totalorder %s8, 0
    %p75 = por %p73, %p74
    %p76 = scmp.ne.s32.totalorder %s65, %s68
    %p77 = scmp.eq.s32.totalorder %s13, 1
    %p78 = por %p76, %p77
    %p79 = scmp.ne.s32.totalorder %s68, %s69
    %p80 = scmp.eq.s32.totalorder %s13, 0
    %p81 = por %p79, %p80
    %p82 = scmp.ne.s32.totalorder %s68, %s69
    %p83 = scmp.eq.s32.totalorder %s14, 1
    %p84 = por %p82, %p83
    %p86 = scmp.ne.s32.totalorder %s69, %s85
    %p87 = scmp.eq.s32.totalorder %s14, 0
    %p88 = por %p86, %p87
    %p89 = scmp.le.s32.totalorder 1, %s8
    %p90 = scmp.lt.s32.totalorder %s8, 3
    %p91 = pnand %p89, %p90
    %p92 = pneg %p91
    // Predicated region
    $region9: #{octave_conv_forward.6} parent=5 // pred_check
      _
    $region10: #{octave_conv_forward.6} parent=5 // pred_check_branch
      %94 = sbr.rel (%p91) target = $region12
    $region11: #{octave_conv_forward.6} parent=5 // pred_region
      %s95 = ssub.s32 %s8, 1
      // Predicated region
      $region13: #{octave_conv_forward.6} parent=11 // pred_check
        %p96 = pneg %p55
      $region14: #{octave_conv_forward.6} parent=11 // pred_check_branch
        %98 = sbr.rel (%p96) target = $region16
      $region15: #{octave_conv_forward.6} parent=11 // pred_region
        _
      $region16: #{octave_conv_forward.6} parent=11 // pred_fallthru
        _
    $region12: #{octave_conv_forward.6} parent=5 // pred_fallthru
      _
    %p99 = scmp.lt.s32.totalorder %s8, 2
    // Predicated region
    $region17: #{octave_conv_forward.6} parent=5 // pred_check
      %p100 = pneg %p99
    $region18: #{octave_conv_forward.6} parent=5 // pred_check_branch
      %102 = sbr.rel (%p100) target = $region20
    $region19: #{octave_conv_forward.6} parent=5 // pred_region
      // Predicated region
      $region21: #{octave_conv_forward.6} parent=19 // pred_check
        %p103 = pneg %p28
      $region22: #{octave_conv_forward.6} parent=19 // pred_check_branch
        %105 = sbr.rel (%p103) target = $region24
      $region23: #{octave_conv_forward.6} parent=19 // pred_region
        %p106 = scmp.lt.s32.totalorder %s8, 1
        %s107 = scalar_select %p106, %s8, 1
        %s108 = smul.addr %s107, 20
        %s109 = smul.addr %s108, 8
        %s110 = scalar_lea.vmem %s0, %s109
      $region24: #{octave_conv_forward.6} parent=19 // pred_fallthru
        _
    $region20: #{octave_conv_forward.6} parent=5 // pred_fallthru
      _
    %p111 = scmp.le.s32.totalorder 1, %s8
    %p112 = scmp.lt.s32.totalorder %s8, 3
    %p113 = pnand %p111, %p112
    %p114 = pneg %p113
    // Predicated region
    $region25: #{octave_conv_forward.6} parent=5 // pred_check
      _
    $region26: #{octave_conv_forward.6} parent=5 // pred_check_branch
      %116 = sbr.rel (%p113) target = $region28
    $region27: #{octave_conv_forward.6} parent=5 // pred_region
      %s117 = ssub.s32 %s8, 1
      %p118 = scmp.lt.s32.totalorder %s13, 1
      %s119 = scalar_select %p118, %s13, 1
      %s120 = smul.addr %s119, 20
      %s121 = smul.addr %s120, 8
      %s122 = scalar_lea.vmem %s0, %s121
      %p123 = pneg %p34
      %p124 = pneg %p31
      %p125 = pneg %p55
      %p126 = pneg %p52
      %p127 = pneg %p81
      %p128 = pneg %p78
      %p129 = scmp.lt.s32.totalorder %s13, 1
      %s130 = scalar_select %p129, %s13, 1
      %s131 = smul.addr %s130, 8
      %s132 = smul.addr %s131, 8
      %s133 = scalar_lea.vmem %s2, %s132
      %p134 = scmp.lt.s32.totalorder %s13, 1
      %s135 = scalar_select %p134, %s13, 1
      %s136 = smul.addr %s135, 20
      %s137 = smul.addr %s136, 8
      %s138 = scalar_lea.vmem %s0, %s137
      %p139 = scmp.lt.s32.totalorder %s13, 1
      %s140 = scalar_select %p139, %s13, 1
      %s141 = smul.addr %s140, 8
      %s142 = smul.addr %s141, 8
      %s143 = scalar_lea.vmem %s2, %s142
      %v145 = vld [vmem:[%s138] sm:$0xff]
      %v146 = vld [vmem:[%s138 + $0x8] sm:$0x3]
      %v147 = vld [vmem:[%s138 + $0x10] sm:$0xff]
      %v148 = vld [vmem:[%s138 + $0x18] sm:$0x3]
      %v149 = vld [vmem:[%s138 + $0x20] sm:$0xff]
      %v150 = vld [vmem:[%s138 + $0x28] sm:$0x3]
      %v151 = vld [vmem:[%s138 + $0x30] sm:$0xff]
      %v152 = vld [vmem:[%s138 + $0x38] sm:$0x3]
      %v153 = vld [vmem:[%s138 + $0x40] sm:$0xff]
      %v154 = vld [vmem:[%s138 + $0x48] sm:$0x3]
      %v155 = vld [vmem:[%s138 + $0x50] sm:$0xff]
      %v156 = vld [vmem:[%s138 + $0x58] sm:$0x3]
      %v157 = vld [vmem:[%s138 + $0x60] sm:$0xff]
      %v158 = vld [vmem:[%s138 + $0x68] sm:$0x3]
      %v159 = vld [vmem:[%s138 + $0x70] sm:$0xff]
      %v160 = vld [vmem:[%s138 + $0x78] sm:$0x3]
      %v161 = vld [vmem:[%s138 + $0x80] sm:$0xff]
      %v162 = vld [vmem:[%s138 + $0x88] sm:$0x3]
      %v163 = vld [vmem:[%s138 + $0x90] sm:$0xff]
      %v164 = vld [vmem:[%s138 + $0x98] sm:$0x3]
      %v165 = vpack.c.bf16 %v147, %v145
      %v166 = vpack.c.bf16 %v151, %v149
      %v167 = vpack.c.bf16 %v155, %v153
      %v168 = vpack.c.bf16 %v159, %v157
      %v169 = vld [vmem:[%s1] sm:$0xf]
      %v170 = vld [vmem:[%s1 + $0x4] sm:$0xf]
      %v171 = vld [vmem:[%s1 + $0x8] sm:$0xf]
      %v172 = vld [vmem:[%s1 + $0xc] sm:$0xf]
      %v173 = vld [vmem:[%s1 + $0x10] sm:$0xf]
      %v174 = vld [vmem:[%s1 + $0x14] sm:$0xf]
      %v175 = vld [vmem:[%s1 + $0x18] sm:$0xf]
      %v176 = vld [vmem:[%s1 + $0x1c] sm:$0xf]
      %v177 = vld [vmem:[%s1 + $0x20] sm:$0xf]
      %v178 = vld [vmem:[%s1 + $0x24] sm:$0xf]
      %v179 = vld [vmem:[%s1 + $0x28] sm:$0xf]
      %v180 = vld [vmem:[%s1 + $0x2c] sm:$0xf]
      %v181 = vld [vmem:[%s1 + $0x30] sm:$0xf]
      %v182 = vld [vmem:[%s1 + $0x34] sm:$0xf]
      %v183 = vld [vmem:[%s1 + $0x38] sm:$0xf]
      %v184 = vld [vmem:[%s1 + $0x3c] sm:$0xf]
      %vm201 = vcmask 1046528
      %v202 = vrot.slane %v145, 1
      %v203 = vrot.slane %v146, 1
      %v204 = vsel %vm201, %v202, %v203
      %v205 = vrot.slane %v147, 1
      %v206 = vrot.slane %v148, 1
      %v207 = vsel %vm201, %v205, %v206
      %v208 = vrot.slane %v149, 1
      %v209 = vrot.slane %v150, 1
      %v210 = vsel %vm201, %v208, %v209
      %v211 = vrot.slane %v151, 1
      %v212 = vrot.slane %v152, 1
      %v213 = vsel %vm201, %v211, %v212
      %v214 = vrot.slane %v153, 1
      %v215 = vrot.slane %v154, 1
      %v216 = vsel %vm201, %v214, %v215
      %v217 = vrot.slane %v155, 1
      %v218 = vrot.slane %v156, 1
      %v219 = vsel %vm201, %v217, %v218
      %v220 = vrot.slane %v157, 1
      %v221 = vrot.slane %v158, 1
      %v222 = vsel %vm201, %v220, %v221
      %v223 = vrot.slane %v159, 1
      %v224 = vrot.slane %v160, 1
      %v225 = vsel %vm201, %v223, %v224
      %v234 = vpack.c.bf16 %v207, %v204
      %v235 = vpack.c.bf16 %v213, %v210
      %v236 = vpack.c.bf16 %v219, %v216
      %v237 = vpack.c.bf16 %v225, %v222
      %s238 = scalar_lea.vmem %s1, 64
      %v239 = vld [vmem:[%s238] sm:$0xf]
      %v240 = vld [vmem:[%s238 + $0x4] sm:$0xf]
      %v241 = vld [vmem:[%s238 + $0x8] sm:$0xf]
      %v242 = vld [vmem:[%s238 + $0xc] sm:$0xf]
      %v243 = vld [vmem:[%s238 + $0x10] sm:$0xf]
      %v244 = vld [vmem:[%s238 + $0x14] sm:$0xf]
      %v245 = vld [vmem:[%s238 + $0x18] sm:$0xf]
      %v246 = vld [vmem:[%s238 + $0x1c] sm:$0xf]
      %v247 = vld [vmem:[%s238 + $0x20] sm:$0xf]
      %v248 = vld [vmem:[%s238 + $0x24] sm:$0xf]
      %v249 = vld [vmem:[%s238 + $0x28] sm:$0xf]
      %v250 = vld [vmem:[%s238 + $0x2c] sm:$0xf]
      %v251 = vld [vmem:[%s238 + $0x30] sm:$0xf]
      %v252 = vld [vmem:[%s238 + $0x34] sm:$0xf]
      %v253 = vld [vmem:[%s238 + $0x38] sm:$0xf]
      %v254 = vld [vmem:[%s238 + $0x3c] sm:$0xf]
      %v271 = vunpack.c.l.b16 %v239
      %v272 = vunpack.c.l.b16 %v240
      %v273 = vunpack.c.l.b16 %v241
      %v274 = vunpack.c.l.b16 %v242
      %v275 = vunpack.c.l.b16 %v243
      %v276 = vunpack.c.l.b16 %v244
      %v277 = vunpack.c.l.b16 %v245
      %v278 = vunpack.c.l.b16 %v246
      %v279 = vunpack.c.l.b16 %v247
      %v280 = vunpack.c.l.b16 %v248
      %v281 = vunpack.c.l.b16 %v249
      %v282 = vunpack.c.l.b16 %v250
      %v283 = vunpack.c.l.b16 %v251
      %v284 = vunpack.c.l.b16 %v252
      %v285 = vunpack.c.l.b16 %v253
      %v286 = vunpack.c.l.b16 %v254
      %v287 = vpack.c.b16 %v272, %v271
      %v288 = vpack.c.b16 %v274, %v273
      %v289 = vpack.c.b16 %v276, %v275
      %v290 = vpack.c.b16 %v278, %v277
      %v291 = vpack.c.b16 %v280, %v279
      %v292 = vpack.c.b16 %v282, %v281
      %v293 = vpack.c.b16 %v284, %v283
      %v294 = vpack.c.b16 %v286, %v285
      %303 = vmatprep.subr.bf16.mxu0 0
      %304 = vmatpush1.bf16.msra.mxu0 %v287
      %305 = vmatprep.subr.bf16.mxu0 0
      %306 = vmatpush1.bf16.msra.mxu0 %v288
      %307 = vmatprep.subr.bf16.mxu0 0
      %308 = vmatpush1.bf16.msra.mxu0 %v289
      %309 = vmatprep.subr.bf16.mxu0 0
      %310 = vmatpush1.bf16.msra.mxu0 %v290
      %311 = vmatprep.subr.bf16.mxu0 0
      %312 = vmatpush1.bf16.msra.mxu0 %v291
      %313 = vmatprep.subr.bf16.mxu0 0
      %314 = vmatpush1.bf16.msra.mxu0 %v292
      %315 = vmatprep.subr.bf16.mxu0 0
      %316 = vmatpush1.bf16.msra.mxu0 %v293
      %317 = vmatprep.subr.bf16.mxu0 0
      %318 = vmatpush1.bf16.msra.mxu0 %v294
      %319 = vmatprep.subr.bf16.mxu0 0
      %320 = vmatpush1.bf16.msra.mxu0 0
      %321 = vmatprep.subr.bf16.mxu0 0
      %322 = vmatpush1.bf16.msra.mxu0 0
      %323 = vmatprep.subr.bf16.mxu0 0
      %324 = vmatpush1.bf16.msra.mxu0 0
      %325 = vmatprep.subr.bf16.mxu0 0
      %326 = vmatpush1.bf16.msra.mxu0 0
      %327 = vmatprep.subr.bf16.mxu0 0
      %328 = vmatpush1.bf16.msra.mxu0 0
      %329 = vmatprep.subr.bf16.mxu0 0
      %330 = vmatpush1.bf16.msra.mxu0 0
      %331 = vmatprep.subr.bf16.mxu0 0
      %332 = vmatpush1.bf16.msra.mxu0 0
      %333 = vmatprep.subr.bf16.mxu0 0
      %334 = vmatpush1.bf16.msra.mxu0 0
      %335 = vmatprep.mubr.bf16.mxu0 0
      %336 = vmatmul.mubr.bf16.gmra.mrb[0].mxu0 %v234
      %v337 = vpop.f32.mrb[0].mxu0
      %v338 = vadd.f32 0.0, %v337
      %v339 = vpop.f32.mrb[0].mxu0
      %v340 = vpop.f32.mrb[0].mxu0
      %v341 = vadd.f32 0.0, %v340
      %v342 = vpop.f32.mrb[0].mxu0
      %343 = vmatprep.mubr.bf16.mxu0 0
      %344 = vmatmul.mubr.bf16.gmra.mrb[0].mxu0 %v235
      %v345 = vpop.f32.mrb[0].mxu0
      %v346 = vadd.f32 0.0, %v345
      %v347 = vpop.f32.mrb[0].mxu0
      %v348 = vpop.f32.mrb[0].mxu0
      %v349 = vadd.f32 0.0, %v348
      %v350 = vpop.f32.mrb[0].mxu0
      %351 = vmatprep.mubr.bf16.mxu0 0
      %352 = vmatmul.mubr.bf16.gmra.mrb[0].mxu0 %v236
      %v353 = vpop.f32.mrb[0].mxu0
      %v354 = vadd.f32 0.0, %v353
      %v355 = vpop.f32.mrb[0].mxu0
      %v356 = vpop.f32.mrb[0].mxu0
      %v357 = vadd.f32 0.0, %v356
      %v358 = vpop.f32.mrb[0].mxu0
      %359 = vmatprep.mubr.bf16.mxu0 0
      %360 = vmatmul.mubr.bf16.gmra.mrb[0].mxu0 %v237
      %v361 = vpop.f32.mrb[0].mxu0
      %v362 = vadd.f32 0.0, %v361
      %v363 = vpop.f32.mrb[0].mxu0
      %v364 = vpop.f32.mrb[0].mxu0
      %v365 = vadd.f32 0.0, %v364
      %v366 = vpop.f32.mrb[0].mxu0
      %367 = vdwg.mxu0
      %v384 = vunpack.c.l.b16 %v169
      %v385 = vunpack.c.l.b16 %v170
      %v386 = vunpack.c.l.b16 %v171
      %v387 = vunpack.c.l.b16 %v172
      %v388 = vunpack.c.l.b16 %v173
      %v389 = vunpack.c.l.b16 %v174
      %v390 = vunpack.c.l.b16 %v175
      %v391 = vunpack.c.l.b16 %v176
      %v392 = vunpack.c.l.b16 %v177
      %v393 = vunpack.c.l.b16 %v178
      %v394 = vunpack.c.l.b16 %v179
      %v395 = vunpack.c.l.b16 %v180
      %v396 = vunpack.c.l.b16 %v181
      %v397 = vunpack.c.l.b16 %v182
      %v398 = vunpack.c.l.b16 %v183
      %v399 = vunpack.c.l.b16 %v184
      %v400 = vpack.c.b16 %v385, %v384
      %v401 = vpack.c.b16 %v387, %v386
      %v402 = vpack.c.b16 %v389, %v388
      %v403 = vpack.c.b16 %v391, %v390
      %v404 = vpack.c.b16 %v393, %v392
      %v405 = vpack.c.b16 %v395, %v394
      %v406 = vpack.c.b16 %v397, %v396
      %v407 = vpack.c.b16 %v399, %v398
      %416 = vmatprep.subr.bf16.mxu0 0
      %417 = vmatpush1.bf16.msra.mxu0 %v400
      %418 = vmatprep.subr.bf16.mxu0 0
      %419 = vmatpush1.bf16.msra.mxu0 %v401
      %420 = vmatprep.subr.bf16.mxu0 0
      %421 = vmatpush1.bf16.msra.mxu0 %v402
      %422 = vmatprep.subr.bf16.mxu0 0
      %423 = vmatpush1.bf16.msra.mxu0 %v403
      %424 = vmatprep.subr.bf16.mxu0 0
      %425 = vmatpush1.bf16.msra.mxu0 %v404
      %426 = vmatprep.subr.bf16.mxu0 0
      %427 = vmatpush1.bf16.msra.mxu0 %v405
      %428 = vmatprep.subr.bf16.mxu0 0
      %429 = vmatpush1.bf16.msra.mxu0 %v406
      %430 = vmatprep.subr.bf16.mxu0 0
      %431 = vmatpush1.bf16.msra.mxu0 %v407
      %432 = vmatprep.subr.bf16.mxu0 0
      %433 = vmatpush1.bf16.msra.mxu0 0
      %434 = vmatprep.subr.bf16.mxu0 0
      %435 = vmatpush1.bf16.msra.mxu0 0
      %436 = vmatprep.subr.bf16.mxu0 0
      %437 = vmatpush1.bf16.msra.mxu0 0
      %438 = vmatprep.subr.bf16.mxu0 0
      %439 = vmatpush1.bf16.msra.mxu0 0
      %440 = vmatprep.subr.bf16.mxu0 0
      %441 = vmatpush1.bf16.msra.mxu0 0
      %442 = vmatprep.subr.bf16.mxu0 0
      %443 = vmatpush1.bf16.msra.mxu0 0
      %444 = vmatprep.subr.bf16.mxu0 0
      %445 = vmatpush1.bf16.msra.mxu0 0
      %446 = vmatprep.subr.bf16.mxu0 0
      %447 = vmatpush1.bf16.msra.mxu0 0
      %448 = vmatprep.mubr.bf16.mxu0 0
      %449 = vmatmul.mubr.bf16.gmra.mrb[0].mxu0 %v165
      %v450 = vpop.f32.mrb[0].mxu0
      %v451 = vadd.f32 %v338, %v450
      %v452 = vpop.f32.mrb[0].mxu0
      %v453 = vpop.f32.mrb[0].mxu0
      %v454 = vadd.f32 %v341, %v453
      %v455 = vpop.f32.mrb[0].mxu0
      %456 = vmatprep.mubr.bf16.mxu0 0
      %457 = vmatmul.mubr.bf16.gmra.mrb[0].mxu0 %v166
      %v458 = vpop.f32.mrb[0].mxu0
      %v459 = vadd.f32 %v346, %v458
      %v460 = vpop.f32.mrb[0].mxu0
      %v461 = vpop.f32.mrb[0].mxu0
      %v462 = vadd.f32 %v349, %v461
      %v463 = vpop.f32.mrb[0].mxu0
      %464 = vmatprep.mubr.bf16.mxu0 0
      %465 = vmatmul.mubr.bf16.gmra.mrb[0].mxu0 %v167
      %v466 = vpop.f32.mrb[0].mxu0
      %v467 = vadd.f32 %v354, %v466
      %v468 = vpop.f32.mrb[0].mxu0
      %v469 = vpop.f32.mrb[0].mxu0
      %v470 = vadd.f32 %v357, %v469
      %v471 = vpop.f32.mrb[0].mxu0
      %472 = vmatprep.mubr.bf16.mxu0 0
      %473 = vmatmul.mubr.bf16.gmra.mrb[0].mxu0 %v168
      %v474 = vpop.f32.mrb[0].mxu0
      %v475 = vadd.f32 %v362, %v474
      %v476 = vpop.f32.mrb[0].mxu0
      %v477 = vpop.f32.mrb[0].mxu0
      %v478 = vadd.f32 %v365, %v477
      %v479 = vpop.f32.mrb[0].mxu0
      %480 = vdwg.mxu0
      %vm481 = vcmask 1045504
      %v482 = vrot.slane %v145, 2
      %v483 = vrot.slane %v146, 2
      %v484 = vsel %vm481, %v482, %v483
      %v485 = vrot.slane %v147, 2
      %v486 = vrot.slane %v148, 2
      %v487 = vsel %vm481, %v485, %v486
      %v488 = vrot.slane %v149, 2
      %v489 = vrot.slane %v150, 2
      %v490 = vsel %vm481, %v488, %v489
      %v491 = vrot.slane %v151, 2
      %v492 = vrot.slane %v152, 2
      %v493 = vsel %vm481, %v491, %v492
      %v494 = vrot.slane %v153, 2
      %v495 = vrot.slane %v154, 2
      %v496 = vsel %vm481, %v494, %v495
      %v497 = vrot.slane %v155, 2
      %v498 = vrot.slane %v156, 2
      %v499 = vsel %vm481, %v497, %v498
      %v500 = vrot.slane %v157, 2
      %v501 = vrot.slane %v158, 2
      %v502 = vsel %vm481, %v500, %v501
      %v503 = vrot.slane %v159, 2
      %v504 = vrot.slane %v160, 2
      %v505 = vsel %vm481, %v503, %v504
      %v514 = vpack.c.bf16 %v487, %v484
      %v515 = vpack.c.bf16 %v493, %v490
      %v516 = vpack.c.bf16 %v499, %v496
      %v517 = vpack.c.bf16 %v505, %v502
      %s518 = scalar_lea.vmem %s1, 128
      %v519 = vld [vmem:[%s518] sm:$0xf]
      %v520 = vld [vmem:[%s518 + $0x4] sm:$0xf]
      %v521 = vld [vmem:[%s518 + $0x8] sm:$0xf]
      %v522 = vld [vmem:[%s518 + $0xc] sm:$0xf]
      %v523 = vld [vmem:[%s518 + $0x10] sm:$0xf]
      %v524 = vld [vmem:[%s518 + $0x14] sm:$0xf]
      %v525 = vld [vmem:[%s518 + $0x18] sm:$0xf]
      %v526 = vld [vmem:[%s518 + $0x1c] sm:$0xf]
      %v527 = vld [vmem:[%s518 + $0x20] sm:$0xf]
      %v528 = vld [vmem:[%s518 + $0x24] sm:$0xf]
      %v529 = vld [vmem:[%s518 + $0x28] sm:$0xf]
      %v530 = vld [vmem:[%s518 + $0x2c] sm:$0xf]
      %v531 = vld [vmem:[%s518 + $0x30] sm:$0xf]
      %v532 = vld [vmem:[%s518 + $0x34] sm:$0xf]
      %v533 = vld [vmem:[%s518 + $0x38] sm:$0xf]
      %v534 = vld [vmem:[%s518 + $0x3c] sm:$0xf]
      %v551 = vunpack.c.l.b16 %v519
      %v552 = vunpack.c.l.b16 %v520
      %v553 = vunpack.c.l.b16 %v521
      %v554 = vunpack.c.l.b16 %v522
      %v555 = vunpack.c.l.b16 %v523
      %v556 = vunpack.c.l.b16 %v524
      %v557 = vunpack.c.l.b16 %v525
      %v558 = vunpack.c.l.b16 %v526
      %v559 = vunpack.c.l.b16 %v527
      %v560 = vunpack.c.l.b16 %v528
      %v561 = vunpack.c.l.b16 %v529
      %v562 = vunpack.c.l.b16 %v530
      %v563 = vunpack.c.l.b16 %v531
      %v564 = vunpack.c.l.b16 %v532
      %v565 = vunpack.c.l.b16 %v533
      %v566 = vunpack.c.l.b16 %v534
      %v567 = vpack.c.b16 %v552, %v551
      %v568 = vpack.c.b16 %v554, %v553
      %v569 = vpack.c.b16 %v556, %v555
      %v570 = vpack.c.b16 %v558, %v557
      %v571 = vpack.c.b16 %v560, %v559
      %v572 = vpack.c.b16 %v562, %v561
      %v573 = vpack.c.b16 %v564, %v563
      %v574 = vpack.c.b16 %v566, %v565
      %583 = vmatprep.subr.bf16.mxu0 0
      %584 = vmatpush1.bf16.msra.mxu0 %v567
      %585 = vmatprep.subr.bf16.mxu0 0
      %586 = vmatpush1.bf16.msra.mxu0 %v568
      %587 = vmatprep.subr.bf16.mxu0 0
      %588 = vmatpush1.bf16.msra.mxu0 %v569
      %589 = vmatprep.subr.bf16.mxu0 0
      %590 = vmatpush1.bf16.msra.mxu0 %v570
      %591 = vmatprep.subr.bf16.mxu0 0
      %592 = vmatpush1.bf16.msra.mxu0 %v571
      %593 = vmatprep.subr.bf16.mxu0 0
      %594 = vmatpush1.bf16.msra.mxu0 %v572
      %595 = vmatprep.subr.bf16.mxu0 0
      %596 = vmatpush1.bf16.msra.mxu0 %v573
      %597 = vmatprep.subr.bf16.mxu0 0
      %598 = vmatpush1.bf16.msra.mxu0 %v574
      %599 = vmatprep.subr.bf16.mxu0 0
      %600 = vmatpush1.bf16.msra.mxu0 0
      %601 = vmatprep.subr.bf16.mxu0 0
      %602 = vmatpush1.bf16.msra.mxu0 0
      %603 = vmatprep.subr.bf16.mxu0 0
      %604 = vmatpush1.bf16.msra.mxu0 0
      %605 = vmatprep.subr.bf16.mxu0 0
      %606 = vmatpush1.bf16.msra.mxu0 0
      %607 = vmatprep.subr.bf16.mxu0 0
      %608 = vmatpush1.bf16.msra.mxu0 0
      %609 = vmatprep.subr.bf16.mxu0 0
      %610 = vmatpush1.bf16.msra.mxu0 0
      %611 = vmatprep.subr.bf16.mxu0 0
      %612 = vmatpush1.bf16.msra.mxu0 0
      %613 = vmatprep.subr.bf16.mxu0 0
      %614 = vmatpush1.bf16.msra.mxu0 0
      %615 = vmatprep.mubr.bf16.mxu0 0
      %616 = vmatmul.mubr.bf16.gmra.mrb[0].mxu0 %v514
      %v617 = vpop.f32.mrb[0].mxu0
      %v618 = vadd.f32 0.0, %v617
      %v619 = vpop.f32.mrb[0].mxu0
      %v620 = vpop.f32.mrb[0].mxu0
      %v621 = vadd.f32 0.0, %v620
      %v622 = vpop.f32.mrb[0].mxu0
      %623 = vmatprep.mubr.bf16.mxu0 0
      %624 = vmatmul.mubr.bf16.gmra.mrb[0].mxu0 %v515
      %v625 = vpop.f32.mrb[0].mxu0
      %v626 = vadd.f32 0.0, %v625
      %v627 = vpop.f32.mrb[0].mxu0
      %v628 = vpop.f32.mrb[0].mxu0
      %v629 = vadd.f32 0.0, %v628
      %v630 = vpop.f32.mrb[0].mxu0
      %631 = vmatprep.mubr.bf16.mxu0 0
      %632 = vmatmul.mubr.bf16.gmra.mrb[0].mxu0 %v516
      %v633 = vpop.f32.mrb[0].mxu0
      %v634 = vadd.f32 0.0, %v633
      %v635 = vpop.f32.mrb[0].mxu0
      %v636 = vpop.f32.mrb[0].mxu0
      %v637 = vadd.f32 0.0, %v636
      %v638 = vpop.f32.mrb[0].mxu0
      %639 = vmatprep.mubr.bf16.mxu0 0
      %640 = vmatmul.mubr.bf16.gmra.mrb[0].mxu0 %v517
      %v641 = vpop.f32.mrb[0].mxu0
      %v642 = vadd.f32 0.0, %v641
      %v643 = vpop.f32.mrb[0].mxu0
      %v644 = vpop.f32.mrb[0].mxu0
      %v645 = vadd.f32 0.0, %v644
      %v646 = vpop.f32.mrb[0].mxu0
      %647 = vdwg.mxu0
      %v648 = vadd.f32 %v451, %v618
      %v649 = vadd.f32 %v454, %v621
      %v650 = vadd.f32 %v459, %v626
      %v651 = vadd.f32 %v462, %v629
      %v652 = vadd.f32 %v467, %v634
      %v653 = vadd.f32 %v470, %v637
      %v654 = vadd.f32 %v475, %v642
      %v655 = vadd.f32 %v478, %v645
      %v656 = vpack.c.bf16 %v149, %v147
      %v657 = vpack.c.bf16 %v153, %v151
      %v658 = vpack.c.bf16 %v157, %v155
      %v659 = vpack.c.bf16 %v161, %v159
      %s660 = scalar_lea.vmem %s1, 192
      %v661 = vld [vmem:[%s660] sm:$0xf]
      %v662 = vld [vmem:[%s660 + $0x4] sm:$0xf]
      %v663 = vld [vmem:[%s660 + $0x8] sm:$0xf]
      %v664 = vld [vmem:[%s660 + $0xc] sm:$0xf]
      %v665 = vld [vmem:[%s660 + $0x10] sm:$0xf]
      %v666 = vld [vmem:[%s660 + $0x14] sm:$0xf]
      %v667 = vld [vmem:[%s660 + $0x18] sm:$0xf]
      %v668 = vld [vmem:[%s660 + $0x1c] sm:$0xf]
      %v669 = vld [vmem:[%s660 + $0x20] sm:$0xf]
      %v670 = vld [vmem:[%s660 + $0x24] sm:$0xf]
      %v671 = vld [vmem:[%s660 + $0x28] sm:$0xf]
      %v672 = vld [vmem:[%s660 + $0x2c] sm:$0xf]
      %v673 = vld [vmem:[%s660 + $0x30] sm:$0xf]
      %v674 = vld [vmem:[%s660 + $0x34] sm:$0xf]
      %v675 = vld [vmem:[%s660 + $0x38] sm:$0xf]
      %v676 = vld [vmem:[%s660 + $0x3c] sm:$0xf]
      %v693 = vunpack.c.l.b16 %v661
      %v694 = vunpack.c.l.b16 %v662
      %v695 = vunpack.c.l.b16 %v663
      %v696 = vunpack.c.l.b16 %v664
      %v697 = vunpack.c.l.b16 %v665
      %v698 = vunpack.c.l.b16 %v666
      %v699 = vunpack.c.l.b16 %v667
      %v700 = vunpack.c.l.b16 %v668
      %v701 = vunpack.c.l.b16 %v669
      %v702 = vunpack.c.l.b16 %v670
      %v703 = vunpack.c.l.b16 %v671
      %v704 = vunpack.c.l.b16 %v672
      %v705 = vunpack.c.l.b16 %v673
      %v706 = vunpack.c.l.b16 %v674
      %v707 = vunpack.c.l.b16 %v675
      %v708 = vunpack.c.l.b16 %v676
      %v709 = vpack.c.b16 %v694, %v693
      %v710 = vpack.c.b16 %v696, %v695
      %v711 = vpack.c.b16 %v698, %v697
      %v712 = vpack.c.b16 %v700, %v699
      %v713 = vpack.c.b16 %v702, %v701
      %v714 = vpack.c.b16 %v704, %v703
      %v715 = vpack.c.b16 %v706, %v705
      %v716 = vpack.c.b16 %v708, %v707
      %725 = vmatprep.subr.bf16.mxu0 0
      %726 = vmatpush1.bf16.msra.mxu0 %v709
      %727 = vmatprep.subr.bf16.mxu0 0
      %728 = vmatpush1.bf16.msra.mxu0 %v710
      %729 = vmatprep.subr.bf16.mxu0 0
      %730 = vmatpush1.bf16.msra.mxu0 %v711
      %731 = vmatprep.subr.bf16.mxu0 0
      %732 = vmatpush1.bf16.msra.mxu0 %v712
      %733 = vmatprep.subr.bf16.mxu0 0
      %734 = vmatpush1.bf16.msra.mxu0 %v713
      %735 = vmatprep.subr.bf16.mxu0 0
      %736 = vmatpush1.bf16.msra.mxu0 %v714
      %737 = vmatprep.subr.bf16.mxu0 0
      %738 = vmatpush1.bf16.msra.mxu0 %v715
      %739 = vmatprep.subr.bf16.mxu0 0
      %740 = vmatpush1.bf16.msra.mxu0 %v716
      %741 = vmatprep.subr.bf16.mxu0 0
      %742 = vmatpush1.bf16.msra.mxu0 0
      %743 = vmatprep.subr.bf16.mxu0 0
      %744 = vmatpush1.bf16.msra.mxu0 0
      %745 = vmatprep.subr.bf16.mxu0 0
      %746 = vmatpush1.bf16.msra.mxu0 0
      %747 = vmatprep.subr.bf16.mxu0 0
      %748 = vmatpush1.bf16.msra.mxu0 0
      %749 = vmatprep.subr.bf16.mxu0 0
      %750 = vmatpush1.bf16.msra.mxu0 0
      %751 = vmatprep.subr.bf16.mxu0 0
      %752 = vmatpush1.bf16.msra.mxu0 0
      %753 = vmatprep.subr.bf16.mxu0 0
      %754 = vmatpush1.bf16.msra.mxu0 0
      %755 = vmatprep.subr.bf16.mxu0 0
      %756 = vmatpush1.bf16.msra.mxu0 0
      %757 = vmatprep.mubr.bf16.mxu0 0
      %758 = vmatmul.mubr.bf16.gmra.mrb[0].mxu0 %v656
      %v759 = vpop.f32.mrb[0].mxu0
      %v760 = vadd.f32 0.0, %v759
      %v761 = vpop.f32.mrb[0].mxu0
      %v762 = vpop.f32.mrb[0].mxu0
      %v763 = vadd.f32 0.0, %v762
      %v764 = vpop.f32.mrb[0].mxu0
      %765 = vmatprep.mubr.bf16.mxu0 0
      %766 = vmatmul.mubr.bf16.gmra.mrb[0].mxu0 %v657
      %v767 = vpop.f32.mrb[0].mxu0
      %v768 = vadd.f32 0.0, %v767
      %v769 = vpop.f32.mrb[0].mxu0
      %v770 = vpop.f32.mrb[0].mxu0
      %v771 = vadd.f32 0.0, %v770
      %v772 = vpop.f32.mrb[0].mxu0
      %773 = vmatprep.mubr.bf16.mxu0 0
      %774 = vmatmul.mubr.bf16.gmra.mrb[0].mxu0 %v658
      %v775 = vpop.f32.mrb[0].mxu0
      %v776 = vadd.f32 0.0, %v775
      %v777 = vpop.f32.mrb[0].mxu0
      %v778 = vpop.f32.mrb[0].mxu0
      %v779 = vadd.f32 0.0, %v778
      %v780 = vpop.f32.mrb[0].mxu0
      %781 = vmatprep.mubr.bf16.mxu0 0
      %782 = vmatmul.mubr.bf16.gmra.mrb[0].mxu0 %v659
      %v783 = vpop.f32.mrb[0].mxu0
      %v784 = vadd.f32 0.0, %v783
      %v785 = vpop.f32.mrb[0].mxu0
      %v786 = vpop.f32.mrb[0].mxu0
      %v787 = vadd.f32 0.0, %v786
      %v788 = vpop.f32.mrb[0].mxu0
      %789 = vdwg.mxu0
      %v790 = vadd.f32 %v648, %v760
      %v791 = vadd.f32 %v649, %v763
      %v792 = vadd.f32 %v650, %v768
      %v793 = vadd.f32 %v651, %v771
      %v794 = vadd.f32 %v652, %v776
      %v795 = vadd.f32 %v653, %v779
      %v796 = vadd.f32 %v654, %v784
      %v797 = vadd.f32 %v655, %v787
      %v800 = vrot.slane %v161, 1
      %v801 = vrot.slane %v162, 1
      %v802 = vsel %vm201, %v800, %v801
      %v804 = vpack.c.bf16 %v210, %v207
      %v805 = vpack.c.bf16 %v216, %v213
      %v806 = vpack.c.bf16 %v222, %v219
      %v807 = vpack.c.bf16 %v802, %v225
      %s808 = scalar_lea.vmem %s1, 256
      %v809 = vld [vmem:[%s808] sm:$0xf]
      %v810 = vld [vmem:[%s808 + $0x4] sm:$0xf]
      %v811 = vld [vmem:[%s808 + $0x8] sm:$0xf]
      %v812 = vld [vmem:[%s808 + $0xc] sm:$0xf]
      %v813 = vld [vmem:[%s808 + $0x10] sm:$0xf]
      %v814 = vld [vmem:[%s808 + $0x14] sm:$0xf]
      %v815 = vld [vmem:[%s808 + $0x18] sm:$0xf]
      %v816 = vld [vmem:[%s808 + $0x1c] sm:$0xf]
      %v817 = vld [vmem:[%s808 + $0x20] sm:$0xf]
      %v818 = vld [vmem:[%s808 + $0x24] sm:$0xf]
      %v819 = vld [vmem:[%s808 + $0x28] sm:$0xf]
      %v820 = vld [vmem:[%s808 + $0x2c] sm:$0xf]
      %v821 = vld [vmem:[%s808 + $0x30] sm:$0xf]
      %v822 = vld [vmem:[%s808 + $0x34] sm:$0xf]
      %v823 = vld [vmem:[%s808 + $0x38] sm:$0xf]
      %v824 = vld [vmem:[%s808 + $0x3c] sm:$0xf]
      %v841 = vunpack.c.l.b16 %v809
      %v842 = vunpack.c.l.b16 %v810
      %v843 = vunpack.c.l.b16 %v811
      %v844 = vunpack.c.l.b16 %v812
      %v845 = vunpack.c.l.b16 %v813
      %v846 = vunpack.c.l.b16 %v814
      %v847 = vunpack.c.l.b16 %v815
      %v848 = vunpack.c.l.b16 %v816
      %v849 = vunpack.c.l.b16 %v817
      %v850 = vunpack.c.l.b16 %v818
      %v851 = vunpack.c.l.b16 %v819
      %v852 = vunpack.c.l.b16 %v820
      %v853 = vunpack.c.l.b16 %v821
      %v854 = vunpack.c.l.b16 %v822
      %v855 = vunpack.c.l.b16 %v823
      %v856 = vunpack.c.l.b16 %v824
      %v857 = vpack.c.b16 %v842, %v841
      %v858 = vpack.c.b16 %v844, %v843
      %v859 = vpack.c.b16 %v846, %v845
      %v860 = vpack.c.b16 %v848, %v847
      %v861 = vpack.c.b16 %v850, %v849
      %v862 = vpack.c.b16 %v852, %v851
      %v863 = vpack.c.b16 %v854, %v853
      %v864 = vpack.c.b16 %v856, %v855
      %873 = vmatprep.subr.bf16.mxu0 0
      %874 = vmatpush1.bf16.msra.mxu0 %v857
      %875 = vmatprep.subr.bf16.mxu0 0
      %876 = vmatpush1.bf16.msra.mxu0 %v858
      %877 = vmatprep.subr.bf16.mxu0 0
      %878 = vmatpush1.bf16.msra.mxu0 %v859
      %879 = vmatprep.subr.bf16.mxu0 0
      %880 = vmatpush1.bf16.msra.mxu0 %v860
      %881 = vmatprep.subr.bf16.mxu0 0
      %882 = vmatpush1.bf16.msra.mxu0 %v861
      %883 = vmatprep.subr.bf16.mxu0 0
      %884 = vmatpush1.bf16.msra.mxu0 %v862
      %885 = vmatprep.subr.bf16.mxu0 0
      %886 = vmatpush1.bf16.msra.mxu0 %v863
      %887 = vmatprep.subr.bf16.mxu0 0
      %888 = vmatpush1.bf16.msra.mxu0 %v864
      %889 = vmatprep.subr.bf16.mxu0 0
      %890 = vmatpush1.bf16.msra.mxu0 0
      %891 = vmatprep.subr.bf16.mxu0 0
      %892 = vmatpush1.bf16.msra.mxu0 0
      %893 = vmatprep.subr.bf16.mxu0 0
      %894 = vmatpush1.bf16.msra.mxu0 0
      %895 = vmatprep.subr.bf16.mxu0 0
      %896 = vmatpush1.bf16.msra.mxu0 0
      %897 = vmatprep.subr.bf16.mxu0 0
      %898 = vmatpush1.bf16.msra.mxu0 0
      %899 = vmatprep.subr.bf16.mxu0 0
      %900 = vmatpush1.bf16.msra.mxu0 0
      %901 = vmatprep.subr.bf16.mxu0 0
      %902 = vmatpush1.bf16.msra.mxu0 0
      %903 = vmatprep.subr.bf16.mxu0 0
      %904 = vmatpush1.bf16.msra.mxu0 0
      %905 = vmatprep.mubr.bf16.mxu0 0
      %906 = vmatmul.mubr.bf16.gmra.mrb[0].mxu0 %v804
      %v907 = vpop.f32.mrb[0].mxu0
      %v908 = vadd.f32 0.0, %v907
      %v909 = vpop.f32.mrb[0].mxu0
      %v910 = vpop.f32.mrb[0].mxu0
      %v911 = vadd.f32 0.0, %v910
      %v912 = vpop.f32.mrb[0].mxu0
      %913 = vmatprep.mubr.bf16.mxu0 0
      %914 = vmatmul.mubr.bf16.gmra.mrb[0].mxu0 %v805
      %v915 = vpop.f32.mrb[0].mxu0
      %v916 = vadd.f32 0.0, %v915
      %v917 = vpop.f32.mrb[0].mxu0
      %v918 = vpop.f32.mrb[0].mxu0
      %v919 = vadd.f32 0.0, %v918
      %v920 = vpop.f32.mrb[0].mxu0
      %921 = vmatprep.mubr.bf16.mxu0 0
      %922 = vmatmul.mubr.bf16.gmra.mrb[0].mxu0 %v806
      %v923 = vpop.f32.mrb[0].mxu0
      %v924 = vadd.f32 0.0, %v923
      %v925 = vpop.f32.mrb[0].mxu0
      %v926 = vpop.f32.mrb[0].mxu0
      %v927 = vadd.f32 0.0, %v926
      %v928 = vpop.f32.mrb[0].mxu0
      %929 = vmatprep.mubr.bf16.mxu0 0
      %930 = vmatmul.mubr.bf16.gmra.mrb[0].mxu0 %v807
      %v931 = vpop.f32.mrb[0].mxu0
      %v932 = vadd.f32 0.0, %v931
      %v933 = vpop.f32.mrb[0].mxu0
      %v934 = vpop.f32.mrb[0].mxu0
      %v935 = vadd.f32 0.0, %v934
      %v936 = vpop.f32.mrb[0].mxu0
      %937 = vdwg.mxu0
      %v938 = vadd.f32 %v790, %v908
      %v939 = vadd.f32 %v791, %v911
      %v940 = vadd.f32 %v792, %v916
      %v941 = vadd.f32 %v793, %v919
      %v942 = vadd.f32 %v794, %v924
      %v943 = vadd.f32 %v795, %v927
      %v944 = vadd.f32 %v796, %v932
      %v945 = vadd.f32 %v797, %v935
      %v946 = vrot.slane %v161, 2
      %v947 = vrot.slane %v162, 2
      %v948 = vsel %vm481, %v946, %v947
      %v950 = vpack.c.bf16 %v490, %v487
      %v951 = vpack.c.bf16 %v496, %v493
      %v952 = vpack.c.bf16 %v502, %v499
      %v953 = vpack.c.bf16 %v948, %v505
      %s954 = scalar_lea.vmem %s1, 320
      %v955 = vld [vmem:[%s954] sm:$0xf]
      %v956 = vld [vmem:[%s954 + $0x4] sm:$0xf]
      %v957 = vld [vmem:[%s954 + $0x8] sm:$0xf]
      %v958 = vld [vmem:[%s954 + $0xc] sm:$0xf]
      %v959 = vld [vmem:[%s954 + $0x10] sm:$0xf]
      %v960 = vld [vmem:[%s954 + $0x14] sm:$0xf]
      %v961 = vld [vmem:[%s954 + $0x18] sm:$0xf]
      %v962 = vld [vmem:[%s954 + $0x1c] sm:$0xf]
      %v963 = vld [vmem:[%s954 + $0x20] sm:$0xf]
      %v964 = vld [vmem:[%s954 + $0x24] sm:$0xf]
      %v965 = vld [vmem:[%s954 + $0x28] sm:$0xf]
      %v966 = vld [vmem:[%s954 + $0x2c] sm:$0xf]
      %v967 = vld [vmem:[%s954 + $0x30] sm:$0xf]
      %v968 = vld [vmem:[%s954 + $0x34] sm:$0xf]
      %v969 = vld [vmem:[%s954 + $0x38] sm:$0xf]
      %v970 = vld [vmem:[%s954 + $0x3c] sm:$0xf]
      %v987 = vunpack.c.l.b16 %v955
      %v988 = vunpack.c.l.b16 %v956
      %v989 = vunpack.c.l.b16 %v957
      %v990 = vunpack.c.l.b16 %v958
      %v991 = vunpack.c.l.b16 %v959
      %v992 = vunpack.c.l.b16 %v960
      %v993 = vunpack.c.l.b16 %v961
      %v994 = vunpack.c.l.b16 %v962
      %v995 = vunpack.c.l.b16 %v963
      %v996 = vunpack.c.l.b16 %v964
      %v997 = vunpack.c.l.b16 %v965
      %v998 = vunpack.c.l.b16 %v966
      %v999 = vunpack.c.l.b16 %v967
      %v1000 = vunpack.c.l.b16 %v968
      %v1001 = vunpack.c.l.b16 %v969
      %v1002 = vunpack.c.l.b16 %v970
      %v1003 = vpack.c.b16 %v988, %v987
      %v1004 = vpack.c.b16 %v990, %v989
      %v1005 = vpack.c.b16 %v992, %v991
      %v1006 = vpack.c.b16 %v994, %v993
      %v1007 = vpack.c.b16 %v996, %v995
      %v1008 = vpack.c.b16 %v998, %v997
      %v1009 = vpack.c.b16 %v1000, %v999
      %v1010 = vpack.c.b16 %v1002, %v1001
      %1019 = vmatprep.subr.bf16.mxu0 0
      %1020 = vmatpush1.bf16.msra.mxu0 %v1003
      %1021 = vmatprep.subr.bf16.mxu0 0
      %1022 = vmatpush1.bf16.msra.mxu0 %v1004
      %1023 = vmatprep.subr.bf16.mxu0 0
      %1024 = vmatpush1.bf16.msra.mxu0 %v1005
      %1025 = vmatprep.subr.bf16.mxu0 0
      %1026 = vmatpush1.bf16.msra.mxu0 %v1006
      %1027 = vmatprep.subr.bf16.mxu0 0
      %1028 = vmatpush1.bf16.msra.mxu0 %v1007
      %1029 = vmatprep.subr.bf16.mxu0 0
      %1030 = vmatpush1.bf16.msra.mxu0 %v1008
      %1031 = vmatprep.subr.bf16.mxu0 0
      %1032 = vmatpush1.bf16.msra.mxu0 %v1009
      %1033 = vmatprep.subr.bf16.mxu0 0
      %1034 = vmatpush1.bf16.msra.mxu0 %v1010
      %1035 = vmatprep.subr.bf16.mxu0 0
      %1036 = vmatpush1.bf16.msra.mxu0 0
      %1037 = vmatprep.subr.bf16.mxu0 0
      %1038 = vmatpush1.bf16.msra.mxu0 0
      %1039 = vmatprep.subr.bf16.mxu0 0
      %1040 = vmatpush1.bf16.msra.mxu0 0
      %1041 = vmatprep.subr.bf16.mxu0 0
      %1042 = vmatpush1.bf16.msra.mxu0 0
      %1043 = vmatprep.subr.bf16.mxu0 0
      %1044 = vmatpush1.bf16.msra.mxu0 0
      %1045 = vmatprep.subr.bf16.mxu0 0
      %1046 = vmatpush1.bf16.msra.mxu0 0
      %1047 = vmatprep.subr.bf16.mxu0 0
      %1048 = vmatpush1.bf16.msra.mxu0 0
      %1049 = vmatprep.subr.bf16.mxu0 0
      %1050 = vmatpush1.bf16.msra.mxu0 0
      %1051 = vmatprep.mubr.bf16.mxu0 0
      %1052 = vmatmul.mubr.bf16.gmra.mrb[0].mxu0 %v950
      %v1053 = vpop.f32.mrb[0].mxu0
      %v1054 = vadd.f32 0.0, %v1053
      %v1055 = vpop.f32.mrb[0].mxu0
      %v1056 = vpop.f32.mrb[0].mxu0
      %v1057 = vadd.f32 0.0, %v1056
      %v1058 = vpop.f32.mrb[0].mxu0
      %1059 = vmatprep.mubr.bf16.mxu0 0
      %1060 = vmatmul.mubr.bf16.gmra.mrb[0].mxu0 %v951
      %v1061 = vpop.f32.mrb[0].mxu0
      %v1062 = vadd.f32 0.0, %v1061
      %v1063 = vpop.f32.mrb[0].mxu0
      %v1064 = vpop.f32.mrb[0].mxu0
      %v1065 = vadd.f32 0.0, %v1064
      %v1066 = vpop.f32.mrb[0].mxu0
      %1067 = vmatprep.mubr.bf16.mxu0 0
      %1068 = vmatmul.mubr.bf16.gmra.mrb[0].mxu0 %v952
      %v1069 = vpop.f32.mrb[0].mxu0
      %v1070 = vadd.f32 0.0, %v1069
      %v1071 = vpop.f32.mrb[0].mxu0
      %v1072 = vpop.f32.mrb[0].mxu0
      %v1073 = vadd.f32 0.0, %v1072
      %v1074 = vpop.f32.mrb[0].mxu0
      %1075 = vmatprep.mubr.bf16.mxu0 0
      %1076 = vmatmul.mubr.bf16.gmra.mrb[0].mxu0 %v953
      %v1077 = vpop.f32.mrb[0].mxu0
      %v1078 = vadd.f32 0.0, %v1077
      %v1079 = vpop.f32.mrb[0].mxu0
      %v1080 = vpop.f32.mrb[0].mxu0
      %v1081 = vadd.f32 0.0, %v1080
      %v1082 = vpop.f32.mrb[0].mxu0
      %1083 = vdwg.mxu0
      %v1084 = vadd.f32 %v938, %v1054
      %v1085 = vadd.f32 %v939, %v1057
      %v1086 = vadd.f32 %v940, %v1062
      %v1087 = vadd.f32 %v941, %v1065
      %v1088 = vadd.f32 %v942, %v1070
      %v1089 = vadd.f32 %v943, %v1073
      %v1090 = vadd.f32 %v944, %v1078
      %v1091 = vadd.f32 %v945, %v1081
      %v1092 = vpack.c.bf16 %v163, %v161
      %s1093 = scalar_lea.vmem %s1, 384
      %v1094 = vld [vmem:[%s1093] sm:$0xf]
      %v1095 = vld [vmem:[%s1093 + $0x4] sm:$0xf]
      %v1096 = vld [vmem:[%s1093 + $0x8] sm:$0xf]
      %v1097 = vld [vmem:[%s1093 + $0xc] sm:$0xf]
      %v1098 = vld [vmem:[%s1093 + $0x10] sm:$0xf]
      %v1099 = vld [vmem:[%s1093 + $0x14] sm:$0xf]
      %v1100 = vld [vmem:[%s1093 + $0x18] sm:$0xf]
      %v1101 = vld [vmem:[%s1093 + $0x1c] sm:$0xf]
      %v1102 = vld [vmem:[%s1093 + $0x20] sm:$0xf]
      %v1103 = vld [vmem:[%s1093 + $0x24] sm:$0xf]
      %v1104 = vld [vmem:[%s1093 + $0x28] sm:$0xf]
      %v1105 = vld [vmem:[%s1093 + $0x2c] sm:$0xf]
      %v1106 = vld [vmem:[%s1093 + $0x30] sm:$0xf]
      %v1107 = vld [vmem:[%s1093 + $0x34] sm:$0xf]
      %v1108 = vld [vmem:[%s1093 + $0x38] sm:$0xf]
      %v1109 = vld [vmem:[%s1093 + $0x3c] sm:$0xf]
      %v1126 = vunpack.c.l.b16 %v1094
      %v1127 = vunpack.c.l.b16 %v1095
      %v1128 = vunpack.c.l.b16 %v1096
      %v1129 = vunpack.c.l.b16 %v1097
      %v1130 = vunpack.c.l.b16 %v1098
      %v1131 = vunpack.c.l.b16 %v1099
      %v1132 = vunpack.c.l.b16 %v1100
      %v1133 = vunpack.c.l.b16 %v1101
      %v1134 = vunpack.c.l.b16 %v1102
      %v1135 = vunpack.c.l.b16 %v1103
      %v1136 = vunpack.c.l.b16 %v1104
      %v1137 = vunpack.c.l.b16 %v1105
      %v1138 = vunpack.c.l.b16 %v1106
      %v1139 = vunpack.c.l.b16 %v1107
      %v1140 = vunpack.c.l.b16 %v1108
      %v1141 = vunpack.c.l.b16 %v1109
      %v1142 = vpack.c.b16 %v1127, %v1126
      %v1143 = vpack.c.b16 %v1129, %v1128
      %v1144 = vpack.c.b16 %v1131, %v1130
      %v1145 = vpack.c.b16 %v1133, %v1132
      %v1146 = vpack.c.b16 %v1135, %v1134
      %v1147 = vpack.c.b16 %v1137, %v1136
      %v1148 = vpack.c.b16 %v1139, %v1138
      %v1149 = vpack.c.b16 %v1141, %v1140
      %1158 = vmatprep.subr.bf16.mxu0 0
      %1159 = vmatpush1.bf16.msra.mxu0 %v1142
      %1160 = vmatprep.subr.bf16.mxu0 0
      %1161 = vmatpush1.bf16.msra.mxu0 %v1143
      %1162 = vmatprep.subr.bf16.mxu0 0
      %1163 = vmatpush1.bf16.msra.mxu0 %v1144
      %1164 = vmatprep.subr.bf16.mxu0 0
      %1165 = vmatpush1.bf16.msra.mxu0 %v1145
      %1166 = vmatprep.subr.bf16.mxu0 0
      %1167 = vmatpush1.bf16.msra.mxu0 %v1146
      %1168 = vmatprep.subr.bf16.mxu0 0
      %1169 = vmatpush1.bf16.msra.mxu0 %v1147
      %1170 = vmatprep.subr.bf16.mxu0 0
      %1171 = vmatpush1.bf16.msra.mxu0 %v1148
      %1172 = vmatprep.subr.bf16.mxu0 0
      %1173 = vmatpush1.bf16.msra.mxu0 %v1149
      %1174 = vmatprep.subr.bf16.mxu0 0
      %1175 = vmatpush1.bf16.msra.mxu0 0
      %1176 = vmatprep.subr.bf16.mxu0 0
      %1177 = vmatpush1.bf16.msra.mxu0 0
      %1178 = vmatprep.subr.bf16.mxu0 0
      %1179 = vmatpush1.bf16.msra.mxu0 0
      %1180 = vmatprep.subr.bf16.mxu0 0
      %1181 = vmatpush1.bf16.msra.mxu0 0
      %1182 = vmatprep.subr.bf16.mxu0 0
      %1183 = vmatpush1.bf16.msra.mxu0 0
      %1184 = vmatprep.subr.bf16.mxu0 0
      %1185 = vmatpush1.bf16.msra.mxu0 0
      %1186 = vmatprep.subr.bf16.mxu0 0
      %1187 = vmatpush1.bf16.msra.mxu0 0
      %1188 = vmatprep.subr.bf16.mxu0 0
      %1189 = vmatpush1.bf16.msra.mxu0 0
      %1190 = vmatprep.mubr.bf16.mxu0 0
      %1191 = vmatmul.mubr.bf16.gmra.mrb[0].mxu0 %v166
      %v1192 = vpop.f32.mrb[0].mxu0
      %v1193 = vadd.f32 0.0, %v1192
      %v1194 = vpop.f32.mrb[0].mxu0
      %v1195 = vpop.f32.mrb[0].mxu0
      %v1196 = vadd.f32 0.0, %v1195
      %v1197 = vpop.f32.mrb[0].mxu0
      %1198 = vmatprep.mubr.bf16.mxu0 0
      %1199 = vmatmul.mubr.bf16.gmra.mrb[0].mxu0 %v167
      %v1200 = vpop.f32.mrb[0].mxu0
      %v1201 = vadd.f32 0.0, %v1200
      %v1202 = vpop.f32.mrb[0].mxu0
      %v1203 = vpop.f32.mrb[0].mxu0
      %v1204 = vadd.f32 0.0, %v1203
      %v1205 = vpop.f32.mrb[0].mxu0
      %1206 = vmatprep.mubr.bf16.mxu0 0
      %1207 = vmatmul.mubr.bf16.gmra.mrb[0].mxu0 %v168
      %v1208 = vpop.f32.mrb[0].mxu0
      %v1209 = vadd.f32 0.0, %v1208
      %v1210 = vpop.f32.mrb[0].mxu0
      %v1211 = vpop.f32.mrb[0].mxu0
      %v1212 = vadd.f32 0.0, %v1211
      %v1213 = vpop.f32.mrb[0].mxu0
      %1214 = vmatprep.mubr.bf16.mxu0 0
      %1215 = vmatmul.mubr.bf16.gmra.mrb[0].mxu0 %v1092
      %v1216 = vpop.f32.mrb[0].mxu0
      %v1217 = vadd.f32 0.0, %v1216
      %v1218 = vpop.f32.mrb[0].mxu0
      %v1219 = vpop.f32.mrb[0].mxu0
      %v1220 = vadd.f32 0.0, %v1219
      %v1221 = vpop.f32.mrb[0].mxu0
      %1222 = vdwg.mxu0
      %v1223 = vadd.f32 %v1084, %v1193
      %v1224 = vadd.f32 %v1085, %v1196
      %v1225 = vadd.f32 %v1086, %v1201
      %v1226 = vadd.f32 %v1087, %v1204
      %v1227 = vadd.f32 %v1088, %v1209
      %v1228 = vadd.f32 %v1089, %v1212
      %v1229 = vadd.f32 %v1090, %v1217
      %v1230 = vadd.f32 %v1091, %v1220
      %v1233 = vrot.slane %v163, 1
      %v1234 = vrot.slane %v164, 1
      %v1235 = vsel %vm201, %v1233, %v1234
      %v1237 = vpack.c.bf16 %v1235, %v802
      %s1238 = scalar_lea.vmem %s1, 448
      %v1239 = vld [vmem:[%s1238] sm:$0xf]
      %v1240 = vld [vmem:[%s1238 + $0x4] sm:$0xf]
      %v1241 = vld [vmem:[%s1238 + $0x8] sm:$0xf]
      %v1242 = vld [vmem:[%s1238 + $0xc] sm:$0xf]
      %v1243 = vld [vmem:[%s1238 + $0x10] sm:$0xf]
      %v1244 = vld [vmem:[%s1238 + $0x14] sm:$0xf]
      %v1245 = vld [vmem:[%s1238 + $0x18] sm:$0xf]
      %v1246 = vld [vmem:[%s1238 + $0x1c] sm:$0xf]
      %v1247 = vld [vmem:[%s1238 + $0x20] sm:$0xf]
      %v1248 = vld [vmem:[%s1238 + $0x24] sm:$0xf]
      %v1249 = vld [vmem:[%s1238 + $0x28] sm:$0xf]
      %v1250 = vld [vmem:[%s1238 + $0x2c] sm:$0xf]
      %v1251 = vld [vmem:[%s1238 + $0x30] sm:$0xf]
      %v1252 = vld [vmem:[%s1238 + $0x34] sm:$0xf]
      %v1253 = vld [vmem:[%s1238 + $0x38] sm:$0xf]
      %v1254 = vld [vmem:[%s1238 + $0x3c] sm:$0xf]
      %v1271 = vunpack.c.l.b16 %v1239
      %v1272 = vunpack.c.l.b16 %v1240
      %v1273 = vunpack.c.l.b16 %v1241
      %v1274 = vunpack.c.l.b16 %v1242
      %v1275 = vunpack.c.l.b16 %v1243
      %v1276 = vunpack.c.l.b16 %v1244
      %v1277 = vunpack.c.l.b16 %v1245
      %v1278 = vunpack.c.l.b16 %v1246
      %v1279 = vunpack.c.l.b16 %v1247
      %v1280 = vunpack.c.l.b16 %v1248
      %v1281 = vunpack.c.l.b16 %v1249
      %v1282 = vunpack.c.l.b16 %v1250
      %v1283 = vunpack.c.l.b16 %v1251
      %v1284 = vunpack.c.l.b16 %v1252
      %v1285 = vunpack.c.l.b16 %v1253
      %v1286 = vunpack.c.l.b16 %v1254
      %v1287 = vpack.c.b16 %v1272, %v1271
      %v1288 = vpack.c.b16 %v1274, %v1273
      %v1289 = vpack.c.b16 %v1276, %v1275
      %v1290 = vpack.c.b16 %v1278, %v1277
      %v1291 = vpack.c.b16 %v1280, %v1279
      %v1292 = vpack.c.b16 %v1282, %v1281
      %v1293 = vpack.c.b16 %v1284, %v1283
      %v1294 = vpack.c.b16 %v1286, %v1285
      %1303 = vmatprep.subr.bf16.mxu0 0
      %1304 = vmatpush1.bf16.msra.mxu0 %v1287
      %1305 = vmatprep.subr.bf16.mxu0 0
      %1306 = vmatpush1.bf16.msra.mxu0 %v1288
      %1307 = vmatprep.subr.bf16.mxu0 0
      %1308 = vmatpush1.bf16.msra.mxu0 %v1289
      %1309 = vmatprep.subr.bf16.mxu0 0
      %1310 = vmatpush1.bf16.msra.mxu0 %v1290
      %1311 = vmatprep.subr.bf16.mxu0 0
      %1312 = vmatpush1.bf16.msra.mxu0 %v1291
      %1313 = vmatprep.subr.bf16.mxu0 0
      %1314 = vmatpush1.bf16.msra.mxu0 %v1292
      %1315 = vmatprep.subr.bf16.mxu0 0
      %1316 = vmatpush1.bf16.msra.mxu0 %v1293
      %1317 = vmatprep.subr.bf16.mxu0 0
      %1318 = vmatpush1.bf16.msra.mxu0 %v1294
      %1319 = vmatprep.subr.bf16.mxu0 0
      %1320 = vmatpush1.bf16.msra.mxu0 0
      %1321 = vmatprep.subr.bf16.mxu0 0
      %1322 = vmatpush1.bf16.msra.mxu0 0
      %1323 = vmatprep.subr.bf16.mxu0 0
      %1324 = vmatpush1.bf16.msra.mxu0 0
      %1325 = vmatprep.subr.bf16.mxu0 0
      %1326 = vmatpush1.bf16.msra.mxu0 0
      %1327 = vmatprep.subr.bf16.mxu0 0
      %1328 = vmatpush1.bf16.msra.mxu0 0
      %1329 = vmatprep.subr.bf16.mxu0 0
      %1330 = vmatpush1.bf16.msra.mxu0 0
      %1331 = vmatprep.subr.bf16.mxu0 0
      %1332 = vmatpush1.bf16.msra.mxu0 0
      %1333 = vmatprep.subr.bf16.mxu0 0
      %1334 = vmatpush1.bf16.msra.mxu0 0
      %1335 = vmatprep.mubr.bf16.mxu0 0
      %1336 = vmatmul.mubr.bf16.gmra.mrb[0].mxu0 %v235
      %v1337 = vpop.f32.mrb[0].mxu0
      %v1338 = vadd.f32 0.0, %v1337
      %v1339 = vpop.f32.mrb[0].mxu0
      %v1340 = vpop.f32.mrb[0].mxu0
      %v1341 = vadd.f32 0.0, %v1340
      %v1342 = vpop.f32.mrb[0].mxu0
      %1343 = vmatprep.mubr.bf16.mxu0 0
      %1344 = vmatmul.mubr.bf16.gmra.mrb[0].mxu0 %v236
      %v1345 = vpop.f32.mrb[0].mxu0
      %v1346 = vadd.f32 0.0, %v1345
      %v1347 = vpop.f32.mrb[0].mxu0
      %v1348 = vpop.f32.mrb[0].mxu0
      %v1349 = vadd.f32 0.0, %v1348
      %v1350 = vpop.f32.mrb[0].mxu0
      %1351 = vmatprep.mubr.bf16.mxu0 0
      %1352 = vmatmul.mubr.bf16.gmra.mrb[0].mxu0 %v237
      %v1353 = vpop.f32.mrb[0].mxu0
      %v1354 = vadd.f32 0.0, %v1353
      %v1355 = vpop.f32.mrb[0].mxu0
      %v1356 = vpop.f32.mrb[0].mxu0
      %v1357 = vadd.f32 0.0, %v1356
      %v1358 = vpop.f32.mrb[0].mxu0
      %1359 = vmatprep.mubr.bf16.mxu0 0
      %1360 = vmatmul.mubr.bf16.gmra.mrb[0].mxu0 %v1237
      %v1361 = vpop.f32.mrb[0].mxu0
      %v1362 = vadd.f32 0.0, %v1361
      %v1363 = vpop.f32.mrb[0].mxu0
      %v1364 = vpop.f32.mrb[0].mxu0
      %v1365 = vadd.f32 0.0, %v1364
      %v1366 = vpop.f32.mrb[0].mxu0
      %1367 = vdwg.mxu0
      %v1368 = vadd.f32 %v1223, %v1338
      %v1369 = vadd.f32 %v1224, %v1341
      %v1370 = vadd.f32 %v1225, %v1346
      %v1371 = vadd.f32 %v1226, %v1349
      %v1372 = vadd.f32 %v1227, %v1354
      %v1373 = vadd.f32 %v1228, %v1357
      %v1374 = vadd.f32 %v1229, %v1362
      %v1375 = vadd.f32 %v1230, %v1365
      %v1376 = vrot.slane %v163, 2
      %v1377 = vrot.slane %v164, 2
      %v1378 = vsel %vm481, %v1376, %v1377
      %v1380 = vpack.c.bf16 %v1378, %v948
      %s1381 = scalar_lea.vmem %s1, 512
      %v1382 = vld [vmem:[%s1381] sm:$0xf]
      %v1383 = vld [vmem:[%s1381 + $0x4] sm:$0xf]
      %v1384 = vld [vmem:[%s1381 + $0x8] sm:$0xf]
      %v1385 = vld [vmem:[%s1381 + $0xc] sm:$0xf]
      %v1386 = vld [vmem:[%s1381 + $0x10] sm:$0xf]
      %v1387 = vld [vmem:[%s1381 + $0x14] sm:$0xf]
      %v1388 = vld [vmem:[%s1381 + $0x18] sm:$0xf]
      %v1389 = vld [vmem:[%s1381 + $0x1c] sm:$0xf]
      %v1390 = vld [vmem:[%s1381 + $0x20] sm:$0xf]
      %v1391 = vld [vmem:[%s1381 + $0x24] sm:$0xf]
      %v1392 = vld [vmem:[%s1381 + $0x28] sm:$0xf]
      %v1393 = vld [vmem:[%s1381 + $0x2c] sm:$0xf]
      %v1394 = vld [vmem:[%s1381 + $0x30] sm:$0xf]
      %v1395 = vld [vmem:[%s1381 + $0x34] sm:$0xf]
      %v1396 = vld [vmem:[%s1381 + $0x38] sm:$0xf]
      %v1397 = vld [vmem:[%s1381 + $0x3c] sm:$0xf]
      %v1414 = vunpack.c.l.b16 %v1382
      %v1415 = vunpack.c.l.b16 %v1383
      %v1416 = vunpack.c.l.b16 %v1384
      %v1417 = vunpack.c.l.b16 %v1385
      %v1418 = vunpack.c.l.b16 %v1386
      %v1419 = vunpack.c.l.b16 %v1387
      %v1420 = vunpack.c.l.b16 %v1388
      %v1421 = vunpack.c.l.b16 %v1389
      %v1422 = vunpack.c.l.b16 %v1390
      %v1423 = vunpack.c.l.b16 %v1391
      %v1424 = vunpack.c.l.b16 %v1392
      %v1425 = vunpack.c.l.b16 %v1393
      %v1426 = vunpack.c.l.b16 %v1394
      %v1427 = vunpack.c.l.b16 %v1395
      %v1428 = vunpack.c.l.b16 %v1396
      %v1429 = vunpack.c.l.b16 %v1397
      %v1430 = vpack.c.b16 %v1415, %v1414
      %v1431 = vpack.c.b16 %v1417, %v1416
      %v1432 = vpack.c.b16 %v1419, %v1418
      %v1433 = vpack.c.b16 %v1421, %v1420
      %v1434 = vpack.c.b16 %v1423, %v1422
      %v1435 = vpack.c.b16 %v1425, %v1424
      %v1436 = vpack.c.b16 %v1427, %v1426
      %v1437 = vpack.c.b16 %v1429, %v1428
      %1446 = vmatprep.subr.bf16.mxu0 0
      %1447 = vmatpush1.bf16.msra.mxu0 %v1430
      %1448 = vmatprep.subr.bf16.mxu0 0
      %1449 = vmatpush1.bf16.msra.mxu0 %v1431
      %1450 = vmatprep.subr.bf16.mxu0 0
      %1451 = vmatpush1.bf16.msra.mxu0 %v1432
      %1452 = vmatprep.subr.bf16.mxu0 0
      %1453 = vmatpush1.bf16.msra.mxu0 %v1433
      %1454 = vmatprep.subr.bf16.mxu0 0
      %1455 = vmatpush1.bf16.msra.mxu0 %v1434
      %1456 = vmatprep.subr.bf16.mxu0 0
      %1457 = vmatpush1.bf16.msra.mxu0 %v1435
      %1458 = vmatprep.subr.bf16.mxu0 0
      %1459 = vmatpush1.bf16.msra.mxu0 %v1436
      %1460 = vmatprep.subr.bf16.mxu0 0
      %1461 = vmatpush1.bf16.msra.mxu0 %v1437
      %1462 = vmatprep.subr.bf16.mxu0 0
      %1463 = vmatpush1.bf16.msra.mxu0 0
      %1464 = vmatprep.subr.bf16.mxu0 0
      %1465 = vmatpush1.bf16.msra.mxu0 0
      %1466 = vmatprep.subr.bf16.mxu0 0
      %1467 = vmatpush1.bf16.msra.mxu0 0
      %1468 = vmatprep.subr.bf16.mxu0 0
      %1469 = vmatpush1.bf16.msra.mxu0 0
      %1470 = vmatprep.subr.bf16.mxu0 0
      %1471 = vmatpush1.bf16.msra.mxu0 0
      %1472 = vmatprep.subr.bf16.mxu0 0
      %1473 = vmatpush1.bf16.msra.mxu0 0
      %1474 = vmatprep.subr.bf16.mxu0 0
      %1475 = vmatpush1.bf16.msra.mxu0 0
      %1476 = vmatprep.subr.bf16.mxu0 0
      %1477 = vmatpush1.bf16.msra.mxu0 0
      %1478 = vmatprep.mubr.bf16.mxu0 0
      %1479 = vmatmul.mubr.bf16.gmra.mrb[0].mxu0 %v515
      %v1480 = vpop.f32.mrb[0].mxu0
      %v1481 = vadd.f32 0.0, %v1480
      %v1482 = vpop.f32.mrb[0].mxu0
      %v1483 = vpop.f32.mrb[0].mxu0
      %v1484 = vadd.f32 0.0, %v1483
      %v1485 = vpop.f32.mrb[0].mxu0
      %1486 = vmatprep.mubr.bf16.mxu0 0
      %1487 = vmatmul.mubr.bf16.gmra.mrb[0].mxu0 %v516
      %v1488 = vpop.f32.mrb[0].mxu0
      %v1489 = vadd.f32 0.0, %v1488
      %v1490 = vpop.f32.mrb[0].mxu0
      %v1491 = vpop.f32.mrb[0].mxu0
      %v1492 = vadd.f32 0.0, %v1491
      %v1493 = vpop.f32.mrb[0].mxu0
      %1494 = vmatprep.mubr.bf16.mxu0 0
      %1495 = vmatmul.mubr.bf16.gmra.mrb[0].mxu0 %v517
      %v1496 = vpop.f32.mrb[0].mxu0
      %v1497 = vadd.f32 0.0, %v1496
      %v1498 = vpop.f32.mrb[0].mxu0
      %v1499 = vpop.f32.mrb[0].mxu0
      %v1500 = vadd.f32 0.0, %v1499
      %v1501 = vpop.f32.mrb[0].mxu0
      %1502 = vmatprep.mubr.bf16.mxu0 0
      %1503 = vmatmul.mubr.bf16.gmra.mrb[0].mxu0 %v1380
      %v1504 = vpop.f32.mrb[0].mxu0
      %v1505 = vadd.f32 0.0, %v1504
      %v1506 = vpop.f32.mrb[0].mxu0
      %v1507 = vpop.f32.mrb[0].mxu0
      %v1508 = vadd.f32 0.0, %v1507
      %v1509 = vpop.f32.mrb[0].mxu0
      %1510 = vdwg.mxu0
      %v1511 = vadd.f32 %v1368, %v1481
      %v1512 = vadd.f32 %v1369, %v1484
      %v1513 = vadd.f32 %v1370, %v1489
      %v1514 = vadd.f32 %v1371, %v1492
      %v1515 = vadd.f32 %v1372, %v1497
      %v1516 = vadd.f32 %v1373, %v1500
      %v1517 = vadd.f32 %v1374, %v1505
      %v1518 = vadd.f32 %v1375, %v1508
      %1519 = vst [vmem:[%s143] sm:$0xff] %v1511
      %1520 = vst [vmem:[%s143 + $0x8] sm:$0xff] %v1512
      %1521 = vst [vmem:[%s143 + $0x10] sm:$0xff] %v1513
      %1522 = vst [vmem:[%s143 + $0x18] sm:$0xff] %v1514
      %1523 = vst [vmem:[%s143 + $0x20] sm:$0xff] %v1515
      %1524 = vst [vmem:[%s143 + $0x28] sm:$0xff] %v1516
      %1525 = vst [vmem:[%s143 + $0x30] sm:$0xff] %v1517
      %1526 = vst [vmem:[%s143 + $0x38] sm:$0xff] %v1518
      %p1527 = scmp.lt.s32.totalorder %s13, 1
      %s1528 = scalar_select %p1527, %s13, 1
      %s1529 = smul.addr %s1528, 8
      %s1530 = smul.addr %s1529, 8
      %s1531 = scalar_lea.vmem %s2, %s1530
      // Predicated region
      $region29: #{octave_conv_forward.6} parent=27 // pred_check
        %p1532 = pneg %p78
      $region30: #{octave_conv_forward.6} parent=27 // pred_check_branch
        %1534 = sbr.rel (%p1532) target = $region32
      $region31: #{octave_conv_forward.6} parent=27 // pred_region
        _
      $region32: #{octave_conv_forward.6} parent=27 // pred_fallthru
        _
    $region28: #{octave_conv_forward.6} parent=5 // pred_fallthru
      _
    %p1535 = scmp.le.s32.totalorder 2, %s8
    // Predicated region
    $region33: #{octave_conv_forward.6} parent=5 // pred_check
      %p1536 = pneg %p1535
    $region34: #{octave_conv_forward.6} parent=5 // pred_check_branch
      %1538 = sbr.rel (%p1536) target = $region36
    $region35: #{octave_conv_forward.6} parent=5 // pred_region
      %s1539 = ssub.s32 %s8, 2
      // Predicated region
      $region37: #{octave_conv_forward.6} parent=35 // pred_check
        %p1540 = pneg %p84
      $region38: #{octave_conv_forward.6} parent=35 // pred_check_branch
        %1542 = sbr.rel (%p1540) target = $region40
      $region39: #{octave_conv_forward.6} parent=35 // pred_region
        %p1543 = scmp.lt.s32.totalorder %s14, 1
        %s1544 = scalar_select %p1543, %s14, 1
        %s1545 = smul.addr %s1544, 8
        %s1546 = smul.addr %s1545, 8
        %s1547 = scalar_lea.vmem %s2, %s1546
      $region40: #{octave_conv_forward.6} parent=35 // pred_fallthru
        _
    $region36: #{octave_conv_forward.6} parent=5 // pred_fallthru
      _
  $region6: #{octave_conv_forward.6} parent=0 // loop_footer
    %s12 = sadd.s32 1, %s8
  $region7: #{octave_conv_forward.6} parent=0 // loop_footer_branch
    %7 = sbr.rel target = $region3
  $region8: #{octave_conv_forward.6} parent=0 // loop_exit
    _

</llo_original>
